<compile_context>
chip_gen: v5e
topology: v5e:2x2
jax: 0.10.0
libtpu: 0.0.40
codegen_flags: <defaults>
</compile_context>

<pallas_src>
import jax
import jax.numpy as jnp
from jax.experimental import pallas as pl
from jax.experimental.pallas import tpu as pltpu

_NEG = -3.0e38   # Python float (NOT a jnp array -> no captured-constant error);
                 # representable in bf16, and far below any SiLU output.


def _make_spp_kernel(W: int, HW: int, c_: int):
    """Build the SPP kernel for a fixed spatial geometry and hidden width."""

    def kernel(x_ref, w1_ref, b1_ref, w2_ref, b2_ref, o_ref, feats_ref, pad_ref):
        ct = pl.program_id(1)                     # output-channel tile index

        # ---- phase 1 (once per batch element): conv1 + BN + SiLU + max pools ----
        @pl.when(ct == 0)
        def _():
            x = x_ref[0]                                              # (HW, c1) bf16
            y = jnp.dot(x, w1_ref[...], preferred_element_type=jnp.float32)
            y = y + b1_ref[...]                                       # folded BN shift
            feat = (y * jax.nn.sigmoid(y)).astype(jnp.bfloat16)       # SiLU -> bf16

            # boundary masks for W-direction shifts (stay inside one image row);
            # they also mask the array wrap-around of the rolls below.
            wcoord = jax.lax.broadcasted_iota(jnp.int32, (HW, 1), 0) % W
            m_m1 = wcoord >= 1
            m_m2 = wcoord >= 2
            m_p1 = wcoord < (W - 1)
            m_p2 = wcoord < (W - 2)

            # -inf borders (2*W rows top and bottom) written once per batch element;
            # the interior is rewritten by every pool pass before it is read.
            border = jnp.full((2 * W, c_), _NEG, pad_ref.dtype)
            pad_ref[pl.ds(0, 2 * W), :] = border
            pad_ref[pl.ds(2 * W + HW, 2 * W), :] = border

            def hshift(off):                       # H-pass shifted view (rows +- W)
                return pad_ref[pl.ds(2 * W + off, HW), :]

            def pool5(cur):
                # separable MaxPool2d(k=5, s=1, p=2), entirely in bf16.
                # W pass: in-register static row shifts + boundary masks.
                wmax = cur
                wmax = jnp.maximum(wmax, jnp.where(m_m1, jnp.roll(cur, 1, axis=0), _NEG))
                wmax = jnp.maximum(wmax, jnp.where(m_m2, jnp.roll(cur, 2, axis=0), _NEG))
                wmax = jnp.maximum(wmax, jnp.where(m_p1, jnp.roll(cur, -1, axis=0), _NEG))
                wmax = jnp.maximum(wmax, jnp.where(m_p2, jnp.roll(cur, -2, axis=0), _NEG))
                # H pass: through the -inf-bordered scratch (image top/bottom padding).
                pad_ref[pl.ds(2 * W, HW), :] = wmax
                out = wmax
                out = jnp.maximum(out, hshift(-W))
                out = jnp.maximum(out, hshift(-2 * W))
                out = jnp.maximum(out, hshift(W))
                out = jnp.maximum(out, hshift(2 * W))
                return out

            p5 = pool5(feat)           # MaxPool k=5
            p9 = pool5(p5)             # == MaxPool k=9
            p13 = pool5(p9)            # == MaxPool k=13

            # virtual concat: channel sub-slices of one (HW, 4*c_) bf16 scratch
            feats_ref[:, 0:c_] = feat
            feats_ref[:, c_:2 * c_] = p5
            feats_ref[:, 2 * c_:3 * c_] = p9
            feats_ref[:, 3 * c_:4 * c_] = p13

        # ---- phase 2 (every grid step): conv2 over the virtual concat -----------
        # single K=4*c_ matmul -> one lane-dense output slab per step
        acc = jnp.dot(feats_ref[...], w2_ref[...], preferred_element_type=jnp.float32)
        acc = acc + b2_ref[...]                                       # folded BN shift
        o_ref[0] = (acc * jax.nn.sigmoid(acc)).astype(o_ref.dtype)    # SiLU

    return kernel


def spp_pallas(x_nchw, w_cv1, bn1_scale, bn1_shift, w_cv2, bn2_scale, bn2_shift):
    """SPP forward.  x_nchw: (B, c1, H, W) f32.  conv weights in (out, in) layout."""
    B, c1, H, W = x_nchw.shape
    c_ = w_cv1.shape[0]
    c2 = w_cv2.shape[0]
    HW = H * W

    # NCHW -> (B, HW, c1); bf16 activations (f32 accumulation inside the kernel)
    x_blc = jnp.transpose(x_nchw, (0, 2, 3, 1)).reshape(B, HW, c1).astype(jnp.bfloat16)

    # fold BN scale into the 1x1-conv weights (exact); keep only the shift vectors
    w1 = (w_cv1 * bn1_scale[:, None]).T.astype(jnp.bfloat16)          # (c1, c_)
    w2 = (w_cv2 * bn2_scale[:, None]).T                               # (4*c_, c2) f32

    # lane-dense output tiles: 256 fills the v6e/v7x MXU N dim; 128 keeps padding
    # waste low for small c2 (and is the natural width on v5e's 128-wide MXU).
    c2_tile = 256 if c2 > 128 else 128
    c2p = ((c2 + c2_tile - 1) // c2_tile) * c2_tile
    w2 = jnp.pad(w2, ((0, 0), (0, c2p - c2))).astype(jnp.bfloat16)    # (4*c_, c2p)
    b1 = bn1_shift.reshape(1, c_).astype(jnp.float32)
    b2 = jnp.pad(bn2_shift, (0, c2p - c2)).reshape(1, c2p).astype(jnp.float32)

    # rough VMEM budget (double-buffered blocks + scratch); raise the scoped limit
    # only when a large geometry needs it (defaults: 16/32/32 MiB on v5e/v6e/v7x).
    est_vmem = (
        2 * (HW * c1 * 2              # x block
             + c1 * c_ * 2            # w1
             + c_ * 4                 # b1
             + 4 * c_ * c2_tile * 2   # w2 tile
             + c2_tile * 4            # b2 tile
             + HW * c2_tile * 4)      # out tile
        + HW * 4 * c_ * 2             # feats scratch (bf16)
        + (HW + 4 * W) * c_ * 2)      # pool pad scratch (bf16)
    cp_kwargs = dict(dimension_semantics=("parallel", "arbitrary"))
    if est_vmem > 12 * 1024 * 1024:
        cp_kwargs["vmem_limit_bytes"] = min(2 * est_vmem, 64 * 1024 * 1024)

    out = pl.pallas_call(
        _make_spp_kernel(W, HW, c_),
        out_shape=jax.ShapeDtypeStruct((B, HW, c2p), jnp.float32),
        grid_spec=pltpu.PrefetchScalarGridSpec(
            num_scalar_prefetch=0,
            grid=(B, c2p // c2_tile),
            in_specs=[
                pl.BlockSpec((1, HW, c1), lambda b, ct: (b, 0, 0)),
                pl.BlockSpec((c1, c_), lambda b, ct: (0, 0)),
                pl.BlockSpec((1, c_), lambda b, ct: (0, 0)),
                pl.BlockSpec((4 * c_, c2_tile), lambda b, ct: (0, ct)),
                pl.BlockSpec((1, c2_tile), lambda b, ct: (0, ct)),
            ],
            out_specs=pl.BlockSpec((1, HW, c2_tile), lambda b, ct: (b, 0, ct)),
            scratch_shapes=[
                pltpu.VMEM((HW, 4 * c_), jnp.bfloat16),        # feat|mp5|mp9|mp13
                pltpu.VMEM((HW + 4 * W, c_), jnp.bfloat16),    # -inf bordered pool buf
            ],
        ),
        compiler_params=pltpu.CompilerParams(**cp_kwargs),
    )(x_blc, w1, b1, w2, b2)

    out = out[:, :, :c2]                                             # drop lane padding
    return jnp.transpose(out.reshape(B, H, W, c2), (0, 3, 1, 2))     # back to NCHW


def spp_reference(x_nchw, w_cv1, bn1_scale, bn1_shift, w_cv2, bn2_scale, bn2_shift):
    """Pure-JAX reference with the same mixed precision as the kernel (bf16 in, f32 acc)."""
    x = jnp.transpose(x_nchw, (0, 2, 3, 1)).astype(jnp.bfloat16)      # (B, H, W, c1)
    w1 = (w_cv1 * bn1_scale[:, None]).T.astype(jnp.bfloat16)          # (c1, c_)
    w2 = (w_cv2 * bn2_scale[:, None]).T.astype(jnp.bfloat16)          # (4*c_, c2)

    y = jnp.einsum('bhwc,cd->bhwd', x, w1, preferred_element_type=jnp.float32)
    y = y + bn1_shift
    feat = y * jax.nn.sigmoid(y)                                      # f32

    def maxpool(a, k):
        p = k // 2
        return jax.lax.reduce_window(
            a, -jnp.inf, jax.lax.max,
            window_dimensions=(1, k, k, 1), window_strides=(1, 1, 1, 1),
            padding=[(0, 0), (p, p), (p, p), (0, 0)])

    cat = jnp.concatenate(
        [feat, maxpool(feat, 5), maxpool(feat, 9), maxpool(feat, 13)],
        axis=-1).astype(jnp.bfloat16)
    y2 = jnp.einsum('bhwc,cd->bhwd', cat, w2, preferred_element_type=jnp.float32)
    y2 = y2 + bn2_shift
    out = y2 * jax.nn.sigmoid(y2)
    return jnp.transpose(out, (0, 3, 1, 2))                           # NCHW


if __name__ == "__main__":
    # SPP(c1=8, c2=32) on (B=2, 8, 16, 16) inputs; c_ = c1 // 2 = 4.
    B, c1, H, W = 2, 8, 16, 16
    c2 = 32
    c_ = c1 // 2

    key = jax.random.PRNGKey(0)
    ks = jax.random.split(key, 11)

    x = jax.random.normal(ks[0], (B, c1, H, W), jnp.float32)

    # cv1 = Conv(c1, c_, 1, 1): 1x1 conv weight (c_, c1), BatchNorm2d(c_) eval stats
    w_cv1 = jax.random.normal(ks[1], (c_, c1), jnp.float32) * 0.3
    g1 = 1.0 + 0.1 * jax.random.normal(ks[2], (c_,), jnp.float32)
    beta1 = 0.1 * jax.random.normal(ks[3], (c_,), jnp.float32)
    mu1 = 0.1 * jax.random.normal(ks[4], (c_,), jnp.float32)
    var1 = jnp.abs(1.0 + 0.1 * jax.random.normal(ks[5], (c_,), jnp.float32))

    # cv2 = Conv(4*c_, c2, 1, 1): 1x1 conv weight (c2, 4*c_), BatchNorm2d(c2) eval stats
    w_cv2 = jax.random.normal(ks[6], (c2, 4 * c_), jnp.float32) * 0.2
    g2 = 1.0 + 0.1 * jax.random.normal(ks[7], (c2,), jnp.float32)
    beta2 = 0.1 * jax.random.normal(ks[8], (c2,), jnp.float32)
    mu2 = 0.1 * jax.random.normal(ks[9], (c2,), jnp.float32)
    var2 = jnp.abs(1.0 + 0.1 * jax.random.normal(ks[10], (c2,), jnp.float32))

    eps = 1e-5
    s1 = g1 / jnp.sqrt(var1 + eps)
    t1 = beta1 - mu1 * s1
    s2 = g2 / jnp.sqrt(var2 + eps)
    t2 = beta2 - mu2 * s2

    out = spp_pallas(x, w_cv1, s1, t1, w_cv2, s2, t2)
    out = jax.block_until_ready(out)

    ref = spp_reference(x, w_cv1, s1, t1, w_cv2, s2, t2)
    ref = jax.block_until_ready(ref)

    assert out.shape == (B, c2, H, W), out.shape
    max_err = float(jnp.max(jnp.abs(out - ref)))
    assert jnp.allclose(out, ref, atol=5e-3, rtol=5e-3), max_err

    print("KERNEL_OK")
</pallas_src>

<mosaic_0001>
module attributes {stable_mosaic.version = 11 : i64} {
  func.func @kernel(%arg0: i32, %arg1: i32, %arg2: memref<1x256x8xbf16, #tpu.memory_space<vmem>>, %arg3: memref<8x4xbf16, #tpu.memory_space<vmem>>, %arg4: memref<1x4xf32, #tpu.memory_space<vmem>>, %arg5: memref<16x128xbf16, #tpu.memory_space<vmem>>, %arg6: memref<1x128xf32, #tpu.memory_space<vmem>>, %arg7: memref<1x256x128xf32, #tpu.memory_space<vmem>>, %arg8: memref<256x16xbf16, #tpu.memory_space<vmem>>, %arg9: memref<320x4xbf16, #tpu.memory_space<vmem>>) attributes {dimension_semantics = [#tpu.dimension_semantics<parallel>, #tpu.dimension_semantics<arbitrary>], iteration_bounds = array<i64: 2, 1>, scalar_prefetch = 0 : i64, scratch_operands = 2 : i64, tpu.core_type = #tpu.core_type<tc>, window_params = [{transform_indices = @transform_0, window_bounds = array<i64: 1, 256, 8>}, {pipeline_mode = #tpu.pipeline_mode<synchronous>, transform_indices = @transform_1, window_bounds = array<i64: 8, 4>}, {pipeline_mode = #tpu.pipeline_mode<synchronous>, transform_indices = @transform_2, window_bounds = array<i64: 1, 4>}, {transform_indices = @transform_3, window_bounds = array<i64: 16, 128>}, {transform_indices = @transform_4, window_bounds = array<i64: 1, 128>}, {transform_indices = @transform_5, window_bounds = array<i64: 1, 256, 128>}]} {
    %c0_i32 = arith.constant 0 : i32
    %0 = arith.cmpi eq, %arg1, %c0_i32 : i32
    %1 = arith.extui %0 : i1 to i32
    %c0_i32_0 = arith.constant 0 : i32
    %2 = arith.cmpi ne, %1, %c0_i32_0 : i32
    scf.if %2 {
      %c0_10 = arith.constant 0 : index
      %c0_11 = arith.constant 0 : index
      %c0_12 = arith.constant 0 : index
      %18 = vector.load %arg2[%c0_10, %c0_11, %c0_12] : memref<1x256x8xbf16, #tpu.memory_space<vmem>>, vector<1x256x8xbf16>
      %19 = vector.shape_cast %18 : vector<1x256x8xbf16> to vector<256x8xbf16>
      %c0_13 = arith.constant 0 : index
      %c0_14 = arith.constant 0 : index
      %20 = vector.load %arg3[%c0_13, %c0_14] : memref<8x4xbf16, #tpu.memory_space<vmem>>, vector<8x4xbf16>
      %cst_15 = arith.constant dense<0.000000e+00> : vector<256x4xf32>
      %21 = tpu.matmul %19, %20, %cst_15 {dimension_numbers = #tpu.dot_dimension_numbers<[1], [0], [0], [1], [0, 0, 1, 1], [], []>} : vector<256x8xbf16>, vector<8x4xbf16>, vector<256x4xf32> -> vector<256x4xf32>
      %c0_16 = arith.constant 0 : index
      %c0_17 = arith.constant 0 : index
      %22 = vector.load %arg4[%c0_16, %c0_17] : memref<1x4xf32, #tpu.memory_space<vmem>>, vector<1x4xf32>
      %23 = vector.broadcast %22 : vector<1x4xf32> to vector<256x4xf32>
      %24 = arith.addf %21, %23 : vector<256x4xf32>
      %25 = arith.negf %24 : vector<256x4xf32>
      %26 = math.exp %25 : vector<256x4xf32>
      %cst_18 = arith.constant 1.000000e+00 : f32
      %27 = vector.broadcast %cst_18 : f32 to vector<256x4xf32>
      %28 = arith.addf %27, %26 : vector<256x4xf32>
      %29 = arith.divf %27, %28 : vector<256x4xf32>
      %30 = arith.mulf %24, %29 : vector<256x4xf32>
      %31 = arith.truncf %30 : vector<256x4xf32> to vector<256x4xbf16>
      %32 = tpu.iota {dimensions = array<i32: 0>} : vector<256x1xi32>
      %c16_i32 = arith.constant 16 : i32
      %c0_i32_19 = arith.constant 0 : i32
      %33 = arith.cmpi eq, %c16_i32, %c0_i32_19 : i32
      %c1_i32 = arith.constant 1 : i32
      %34 = arith.select %33, %c1_i32, %c16_i32 : i32
      %35 = vector.broadcast %34 : i32 to vector<256x1xi32>
      %36 = arith.remsi %32, %35 : vector<256x1xi32>
      %c0_i32_20 = arith.constant 0 : i32
      %37 = vector.broadcast %c0_i32_20 : i32 to vector<256x1xi32>
      %38 = arith.cmpi ne, %36, %37 : vector<256x1xi32>
      %c0_i32_21 = arith.constant 0 : i32
      %39 = vector.broadcast %c0_i32_21 : i32 to vector<256x1xi32>
      %40 = arith.cmpi slt, %36, %39 : vector<256x1xi32>
      %c0_i32_22 = arith.constant 0 : i32
      %41 = arith.cmpi slt, %34, %c0_i32_22 : i32
      %42 = vector.broadcast %41 : i1 to vector<256x1xi1>
      %43 = vector.broadcast %42 : vector<256x1xi1> to vector<256x1xi1>
      %44 = arith.xori %40, %43 : vector<256x1xi1>
      %45 = arith.andi %44, %38 : vector<256x1xi1>
      %46 = vector.broadcast %34 : i32 to vector<256x1xi32>
      %47 = arith.addi %36, %46 : vector<256x1xi32>
      %48 = arith.select %45, %47, %36 : vector<256x1xi1>, vector<256x1xi32>
      %c1_i32_23 = arith.constant 1 : i32
      %49 = vector.broadcast %c1_i32_23 : i32 to vector<256x1xi32>
      %50 = arith.cmpi sge, %48, %49 : vector<256x1xi32>
      %c2_i32 = arith.constant 2 : i32
      %51 = vector.broadcast %c2_i32 : i32 to vector<256x1xi32>
      %52 = arith.cmpi sge, %48, %51 : vector<256x1xi32>
      %c15_i32 = arith.constant 15 : i32
      %53 = vector.broadcast %c15_i32 : i32 to vector<256x1xi32>
      %54 = arith.cmpi slt, %48, %53 : vector<256x1xi32>
      %c14_i32 = arith.constant 14 : i32
      %55 = vector.broadcast %c14_i32 : i32 to vector<256x1xi32>
      %56 = arith.cmpi slt, %48, %55 : vector<256x1xi32>
      %cst_24 = arith.constant -3.004060e+38 : bf16
      %57 = vector.broadcast %cst_24 : bf16 to vector<32x4xbf16>
      %c0_25 = arith.constant 0 : index
      %c0_26 = arith.constant 0 : index
      %58 = vector.load %arg9[%c0_25, %c0_26] : memref<320x4xbf16, #tpu.memory_space<vmem>>, vector<32x4xbf16>
      tpu.vector_store %arg9[%c0_25, %c0_26], %57 {strides = array<i32>} : memref<320x4xbf16, #tpu.memory_space<vmem>>, vector<32x4xbf16>,
      %c288 = arith.constant 288 : index
      %c0_27 = arith.constant 0 : index
      %59 = vector.load %arg9[%c288, %c0_27] : memref<320x4xbf16, #tpu.memory_space<vmem>>, vector<32x4xbf16>
      tpu.vector_store %arg9[%c288, %c0_27], %57 {strides = array<i32>} : memref<320x4xbf16, #tpu.memory_space<vmem>>, vector<32x4xbf16>,
      %60 = vector.extract_strided_slice %31 {offsets = [255, 0], sizes = [1, 4], strides = [1, 1]} : vector<256x4xbf16> to vector<1x4xbf16>
      %61 = vector.extract_strided_slice %31 {offsets = [0, 0], sizes = [255, 4], strides = [1, 1]} : vector<256x4xbf16> to vector<255x4xbf16>
      %62 = tpu.concatenate %60, %61 in 0 : vector<1x4xbf16>, vector<255x4xbf16> -> vector<256x4xbf16>
      %cst_28 = arith.constant -3.000000e+38 : f32
      %63 = arith.truncf %cst_28 : f32 to bf16
      %64 = vector.shape_cast %50 : vector<256x1xi1> to vector<256x1xi1>
      %65 = vector.broadcast %64 : vector<256x1xi1> to vector<256x4xi1>
      %66 = vector.broadcast %63 : bf16 to vector<256x4xbf16>
      %67 = arith.select %65, %62, %66 : vector<256x4xi1>, vector<256x4xbf16>
      %68 = arith.maximumf %31, %67 : vector<256x4xbf16>
      %69 = vector.extract_strided_slice %31 {offsets = [254, 0], sizes = [2, 4], strides = [1, 1]} : vector<256x4xbf16> to vector<2x4xbf16>
      %70 = vector.extract_strided_slice %31 {offsets = [0, 0], sizes = [254, 4], strides = [1, 1]} : vector<256x4xbf16> to vector<254x4xbf16>
      %71 = tpu.concatenate %69, %70 in 0 : vector<2x4xbf16>, vector<254x4xbf16> -> vector<256x4xbf16>
      %cst_29 = arith.constant -3.000000e+38 : f32
      %72 = arith.truncf %cst_29 : f32 to bf16
      %73 = vector.shape_cast %52 : vector<256x1xi1> to vector<256x1xi1>
      %74 = vector.broadcast %73 : vector<256x1xi1> to vector<256x4xi1>
      %75 = vector.broadcast %72 : bf16 to vector<256x4xbf16>
      %76 = arith.select %74, %71, %75 : vector<256x4xi1>, vector<256x4xbf16>
      %77 = arith.maximumf %68, %76 : vector<256x4xbf16>
      %78 = vector.extract_strided_slice %31 {offsets = [1, 0], sizes = [255, 4], strides = [1, 1]} : vector<256x4xbf16> to vector<255x4xbf16>
      %79 = vector.extract_strided_slice %31 {offsets = [0, 0], sizes = [1, 4], strides = [1, 1]} : vector<256x4xbf16> to vector<1x4xbf16>
      %80 = tpu.concatenate %78, %79 in 0 : vector<255x4xbf16>, vector<1x4xbf16> -> vector<256x4xbf16>
      %cst_30 = arith.constant -3.000000e+38 : f32
      %81 = arith.truncf %cst_30 : f32 to bf16
      %82 = vector.shape_cast %54 : vector<256x1xi1> to vector<256x1xi1>
      %83 = vector.broadcast %82 : vector<256x1xi1> to vector<256x4xi1>
      %84 = vector.broadcast %81 : bf16 to vector<256x4xbf16>
      %85 = arith.select %83, %80, %84 : vector<256x4xi1>, vector<256x4xbf16>
      %86 = arith.maximumf %77, %85 : vector<256x4xbf16>
      %87 = vector.extract_strided_slice %31 {offsets = [2, 0], sizes = [254, 4], strides = [1, 1]} : vector<256x4xbf16> to vector<254x4xbf16>
      %88 = vector.extract_strided_slice %31 {offsets = [0, 0], sizes = [2, 4], strides = [1, 1]} : vector<256x4xbf16> to vector<2x4xbf16>
      %89 = tpu.concatenate %87, %88 in 0 : vector<254x4xbf16>, vector<2x4xbf16> -> vector<256x4xbf16>
      %cst_31 = arith.constant -3.000000e+38 : f32
      %90 = arith.truncf %cst_31 : f32 to bf16
      %91 = vector.shape_cast %56 : vector<256x1xi1> to vector<256x1xi1>
      %92 = vector.broadcast %91 : vector<256x1xi1> to vector<256x4xi1>
      %93 = vector.broadcast %90 : bf16 to vector<256x4xbf16>
      %94 = arith.select %92, %89, %93 : vector<256x4xi1>, vector<256x4xbf16>
      %95 = arith.maximumf %86, %94 : vector<256x4xbf16>
      %c32 = arith.constant 32 : index
      %c0_32 = arith.constant 0 : index
      %96 = vector.load %arg9[%c32, %c0_32] : memref<320x4xbf16, #tpu.memory_space<vmem>>, vector<256x4xbf16>
      tpu.vector_store %arg9[%c32, %c0_32], %95 {strides = array<i32>} : memref<320x4xbf16, #tpu.memory_space<vmem>>, vector<256x4xbf16>,
      %c16 = arith.constant 16 : index
      %c0_33 = arith.constant 0 : index
      %97 = vector.load %arg9[%c16, %c0_33] : memref<320x4xbf16, #tpu.memory_space<vmem>>, vector<256x4xbf16>
      %98 = arith.maximumf %95, %97 : vector<256x4xbf16>
      %c0_34 = arith.constant 0 : index
      %c0_35 = arith.constant 0 : index
      %99 = vector.load %arg9[%c0_34, %c0_35] : memref<320x4xbf16, #tpu.memory_space<vmem>>, vector<256x4xbf16>
      %100 = arith.maximumf %98, %99 : vector<256x4xbf16>
      %c48 = arith.constant 48 : index
      %c0_36 = arith.constant 0 : index
      %101 = vector.load %arg9[%c48, %c0_36] : memref<320x4xbf16, #tpu.memory_space<vmem>>, vector<256x4xbf16>
      %102 = arith.maximumf %100, %101 : vector<256x4xbf16>
      %c64 = arith.constant 64 : index
      %c0_37 = arith.constant 0 : index
      %103 = vector.load %arg9[%c64, %c0_37] : memref<320x4xbf16, #tpu.memory_space<vmem>>, vector<256x4xbf16>
      %104 = arith.maximumf %102, %103 : vector<256x4xbf16>
      %105 = vector.extract_strided_slice %104 {offsets = [255, 0], sizes = [1, 4], strides = [1, 1]} : vector<256x4xbf16> to vector<1x4xbf16>
      %106 = vector.extract_strided_slice %104 {offsets = [0, 0], sizes = [255, 4], strides = [1, 1]} : vector<256x4xbf16> to vector<255x4xbf16>
      %107 = tpu.concatenate %105, %106 in 0 : vector<1x4xbf16>, vector<255x4xbf16> -> vector<256x4xbf16>
      %cst_38 = arith.constant -3.000000e+38 : f32
      %108 = arith.truncf %cst_38 : f32 to bf16
      %109 = vector.shape_cast %50 : vector<256x1xi1> to vector<256x1xi1>
      %110 = vector.broadcast %109 : vector<256x1xi1> to vector<256x4xi1>
      %111 = vector.broadcast %108 : bf16 to vector<256x4xbf16>
      %112 = arith.select %110, %107, %111 : vector<256x4xi1>, vector<256x4xbf16>
      %113 = arith.maximumf %104, %112 : vector<256x4xbf16>
      %114 = vector.extract_strided_slice %104 {offsets = [254, 0], sizes = [2, 4], strides = [1, 1]} : vector<256x4xbf16> to vector<2x4xbf16>
      %115 = vector.extract_strided_slice %104 {offsets = [0, 0], sizes = [254, 4], strides = [1, 1]} : vector<256x4xbf16> to vector<254x4xbf16>
      %116 = tpu.concatenate %114, %115 in 0 : vector<2x4xbf16>, vector<254x4xbf16> -> vector<256x4xbf16>
      %cst_39 = arith.constant -3.000000e+38 : f32
      %117 = arith.truncf %cst_39 : f32 to bf16
      %118 = vector.shape_cast %52 : vector<256x1xi1> to vector<256x1xi1>
      %119 = vector.broadcast %118 : vector<256x1xi1> to vector<256x4xi1>
      %120 = vector.broadcast %117 : bf16 to vector<256x4xbf16>
      %121 = arith.select %119, %116, %120 : vector<256x4xi1>, vector<256x4xbf16>
      %122 = arith.maximumf %113, %121 : vector<256x4xbf16>
      %123 = vector.extract_strided_slice %104 {offsets = [1, 0], sizes = [255, 4], strides = [1, 1]} : vector<256x4xbf16> to vector<255x4xbf16>
      %124 = vector.extract_strided_slice %104 {offsets = [0, 0], sizes = [1, 4], strides = [1, 1]} : vector<256x4xbf16> to vector<1x4xbf16>
      %125 = tpu.concatenate %123, %124 in 0 : vector<255x4xbf16>, vector<1x4xbf16> -> vector<256x4xbf16>
      %cst_40 = arith.constant -3.000000e+38 : f32
      %126 = arith.truncf %cst_40 : f32 to bf16
      %127 = vector.shape_cast %54 : vector<256x1xi1> to vector<256x1xi1>
      %128 = vector.broadcast %127 : vector<256x1xi1> to vector<256x4xi1>
      %129 = vector.broadcast %126 : bf16 to vector<256x4xbf16>
      %130 = arith.select %128, %125, %129 : vector<256x4xi1>, vector<256x4xbf16>
      %131 = arith.maximumf %122, %130 : vector<256x4xbf16>
      %132 = vector.extract_strided_slice %104 {offsets = [2, 0], sizes = [254, 4], strides = [1, 1]} : vector<256x4xbf16> to vector<254x4xbf16>
      %133 = vector.extract_strided_slice %104 {offsets = [0, 0], sizes = [2, 4], strides = [1, 1]} : vector<256x4xbf16> to vector<2x4xbf16>
      %134 = tpu.concatenate %132, %133 in 0 : vector<254x4xbf16>, vector<2x4xbf16> -> vector<256x4xbf16>
      %cst_41 = arith.constant -3.000000e+38 : f32
      %135 = arith.truncf %cst_41 : f32 to bf16
      %136 = vector.shape_cast %56 : vector<256x1xi1> to vector<256x1xi1>
      %137 = vector.broadcast %136 : vector<256x1xi1> to vector<256x4xi1>
      %138 = vector.broadcast %135 : bf16 to vector<256x4xbf16>
      %139 = arith.select %137, %134, %138 : vector<256x4xi1>, vector<256x4xbf16>
      %140 = arith.maximumf %131, %139 : vector<256x4xbf16>
      %c32_42 = arith.constant 32 : index
      %c0_43 = arith.constant 0 : index
      %141 = vector.load %arg9[%c32_42, %c0_43] : memref<320x4xbf16, #tpu.memory_space<vmem>>, vector<256x4xbf16>
      tpu.vector_store %arg9[%c32_42, %c0_43], %140 {strides = array<i32>} : memref<320x4xbf16, #tpu.memory_space<vmem>>, vector<256x4xbf16>,
      %c16_44 = arith.constant 16 : index
      %c0_45 = arith.constant 0 : index
      %142 = vector.load %arg9[%c16_44, %c0_45] : memref<320x4xbf16, #tpu.memory_space<vmem>>, vector<256x4xbf16>
      %143 = arith.maximumf %140, %142 : vector<256x4xbf16>
      %c0_46 = arith.constant 0 : index
      %c0_47 = arith.constant 0 : index
      %144 = vector.load %arg9[%c0_46, %c0_47] : memref<320x4xbf16, #tpu.memory_space<vmem>>, vector<256x4xbf16>
      %145 = arith.maximumf %143, %144 : vector<256x4xbf16>
      %c48_48 = arith.constant 48 : index
      %c0_49 = arith.constant 0 : index
      %146 = vector.load %arg9[%c48_48, %c0_49] : memref<320x4xbf16, #tpu.memory_space<vmem>>, vector<256x4xbf16>
      %147 = arith.maximumf %145, %146 : vector<256x4xbf16>
      %c64_50 = arith.constant 64 : index
      %c0_51 = arith.constant 0 : index
      %148 = vector.load %arg9[%c64_50, %c0_51] : memref<320x4xbf16, #tpu.memory_space<vmem>>, vector<256x4xbf16>
      %149 = arith.maximumf %147, %148 : vector<256x4xbf16>
      %150 = vector.extract_strided_slice %149 {offsets = [255, 0], sizes = [1, 4], strides = [1, 1]} : vector<256x4xbf16> to vector<1x4xbf16>
      %151 = vector.extract_strided_slice %149 {offsets = [0, 0], sizes = [255, 4], strides = [1, 1]} : vector<256x4xbf16> to vector<255x4xbf16>
      %152 = tpu.concatenate %150, %151 in 0 : vector<1x4xbf16>, vector<255x4xbf16> -> vector<256x4xbf16>
      %cst_52 = arith.constant -3.000000e+38 : f32
      %153 = arith.truncf %cst_52 : f32 to bf16
      %154 = vector.shape_cast %50 : vector<256x1xi1> to vector<256x1xi1>
      %155 = vector.broadcast %154 : vector<256x1xi1> to vector<256x4xi1>
      %156 = vector.broadcast %153 : bf16 to vector<256x4xbf16>
      %157 = arith.select %155, %152, %156 : vector<256x4xi1>, vector<256x4xbf16>
      %158 = arith.maximumf %149, %157 : vector<256x4xbf16>
      %159 = vector.extract_strided_slice %149 {offsets = [254, 0], sizes = [2, 4], strides = [1, 1]} : vector<256x4xbf16> to vector<2x4xbf16>
      %160 = vector.extract_strided_slice %149 {offsets = [0, 0], sizes = [254, 4], strides = [1, 1]} : vector<256x4xbf16> to vector<254x4xbf16>
      %161 = tpu.concatenate %159, %160 in 0 : vector<2x4xbf16>, vector<254x4xbf16> -> vector<256x4xbf16>
      %cst_53 = arith.constant -3.000000e+38 : f32
      %162 = arith.truncf %cst_53 : f32 to bf16
      %163 = vector.shape_cast %52 : vector<256x1xi1> to vector<256x1xi1>
      %164 = vector.broadcast %163 : vector<256x1xi1> to vector<256x4xi1>
      %165 = vector.broadcast %162 : bf16 to vector<256x4xbf16>
      %166 = arith.select %164, %161, %165 : vector<256x4xi1>, vector<256x4xbf16>
      %167 = arith.maximumf %158, %166 : vector<256x4xbf16>
      %168 = vector.extract_strided_slice %149 {offsets = [1, 0], sizes = [255, 4], strides = [1, 1]} : vector<256x4xbf16> to vector<255x4xbf16>
      %169 = vector.extract_strided_slice %149 {offsets = [0, 0], sizes = [1, 4], strides = [1, 1]} : vector<256x4xbf16> to vector<1x4xbf16>
      %170 = tpu.concatenate %168, %169 in 0 : vector<255x4xbf16>, vector<1x4xbf16> -> vector<256x4xbf16>
      %cst_54 = arith.constant -3.000000e+38 : f32
      %171 = arith.truncf %cst_54 : f32 to bf16
      %172 = vector.shape_cast %54 : vector<256x1xi1> to vector<256x1xi1>
      %173 = vector.broadcast %172 : vector<256x1xi1> to vector<256x4xi1>
      %174 = vector.broadcast %171 : bf16 to vector<256x4xbf16>
      %175 = arith.select %173, %170, %174 : vector<256x4xi1>, vector<256x4xbf16>
      %176 = arith.maximumf %167, %175 : vector<256x4xbf16>
      %177 = vector.extract_strided_slice %149 {offsets = [2, 0], sizes = [254, 4], strides = [1, 1]} : vector<256x4xbf16> to vector<254x4xbf16>
      %178 = vector.extract_strided_slice %149 {offsets = [0, 0], sizes = [2, 4], strides = [1, 1]} : vector<256x4xbf16> to vector<2x4xbf16>
      %179 = tpu.concatenate %177, %178 in 0 : vector<254x4xbf16>, vector<2x4xbf16> -> vector<256x4xbf16>
      %cst_55 = arith.constant -3.000000e+38 : f32
      %180 = arith.truncf %cst_55 : f32 to bf16
      %181 = vector.shape_cast %56 : vector<256x1xi1> to vector<256x1xi1>
      %182 = vector.broadcast %181 : vector<256x1xi1> to vector<256x4xi1>
      %183 = vector.broadcast %180 : bf16 to vector<256x4xbf16>
      %184 = arith.select %182, %179, %183 : vector<256x4xi1>, vector<256x4xbf16>
      %185 = arith.maximumf %176, %184 : vector<256x4xbf16>
      %c32_56 = arith.constant 32 : index
      %c0_57 = arith.constant 0 : index
      %186 = vector.load %arg9[%c32_56, %c0_57] : memref<320x4xbf16, #tpu.memory_space<vmem>>, vector<256x4xbf16>
      tpu.vector_store %arg9[%c32_56, %c0_57], %185 {strides = array<i32>} : memref<320x4xbf16, #tpu.memory_space<vmem>>, vector<256x4xbf16>,
      %c16_58 = arith.constant 16 : index
      %c0_59 = arith.constant 0 : index
      %187 = vector.load %arg9[%c16_58, %c0_59] : memref<320x4xbf16, #tpu.memory_space<vmem>>, vector<256x4xbf16>
      %188 = arith.maximumf %185, %187 : vector<256x4xbf16>
      %c0_60 = arith.constant 0 : index
      %c0_61 = arith.constant 0 : index
      %189 = vector.load %arg9[%c0_60, %c0_61] : memref<320x4xbf16, #tpu.memory_space<vmem>>, vector<256x4xbf16>
      %190 = arith.maximumf %188, %189 : vector<256x4xbf16>
      %c48_62 = arith.constant 48 : index
      %c0_63 = arith.constant 0 : index
      %191 = vector.load %arg9[%c48_62, %c0_63] : memref<320x4xbf16, #tpu.memory_space<vmem>>, vector<256x4xbf16>
      %192 = arith.maximumf %190, %191 : vector<256x4xbf16>
      %c64_64 = arith.constant 64 : index
      %c0_65 = arith.constant 0 : index
      %193 = vector.load %arg9[%c64_64, %c0_65] : memref<320x4xbf16, #tpu.memory_space<vmem>>, vector<256x4xbf16>
      %194 = arith.maximumf %192, %193 : vector<256x4xbf16>
      %c0_66 = arith.constant 0 : index
      %c0_67 = arith.constant 0 : index
      %195 = vector.load %arg8[%c0_66, %c0_67] : memref<256x16xbf16, #tpu.memory_space<vmem>>, vector<256x4xbf16>
      tpu.vector_store %arg8[%c0_66, %c0_67], %31 {strides = array<i32>} : memref<256x16xbf16, #tpu.memory_space<vmem>>, vector<256x4xbf16>,
      %c0_68 = arith.constant 0 : index
      %c4 = arith.constant 4 : index
      %196 = vector.load %arg8[%c0_68, %c4] : memref<256x16xbf16, #tpu.memory_space<vmem>>, vector<256x4xbf16>
      tpu.vector_store %arg8[%c0_68, %c4], %104 {strides = array<i32>} : memref<256x16xbf16, #tpu.memory_space<vmem>>, vector<256x4xbf16>,
      %c0_69 = arith.constant 0 : index
      %c8 = arith.constant 8 : index
      %197 = vector.load %arg8[%c0_69, %c8] : memref<256x16xbf16, #tpu.memory_space<vmem>>, vector<256x4xbf16>
      tpu.vector_store %arg8[%c0_69, %c8], %149 {strides = array<i32>} : memref<256x16xbf16, #tpu.memory_space<vmem>>, vector<256x4xbf16>,
      %c0_70 = arith.constant 0 : index
      %c12 = arith.constant 12 : index
      %198 = vector.load %arg8[%c0_70, %c12] : memref<256x16xbf16, #tpu.memory_space<vmem>>, vector<256x4xbf16>
      tpu.vector_store %arg8[%c0_70, %c12], %194 {strides = array<i32>} : memref<256x16xbf16, #tpu.memory_space<vmem>>, vector<256x4xbf16>,
    } else {
    }
    %c0 = arith.constant 0 : index
    %c0_1 = arith.constant 0 : index
    %3 = vector.load %arg8[%c0, %c0_1] : memref<256x16xbf16, #tpu.memory_space<vmem>>, vector<256x16xbf16>
    %c0_2 = arith.constant 0 : index
    %c0_3 = arith.constant 0 : index
    %4 = vector.load %arg5[%c0_2, %c0_3] : memref<16x128xbf16, #tpu.memory_space<vmem>>, vector<16x128xbf16>
    %cst = arith.constant dense<0.000000e+00> : vector<256x128xf32>
    %5 = tpu.matmul %3, %4, %cst {dimension_numbers = #tpu.dot_dimension_numbers<[1], [0], [0], [1], [0, 0, 1, 1], [], []>} : vector<256x16xbf16>, vector<16x128xbf16>, vector<256x128xf32> -> vector<256x128xf32>
    %c0_4 = arith.constant 0 : index
    %c0_5 = arith.constant 0 : index
    %6 = vector.load %arg6[%c0_4, %c0_5] : memref<1x128xf32, #tpu.memory_space<vmem>>, vector<1x128xf32>
    %7 = vector.broadcast %6 : vector<1x128xf32> to vector<256x128xf32>
    %8 = arith.addf %5, %7 : vector<256x128xf32>
    %9 = arith.negf %8 : vector<256x128xf32>
    %10 = math.exp %9 : vector<256x128xf32>
    %cst_6 = arith.constant 1.000000e+00 : f32
    %11 = vector.broadcast %cst_6 : f32 to vector<256x128xf32>
    %12 = arith.addf %11, %10 : vector<256x128xf32>
    %13 = arith.divf %11, %12 : vector<256x128xf32>
    %14 = arith.mulf %8, %13 : vector<256x128xf32>
    %c0_7 = arith.constant 0 : index
    %c0_8 = arith.constant 0 : index
    %c0_9 = arith.constant 0 : index
    %15 = vector.load %arg7[%c0_7, %c0_8, %c0_9] : memref<1x256x128xf32, #tpu.memory_space<vmem>>, vector<1x256x128xf32>
    %16 = vector.shape_cast %15 : vector<1x256x128xf32> to vector<256x128xf32>
    %17 = vector.shape_cast %14 : vector<256x128xf32> to vector<1x256x128xf32>
    tpu.vector_store %arg7[%c0_7, %c0_8, %c0_9], %17 {strides = array<i32>} : memref<1x256x128xf32, #tpu.memory_space<vmem>>, vector<1x256x128xf32>,
    return
  }
  func.func @transform_0(%arg0: i32, %arg1: i32) -> (i32, i32, i32) {
    %c0_i32 = arith.constant 0 : i32
    %c0_i32_0 = arith.constant 0 : i32
    %c0_i32_1 = arith.constant 0 : i32
    return %arg0, %c0_i32, %c0_i32_0 : i32, i32, i32
  }
  func.func @transform_1(%arg0: i32, %arg1: i32) -> (i32, i32) {
    %c0_i32 = arith.constant 0 : i32
    %c0_i32_0 = arith.constant 0 : i32
    %c0_i32_1 = arith.constant 0 : i32
    return %c0_i32, %c0_i32_0 : i32, i32
  }
  func.func @transform_2(%arg0: i32, %arg1: i32) -> (i32, i32) {
    %c0_i32 = arith.constant 0 : i32
    %c0_i32_0 = arith.constant 0 : i32
    %c0_i32_1 = arith.constant 0 : i32
    return %c0_i32, %c0_i32_0 : i32, i32
  }
  func.func @transform_3(%arg0: i32, %arg1: i32) -> (i32, i32) {
    %c0_i32 = arith.constant 0 : i32
    %c0_i32_0 = arith.constant 0 : i32
    return %c0_i32, %arg1 : i32, i32
  }
  func.func @transform_4(%arg0: i32, %arg1: i32) -> (i32, i32) {
    %c0_i32 = arith.constant 0 : i32
    %c0_i32_0 = arith.constant 0 : i32
    return %c0_i32, %arg1 : i32, i32
  }
  func.func @transform_5(%arg0: i32, %arg1: i32) -> (i32, i32, i32) {
    %c0_i32 = arith.constant 0 : i32
    %c0_i32_0 = arith.constant 0 : i32
    return %arg0, %c0_i32, %arg1 : i32, i32, i32
  }
}

</mosaic_0001>

<llo_original>
// kernel: tpu_custom_call.1
$region0: #{tpu_custom_call.1}
  #allocation0 [shape = 'u32[]', space=smem, size = 0x4, offset = 0x4, fixed_abs, tag = 'smem constant byte address 0x4 - core index']
  #allocation1 [shape = 'u32[72,128]{1,0:T(1,128)}', space=vmem, size = 0x9000, scoped, tag = 'internal scratch']
  #allocation2 [shape = 'bf16[256,16]{1,0:T(8,128)(2,1)}', space=vmem, size = 0x10000, scoped, tag = 'scratch operand']
  #allocation3 [shape = 'bf16[320,4]{1,0:T(8,128)(2,1)}', space=vmem, size = 0x14000, scoped, tag = 'scratch operand']
  %s0 = inlined_call_operand.vmem [shape: bf16[2,256,8], index: 0, kind: input, shape index: {}]
  %s1 = inlined_call_operand.vmem [shape: bf16[8,4], index: 1, kind: input, shape index: {}]
  %s2 = inlined_call_operand.vmem [shape: f32[1,4], index: 2, kind: input, shape index: {}]
  %s3 = inlined_call_operand.vmem [shape: bf16[16,128], index: 3, kind: input, shape index: {}]
  %s4 = inlined_call_operand.vmem [shape: f32[1,128], index: 4, kind: input, shape index: {}]
  %s5 = inlined_call_operand.hbm [shape: f32[2,256,128], index: 5, kind: output, shape index: {}]
  %s6 = sld [smem:[#allocation0]]
  $region57: #{tpu_custom_call.1} parent=0
    _
  %s8 = ssub.s32 1, %s6
  %s9 = scalar_select 0, %s8, %s6
  $region1: #{tpu_custom_call.1} parent=0
    #allocation4 [shape = 'u8[262144]{0}', space=vmem, size = 0x40000, scoped, tag = 'output window, operand 0']
    #allocation5 [shape = 's32[2]{0}', space=sflag, size = 0x8, scoped, tag = 'scoped memory for tpu_custom_call.1']
    %10 = vsyncpa [#allocation5], 0
    %s11 = scalar_lea.sflag [#allocation5], 1
    %12 = vsyncpa %s11, 0
    loop: start=0, step=1, limit=4
    $region2: #{tpu_custom_call.1} parent=1 // loop_pre_header
      _
    $region3: #{tpu_custom_call.1} parent=1 // loop_header
      %s14 = sphi 0, %s18
      %p15 = scmp.ge.s32.totalorder %s14, 4
      %s21 = sphi 0, %s33
      %s22 = sphi 0, %s29
      %s23 = sphi 0, %s21
      %s24 = sphi 0, %s22
      %s25 = sphi 0, %s23
      %s26 = sphi 0, %s24
      %s36 = sphi 0, %s38
      %s39 = sphi 0, %s36
      %s40 = sphi 0, %s39
      %s56 = sphi 0, %s40
      %s60 = sphi 0, %s60
      %s62 = sphi 0, %s60
      %s63 = sphi 0, %s62
      %s77 = sphi 0, %s63
      %s81 = sphi 0, %s81
      %s83 = sphi 0, %s81
      %s84 = sphi 0, %s83
      %s98 = sphi 0, %s84
      %s104 = sphi 0, %s106
      %s107 = sphi 0, %s104
      %s108 = sphi 0, %s107
      %s124 = sphi 0, %s108
      %s130 = sphi 0, %s132
      %s133 = sphi 0, %s130
      %s134 = sphi 0, %s133
      %s150 = sphi 0, %s134
      %s158 = sphi 0, %s160
      %s161 = sphi 0, %s158
      %s162 = sphi 0, %s161
      %s178 = sphi 0, %s162
    $region4: #{tpu_custom_call.1} parent=1 // loop_header_branch
      %17 = sbr.rel (%p15) target = $region8
    $region5: #{tpu_custom_call.1} parent=1 // loop_body
      %s19 = ssub.s32 %s14, 1
      %s20 = ssub.s32 %s14, 2
      %s27 = sadd.s32 1, %s22
      %p28 = scmp.ge.s32.totalorder %s27, 1
      %s29 = scalar_select %p28, 0, %s27
      %s30 = sadd.s32 1, %s21
      %s31 = scalar_select %p28, %s30, %s21
      %p32 = scmp.ge.s32.totalorder %s31, 2
      %s33 = scalar_select %p32, 0, %s31
      %s34 = ssub.s32 %s21, %s33
      %p35 = scmp.eq.s32.totalorder %s34, 0
      %s37 = sadd.s32 %s36, 1
      %s38 = scalar_select %p35, %s36, %s37
      %p41 = pneg %p35
      %p42 = scmp.eq.s32.totalorder %s14, 1
      %p43 = por %p41, %p42
      %p44 = scmp.ne.s32.totalorder %s36, %s39
      %p45 = scmp.eq.s32.totalorder %s14, 0
      %p46 = por %p44, %p45
      %p47 = scmp.ne.s32.totalorder %s36, %s39
      %p48 = scmp.eq.s32.totalorder %s19, 1
      %p49 = por %p47, %p48
      %p50 = scmp.ne.s32.totalorder %s39, %s40
      %p51 = scmp.eq.s32.totalorder %s19, 0
      %p52 = por %p50, %p51
      %p53 = scmp.ne.s32.totalorder %s39, %s40
      %p54 = scmp.eq.s32.totalorder %s20, 1
      %p55 = por %p53, %p54
      %p57 = scmp.ne.s32.totalorder %s40, %s56
      %p58 = scmp.eq.s32.totalorder %s20, 0
      %p59 = por %p57, %p58
      %s61 = sadd.s32 %s60, 1
      %p64 = scmp.eq.s32.totalorder %s14, 1
      %p65 = scmp.ne.s32.totalorder %s60, %s62
      %p66 = scmp.eq.s32.totalorder %s14, 0
      %p67 = por %p65, %p66
      %p68 = scmp.ne.s32.totalorder %s60, %s62
      %p69 = scmp.eq.s32.totalorder %s19, 1
      %p70 = por %p68, %p69
      %p71 = scmp.ne.s32.totalorder %s62, %s63
      %p72 = scmp.eq.s32.totalorder %s19, 0
      %p73 = por %p71, %p72
      %p74 = scmp.ne.s32.totalorder %s62, %s63
      %p75 = scmp.eq.s32.totalorder %s20, 1
      %p76 = por %p74, %p75
      %p78 = scmp.ne.s32.totalorder %s63, %s77
      %p79 = scmp.eq.s32.totalorder %s20, 0
      %p80 = por %p78, %p79
      %s82 = sadd.s32 %s81, 1
      %p85 = scmp.eq.s32.totalorder %s14, 1
      %p86 = scmp.ne.s32.totalorder %s81, %s83
      %p87 = scmp.eq.s32.totalorder %s14, 0
      %p88 = por %p86, %p87
      %p89 = scmp.ne.s32.totalorder %s81, %s83
      %p90 = scmp.eq.s32.totalorder %s19, 1
      %p91 = por %p89, %p90
      %p92 = scmp.ne.s32.totalorder %s83, %s84
      %p93 = scmp.eq.s32.totalorder %s19, 0
      %p94 = por %p92, %p93
      %p95 = scmp.ne.s32.totalorder %s83, %s84
      %p96 = scmp.eq.s32.totalorder %s20, 1
      %p97 = por %p95, %p96
      %p99 = scmp.ne.s32.totalorder %s84, %s98
      %p100 = scmp.eq.s32.totalorder %s20, 0
      %p101 = por %p99, %p100
      %s102 = ssub.s32 %s22, %s29
      %p103 = scmp.eq.s32.totalorder %s102, 0
      %s105 = sadd.s32 %s104, 1
      %s106 = scalar_select %p103, %s104, %s105
      %p109 = pneg %p103
      %p110 = scmp.eq.s32.totalorder %s14, 1
      %p111 = por %p109, %p110
      %p112 = scmp.ne.s32.totalorder %s104, %s107
      %p113 = scmp.eq.s32.totalorder %s14, 0
      %p114 = por %p112, %p113
      %p115 = scmp.ne.s32.totalorder %s104, %s107
      %p116 = scmp.eq.s32.totalorder %s19, 1
      %p117 = por %p115, %p116
      %p118 = scmp.ne.s32.totalorder %s107, %s108
      %p119 = scmp.eq.s32.totalorder %s19, 0
      %p120 = por %p118, %p119
      %p121 = scmp.ne.s32.totalorder %s107, %s108
      %p122 = scmp.eq.s32.totalorder %s20, 1
      %p123 = por %p121, %p122
      %p125 = scmp.ne.s32.totalorder %s108, %s124
      %p126 = scmp.eq.s32.totalorder %s20, 0
      %p127 = por %p125, %p126
      %s128 = ssub.s32 %s22, %s29
      %p129 = scmp.eq.s32.totalorder %s128, 0
      %s131 = sadd.s32 %s130, 1
      %s132 = scalar_select %p129, %s130, %s131
      %p135 = pneg %p129
      %p136 = scmp.eq.s32.totalorder %s14, 1
      %p137 = por %p135, %p136
      %p138 = scmp.ne.s32.totalorder %s130, %s133
      %p139 = scmp.eq.s32.totalorder %s14, 0
      %p140 = por %p138, %p139
      %p141 = scmp.ne.s32.totalorder %s130, %s133
      %p142 = scmp.eq.s32.totalorder %s19, 1
      %p143 = por %p141, %p142
      %p144 = scmp.ne.s32.totalorder %s133, %s134
      %p145 = scmp.eq.s32.totalorder %s19, 0
      %p146 = por %p144, %p145
      %p147 = scmp.ne.s32.totalorder %s133, %s134
      %p148 = scmp.eq.s32.totalorder %s20, 1
      %p149 = por %p147, %p148
      %p151 = scmp.ne.s32.totalorder %s134, %s150
      %p152 = scmp.eq.s32.totalorder %s20, 0
      %p153 = por %p151, %p152
      %s154 = ssub.s32 %s21, %s33
      %s155 = ssub.s32 %s22, %s29
      %s156 = sor.u32 %s154, %s155
      %p157 = scmp.eq.s32.totalorder %s156, 0
      %s159 = sadd.s32 %s158, 1
      %s160 = scalar_select %p157, %s158, %s159
      %p163 = pneg %p157
      %p164 = scmp.eq.s32.totalorder %s14, 1
      %p165 = por %p163, %p164
      %p166 = scmp.ne.s32.totalorder %s158, %s161
      %p167 = scmp.eq.s32.totalorder %s14, 0
      %p168 = por %p166, %p167
      %p169 = scmp.ne.s32.totalorder %s158, %s161
      %p170 = scmp.eq.s32.totalorder %s19, 1
      %p171 = por %p169, %p170
      %p172 = scmp.ne.s32.totalorder %s161, %s162
      %p173 = scmp.eq.s32.totalorder %s19, 0
      %p174 = por %p172, %p173
      %p175 = scmp.ne.s32.totalorder %s161, %s162
      %p176 = scmp.eq.s32.totalorder %s20, 1
      %p177 = por %p175, %p176
      %p179 = scmp.ne.s32.totalorder %s162, %s178
      %p180 = scmp.eq.s32.totalorder %s20, 0
      %p181 = por %p179, %p180
      %p182 = scmp.le.s32.totalorder 1, %s14
      %p183 = scmp.lt.s32.totalorder %s14, 3
      %p184 = pnand %p182, %p183
      %p185 = pneg %p184
      // Predicated region
      $region9: #{tpu_custom_call.1} parent=5 // pred_check
        _
      $region10: #{tpu_custom_call.1} parent=5 // pred_check_branch
        %187 = sbr.rel (%p184) target = $region12
      $region11: #{tpu_custom_call.1} parent=5 // pred_region
        %s188 = ssub.s32 %s14, 1
        // Predicated region
        $region13: #{tpu_custom_call.1} parent=11 // pred_check
          %p189 = pneg %p73
        $region14: #{tpu_custom_call.1} parent=11 // pred_check_branch
          %191 = sbr.rel (%p189) target = $region16
        $region15: #{tpu_custom_call.1} parent=11 // pred_region
          _
        $region16: #{tpu_custom_call.1} parent=11 // pred_fallthru
          _
        // Predicated region
        $region17: #{tpu_custom_call.1} parent=11 // pred_check
          %p192 = pneg %p94
        $region18: #{tpu_custom_call.1} parent=11 // pred_check_branch
          %194 = sbr.rel (%p192) target = $region20
        $region19: #{tpu_custom_call.1} parent=11 // pred_region
          _
        $region20: #{tpu_custom_call.1} parent=11 // pred_fallthru
          _
        // Predicated region
        $region21: #{tpu_custom_call.1} parent=11 // pred_check
          %p195 = pneg %p120
        $region22: #{tpu_custom_call.1} parent=11 // pred_check_branch
          %197 = sbr.rel (%p195) target = $region24
        $region23: #{tpu_custom_call.1} parent=11 // pred_region
          %p198 = scmp.lt.s32.totalorder %s24, 0
          %s199 = scalar_select %p198, %s24, 0
          %s200 = smul.addr %s199, 4
          %s201 = scalar_lea.vmem %s3, %s200
        $region24: #{tpu_custom_call.1} parent=11 // pred_fallthru
          _
        // Predicated region
        $region25: #{tpu_custom_call.1} parent=11 // pred_check
          %p202 = pneg %p146
        $region26: #{tpu_custom_call.1} parent=11 // pred_check_branch
          %204 = sbr.rel (%p202) target = $region28
        $region27: #{tpu_custom_call.1} parent=11 // pred_region
          %p205 = scmp.lt.s32.totalorder %s24, 0
          %s206 = scalar_select %p205, %s24, 0
          %s207 = scalar_lea.vmem %s4, %s206
        $region28: #{tpu_custom_call.1} parent=11 // pred_fallthru
          _
      $region12: #{tpu_custom_call.1} parent=5 // pred_fallthru
        _
      %p208 = scmp.lt.s32.totalorder %s14, 2
      // Predicated region
      $region29: #{tpu_custom_call.1} parent=5 // pred_check
        %p209 = pneg %p208
      $region30: #{tpu_custom_call.1} parent=5 // pred_check_branch
        %211 = sbr.rel (%p209) target = $region32
      $region31: #{tpu_custom_call.1} parent=5 // pred_region
        // Predicated region
        $region33: #{tpu_custom_call.1} parent=31 // pred_check
          %p212 = pneg %p46
        $region34: #{tpu_custom_call.1} parent=31 // pred_check_branch
          %214 = sbr.rel (%p212) target = $region36
        $region35: #{tpu_custom_call.1} parent=31 // pred_region
          %p215 = scmp.lt.s32.totalorder %s21, 1
          %s216 = scalar_select %p215, %s21, 1
          %s217 = smul.addr %s216, 32
          %s218 = smul.addr %s217, 4
          %s219 = scalar_lea.vmem %s0, %s218
        $region36: #{tpu_custom_call.1} parent=31 // pred_fallthru
          _
      $region32: #{tpu_custom_call.1} parent=5 // pred_fallthru
        _
      %p220 = scmp.le.s32.totalorder 1, %s14
      %p221 = scmp.lt.s32.totalorder %s14, 3
      %p222 = pnand %p220, %p221
      %p223 = pneg %p222
      // Predicated region
      $region37: #{tpu_custom_call.1} parent=5 // pred_check
        _
      $region38: #{tpu_custom_call.1} parent=5 // pred_check_branch
        %225 = sbr.rel (%p222) target = $region40
      $region39: #{tpu_custom_call.1} parent=5 // pred_region
        %s226 = ssub.s32 %s14, 1
        %p227 = scmp.lt.s32.totalorder %s23, 1
        %s228 = scalar_select %p227, %s23, 1
        %s229 = smul.addr %s228, 32
        %s230 = smul.addr %s229, 4
        %s231 = scalar_lea.vmem %s0, %s230
        %p232 = pneg %p52
        %p233 = pneg %p49
        %p234 = pneg %p73
        %p235 = pneg %p70
        %p236 = pneg %p94
        %p237 = pneg %p91
        %p238 = scmp.lt.s32.totalorder %s24, 0
        %s239 = scalar_select %p238, %s24, 0
        %s240 = smul.addr %s239, 4
        %s241 = scalar_lea.vmem %s3, %s240
        %p242 = pneg %p120
        %p243 = pneg %p117
        %p244 = scmp.lt.s32.totalorder %s24, 0
        %s245 = scalar_select %p244, %s24, 0
        %s246 = scalar_lea.vmem %s4, %s245
        %p247 = pneg %p146
        %p248 = pneg %p143
        %p249 = pneg %p174
        %p250 = pneg %p171
        %s251 = sand.u32 %s161, 1
        %s252 = scalar_lea.sflag [#allocation5], %s251
        %s253 = sand.u32 %s161, 1
        %s254 = smul.addr %s253, 256
        %s255 = scalar_lea.vmem [#allocation4], %s254
        %p256 = scmp.lt.s32.totalorder %s23, 1
        %s257 = scalar_select %p256, %s23, 1
        %s258 = smul.addr %s257, 32
        %s259 = smul.addr %s258, 4
        %s260 = scalar_lea.vmem %s0, %s259
        %p261 = scmp.lt.s32.totalorder %s24, 0
        %s262 = scalar_select %p261, %s24, 0
        %s263 = smul.addr %s262, 4
        %s264 = scalar_lea.vmem %s3, %s263
        %p265 = scmp.lt.s32.totalorder %s24, 0
        %s266 = scalar_select %p265, %s24, 0
        %s267 = scalar_lea.vmem %s4, %s266
        %p272 = scmp.eq.s32.totalorder %s24, 0
        // Predicated region
        $region41: #{tpu_custom_call.1} parent=39 // pred_check
          %p273 = pneg %p272
        $region42: #{tpu_custom_call.1} parent=39 // pred_check_branch
          %275 = sbr.rel (%p273) target = $region44
        $region43: #{tpu_custom_call.1} parent=39 // pred_region
          %v276 = vld [vmem:[%s260] sm:$0xf]
          %v277 = vld [vmem:[%s260 + $0x4] sm:$0xf]
          %v278 = vld [vmem:[%s260 + $0x8] sm:$0xf]
          %v279 = vld [vmem:[%s260 + $0xc] sm:$0xf]
          %v280 = vld [vmem:[%s260 + $0x10] sm:$0xf]
          %v281 = vld [vmem:[%s260 + $0x14] sm:$0xf]
          %v282 = vld [vmem:[%s260 + $0x18] sm:$0xf]
          %v283 = vld [vmem:[%s260 + $0x1c] sm:$0xf]
          %v284 = vld [vmem:[%s260 + $0x20] sm:$0xf]
          %v285 = vld [vmem:[%s260 + $0x24] sm:$0xf]
          %v286 = vld [vmem:[%s260 + $0x28] sm:$0xf]
          %v287 = vld [vmem:[%s260 + $0x2c] sm:$0xf]
          %v288 = vld [vmem:[%s260 + $0x30] sm:$0xf]
          %v289 = vld [vmem:[%s260 + $0x34] sm:$0xf]
          %v290 = vld [vmem:[%s260 + $0x38] sm:$0xf]
          %v291 = vld [vmem:[%s260 + $0x3c] sm:$0xf]
          %v292 = vld [vmem:[%s260 + $0x40] sm:$0xf]
          %v293 = vld [vmem:[%s260 + $0x44] sm:$0xf]
          %v294 = vld [vmem:[%s260 + $0x48] sm:$0xf]
          %v295 = vld [vmem:[%s260 + $0x4c] sm:$0xf]
          %v296 = vld [vmem:[%s260 + $0x50] sm:$0xf]
          %v297 = vld [vmem:[%s260 + $0x54] sm:$0xf]
          %v298 = vld [vmem:[%s260 + $0x58] sm:$0xf]
          %v299 = vld [vmem:[%s260 + $0x5c] sm:$0xf]
          %v300 = vld [vmem:[%s260 + $0x60] sm:$0xf]
          %v301 = vld [vmem:[%s260 + $0x64] sm:$0xf]
          %v302 = vld [vmem:[%s260 + $0x68] sm:$0xf]
          %v303 = vld [vmem:[%s260 + $0x6c] sm:$0xf]
          %v304 = vld [vmem:[%s260 + $0x70] sm:$0xf]
          %v305 = vld [vmem:[%s260 + $0x74] sm:$0xf]
          %v306 = vld [vmem:[%s260 + $0x78] sm:$0xf]
          %v307 = vld [vmem:[%s260 + $0x7c] sm:$0xf]
          %v308 = vld [vmem:[%s1] sm:$0xf]
          %v309 = vld [vmem:[%s2] sm:$0x1]
          %v311 = vperm.slane %v309, 0
          %v345 = vunpack.c.l.b16 %v276
          %v346 = vunpack.c.l.b16 %v277
          %v347 = vunpack.c.l.b16 %v278
          %v348 = vunpack.c.l.b16 %v279
          %v349 = vunpack.c.l.b16 %v280
          %v350 = vunpack.c.l.b16 %v281
          %v351 = vunpack.c.l.b16 %v282
          %v352 = vunpack.c.l.b16 %v283
          %v353 = vunpack.c.l.b16 %v284
          %v354 = vunpack.c.l.b16 %v285
          %v355 = vunpack.c.l.b16 %v286
          %v356 = vunpack.c.l.b16 %v287
          %v357 = vunpack.c.l.b16 %v288
          %v358 = vunpack.c.l.b16 %v289
          %v359 = vunpack.c.l.b16 %v290
          %v360 = vunpack.c.l.b16 %v291
          %v361 = vunpack.c.l.b16 %v292
          %v362 = vunpack.c.l.b16 %v293
          %v363 = vunpack.c.l.b16 %v294
          %v364 = vunpack.c.l.b16 %v295
          %v365 = vunpack.c.l.b16 %v296
          %v366 = vunpack.c.l.b16 %v297
          %v367 = vunpack.c.l.b16 %v298
          %v368 = vunpack.c.l.b16 %v299
          %v369 = vunpack.c.l.b16 %v300
          %v370 = vunpack.c.l.b16 %v301
          %v371 = vunpack.c.l.b16 %v302
          %v372 = vunpack.c.l.b16 %v303
          %v373 = vunpack.c.l.b16 %v304
          %v374 = vunpack.c.l.b16 %v305
          %v375 = vunpack.c.l.b16 %v306
          %v376 = vunpack.c.l.b16 %v307
          %v377 = vpack.c.b16 %v346, %v345
          %v378 = vpack.c.b16 %v348, %v347
          %v379 = vpack.c.b16 %v350, %v349
          %v380 = vpack.c.b16 %v352, %v351
          %v381 = vpack.c.b16 %v354, %v353
          %v382 = vpack.c.b16 %v356, %v355
          %v383 = vpack.c.b16 %v358, %v357
          %v384 = vpack.c.b16 %v360, %v359
          %v385 = vpack.c.b16 %v362, %v361
          %v386 = vpack.c.b16 %v364, %v363
          %v387 = vpack.c.b16 %v366, %v365
          %v388 = vpack.c.b16 %v368, %v367
          %v389 = vpack.c.b16 %v370, %v369
          %v390 = vpack.c.b16 %v372, %v371
          %v391 = vpack.c.b16 %v374, %v373
          %v392 = vpack.c.b16 %v376, %v375
          %vm393 = vcmask 64512
          %v395 = vsel %vm393, %v377, 0
          %v398 = vsel %vm393, %v378, 0
          %v401 = vsel %vm393, %v379, 0
          %v404 = vsel %vm393, %v380, 0
          %v407 = vsel %vm393, %v381, 0
          %v410 = vsel %vm393, %v382, 0
          %v413 = vsel %vm393, %v383, 0
          %v416 = vsel %vm393, %v384, 0
          %v419 = vsel %vm393, %v385, 0
          %v422 = vsel %vm393, %v386, 0
          %v425 = vsel %vm393, %v387, 0
          %v428 = vsel %vm393, %v388, 0
          %v431 = vsel %vm393, %v389, 0
          %v434 = vsel %vm393, %v390, 0
          %v437 = vsel %vm393, %v391, 0
          %v440 = vsel %vm393, %v392, 0
          %vm442 = vcmask 1043456
          %v444 = vsel %vm442, %v308, 0
          %446 = vmatpush.bf16.msra.mxu0 0
          %447 = vmatpush.bf16.msra.mxu0 0
          %448 = vmatpush.bf16.msra.mxu0 0
          %449 = vmatpush.bf16.msra.mxu0 0
          %450 = vmatpush.bf16.msra.mxu0 0
          %451 = vmatpush.bf16.msra.mxu0 0
          %452 = vmatpush.bf16.msra.mxu0 0
          %453 = vmatpush.bf16.msra.mxu0 %v444
          %454 = vmatmul.bf16.gmra.mxu0 %v395
          %v455 = vpop.f32.mrf.mxu0
          %v456 = vadd.f32 %v311, %v455
          %v457 = vpop.f32.mrf.mxu0
          %v458 = vadd.f32 %v311, %v457
          %459 = vmatmul.bf16.gmra.mxu0 %v398
          %v460 = vpop.f32.mrf.mxu0
          %v461 = vadd.f32 %v311, %v460
          %v462 = vpop.f32.mrf.mxu0
          %v463 = vadd.f32 %v311, %v462
          %464 = vmatmul.bf16.gmra.mxu0 %v401
          %v465 = vpop.f32.mrf.mxu0
          %v466 = vadd.f32 %v311, %v465
          %v467 = vpop.f32.mrf.mxu0
          %v468 = vadd.f32 %v311, %v467
          %469 = vmatmul.bf16.gmra.mxu0 %v404
          %v470 = vpop.f32.mrf.mxu0
          %v471 = vadd.f32 %v311, %v470
          %v472 = vpop.f32.mrf.mxu0
          %v473 = vadd.f32 %v311, %v472
          %474 = vmatmul.bf16.gmra.mxu0 %v407
          %v475 = vpop.f32.mrf.mxu0
          %v476 = vadd.f32 %v311, %v475
          %v477 = vpop.f32.mrf.mxu0
          %v478 = vadd.f32 %v311, %v477
          %479 = vmatmul.bf16.gmra.mxu0 %v410
          %v480 = vpop.f32.mrf.mxu0
          %v481 = vadd.f32 %v311, %v480
          %v482 = vpop.f32.mrf.mxu0
          %v483 = vadd.f32 %v311, %v482
          %484 = vmatmul.bf16.gmra.mxu0 %v413
          %v485 = vpop.f32.mrf.mxu0
          %v486 = vadd.f32 %v311, %v485
          %v487 = vpop.f32.mrf.mxu0
          %v488 = vadd.f32 %v311, %v487
          %489 = vmatmul.bf16.gmra.mxu0 %v416
          %v490 = vpop.f32.mrf.mxu0
          %v491 = vadd.f32 %v311, %v490
          %v492 = vpop.f32.mrf.mxu0
          %v493 = vadd.f32 %v311, %v492
          %494 = vmatmul.bf16.gmra.mxu0 %v419
          %v495 = vpop.f32.mrf.mxu0
          %v496 = vadd.f32 %v311, %v495
          %v497 = vpop.f32.mrf.mxu0
          %v498 = vadd.f32 %v311, %v497
          %499 = vmatmul.bf16.gmra.mxu0 %v422
          %v500 = vpop.f32.mrf.mxu0
          %v501 = vadd.f32 %v311, %v500
          %v502 = vpop.f32.mrf.mxu0
          %v503 = vadd.f32 %v311, %v502
          %504 = vmatmul.bf16.gmra.mxu0 %v425
          %v505 = vpop.f32.mrf.mxu0
          %v506 = vadd.f32 %v311, %v505
          %v507 = vpop.f32.mrf.mxu0
          %v508 = vadd.f32 %v311, %v507
          %509 = vmatmul.bf16.gmra.mxu0 %v428
          %v510 = vpop.f32.mrf.mxu0
          %v511 = vadd.f32 %v311, %v510
          %v512 = vpop.f32.mrf.mxu0
          %v513 = vadd.f32 %v311, %v512
          %514 = vmatmul.bf16.gmra.mxu0 %v431
          %v515 = vpop.f32.mrf.mxu0
          %v516 = vadd.f32 %v311, %v515
          %v517 = vpop.f32.mrf.mxu0
          %v518 = vadd.f32 %v311, %v517
          %519 = vmatmul.bf16.gmra.mxu0 %v434
          %v520 = vpop.f32.mrf.mxu0
          %v521 = vadd.f32 %v311, %v520
          %v522 = vpop.f32.mrf.mxu0
          %v523 = vadd.f32 %v311, %v522
          %524 = vmatmul.bf16.gmra.mxu0 %v437
          %v525 = vpop.f32.mrf.mxu0
          %v526 = vadd.f32 %v311, %v525
          %v527 = vpop.f32.mrf.mxu0
          %v528 = vadd.f32 %v311, %v527
          %529 = vmatmul.bf16.gmra.mxu0 %v440
          %v530 = vpop.f32.mrf.mxu0
          %v531 = vadd.f32 %v311, %v530
          %v532 = vpop.f32.mrf.mxu0
          %v533 = vadd.f32 %v311, %v532
          %534 = vdwg.mxu0
          %v535 = vxor.u32 %v456, 2147483648
          %v536 = vxor.u32 %v458, 2147483648
          %v537 = vxor.u32 %v461, 2147483648
          %v538 = vxor.u32 %v463, 2147483648
          %v539 = vxor.u32 %v466, 2147483648
          %v540 = vxor.u32 %v468, 2147483648
          %v541 = vxor.u32 %v471, 2147483648
          %v542 = vxor.u32 %v473, 2147483648
          %v543 = vxor.u32 %v476, 2147483648
          %v544 = vxor.u32 %v478, 2147483648
          %v545 = vxor.u32 %v481, 2147483648
          %v546 = vxor.u32 %v483, 2147483648
          %v547 = vxor.u32 %v486, 2147483648
          %v548 = vxor.u32 %v488, 2147483648
          %v549 = vxor.u32 %v491, 2147483648
          %v550 = vxor.u32 %v493, 2147483648
          %v551 = vxor.u32 %v496, 2147483648
          %v552 = vxor.u32 %v498, 2147483648
          %v553 = vxor.u32 %v501, 2147483648
          %v554 = vxor.u32 %v503, 2147483648
          %v555 = vxor.u32 %v506, 2147483648
          %v556 = vxor.u32 %v508, 2147483648
          %v557 = vxor.u32 %v511, 2147483648
          %v558 = vxor.u32 %v513, 2147483648
          %v559 = vxor.u32 %v516, 2147483648
          %v560 = vxor.u32 %v518, 2147483648
          %v561 = vxor.u32 %v521, 2147483648
          %v562 = vxor.u32 %v523, 2147483648
          %v563 = vxor.u32 %v526, 2147483648
          %v564 = vxor.u32 %v528, 2147483648
          %v565 = vxor.u32 %v531, 2147483648
          %v566 = vxor.u32 %v533, 2147483648
          %v567 = vmul.f32 %v535, 1.442695
          %v568 = vpow.pop %v567
          %v569 = vmul.f32 %v536, 1.442695
          %v570 = vpow.pop %v569
          %v571 = vmul.f32 %v537, 1.442695
          %v572 = vpow.pop %v571
          %v573 = vmul.f32 %v538, 1.442695
          %v574 = vpow.pop %v573
          %v575 = vmul.f32 %v539, 1.442695
          %v576 = vpow.pop %v575
          %v577 = vmul.f32 %v540, 1.442695
          %v578 = vpow.pop %v577
          %v579 = vmul.f32 %v541, 1.442695
          %v580 = vpow.pop %v579
          %v581 = vmul.f32 %v542, 1.442695
          %v582 = vpow.pop %v581
          %v583 = vmul.f32 %v543, 1.442695
          %v584 = vpow.pop %v583
          %v585 = vmul.f32 %v544, 1.442695
          %v586 = vpow.pop %v585
          %v587 = vmul.f32 %v545, 1.442695
          %v588 = vpow.pop %v587
          %v589 = vmul.f32 %v546, 1.442695
          %v590 = vpow.pop %v589
          %v591 = vmul.f32 %v547, 1.442695
          %v592 = vpow.pop %v591
          %v593 = vmul.f32 %v548, 1.442695
          %v594 = vpow.pop %v593
          %v595 = vmul.f32 %v549, 1.442695
          %v596 = vpow.pop %v595
          %v597 = vmul.f32 %v550, 1.442695
          %v598 = vpow.pop %v597
          %v599 = vmul.f32 %v551, 1.442695
          %v600 = vpow.pop %v599
          %v601 = vmul.f32 %v552, 1.442695
          %v602 = vpow.pop %v601
          %v603 = vmul.f32 %v553, 1.442695
          %v604 = vpow.pop %v603
          %v605 = vmul.f32 %v554, 1.442695
          %v606 = vpow.pop %v605
          %v607 = vmul.f32 %v555, 1.442695
          %v608 = vpow.pop %v607
          %v609 = vmul.f32 %v556, 1.442695
          %v610 = vpow.pop %v609
          %v611 = vmul.f32 %v557, 1.442695
          %v612 = vpow.pop %v611
          %v613 = vmul.f32 %v558, 1.442695
          %v614 = vpow.pop %v613
          %v615 = vmul.f32 %v559, 1.442695
          %v616 = vpow.pop %v615
          %v617 = vmul.f32 %v560, 1.442695
          %v618 = vpow.pop %v617
          %v619 = vmul.f32 %v561, 1.442695
          %v620 = vpow.pop %v619
          %v621 = vmul.f32 %v562, 1.442695
          %v622 = vpow.pop %v621
          %v623 = vmul.f32 %v563, 1.442695
          %v624 = vpow.pop %v623
          %v625 = vmul.f32 %v564, 1.442695
          %v626 = vpow.pop %v625
          %v627 = vmul.f32 %v565, 1.442695
          %v628 = vpow.pop %v627
          %v629 = vmul.f32 %v566, 1.442695
          %v630 = vpow.pop %v629
          %v631 = vadd.f32 %v568, 1.0
          %v632 = vadd.f32 %v570, 1.0
          %v633 = vadd.f32 %v572, 1.0
          %v634 = vadd.f32 %v574, 1.0
          %v635 = vadd.f32 %v576, 1.0
          %v636 = vadd.f32 %v578, 1.0
          %v637 = vadd.f32 %v580, 1.0
          %v638 = vadd.f32 %v582, 1.0
          %v639 = vadd.f32 %v584, 1.0
          %v640 = vadd.f32 %v586, 1.0
          %v641 = vadd.f32 %v588, 1.0
          %v642 = vadd.f32 %v590, 1.0
          %v643 = vadd.f32 %v592, 1.0
          %v644 = vadd.f32 %v594, 1.0
          %v645 = vadd.f32 %v596, 1.0
          %v646 = vadd.f32 %v598, 1.0
          %v647 = vadd.f32 %v600, 1.0
          %v648 = vadd.f32 %v602, 1.0
          %v649 = vadd.f32 %v604, 1.0
          %v650 = vadd.f32 %v606, 1.0
          %v651 = vadd.f32 %v608, 1.0
          %v652 = vadd.f32 %v610, 1.0
          %v653 = vadd.f32 %v612, 1.0
          %v654 = vadd.f32 %v614, 1.0
          %v655 = vadd.f32 %v616, 1.0
          %v656 = vadd.f32 %v618, 1.0
          %v657 = vadd.f32 %v620, 1.0
          %v658 = vadd.f32 %v622, 1.0
          %v659 = vadd.f32 %v624, 1.0
          %v660 = vadd.f32 %v626, 1.0
          %v661 = vadd.f32 %v628, 1.0
          %v662 = vadd.f32 %v630, 1.0
          %v663 = vrcp.pop %v631
          %v664 = vmul.f32 %v631, %v663
          %v665 = vsub.f32 1.0, %v664
          %v666 = vmul.f32 %v663, %v665
          %v667 = vadd.f32 %v663, %v666
          %vm668 = vweird.f32 %v631
          %vm669 = vweird.f32 %v663
          %vm670 = vmor %vm668, %vm669
          %v671 = vsel %vm670, %v663, %v667
          %v672 = vand.u32 2147483647, %v631
          %vm673 = vcmp.eq.f32.partialorder %v672, 8.507059e+37
          %v674 = vand.u32 %v631, 2147483648
          %v675 = vor.u32 1.1754944e-38, %v674
          %v676 = vsel %vm673, %v675, %v671
          %v677 = vmul.f32 1.0, %v676
          %v678 = vrcp.pop %v632
          %v679 = vmul.f32 %v632, %v678
          %v680 = vsub.f32 1.0, %v679
          %v681 = vmul.f32 %v678, %v680
          %v682 = vadd.f32 %v678, %v681
          %vm683 = vweird.f32 %v632
          %vm684 = vweird.f32 %v678
          %vm685 = vmor %vm683, %vm684
          %v686 = vsel %vm685, %v678, %v682
          %v687 = vand.u32 2147483647, %v632
          %vm688 = vcmp.eq.f32.partialorder %v687, 8.507059e+37
          %v689 = vand.u32 %v632, 2147483648
          %v690 = vor.u32 1.1754944e-38, %v689
          %v691 = vsel %vm688, %v690, %v686
          %v692 = vmul.f32 1.0, %v691
          %v693 = vrcp.pop %v633
          %v694 = vmul.f32 %v633, %v693
          %v695 = vsub.f32 1.0, %v694
          %v696 = vmul.f32 %v693, %v695
          %v697 = vadd.f32 %v693, %v696
          %vm698 = vweird.f32 %v633
          %vm699 = vweird.f32 %v693
          %vm700 = vmor %vm698, %vm699
          %v701 = vsel %vm700, %v693, %v697
          %v702 = vand.u32 2147483647, %v633
          %vm703 = vcmp.eq.f32.partialorder %v702, 8.507059e+37
          %v704 = vand.u32 %v633, 2147483648
          %v705 = vor.u32 1.1754944e-38, %v704
          %v706 = vsel %vm703, %v705, %v701
          %v707 = vmul.f32 1.0, %v706
          %v708 = vrcp.pop %v634
          %v709 = vmul.f32 %v634, %v708
          %v710 = vsub.f32 1.0, %v709
          %v711 = vmul.f32 %v708, %v710
          %v712 = vadd.f32 %v708, %v711
          %vm713 = vweird.f32 %v634
          %vm714 = vweird.f32 %v708
          %vm715 = vmor %vm713, %vm714
          %v716 = vsel %vm715, %v708, %v712
          %v717 = vand.u32 2147483647, %v634
          %vm718 = vcmp.eq.f32.partialorder %v717, 8.507059e+37
          %v719 = vand.u32 %v634, 2147483648
          %v720 = vor.u32 1.1754944e-38, %v719
          %v721 = vsel %vm718, %v720, %v716
          %v722 = vmul.f32 1.0, %v721
          %v723 = vrcp.pop %v635
          %v724 = vmul.f32 %v635, %v723
          %v725 = vsub.f32 1.0, %v724
          %v726 = vmul.f32 %v723, %v725
          %v727 = vadd.f32 %v723, %v726
          %vm728 = vweird.f32 %v635
          %vm729 = vweird.f32 %v723
          %vm730 = vmor %vm728, %vm729
          %v731 = vsel %vm730, %v723, %v727
          %v732 = vand.u32 2147483647, %v635
          %vm733 = vcmp.eq.f32.partialorder %v732, 8.507059e+37
          %v734 = vand.u32 %v635, 2147483648
          %v735 = vor.u32 1.1754944e-38, %v734
          %v736 = vsel %vm733, %v735, %v731
          %v737 = vmul.f32 1.0, %v736
          %v738 = vrcp.pop %v636
          %v739 = vmul.f32 %v636, %v738
          %v740 = vsub.f32 1.0, %v739
          %v741 = vmul.f32 %v738, %v740
          %v742 = vadd.f32 %v738, %v741
          %vm743 = vweird.f32 %v636
          %vm744 = vweird.f32 %v738
          %vm745 = vmor %vm743, %vm744
          %v746 = vsel %vm745, %v738, %v742
          %v747 = vand.u32 2147483647, %v636
          %vm748 = vcmp.eq.f32.partialorder %v747, 8.507059e+37
          %v749 = vand.u32 %v636, 2147483648
          %v750 = vor.u32 1.1754944e-38, %v749
          %v751 = vsel %vm748, %v750, %v746
          %v752 = vmul.f32 1.0, %v751
          %v753 = vrcp.pop %v637
          %v754 = vmul.f32 %v637, %v753
          %v755 = vsub.f32 1.0, %v754
          %v756 = vmul.f32 %v753, %v755
          %v757 = vadd.f32 %v753, %v756
          %vm758 = vweird.f32 %v637
          %vm759 = vweird.f32 %v753
          %vm760 = vmor %vm758, %vm759
          %v761 = vsel %vm760, %v753, %v757
          %v762 = vand.u32 2147483647, %v637
          %vm763 = vcmp.eq.f32.partialorder %v762, 8.507059e+37
          %v764 = vand.u32 %v637, 2147483648
          %v765 = vor.u32 1.1754944e-38, %v764
          %v766 = vsel %vm763, %v765, %v761
          %v767 = vmul.f32 1.0, %v766
          %v768 = vrcp.pop %v638
          %v769 = vmul.f32 %v638, %v768
          %v770 = vsub.f32 1.0, %v769
          %v771 = vmul.f32 %v768, %v770
          %v772 = vadd.f32 %v768, %v771
          %vm773 = vweird.f32 %v638
          %vm774 = vweird.f32 %v768
          %vm775 = vmor %vm773, %vm774
          %v776 = vsel %vm775, %v768, %v772
          %v777 = vand.u32 2147483647, %v638
          %vm778 = vcmp.eq.f32.partialorder %v777, 8.507059e+37
          %v779 = vand.u32 %v638, 2147483648
          %v780 = vor.u32 1.1754944e-38, %v779
          %v781 = vsel %vm778, %v780, %v776
          %v782 = vmul.f32 1.0, %v781
          %v783 = vrcp.pop %v639
          %v784 = vmul.f32 %v639, %v783
          %v785 = vsub.f32 1.0, %v784
          %v786 = vmul.f32 %v783, %v785
          %v787 = vadd.f32 %v783, %v786
          %vm788 = vweird.f32 %v639
          %vm789 = vweird.f32 %v783
          %vm790 = vmor %vm788, %vm789
          %v791 = vsel %vm790, %v783, %v787
          %v792 = vand.u32 2147483647, %v639
          %vm793 = vcmp.eq.f32.partialorder %v792, 8.507059e+37
          %v794 = vand.u32 %v639, 2147483648
          %v795 = vor.u32 1.1754944e-38, %v794
          %v796 = vsel %vm793, %v795, %v791
          %v797 = vmul.f32 1.0, %v796
          %v798 = vrcp.pop %v640
          %v799 = vmul.f32 %v640, %v798
          %v800 = vsub.f32 1.0, %v799
          %v801 = vmul.f32 %v798, %v800
          %v802 = vadd.f32 %v798, %v801
          %vm803 = vweird.f32 %v640
          %vm804 = vweird.f32 %v798
          %vm805 = vmor %vm803, %vm804
          %v806 = vsel %vm805, %v798, %v802
          %v807 = vand.u32 2147483647, %v640
          %vm808 = vcmp.eq.f32.partialorder %v807, 8.507059e+37
          %v809 = vand.u32 %v640, 2147483648
          %v810 = vor.u32 1.1754944e-38, %v809
          %v811 = vsel %vm808, %v810, %v806
          %v812 = vmul.f32 1.0, %v811
          %v813 = vrcp.pop %v641
          %v814 = vmul.f32 %v641, %v813
          %v815 = vsub.f32 1.0, %v814
          %v816 = vmul.f32 %v813, %v815
          %v817 = vadd.f32 %v813, %v816
          %vm818 = vweird.f32 %v641
          %vm819 = vweird.f32 %v813
          %vm820 = vmor %vm818, %vm819
          %v821 = vsel %vm820, %v813, %v817
          %v822 = vand.u32 2147483647, %v641
          %vm823 = vcmp.eq.f32.partialorder %v822, 8.507059e+37
          %v824 = vand.u32 %v641, 2147483648
          %v825 = vor.u32 1.1754944e-38, %v824
          %v826 = vsel %vm823, %v825, %v821
          %v827 = vmul.f32 1.0, %v826
          %v828 = vrcp.pop %v642
          %v829 = vmul.f32 %v642, %v828
          %v830 = vsub.f32 1.0, %v829
          %v831 = vmul.f32 %v828, %v830
          %v832 = vadd.f32 %v828, %v831
          %vm833 = vweird.f32 %v642
          %vm834 = vweird.f32 %v828
          %vm835 = vmor %vm833, %vm834
          %v836 = vsel %vm835, %v828, %v832
          %v837 = vand.u32 2147483647, %v642
          %vm838 = vcmp.eq.f32.partialorder %v837, 8.507059e+37
          %v839 = vand.u32 %v642, 2147483648
          %v840 = vor.u32 1.1754944e-38, %v839
          %v841 = vsel %vm838, %v840, %v836
          %v842 = vmul.f32 1.0, %v841
          %v843 = vrcp.pop %v643
          %v844 = vmul.f32 %v643, %v843
          %v845 = vsub.f32 1.0, %v844
          %v846 = vmul.f32 %v843, %v845
          %v847 = vadd.f32 %v843, %v846
          %vm848 = vweird.f32 %v643
          %vm849 = vweird.f32 %v843
          %vm850 = vmor %vm848, %vm849
          %v851 = vsel %vm850, %v843, %v847
          %v852 = vand.u32 2147483647, %v643
          %vm853 = vcmp.eq.f32.partialorder %v852, 8.507059e+37
          %v854 = vand.u32 %v643, 2147483648
          %v855 = vor.u32 1.1754944e-38, %v854
          %v856 = vsel %vm853, %v855, %v851
          %v857 = vmul.f32 1.0, %v856
          %v858 = vrcp.pop %v644
          %v859 = vmul.f32 %v644, %v858
          %v860 = vsub.f32 1.0, %v859
          %v861 = vmul.f32 %v858, %v860
          %v862 = vadd.f32 %v858, %v861
          %vm863 = vweird.f32 %v644
          %vm864 = vweird.f32 %v858
          %vm865 = vmor %vm863, %vm864
          %v866 = vsel %vm865, %v858, %v862
          %v867 = vand.u32 2147483647, %v644
          %vm868 = vcmp.eq.f32.partialorder %v867, 8.507059e+37
          %v869 = vand.u32 %v644, 2147483648
          %v870 = vor.u32 1.1754944e-38, %v869
          %v871 = vsel %vm868, %v870, %v866
          %v872 = vmul.f32 1.0, %v871
          %v873 = vrcp.pop %v645
          %v874 = vmul.f32 %v645, %v873
          %v875 = vsub.f32 1.0, %v874
          %v876 = vmul.f32 %v873, %v875
          %v877 = vadd.f32 %v873, %v876
          %vm878 = vweird.f32 %v645
          %vm879 = vweird.f32 %v873
          %vm880 = vmor %vm878, %vm879
          %v881 = vsel %vm880, %v873, %v877
          %v882 = vand.u32 2147483647, %v645
          %vm883 = vcmp.eq.f32.partialorder %v882, 8.507059e+37
          %v884 = vand.u32 %v645, 2147483648
          %v885 = vor.u32 1.1754944e-38, %v884
          %v886 = vsel %vm883, %v885, %v881
          %v887 = vmul.f32 1.0, %v886
          %v888 = vrcp.pop %v646
          %v889 = vmul.f32 %v646, %v888
          %v890 = vsub.f32 1.0, %v889
          %v891 = vmul.f32 %v888, %v890
          %v892 = vadd.f32 %v888, %v891
          %vm893 = vweird.f32 %v646
          %vm894 = vweird.f32 %v888
          %vm895 = vmor %vm893, %vm894
          %v896 = vsel %vm895, %v888, %v892
          %v897 = vand.u32 2147483647, %v646
          %vm898 = vcmp.eq.f32.partialorder %v897, 8.507059e+37
          %v899 = vand.u32 %v646, 2147483648
          %v900 = vor.u32 1.1754944e-38, %v899
          %v901 = vsel %vm898, %v900, %v896
          %v902 = vmul.f32 1.0, %v901
          %v903 = vrcp.pop %v647
          %v904 = vmul.f32 %v647, %v903
          %v905 = vsub.f32 1.0, %v904
          %v906 = vmul.f32 %v903, %v905
          %v907 = vadd.f32 %v903, %v906
          %vm908 = vweird.f32 %v647
          %vm909 = vweird.f32 %v903
          %vm910 = vmor %vm908, %vm909
          %v911 = vsel %vm910, %v903, %v907
          %v912 = vand.u32 2147483647, %v647
          %vm913 = vcmp.eq.f32.partialorder %v912, 8.507059e+37
          %v914 = vand.u32 %v647, 2147483648
          %v915 = vor.u32 1.1754944e-38, %v914
          %v916 = vsel %vm913, %v915, %v911
          %v917 = vmul.f32 1.0, %v916
          %v918 = vrcp.pop %v648
          %v919 = vmul.f32 %v648, %v918
          %v920 = vsub.f32 1.0, %v919
          %v921 = vmul.f32 %v918, %v920
          %v922 = vadd.f32 %v918, %v921
          %vm923 = vweird.f32 %v648
          %vm924 = vweird.f32 %v918
          %vm925 = vmor %vm923, %vm924
          %v926 = vsel %vm925, %v918, %v922
          %v927 = vand.u32 2147483647, %v648
          %vm928 = vcmp.eq.f32.partialorder %v927, 8.507059e+37
          %v929 = vand.u32 %v648, 2147483648
          %v930 = vor.u32 1.1754944e-38, %v929
          %v931 = vsel %vm928, %v930, %v926
          %v932 = vmul.f32 1.0, %v931
          %v933 = vrcp.pop %v649
          %v934 = vmul.f32 %v649, %v933
          %v935 = vsub.f32 1.0, %v934
          %v936 = vmul.f32 %v933, %v935
          %v937 = vadd.f32 %v933, %v936
          %vm938 = vweird.f32 %v649
          %vm939 = vweird.f32 %v933
          %vm940 = vmor %vm938, %vm939
          %v941 = vsel %vm940, %v933, %v937
          %v942 = vand.u32 2147483647, %v649
          %vm943 = vcmp.eq.f32.partialorder %v942, 8.507059e+37
          %v944 = vand.u32 %v649, 2147483648
          %v945 = vor.u32 1.1754944e-38, %v944
          %v946 = vsel %vm943, %v945, %v941
          %v947 = vmul.f32 1.0, %v946
          %v948 = vrcp.pop %v650
          %v949 = vmul.f32 %v650, %v948
          %v950 = vsub.f32 1.0, %v949
          %v951 = vmul.f32 %v948, %v950
          %v952 = vadd.f32 %v948, %v951
          %vm953 = vweird.f32 %v650
          %vm954 = vweird.f32 %v948
          %vm955 = vmor %vm953, %vm954
          %v956 = vsel %vm955, %v948, %v952
          %v957 = vand.u32 2147483647, %v650
          %vm958 = vcmp.eq.f32.partialorder %v957, 8.507059e+37
          %v959 = vand.u32 %v650, 2147483648
          %v960 = vor.u32 1.1754944e-38, %v959
          %v961 = vsel %vm958, %v960, %v956
          %v962 = vmul.f32 1.0, %v961
          %v963 = vrcp.pop %v651
          %v964 = vmul.f32 %v651, %v963
          %v965 = vsub.f32 1.0, %v964
          %v966 = vmul.f32 %v963, %v965
          %v967 = vadd.f32 %v963, %v966
          %vm968 = vweird.f32 %v651
          %vm969 = vweird.f32 %v963
          %vm970 = vmor %vm968, %vm969
          %v971 = vsel %vm970, %v963, %v967
          %v972 = vand.u32 2147483647, %v651
          %vm973 = vcmp.eq.f32.partialorder %v972, 8.507059e+37
          %v974 = vand.u32 %v651, 2147483648
          %v975 = vor.u32 1.1754944e-38, %v974
          %v976 = vsel %vm973, %v975, %v971
          %v977 = vmul.f32 1.0, %v976
          %v978 = vrcp.pop %v652
          %v979 = vmul.f32 %v652, %v978
          %v980 = vsub.f32 1.0, %v979
          %v981 = vmul.f32 %v978, %v980
          %v982 = vadd.f32 %v978, %v981
          %vm983 = vweird.f32 %v652
          %vm984 = vweird.f32 %v978
          %vm985 = vmor %vm983, %vm984
          %v986 = vsel %vm985, %v978, %v982
          %v987 = vand.u32 2147483647, %v652
          %vm988 = vcmp.eq.f32.partialorder %v987, 8.507059e+37
          %v989 = vand.u32 %v652, 2147483648
          %v990 = vor.u32 1.1754944e-38, %v989
          %v991 = vsel %vm988, %v990, %v986
          %v992 = vmul.f32 1.0, %v991
          %v993 = vrcp.pop %v653
          %v994 = vmul.f32 %v653, %v993
          %v995 = vsub.f32 1.0, %v994
          %v996 = vmul.f32 %v993, %v995
          %v997 = vadd.f32 %v993, %v996
          %vm998 = vweird.f32 %v653
          %vm999 = vweird.f32 %v993
          %vm1000 = vmor %vm998, %vm999
          %v1001 = vsel %vm1000, %v993, %v997
          %v1002 = vand.u32 2147483647, %v653
          %vm1003 = vcmp.eq.f32.partialorder %v1002, 8.507059e+37
          %v1004 = vand.u32 %v653, 2147483648
          %v1005 = vor.u32 1.1754944e-38, %v1004
          %v1006 = vsel %vm1003, %v1005, %v1001
          %v1007 = vmul.f32 1.0, %v1006
          %v1008 = vrcp.pop %v654
          %v1009 = vmul.f32 %v654, %v1008
          %v1010 = vsub.f32 1.0, %v1009
          %v1011 = vmul.f32 %v1008, %v1010
          %v1012 = vadd.f32 %v1008, %v1011
          %vm1013 = vweird.f32 %v654
          %vm1014 = vweird.f32 %v1008
          %vm1015 = vmor %vm1013, %vm1014
          %v1016 = vsel %vm1015, %v1008, %v1012
          %v1017 = vand.u32 2147483647, %v654
          %vm1018 = vcmp.eq.f32.partialorder %v1017, 8.507059e+37
          %v1019 = vand.u32 %v654, 2147483648
          %v1020 = vor.u32 1.1754944e-38, %v1019
          %v1021 = vsel %vm1018, %v1020, %v1016
          %v1022 = vmul.f32 1.0, %v1021
          %v1023 = vrcp.pop %v655
          %v1024 = vmul.f32 %v655, %v1023
          %v1025 = vsub.f32 1.0, %v1024
          %v1026 = vmul.f32 %v1023, %v1025
          %v1027 = vadd.f32 %v1023, %v1026
          %vm1028 = vweird.f32 %v655
          %vm1029 = vweird.f32 %v1023
          %vm1030 = vmor %vm1028, %vm1029
          %v1031 = vsel %vm1030, %v1023, %v1027
          %v1032 = vand.u32 2147483647, %v655
          %vm1033 = vcmp.eq.f32.partialorder %v1032, 8.507059e+37
          %v1034 = vand.u32 %v655, 2147483648
          %v1035 = vor.u32 1.1754944e-38, %v1034
          %v1036 = vsel %vm1033, %v1035, %v1031
          %v1037 = vmul.f32 1.0, %v1036
          %v1038 = vrcp.pop %v656
          %v1039 = vmul.f32 %v656, %v1038
          %v1040 = vsub.f32 1.0, %v1039
          %v1041 = vmul.f32 %v1038, %v1040
          %v1042 = vadd.f32 %v1038, %v1041
          %vm1043 = vweird.f32 %v656
          %vm1044 = vweird.f32 %v1038
          %vm1045 = vmor %vm1043, %vm1044
          %v1046 = vsel %vm1045, %v1038, %v1042
          %v1047 = vand.u32 2147483647, %v656
          %vm1048 = vcmp.eq.f32.partialorder %v1047, 8.507059e+37
          %v1049 = vand.u32 %v656, 2147483648
          %v1050 = vor.u32 1.1754944e-38, %v1049
          %v1051 = vsel %vm1048, %v1050, %v1046
          %v1052 = vmul.f32 1.0, %v1051
          %v1053 = vrcp.pop %v657
          %v1054 = vmul.f32 %v657, %v1053
          %v1055 = vsub.f32 1.0, %v1054
          %v1056 = vmul.f32 %v1053, %v1055
          %v1057 = vadd.f32 %v1053, %v1056
          %vm1058 = vweird.f32 %v657
          %vm1059 = vweird.f32 %v1053
          %vm1060 = vmor %vm1058, %vm1059
          %v1061 = vsel %vm1060, %v1053, %v1057
          %v1062 = vand.u32 2147483647, %v657
          %vm1063 = vcmp.eq.f32.partialorder %v1062, 8.507059e+37
          %v1064 = vand.u32 %v657, 2147483648
          %v1065 = vor.u32 1.1754944e-38, %v1064
          %v1066 = vsel %vm1063, %v1065, %v1061
          %v1067 = vmul.f32 1.0, %v1066
          %v1068 = vrcp.pop %v658
          %v1069 = vmul.f32 %v658, %v1068
          %v1070 = vsub.f32 1.0, %v1069
          %v1071 = vmul.f32 %v1068, %v1070
          %v1072 = vadd.f32 %v1068, %v1071
          %vm1073 = vweird.f32 %v658
          %vm1074 = vweird.f32 %v1068
          %vm1075 = vmor %vm1073, %vm1074
          %v1076 = vsel %vm1075, %v1068, %v1072
          %v1077 = vand.u32 2147483647, %v658
          %vm1078 = vcmp.eq.f32.partialorder %v1077, 8.507059e+37
          %v1079 = vand.u32 %v658, 2147483648
          %v1080 = vor.u32 1.1754944e-38, %v1079
          %v1081 = vsel %vm1078, %v1080, %v1076
          %v1082 = vmul.f32 1.0, %v1081
          %v1083 = vrcp.pop %v659
          %v1084 = vmul.f32 %v659, %v1083
          %v1085 = vsub.f32 1.0, %v1084
          %v1086 = vmul.f32 %v1083, %v1085
          %v1087 = vadd.f32 %v1083, %v1086
          %vm1088 = vweird.f32 %v659
          %vm1089 = vweird.f32 %v1083
          %vm1090 = vmor %vm1088, %vm1089
          %v1091 = vsel %vm1090, %v1083, %v1087
          %v1092 = vand.u32 2147483647, %v659
          %vm1093 = vcmp.eq.f32.partialorder %v1092, 8.507059e+37
          %v1094 = vand.u32 %v659, 2147483648
          %v1095 = vor.u32 1.1754944e-38, %v1094
          %v1096 = vsel %vm1093, %v1095, %v1091
          %v1097 = vmul.f32 1.0, %v1096
          %v1098 = vrcp.pop %v660
          %v1099 = vmul.f32 %v660, %v1098
          %v1100 = vsub.f32 1.0, %v1099
          %v1101 = vmul.f32 %v1098, %v1100
          %v1102 = vadd.f32 %v1098, %v1101
          %vm1103 = vweird.f32 %v660
          %vm1104 = vweird.f32 %v1098
          %vm1105 = vmor %vm1103, %vm1104
          %v1106 = vsel %vm1105, %v1098, %v1102
          %v1107 = vand.u32 2147483647, %v660
          %vm1108 = vcmp.eq.f32.partialorder %v1107, 8.507059e+37
          %v1109 = vand.u32 %v660, 2147483648
          %v1110 = vor.u32 1.1754944e-38, %v1109
          %v1111 = vsel %vm1108, %v1110, %v1106
          %v1112 = vmul.f32 1.0, %v1111
          %v1113 = vrcp.pop %v661
          %v1114 = vmul.f32 %v661, %v1113
          %v1115 = vsub.f32 1.0, %v1114
          %v1116 = vmul.f32 %v1113, %v1115
          %v1117 = vadd.f32 %v1113, %v1116
          %vm1118 = vweird.f32 %v661
          %vm1119 = vweird.f32 %v1113
          %vm1120 = vmor %vm1118, %vm1119
          %v1121 = vsel %vm1120, %v1113, %v1117
          %v1122 = vand.u32 2147483647, %v661
          %vm1123 = vcmp.eq.f32.partialorder %v1122, 8.507059e+37
          %v1124 = vand.u32 %v661, 2147483648
          %v1125 = vor.u32 1.1754944e-38, %v1124
          %v1126 = vsel %vm1123, %v1125, %v1121
          %v1127 = vmul.f32 1.0, %v1126
          %v1128 = vrcp.pop %v662
          %v1129 = vmul.f32 %v662, %v1128
          %v1130 = vsub.f32 1.0, %v1129
          %v1131 = vmul.f32 %v1128, %v1130
          %v1132 = vadd.f32 %v1128, %v1131
          %vm1133 = vweird.f32 %v662
          %vm1134 = vweird.f32 %v1128
          %vm1135 = vmor %vm1133, %vm1134
          %v1136 = vsel %vm1135, %v1128, %v1132
          %v1137 = vand.u32 2147483647, %v662
          %vm1138 = vcmp.eq.f32.partialorder %v1137, 8.507059e+37
          %v1139 = vand.u32 %v662, 2147483648
          %v1140 = vor.u32 1.1754944e-38, %v1139
          %v1141 = vsel %vm1138, %v1140, %v1136
          %v1142 = vmul.f32 1.0, %v1141
          %v1143 = vmul.f32 %v456, %v677
          %v1144 = vmul.f32 %v458, %v692
          %v1145 = vmul.f32 %v461, %v707
          %v1146 = vmul.f32 %v463, %v722
          %v1147 = vmul.f32 %v466, %v737
          %v1148 = vmul.f32 %v468, %v752
          %v1149 = vmul.f32 %v471, %v767
          %v1150 = vmul.f32 %v473, %v782
          %v1151 = vmul.f32 %v476, %v797
          %v1152 = vmul.f32 %v478, %v812
          %v1153 = vmul.f32 %v481, %v827
          %v1154 = vmul.f32 %v483, %v842
          %v1155 = vmul.f32 %v486, %v857
          %v1156 = vmul.f32 %v488, %v872
          %v1157 = vmul.f32 %v491, %v887
          %v1158 = vmul.f32 %v493, %v902
          %v1159 = vmul.f32 %v496, %v917
          %v1160 = vmul.f32 %v498, %v932
          %v1161 = vmul.f32 %v501, %v947
          %v1162 = vmul.f32 %v503, %v962
          %v1163 = vmul.f32 %v506, %v977
          %v1164 = vmul.f32 %v508, %v992
          %v1165 = vmul.f32 %v511, %v1007
          %v1166 = vmul.f32 %v513, %v1022
          %v1167 = vmul.f32 %v516, %v1037
          %v1168 = vmul.f32 %v518, %v1052
          %v1169 = vmul.f32 %v521, %v1067
          %v1170 = vmul.f32 %v523, %v1082
          %v1171 = vmul.f32 %v526, %v1097
          %v1172 = vmul.f32 %v528, %v1112
          %v1173 = vmul.f32 %v531, %v1127
          %v1174 = vmul.f32 %v533, %v1142
          %v1175 = vpack.c.bf16 %v1143, %v1143
          %v1176 = vpack.c.bf16 %v1144, %v1144
          %v1177 = vpack.c.bf16 %v1145, %v1145
          %v1178 = vpack.c.bf16 %v1146, %v1146
          %v1179 = vpack.c.bf16 %v1147, %v1147
          %v1180 = vpack.c.bf16 %v1148, %v1148
          %v1181 = vpack.c.bf16 %v1149, %v1149
          %v1182 = vpack.c.bf16 %v1150, %v1150
          %v1183 = vpack.c.bf16 %v1151, %v1151
          %v1184 = vpack.c.bf16 %v1152, %v1152
          %v1185 = vpack.c.bf16 %v1153, %v1153
          %v1186 = vpack.c.bf16 %v1154, %v1154
          %v1187 = vpack.c.bf16 %v1155, %v1155
          %v1188 = vpack.c.bf16 %v1156, %v1156
          %v1189 = vpack.c.bf16 %v1157, %v1157
          %v1190 = vpack.c.bf16 %v1158, %v1158
          %v1191 = vpack.c.bf16 %v1159, %v1159
          %v1192 = vpack.c.bf16 %v1160, %v1160
          %v1193 = vpack.c.bf16 %v1161, %v1161
          %v1194 = vpack.c.bf16 %v1162, %v1162
          %v1195 = vpack.c.bf16 %v1163, %v1163
          %v1196 = vpack.c.bf16 %v1164, %v1164
          %v1197 = vpack.c.bf16 %v1165, %v1165
          %v1198 = vpack.c.bf16 %v1166, %v1166
          %v1199 = vpack.c.bf16 %v1167, %v1167
          %v1200 = vpack.c.bf16 %v1168, %v1168
          %v1201 = vpack.c.bf16 %v1169, %v1169
          %v1202 = vpack.c.bf16 %v1170, %v1170
          %v1203 = vpack.c.bf16 %v1171, %v1171
          %v1204 = vpack.c.bf16 %v1172, %v1172
          %v1205 = vpack.c.bf16 %v1173, %v1173
          %v1206 = vpack.c.bf16 %v1174, %v1174
          %v1207 = vlaneseq
          %v1208 = vshrl.u32 %v1207, 7
          %v1209 = vadd.s32 %v1208, 8
          %v1210 = vadd.s32 %v1208, 16
          %v1211 = vadd.s32 %v1208, 24
          %v1212 = vadd.s32 %v1208, 32
          %v1213 = vadd.s32 %v1208, 40
          %v1214 = vadd.s32 %v1208, 48
          %v1215 = vadd.s32 %v1208, 56
          %v1216 = vadd.s32 %v1208, 64
          %v1217 = vadd.s32 %v1208, 72
          %v1218 = vadd.s32 %v1208, 80
          %v1219 = vadd.s32 %v1208, 88
          %v1220 = vadd.s32 %v1208, 96
          %v1221 = vadd.s32 %v1208, 104
          %v1222 = vadd.s32 %v1208, 112
          %v1223 = vadd.s32 %v1208, 120
          %v1224 = vadd.s32 %v1208, 128
          %v1225 = vadd.s32 %v1208, 136
          %v1226 = vadd.s32 %v1208, 144
          %v1227 = vadd.s32 %v1208, 152
          %v1228 = vadd.s32 %v1208, 160
          %v1229 = vadd.s32 %v1208, 168
          %v1230 = vadd.s32 %v1208, 176
          %v1231 = vadd.s32 %v1208, 184
          %v1232 = vadd.s32 %v1208, 192
          %v1233 = vadd.s32 %v1208, 200
          %v1234 = vadd.s32 %v1208, 208
          %v1235 = vadd.s32 %v1208, 216
          %v1236 = vadd.s32 %v1208, 224
          %v1237 = vadd.s32 %v1208, 232
          %v1238 = vadd.s32 %v1208, 240
          %v1239 = vadd.s32 %v1208, 248
          %vm1240 = vcmp.lt.s32.totalorder %v1208, 0
          %v1241 = vsub.s32 0, %v1208
          %v1242 = vsel %vm1240, %v1241, %v1208
          %v1243 = vshrl.u32 %v1242, 4
          %v1244 = vand.u32 %v1242, 15
          %v1245 = vsub.s32 0, %v1244
          %v1246 = vsel %vm1240, %v1245, %v1244
          %vm1247 = vcmp.lt.s32.totalorder %v1209, 0
          %v1248 = vsub.s32 0, %v1209
          %v1249 = vsel %vm1247, %v1248, %v1209
          %v1250 = vshrl.u32 %v1249, 4
          %v1251 = vand.u32 %v1249, 15
          %v1252 = vsub.s32 0, %v1251
          %v1253 = vsel %vm1247, %v1252, %v1251
          %vm1254 = vcmp.lt.s32.totalorder %v1210, 0
          %v1255 = vsub.s32 0, %v1210
          %v1256 = vsel %vm1254, %v1255, %v1210
          %v1257 = vshrl.u32 %v1256, 4
          %v1258 = vand.u32 %v1256, 15
          %v1259 = vsub.s32 0, %v1258
          %v1260 = vsel %vm1254, %v1259, %v1258
          %vm1261 = vcmp.lt.s32.totalorder %v1211, 0
          %v1262 = vsub.s32 0, %v1211
          %v1263 = vsel %vm1261, %v1262, %v1211
          %v1264 = vshrl.u32 %v1263, 4
          %v1265 = vand.u32 %v1263, 15
          %v1266 = vsub.s32 0, %v1265
          %v1267 = vsel %vm1261, %v1266, %v1265
          %vm1268 = vcmp.lt.s32.totalorder %v1212, 0
          %v1269 = vsub.s32 0, %v1212
          %v1270 = vsel %vm1268, %v1269, %v1212
          %v1271 = vshrl.u32 %v1270, 4
          %v1272 = vand.u32 %v1270, 15
          %v1273 = vsub.s32 0, %v1272
          %v1274 = vsel %vm1268, %v1273, %v1272
          %vm1275 = vcmp.lt.s32.totalorder %v1213, 0
          %v1276 = vsub.s32 0, %v1213
          %v1277 = vsel %vm1275, %v1276, %v1213
          %v1278 = vshrl.u32 %v1277, 4
          %v1279 = vand.u32 %v1277, 15
          %v1280 = vsub.s32 0, %v1279
          %v1281 = vsel %vm1275, %v1280, %v1279
          %vm1282 = vcmp.lt.s32.totalorder %v1214, 0
          %v1283 = vsub.s32 0, %v1214
          %v1284 = vsel %vm1282, %v1283, %v1214
          %v1285 = vshrl.u32 %v1284, 4
          %v1286 = vand.u32 %v1284, 15
          %v1287 = vsub.s32 0, %v1286
          %v1288 = vsel %vm1282, %v1287, %v1286
          %vm1289 = vcmp.lt.s32.totalorder %v1215, 0
          %v1290 = vsub.s32 0, %v1215
          %v1291 = vsel %vm1289, %v1290, %v1215
          %v1292 = vshrl.u32 %v1291, 4
          %v1293 = vand.u32 %v1291, 15
          %v1294 = vsub.s32 0, %v1293
          %v1295 = vsel %vm1289, %v1294, %v1293
          %vm1296 = vcmp.lt.s32.totalorder %v1216, 0
          %v1297 = vsub.s32 0, %v1216
          %v1298 = vsel %vm1296, %v1297, %v1216
          %v1299 = vshrl.u32 %v1298, 4
          %v1300 = vand.u32 %v1298, 15
          %v1301 = vsub.s32 0, %v1300
          %v1302 = vsel %vm1296, %v1301, %v1300
          %vm1303 = vcmp.lt.s32.totalorder %v1217, 0
          %v1304 = vsub.s32 0, %v1217
          %v1305 = vsel %vm1303, %v1304, %v1217
          %v1306 = vshrl.u32 %v1305, 4
          %v1307 = vand.u32 %v1305, 15
          %v1308 = vsub.s32 0, %v1307
          %v1309 = vsel %vm1303, %v1308, %v1307
          %vm1310 = vcmp.lt.s32.totalorder %v1218, 0
          %v1311 = vsub.s32 0, %v1218
          %v1312 = vsel %vm1310, %v1311, %v1218
          %v1313 = vshrl.u32 %v1312, 4
          %v1314 = vand.u32 %v1312, 15
          %v1315 = vsub.s32 0, %v1314
          %v1316 = vsel %vm1310, %v1315, %v1314
          %vm1317 = vcmp.lt.s32.totalorder %v1219, 0
          %v1318 = vsub.s32 0, %v1219
          %v1319 = vsel %vm1317, %v1318, %v1219
          %v1320 = vshrl.u32 %v1319, 4
          %v1321 = vand.u32 %v1319, 15
          %v1322 = vsub.s32 0, %v1321
          %v1323 = vsel %vm1317, %v1322, %v1321
          %vm1324 = vcmp.lt.s32.totalorder %v1220, 0
          %v1325 = vsub.s32 0, %v1220
          %v1326 = vsel %vm1324, %v1325, %v1220
          %v1327 = vshrl.u32 %v1326, 4
          %v1328 = vand.u32 %v1326, 15
          %v1329 = vsub.s32 0, %v1328
          %v1330 = vsel %vm1324, %v1329, %v1328
          %vm1331 = vcmp.lt.s32.totalorder %v1221, 0
          %v1332 = vsub.s32 0, %v1221
          %v1333 = vsel %vm1331, %v1332, %v1221
          %v1334 = vshrl.u32 %v1333, 4
          %v1335 = vand.u32 %v1333, 15
          %v1336 = vsub.s32 0, %v1335
          %v1337 = vsel %vm1331, %v1336, %v1335
          %vm1338 = vcmp.lt.s32.totalorder %v1222, 0
          %v1339 = vsub.s32 0, %v1222
          %v1340 = vsel %vm1338, %v1339, %v1222
          %v1341 = vshrl.u32 %v1340, 4
          %v1342 = vand.u32 %v1340, 15
          %v1343 = vsub.s32 0, %v1342
          %v1344 = vsel %vm1338, %v1343, %v1342
          %vm1345 = vcmp.lt.s32.totalorder %v1223, 0
          %v1346 = vsub.s32 0, %v1223
          %v1347 = vsel %vm1345, %v1346, %v1223
          %v1348 = vshrl.u32 %v1347, 4
          %v1349 = vand.u32 %v1347, 15
          %v1350 = vsub.s32 0, %v1349
          %v1351 = vsel %vm1345, %v1350, %v1349
          %vm1352 = vcmp.lt.s32.totalorder %v1224, 0
          %v1353 = vsub.s32 0, %v1224
          %v1354 = vsel %vm1352, %v1353, %v1224
          %v1355 = vshrl.u32 %v1354, 4
          %v1356 = vand.u32 %v1354, 15
          %v1357 = vsub.s32 0, %v1356
          %v1358 = vsel %vm1352, %v1357, %v1356
          %vm1359 = vcmp.lt.s32.totalorder %v1225, 0
          %v1360 = vsub.s32 0, %v1225
          %v1361 = vsel %vm1359, %v1360, %v1225
          %v1362 = vshrl.u32 %v1361, 4
          %v1363 = vand.u32 %v1361, 15
          %v1364 = vsub.s32 0, %v1363
          %v1365 = vsel %vm1359, %v1364, %v1363
          %vm1366 = vcmp.lt.s32.totalorder %v1226, 0
          %v1367 = vsub.s32 0, %v1226
          %v1368 = vsel %vm1366, %v1367, %v1226
          %v1369 = vshrl.u32 %v1368, 4
          %v1370 = vand.u32 %v1368, 15
          %v1371 = vsub.s32 0, %v1370
          %v1372 = vsel %vm1366, %v1371, %v1370
          %vm1373 = vcmp.lt.s32.totalorder %v1227, 0
          %v1374 = vsub.s32 0, %v1227
          %v1375 = vsel %vm1373, %v1374, %v1227
          %v1376 = vshrl.u32 %v1375, 4
          %v1377 = vand.u32 %v1375, 15
          %v1378 = vsub.s32 0, %v1377
          %v1379 = vsel %vm1373, %v1378, %v1377
          %vm1380 = vcmp.lt.s32.totalorder %v1228, 0
          %v1381 = vsub.s32 0, %v1228
          %v1382 = vsel %vm1380, %v1381, %v1228
          %v1383 = vshrl.u32 %v1382, 4
          %v1384 = vand.u32 %v1382, 15
          %v1385 = vsub.s32 0, %v1384
          %v1386 = vsel %vm1380, %v1385, %v1384
          %vm1387 = vcmp.lt.s32.totalorder %v1229, 0
          %v1388 = vsub.s32 0, %v1229
          %v1389 = vsel %vm1387, %v1388, %v1229
          %v1390 = vshrl.u32 %v1389, 4
          %v1391 = vand.u32 %v1389, 15
          %v1392 = vsub.s32 0, %v1391
          %v1393 = vsel %vm1387, %v1392, %v1391
          %vm1394 = vcmp.lt.s32.totalorder %v1230, 0
          %v1395 = vsub.s32 0, %v1230
          %v1396 = vsel %vm1394, %v1395, %v1230
          %v1397 = vshrl.u32 %v1396, 4
          %v1398 = vand.u32 %v1396, 15
          %v1399 = vsub.s32 0, %v1398
          %v1400 = vsel %vm1394, %v1399, %v1398
          %vm1401 = vcmp.lt.s32.totalorder %v1231, 0
          %v1402 = vsub.s32 0, %v1231
          %v1403 = vsel %vm1401, %v1402, %v1231
          %v1404 = vshrl.u32 %v1403, 4
          %v1405 = vand.u32 %v1403, 15
          %v1406 = vsub.s32 0, %v1405
          %v1407 = vsel %vm1401, %v1406, %v1405
          %vm1408 = vcmp.lt.s32.totalorder %v1232, 0
          %v1409 = vsub.s32 0, %v1232
          %v1410 = vsel %vm1408, %v1409, %v1232
          %v1411 = vshrl.u32 %v1410, 4
          %v1412 = vand.u32 %v1410, 15
          %v1413 = vsub.s32 0, %v1412
          %v1414 = vsel %vm1408, %v1413, %v1412
          %vm1415 = vcmp.lt.s32.totalorder %v1233, 0
          %v1416 = vsub.s32 0, %v1233
          %v1417 = vsel %vm1415, %v1416, %v1233
          %v1418 = vshrl.u32 %v1417, 4
          %v1419 = vand.u32 %v1417, 15
          %v1420 = vsub.s32 0, %v1419
          %v1421 = vsel %vm1415, %v1420, %v1419
          %vm1422 = vcmp.lt.s32.totalorder %v1234, 0
          %v1423 = vsub.s32 0, %v1234
          %v1424 = vsel %vm1422, %v1423, %v1234
          %v1425 = vshrl.u32 %v1424, 4
          %v1426 = vand.u32 %v1424, 15
          %v1427 = vsub.s32 0, %v1426
          %v1428 = vsel %vm1422, %v1427, %v1426
          %vm1429 = vcmp.lt.s32.totalorder %v1235, 0
          %v1430 = vsub.s32 0, %v1235
          %v1431 = vsel %vm1429, %v1430, %v1235
          %v1432 = vshrl.u32 %v1431, 4
          %v1433 = vand.u32 %v1431, 15
          %v1434 = vsub.s32 0, %v1433
          %v1435 = vsel %vm1429, %v1434, %v1433
          %vm1436 = vcmp.lt.s32.totalorder %v1236, 0
          %v1437 = vsub.s32 0, %v1236
          %v1438 = vsel %vm1436, %v1437, %v1236
          %v1439 = vshrl.u32 %v1438, 4
          %v1440 = vand.u32 %v1438, 15
          %v1441 = vsub.s32 0, %v1440
          %v1442 = vsel %vm1436, %v1441, %v1440
          %vm1443 = vcmp.lt.s32.totalorder %v1237, 0
          %v1444 = vsub.s32 0, %v1237
          %v1445 = vsel %vm1443, %v1444, %v1237
          %v1446 = vshrl.u32 %v1445, 4
          %v1447 = vand.u32 %v1445, 15
          %v1448 = vsub.s32 0, %v1447
          %v1449 = vsel %vm1443, %v1448, %v1447
          %vm1450 = vcmp.lt.s32.totalorder %v1238, 0
          %v1451 = vsub.s32 0, %v1238
          %v1452 = vsel %vm1450, %v1451, %v1238
          %v1453 = vshrl.u32 %v1452, 4
          %v1454 = vand.u32 %v1452, 15
          %v1455 = vsub.s32 0, %v1454
          %v1456 = vsel %vm1450, %v1455, %v1454
          %vm1457 = vcmp.lt.s32.totalorder %v1239, 0
          %v1458 = vsub.s32 0, %v1239
          %v1459 = vsel %vm1457, %v1458, %v1239
          %v1460 = vshrl.u32 %v1459, 4
          %v1461 = vand.u32 %v1459, 15
          %v1462 = vsub.s32 0, %v1461
          %v1463 = vsel %vm1457, %v1462, %v1461
          %vm1464 = vcmp.ne.s32.totalorder %v1246, 0
          %vm1465 = vcmp.ne.s32.totalorder %v1253, 0
          %vm1466 = vcmp.ne.s32.totalorder %v1260, 0
          %vm1467 = vcmp.ne.s32.totalorder %v1267, 0
          %vm1468 = vcmp.ne.s32.totalorder %v1274, 0
          %vm1469 = vcmp.ne.s32.totalorder %v1281, 0
          %vm1470 = vcmp.ne.s32.totalorder %v1288, 0
          %vm1471 = vcmp.ne.s32.totalorder %v1295, 0
          %vm1472 = vcmp.ne.s32.totalorder %v1302, 0
          %vm1473 = vcmp.ne.s32.totalorder %v1309, 0
          %vm1474 = vcmp.ne.s32.totalorder %v1316, 0
          %vm1475 = vcmp.ne.s32.totalorder %v1323, 0
          %vm1476 = vcmp.ne.s32.totalorder %v1330, 0
          %vm1477 = vcmp.ne.s32.totalorder %v1337, 0
          %vm1478 = vcmp.ne.s32.totalorder %v1344, 0
          %vm1479 = vcmp.ne.s32.totalorder %v1351, 0
          %vm1480 = vcmp.ne.s32.totalorder %v1358, 0
          %vm1481 = vcmp.ne.s32.totalorder %v1365, 0
          %vm1482 = vcmp.ne.s32.totalorder %v1372, 0
          %vm1483 = vcmp.ne.s32.totalorder %v1379, 0
          %vm1484 = vcmp.ne.s32.totalorder %v1386, 0
          %vm1485 = vcmp.ne.s32.totalorder %v1393, 0
          %vm1486 = vcmp.ne.s32.totalorder %v1400, 0
          %vm1487 = vcmp.ne.s32.totalorder %v1407, 0
          %vm1488 = vcmp.ne.s32.totalorder %v1414, 0
          %vm1489 = vcmp.ne.s32.totalorder %v1421, 0
          %vm1490 = vcmp.ne.s32.totalorder %v1428, 0
          %vm1491 = vcmp.ne.s32.totalorder %v1435, 0
          %vm1492 = vcmp.ne.s32.totalorder %v1442, 0
          %vm1493 = vcmp.ne.s32.totalorder %v1449, 0
          %vm1494 = vcmp.ne.s32.totalorder %v1456, 0
          %vm1495 = vcmp.ne.s32.totalorder %v1463, 0
          %vm1496 = vcmp.lt.s32.totalorder %v1246, 0
          %vm1497 = vcmp.lt.s32.totalorder %v1253, 0
          %vm1498 = vcmp.lt.s32.totalorder %v1260, 0
          %vm1499 = vcmp.lt.s32.totalorder %v1267, 0
          %vm1500 = vcmp.lt.s32.totalorder %v1274, 0
          %vm1501 = vcmp.lt.s32.totalorder %v1281, 0
          %vm1502 = vcmp.lt.s32.totalorder %v1288, 0
          %vm1503 = vcmp.lt.s32.totalorder %v1295, 0
          %vm1504 = vcmp.lt.s32.totalorder %v1302, 0
          %vm1505 = vcmp.lt.s32.totalorder %v1309, 0
          %vm1506 = vcmp.lt.s32.totalorder %v1316, 0
          %vm1507 = vcmp.lt.s32.totalorder %v1323, 0
          %vm1508 = vcmp.lt.s32.totalorder %v1330, 0
          %vm1509 = vcmp.lt.s32.totalorder %v1337, 0
          %vm1510 = vcmp.lt.s32.totalorder %v1344, 0
          %vm1511 = vcmp.lt.s32.totalorder %v1351, 0
          %vm1512 = vcmp.lt.s32.totalorder %v1358, 0
          %vm1513 = vcmp.lt.s32.totalorder %v1365, 0
          %vm1514 = vcmp.lt.s32.totalorder %v1372, 0
          %vm1515 = vcmp.lt.s32.totalorder %v1379, 0
          %vm1516 = vcmp.lt.s32.totalorder %v1386, 0
          %vm1517 = vcmp.lt.s32.totalorder %v1393, 0
          %vm1518 = vcmp.lt.s32.totalorder %v1400, 0
          %vm1519 = vcmp.lt.s32.totalorder %v1407, 0
          %vm1520 = vcmp.lt.s32.totalorder %v1414, 0
          %vm1521 = vcmp.lt.s32.totalorder %v1421, 0
          %vm1522 = vcmp.lt.s32.totalorder %v1428, 0
          %vm1523 = vcmp.lt.s32.totalorder %v1435, 0
          %vm1524 = vcmp.lt.s32.totalorder %v1442, 0
          %vm1525 = vcmp.lt.s32.totalorder %v1449, 0
          %vm1526 = vcmp.lt.s32.totalorder %v1456, 0
          %vm1527 = vcmp.lt.s32.totalorder %v1463, 0
          %vm1528 = vmand %vm1496, %vm1464
          %vm1529 = vmand %vm1497, %vm1465
          %vm1530 = vmand %vm1498, %vm1466
          %vm1531 = vmand %vm1499, %vm1467
          %vm1532 = vmand %vm1500, %vm1468
          %vm1533 = vmand %vm1501, %vm1469
          %vm1534 = vmand %vm1502, %vm1470
          %vm1535 = vmand %vm1503, %vm1471
          %vm1536 = vmand %vm1504, %vm1472
          %vm1537 = vmand %vm1505, %vm1473
          %vm1538 = vmand %vm1506, %vm1474
          %vm1539 = vmand %vm1507, %vm1475
          %vm1540 = vmand %vm1508, %vm1476
          %vm1541 = vmand %vm1509, %vm1477
          %vm1542 = vmand %vm1510, %vm1478
          %vm1543 = vmand %vm1511, %vm1479
          %vm1544 = vmand %vm1512, %vm1480
          %vm1545 = vmand %vm1513, %vm1481
          %vm1546 = vmand %vm1514, %vm1482
          %vm1547 = vmand %vm1515, %vm1483
          %vm1548 = vmand %vm1516, %vm1484
          %vm1549 = vmand %vm1517, %vm1485
          %vm1550 = vmand %vm1518, %vm1486
          %vm1551 = vmand %vm1519, %vm1487
          %vm1552 = vmand %vm1520, %vm1488
          %vm1553 = vmand %vm1521, %vm1489
          %vm1554 = vmand %vm1522, %vm1490
          %vm1555 = vmand %vm1523, %vm1491
          %vm1556 = vmand %vm1524, %vm1492
          %vm1557 = vmand %vm1525, %vm1493
          %vm1558 = vmand %vm1526, %vm1494
          %vm1559 = vmand %vm1527, %vm1495
          %v1560 = vadd.s32 %v1246, 16
          %v1561 = vadd.s32 %v1253, 16
          %v1562 = vadd.s32 %v1260, 16
          %v1563 = vadd.s32 %v1267, 16
          %v1564 = vadd.s32 %v1274, 16
          %v1565 = vadd.s32 %v1281, 16
          %v1566 = vadd.s32 %v1288, 16
          %v1567 = vadd.s32 %v1295, 16
          %v1568 = vadd.s32 %v1302, 16
          %v1569 = vadd.s32 %v1309, 16
          %v1570 = vadd.s32 %v1316, 16
          %v1571 = vadd.s32 %v1323, 16
          %v1572 = vadd.s32 %v1330, 16
          %v1573 = vadd.s32 %v1337, 16
          %v1574 = vadd.s32 %v1344, 16
          %v1575 = vadd.s32 %v1351, 16
          %v1576 = vadd.s32 %v1358, 16
          %v1577 = vadd.s32 %v1365, 16
          %v1578 = vadd.s32 %v1372, 16
          %v1579 = vadd.s32 %v1379, 16
          %v1580 = vadd.s32 %v1386, 16
          %v1581 = vadd.s32 %v1393, 16
          %v1582 = vadd.s32 %v1400, 16
          %v1583 = vadd.s32 %v1407, 16
          %v1584 = vadd.s32 %v1414, 16
          %v1585 = vadd.s32 %v1421, 16
          %v1586 = vadd.s32 %v1428, 16
          %v1587 = vadd.s32 %v1435, 16
          %v1588 = vadd.s32 %v1442, 16
          %v1589 = vadd.s32 %v1449, 16
          %v1590 = vadd.s32 %v1456, 16
          %v1591 = vadd.s32 %v1463, 16
          %v1592 = vsel %vm1528, %v1560, %v1246
          %v1593 = vsel %vm1529, %v1561, %v1253
          %v1594 = vsel %vm1530, %v1562, %v1260
          %v1595 = vsel %vm1531, %v1563, %v1267
          %v1596 = vsel %vm1532, %v1564, %v1274
          %v1597 = vsel %vm1533, %v1565, %v1281
          %v1598 = vsel %vm1534, %v1566, %v1288
          %v1599 = vsel %vm1535, %v1567, %v1295
          %v1600 = vsel %vm1536, %v1568, %v1302
          %v1601 = vsel %vm1537, %v1569, %v1309
          %v1602 = vsel %vm1538, %v1570, %v1316
          %v1603 = vsel %vm1539, %v1571, %v1323
          %v1604 = vsel %vm1540, %v1572, %v1330
          %v1605 = vsel %vm1541, %v1573, %v1337
          %v1606 = vsel %vm1542, %v1574, %v1344
          %v1607 = vsel %vm1543, %v1575, %v1351
          %v1608 = vsel %vm1544, %v1576, %v1358
          %v1609 = vsel %vm1545, %v1577, %v1365
          %v1610 = vsel %vm1546, %v1578, %v1372
          %v1611 = vsel %vm1547, %v1579, %v1379
          %v1612 = vsel %vm1548, %v1580, %v1386
          %v1613 = vsel %vm1549, %v1581, %v1393
          %v1614 = vsel %vm1550, %v1582, %v1400
          %v1615 = vsel %vm1551, %v1583, %v1407
          %v1616 = vsel %vm1552, %v1584, %v1414
          %v1617 = vsel %vm1553, %v1585, %v1421
          %v1618 = vsel %vm1554, %v1586, %v1428
          %v1619 = vsel %vm1555, %v1587, %v1435
          %v1620 = vsel %vm1556, %v1588, %v1442
          %v1621 = vsel %vm1557, %v1589, %v1449
          %v1622 = vsel %vm1558, %v1590, %v1456
          %v1623 = vsel %vm1559, %v1591, %v1463
          %vm1624 = vcmp.ge.s32.totalorder %v1592, 1
          %vm1625 = vcmp.ge.s32.totalorder %v1593, 1
          %vm1626 = vcmp.ge.s32.totalorder %v1594, 1
          %vm1627 = vcmp.ge.s32.totalorder %v1595, 1
          %vm1628 = vcmp.ge.s32.totalorder %v1596, 1
          %vm1629 = vcmp.ge.s32.totalorder %v1597, 1
          %vm1630 = vcmp.ge.s32.totalorder %v1598, 1
          %vm1631 = vcmp.ge.s32.totalorder %v1599, 1
          %vm1632 = vcmp.ge.s32.totalorder %v1600, 1
          %vm1633 = vcmp.ge.s32.totalorder %v1601, 1
          %vm1634 = vcmp.ge.s32.totalorder %v1602, 1
          %vm1635 = vcmp.ge.s32.totalorder %v1603, 1
          %vm1636 = vcmp.ge.s32.totalorder %v1604, 1
          %vm1637 = vcmp.ge.s32.totalorder %v1605, 1
          %vm1638 = vcmp.ge.s32.totalorder %v1606, 1
          %vm1639 = vcmp.ge.s32.totalorder %v1607, 1
          %vm1640 = vcmp.ge.s32.totalorder %v1608, 1
          %vm1641 = vcmp.ge.s32.totalorder %v1609, 1
          %vm1642 = vcmp.ge.s32.totalorder %v1610, 1
          %vm1643 = vcmp.ge.s32.totalorder %v1611, 1
          %vm1644 = vcmp.ge.s32.totalorder %v1612, 1
          %vm1645 = vcmp.ge.s32.totalorder %v1613, 1
          %vm1646 = vcmp.ge.s32.totalorder %v1614, 1
          %vm1647 = vcmp.ge.s32.totalorder %v1615, 1
          %vm1648 = vcmp.ge.s32.totalorder %v1616, 1
          %vm1649 = vcmp.ge.s32.totalorder %v1617, 1
          %vm1650 = vcmp.ge.s32.totalorder %v1618, 1
          %vm1651 = vcmp.ge.s32.totalorder %v1619, 1
          %vm1652 = vcmp.ge.s32.totalorder %v1620, 1
          %vm1653 = vcmp.ge.s32.totalorder %v1621, 1
          %vm1654 = vcmp.ge.s32.totalorder %v1622, 1
          %vm1655 = vcmp.ge.s32.totalorder %v1623, 1
          %vm1656 = vcmp.ge.s32.totalorder %v1592, 2
          %vm1657 = vcmp.ge.s32.totalorder %v1593, 2
          %vm1658 = vcmp.ge.s32.totalorder %v1594, 2
          %vm1659 = vcmp.ge.s32.totalorder %v1595, 2
          %vm1660 = vcmp.ge.s32.totalorder %v1596, 2
          %vm1661 = vcmp.ge.s32.totalorder %v1597, 2
          %vm1662 = vcmp.ge.s32.totalorder %v1598, 2
          %vm1663 = vcmp.ge.s32.totalorder %v1599, 2
          %vm1664 = vcmp.ge.s32.totalorder %v1600, 2
          %vm1665 = vcmp.ge.s32.totalorder %v1601, 2
          %vm1666 = vcmp.ge.s32.totalorder %v1602, 2
          %vm1667 = vcmp.ge.s32.totalorder %v1603, 2
          %vm1668 = vcmp.ge.s32.totalorder %v1604, 2
          %vm1669 = vcmp.ge.s32.totalorder %v1605, 2
          %vm1670 = vcmp.ge.s32.totalorder %v1606, 2
          %vm1671 = vcmp.ge.s32.totalorder %v1607, 2
          %vm1672 = vcmp.ge.s32.totalorder %v1608, 2
          %vm1673 = vcmp.ge.s32.totalorder %v1609, 2
          %vm1674 = vcmp.ge.s32.totalorder %v1610, 2
          %vm1675 = vcmp.ge.s32.totalorder %v1611, 2
          %vm1676 = vcmp.ge.s32.totalorder %v1612, 2
          %vm1677 = vcmp.ge.s32.totalorder %v1613, 2
          %vm1678 = vcmp.ge.s32.totalorder %v1614, 2
          %vm1679 = vcmp.ge.s32.totalorder %v1615, 2
          %vm1680 = vcmp.ge.s32.totalorder %v1616, 2
          %vm1681 = vcmp.ge.s32.totalorder %v1617, 2
          %vm1682 = vcmp.ge.s32.totalorder %v1618, 2
          %vm1683 = vcmp.ge.s32.totalorder %v1619, 2
          %vm1684 = vcmp.ge.s32.totalorder %v1620, 2
          %vm1685 = vcmp.ge.s32.totalorder %v1621, 2
          %vm1686 = vcmp.ge.s32.totalorder %v1622, 2
          %vm1687 = vcmp.ge.s32.totalorder %v1623, 2
          %vm1688 = vcmp.lt.s32.totalorder %v1592, 15
          %vm1689 = vcmp.lt.s32.totalorder %v1593, 15
          %vm1690 = vcmp.lt.s32.totalorder %v1594, 15
          %vm1691 = vcmp.lt.s32.totalorder %v1595, 15
          %vm1692 = vcmp.lt.s32.totalorder %v1596, 15
          %vm1693 = vcmp.lt.s32.totalorder %v1597, 15
          %vm1694 = vcmp.lt.s32.totalorder %v1598, 15
          %vm1695 = vcmp.lt.s32.totalorder %v1599, 15
          %vm1696 = vcmp.lt.s32.totalorder %v1600, 15
          %vm1697 = vcmp.lt.s32.totalorder %v1601, 15
          %vm1698 = vcmp.lt.s32.totalorder %v1602, 15
          %vm1699 = vcmp.lt.s32.totalorder %v1603, 15
          %vm1700 = vcmp.lt.s32.totalorder %v1604, 15
          %vm1701 = vcmp.lt.s32.totalorder %v1605, 15
          %vm1702 = vcmp.lt.s32.totalorder %v1606, 15
          %vm1703 = vcmp.lt.s32.totalorder %v1607, 15
          %vm1704 = vcmp.lt.s32.totalorder %v1608, 15
          %vm1705 = vcmp.lt.s32.totalorder %v1609, 15
          %vm1706 = vcmp.lt.s32.totalorder %v1610, 15
          %vm1707 = vcmp.lt.s32.totalorder %v1611, 15
          %vm1708 = vcmp.lt.s32.totalorder %v1612, 15
          %vm1709 = vcmp.lt.s32.totalorder %v1613, 15
          %vm1710 = vcmp.lt.s32.totalorder %v1614, 15
          %vm1711 = vcmp.lt.s32.totalorder %v1615, 15
          %vm1712 = vcmp.lt.s32.totalorder %v1616, 15
          %vm1713 = vcmp.lt.s32.totalorder %v1617, 15
          %vm1714 = vcmp.lt.s32.totalorder %v1618, 15
          %vm1715 = vcmp.lt.s32.totalorder %v1619, 15
          %vm1716 = vcmp.lt.s32.totalorder %v1620, 15
          %vm1717 = vcmp.lt.s32.totalorder %v1621, 15
          %vm1718 = vcmp.lt.s32.totalorder %v1622, 15
          %vm1719 = vcmp.lt.s32.totalorder %v1623, 15
          %vm1720 = vcmp.lt.s32.totalorder %v1592, 14
          %vm1721 = vcmp.lt.s32.totalorder %v1593, 14
          %vm1722 = vcmp.lt.s32.totalorder %v1594, 14
          %vm1723 = vcmp.lt.s32.totalorder %v1595, 14
          %vm1724 = vcmp.lt.s32.totalorder %v1596, 14
          %vm1725 = vcmp.lt.s32.totalorder %v1597, 14
          %vm1726 = vcmp.lt.s32.totalorder %v1598, 14
          %vm1727 = vcmp.lt.s32.totalorder %v1599, 14
          %vm1728 = vcmp.lt.s32.totalorder %v1600, 14
          %vm1729 = vcmp.lt.s32.totalorder %v1601, 14
          %vm1730 = vcmp.lt.s32.totalorder %v1602, 14
          %vm1731 = vcmp.lt.s32.totalorder %v1603, 14
          %vm1732 = vcmp.lt.s32.totalorder %v1604, 14
          %vm1733 = vcmp.lt.s32.totalorder %v1605, 14
          %vm1734 = vcmp.lt.s32.totalorder %v1606, 14
          %vm1735 = vcmp.lt.s32.totalorder %v1607, 14
          %vm1736 = vcmp.lt.s32.totalorder %v1608, 14
          %vm1737 = vcmp.lt.s32.totalorder %v1609, 14
          %vm1738 = vcmp.lt.s32.totalorder %v1610, 14
          %vm1739 = vcmp.lt.s32.totalorder %v1611, 14
          %vm1740 = vcmp.lt.s32.totalorder %v1612, 14
          %vm1741 = vcmp.lt.s32.totalorder %v1613, 14
          %vm1742 = vcmp.lt.s32.totalorder %v1614, 14
          %vm1743 = vcmp.lt.s32.totalorder %v1615, 14
          %vm1744 = vcmp.lt.s32.totalorder %v1616, 14
          %vm1745 = vcmp.lt.s32.totalorder %v1617, 14
          %vm1746 = vcmp.lt.s32.totalorder %v1618, 14
          %vm1747 = vcmp.lt.s32.totalorder %v1619, 14
          %vm1748 = vcmp.lt.s32.totalorder %v1620, 14
          %vm1749 = vcmp.lt.s32.totalorder %v1621, 14
          %vm1750 = vcmp.lt.s32.totalorder %v1622, 14
          %vm1751 = vcmp.lt.s32.totalorder %v1623, 14
          %vm1752 = vcmask 27648
          %1753 = vst.msk [vmem:[#allocation3] sm:$0xf] %vm1752, 4284677986
          %1754 = vst.msk [vmem:[#allocation3 + $0x4] sm:$0xf] %vm1752, 4284677986
          %1755 = vst.msk [vmem:[#allocation3 + $0x8] sm:$0xf] %vm1752, 4284677986
          %1756 = vst.msk [vmem:[#allocation3 + $0xc] sm:$0xf] %vm1752, 4284677986
          %1757 = vst.msk [vmem:[#allocation3 + $0x90] sm:$0xf] %vm1752, 4284677986
          %1758 = vst.msk [vmem:[#allocation3 + $0x94] sm:$0xf] %vm1752, 4284677986
          %1759 = vst.msk [vmem:[#allocation3 + $0x98] sm:$0xf] %vm1752, 4284677986
          %1760 = vst.msk [vmem:[#allocation3 + $0x9c] sm:$0xf] %vm1752, 4284677986
          %v1762 = vunpack.c.l.b16 %v1206
          %v1763 = vpack.c.b16 %v1762, %v1762
          %v1765 = vshrl.u32 %v1763, 16
          %v1767 = vrot.slane %v1765, 3
          %v1800 = vunpack.c.l.b16 %v1175
          %v1801 = vunpack.c.l.b16 %v1176
          %v1802 = vunpack.c.l.b16 %v1177
          %v1803 = vunpack.c.l.b16 %v1178
          %v1804 = vunpack.c.l.b16 %v1179
          %v1805 = vunpack.c.l.b16 %v1180
          %v1806 = vunpack.c.l.b16 %v1181
          %v1807 = vunpack.c.l.b16 %v1182
          %v1808 = vunpack.c.l.b16 %v1183
          %v1809 = vunpack.c.l.b16 %v1184
          %v1810 = vunpack.c.l.b16 %v1185
          %v1811 = vunpack.c.l.b16 %v1186
          %v1812 = vunpack.c.l.b16 %v1187
          %v1813 = vunpack.c.l.b16 %v1188
          %v1814 = vunpack.c.l.b16 %v1189
          %v1815 = vunpack.c.l.b16 %v1190
          %v1816 = vunpack.c.l.b16 %v1191
          %v1817 = vunpack.c.l.b16 %v1192
          %v1818 = vunpack.c.l.b16 %v1193
          %v1819 = vunpack.c.l.b16 %v1194
          %v1820 = vunpack.c.l.b16 %v1195
          %v1821 = vunpack.c.l.b16 %v1196
          %v1822 = vunpack.c.l.b16 %v1197
          %v1823 = vunpack.c.l.b16 %v1198
          %v1824 = vunpack.c.l.b16 %v1199
          %v1825 = vunpack.c.l.b16 %v1200
          %v1826 = vunpack.c.l.b16 %v1201
          %v1827 = vunpack.c.l.b16 %v1202
          %v1828 = vunpack.c.l.b16 %v1203
          %v1829 = vunpack.c.l.b16 %v1204
          %v1830 = vunpack.c.l.b16 %v1205
          %v1831 = vpack.c.b16 %v1801, %v1800
          %v1832 = vpack.c.b16 %v1803, %v1802
          %v1833 = vpack.c.b16 %v1805, %v1804
          %v1834 = vpack.c.b16 %v1807, %v1806
          %v1835 = vpack.c.b16 %v1809, %v1808
          %v1836 = vpack.c.b16 %v1811, %v1810
          %v1837 = vpack.c.b16 %v1813, %v1812
          %v1838 = vpack.c.b16 %v1815, %v1814
          %v1839 = vpack.c.b16 %v1817, %v1816
          %v1840 = vpack.c.b16 %v1819, %v1818
          %v1841 = vpack.c.b16 %v1821, %v1820
          %v1842 = vpack.c.b16 %v1823, %v1822
          %v1843 = vpack.c.b16 %v1825, %v1824
          %v1844 = vpack.c.b16 %v1827, %v1826
          %v1845 = vpack.c.b16 %v1829, %v1828
          %v1846 = vpack.c.b16 %v1762, %v1830
          %vm1847 = vsmask.f32 256
          %v1849 = vshrl.u32 %v1831, 16
          %v1851 = vrot.slane %v1849, 7
          %v1852 = vshll.u32 %v1831, 16
          %v1854 = vor.u32 %v1851, %v1852
          %v1856 = vshrl.u32 %v1832, 16
          %v1858 = vrot.slane %v1856, 7
          %v1859 = vshll.u32 %v1832, 16
          %v1861 = vor.u32 %v1858, %v1859
          %v1862 = vsel %vm1847, %v1851, %v1861
          %v1864 = vshrl.u32 %v1833, 16
          %v1866 = vrot.slane %v1864, 7
          %v1867 = vshll.u32 %v1833, 16
          %v1869 = vor.u32 %v1866, %v1867
          %v1870 = vsel %vm1847, %v1858, %v1869
          %v1872 = vshrl.u32 %v1834, 16
          %v1874 = vrot.slane %v1872, 7
          %v1875 = vshll.u32 %v1834, 16
          %v1877 = vor.u32 %v1874, %v1875
          %v1878 = vsel %vm1847, %v1866, %v1877
          %v1880 = vshrl.u32 %v1835, 16
          %v1882 = vrot.slane %v1880, 7
          %v1883 = vshll.u32 %v1835, 16
          %v1885 = vor.u32 %v1882, %v1883
          %v1886 = vsel %vm1847, %v1874, %v1885
          %v1888 = vshrl.u32 %v1836, 16
          %v1890 = vrot.slane %v1888, 7
          %v1891 = vshll.u32 %v1836, 16
          %v1893 = vor.u32 %v1890, %v1891
          %v1894 = vsel %vm1847, %v1882, %v1893
          %v1896 = vshrl.u32 %v1837, 16
          %v1898 = vrot.slane %v1896, 7
          %v1899 = vshll.u32 %v1837, 16
          %v1901 = vor.u32 %v1898, %v1899
          %v1902 = vsel %vm1847, %v1890, %v1901
          %v1904 = vshrl.u32 %v1838, 16
          %v1906 = vrot.slane %v1904, 7
          %v1907 = vshll.u32 %v1838, 16
          %v1909 = vor.u32 %v1906, %v1907
          %v1910 = vsel %vm1847, %v1898, %v1909
          %v1912 = vshrl.u32 %v1839, 16
          %v1914 = vrot.slane %v1912, 7
          %v1915 = vshll.u32 %v1839, 16
          %v1917 = vor.u32 %v1914, %v1915
          %v1918 = vsel %vm1847, %v1906, %v1917
          %v1920 = vshrl.u32 %v1840, 16
          %v1922 = vrot.slane %v1920, 7
          %v1923 = vshll.u32 %v1840, 16
          %v1925 = vor.u32 %v1922, %v1923
          %v1926 = vsel %vm1847, %v1914, %v1925
          %v1928 = vshrl.u32 %v1841, 16
          %v1930 = vrot.slane %v1928, 7
          %v1931 = vshll.u32 %v1841, 16
          %v1933 = vor.u32 %v1930, %v1931
          %v1934 = vsel %vm1847, %v1922, %v1933
          %v1936 = vshrl.u32 %v1842, 16
          %v1938 = vrot.slane %v1936, 7
          %v1939 = vshll.u32 %v1842, 16
          %v1941 = vor.u32 %v1938, %v1939
          %v1942 = vsel %vm1847, %v1930, %v1941
          %v1944 = vshrl.u32 %v1843, 16
          %v1946 = vrot.slane %v1944, 7
          %v1947 = vshll.u32 %v1843, 16
          %v1949 = vor.u32 %v1946, %v1947
          %v1950 = vsel %vm1847, %v1938, %v1949
          %v1952 = vshrl.u32 %v1844, 16
          %v1954 = vrot.slane %v1952, 7
          %v1955 = vshll.u32 %v1844, 16
          %v1957 = vor.u32 %v1954, %v1955
          %v1958 = vsel %vm1847, %v1946, %v1957
          %v1960 = vshrl.u32 %v1845, 16
          %v1962 = vrot.slane %v1960, 7
          %v1963 = vshll.u32 %v1845, 16
          %v1965 = vor.u32 %v1962, %v1963
          %v1966 = vsel %vm1847, %v1954, %v1965
          %v1968 = vshrl.u32 %v1846, 16
          %v1970 = vrot.slane %v1968, 7
          %v1971 = vshll.u32 %v1846, 16
          %v1973 = vor.u32 %v1970, %v1971
          %v1974 = vsel %vm1847, %v1962, %v1973
          %vm1991 = vcmask 1040384
          %vm1992 = vmand %vm1991, %vm1847
          %v1993 = vsel %vm1992, %v1767, %v1854
          %p1995 = scmp.ne.f32.partialorder -3e+38, -3e+38
          %s1996 = sshrl.u32 -3e+38, 16
          %s1997 = sand.u32 %s1996, 1
          %s1998 = sadd.s32 32767, %s1997
          %s1999 = sadd.s32 -3e+38, %s1998
          %s2000 = sand.u32 %s1999, 4294901760
          %s2001 = scalar_select %p1995, 2143289344, %s2000
          %s2003 = sshrl.u32 %s2001, 16
          %v2004 = vsel %vm1624, 1, 0
          %v2005 = vsel %vm1625, 1, 0
          %v2006 = vsel %vm1626, 1, 0
          %v2007 = vsel %vm1627, 1, 0
          %v2008 = vsel %vm1628, 1, 0
          %v2009 = vsel %vm1629, 1, 0
          %v2010 = vsel %vm1630, 1, 0
          %v2011 = vsel %vm1631, 1, 0
          %v2012 = vsel %vm1632, 1, 0
          %v2013 = vsel %vm1633, 1, 0
          %v2014 = vsel %vm1634, 1, 0
          %v2015 = vsel %vm1635, 1, 0
          %v2016 = vsel %vm1636, 1, 0
          %v2017 = vsel %vm1637, 1, 0
          %v2018 = vsel %vm1638, 1, 0
          %v2019 = vsel %vm1639, 1, 0
          %v2020 = vsel %vm1640, 1, 0
          %v2021 = vsel %vm1641, 1, 0
          %v2022 = vsel %vm1642, 1, 0
          %v2023 = vsel %vm1643, 1, 0
          %v2024 = vsel %vm1644, 1, 0
          %v2025 = vsel %vm1645, 1, 0
          %v2026 = vsel %vm1646, 1, 0
          %v2027 = vsel %vm1647, 1, 0
          %v2028 = vsel %vm1648, 1, 0
          %v2029 = vsel %vm1649, 1, 0
          %v2030 = vsel %vm1650, 1, 0
          %v2031 = vsel %vm1651, 1, 0
          %v2032 = vsel %vm1652, 1, 0
          %v2033 = vsel %vm1653, 1, 0
          %v2034 = vsel %vm1654, 1, 0
          %v2035 = vsel %vm1655, 1, 0
          %vm2036 = vcmp.eq.s32.totalorder %v2004, 1
          %vm2037 = vcmp.eq.s32.totalorder %v2005, 1
          %vm2038 = vcmp.eq.s32.totalorder %v2006, 1
          %vm2039 = vcmp.eq.s32.totalorder %v2007, 1
          %vm2040 = vcmp.eq.s32.totalorder %v2008, 1
          %vm2041 = vcmp.eq.s32.totalorder %v2009, 1
          %vm2042 = vcmp.eq.s32.totalorder %v2010, 1
          %vm2043 = vcmp.eq.s32.totalorder %v2011, 1
          %vm2044 = vcmp.eq.s32.totalorder %v2012, 1
          %vm2045 = vcmp.eq.s32.totalorder %v2013, 1
          %vm2046 = vcmp.eq.s32.totalorder %v2014, 1
          %vm2047 = vcmp.eq.s32.totalorder %v2015, 1
          %vm2048 = vcmp.eq.s32.totalorder %v2016, 1
          %vm2049 = vcmp.eq.s32.totalorder %v2017, 1
          %vm2050 = vcmp.eq.s32.totalorder %v2018, 1
          %vm2051 = vcmp.eq.s32.totalorder %v2019, 1
          %vm2052 = vcmp.eq.s32.totalorder %v2020, 1
          %vm2053 = vcmp.eq.s32.totalorder %v2021, 1
          %vm2054 = vcmp.eq.s32.totalorder %v2022, 1
          %vm2055 = vcmp.eq.s32.totalorder %v2023, 1
          %vm2056 = vcmp.eq.s32.totalorder %v2024, 1
          %vm2057 = vcmp.eq.s32.totalorder %v2025, 1
          %vm2058 = vcmp.eq.s32.totalorder %v2026, 1
          %vm2059 = vcmp.eq.s32.totalorder %v2027, 1
          %vm2060 = vcmp.eq.s32.totalorder %v2028, 1
          %vm2061 = vcmp.eq.s32.totalorder %v2029, 1
          %vm2062 = vcmp.eq.s32.totalorder %v2030, 1
          %vm2063 = vcmp.eq.s32.totalorder %v2031, 1
          %vm2064 = vcmp.eq.s32.totalorder %v2032, 1
          %vm2065 = vcmp.eq.s32.totalorder %v2033, 1
          %vm2066 = vcmp.eq.s32.totalorder %v2034, 1
          %vm2067 = vcmp.eq.s32.totalorder %v2035, 1
          %s2068 = sshll.u32 %s2003, 16
          %s2069 = sor.u32 %s2003, %s2068
          %v2070 = vstv %s2069
          %vm2072 = vmpackc.low %vm2036, %vm2036
          %vm2073 = vmpackc.low %vm2037, %vm2037
          %vm2074 = vmpackc.low %vm2038, %vm2038
          %vm2075 = vmpackc.low %vm2039, %vm2039
          %vm2076 = vmpackc.low %vm2040, %vm2040
          %vm2077 = vmpackc.low %vm2041, %vm2041
          %vm2078 = vmpackc.low %vm2042, %vm2042
          %vm2079 = vmpackc.low %vm2043, %vm2043
          %vm2080 = vmpackc.low %vm2044, %vm2044
          %vm2081 = vmpackc.low %vm2045, %vm2045
          %vm2082 = vmpackc.low %vm2046, %vm2046
          %vm2083 = vmpackc.low %vm2047, %vm2047
          %vm2084 = vmpackc.low %vm2048, %vm2048
          %vm2085 = vmpackc.low %vm2049, %vm2049
          %vm2086 = vmpackc.low %vm2050, %vm2050
          %vm2087 = vmpackc.low %vm2051, %vm2051
          %vm2088 = vmpackc.low %vm2052, %vm2052
          %vm2089 = vmpackc.low %vm2053, %vm2053
          %vm2090 = vmpackc.low %vm2054, %vm2054
          %vm2091 = vmpackc.low %vm2055, %vm2055
          %vm2092 = vmpackc.low %vm2056, %vm2056
          %vm2093 = vmpackc.low %vm2057, %vm2057
          %vm2094 = vmpackc.low %vm2058, %vm2058
          %vm2095 = vmpackc.low %vm2059, %vm2059
          %vm2096 = vmpackc.low %vm2060, %vm2060
          %vm2097 = vmpackc.low %vm2061, %vm2061
          %vm2098 = vmpackc.low %vm2062, %vm2062
          %vm2099 = vmpackc.low %vm2063, %vm2063
          %vm2100 = vmpackc.low %vm2064, %vm2064
          %vm2101 = vmpackc.low %vm2065, %vm2065
          %vm2102 = vmpackc.low %vm2066, %vm2066
          %vm2103 = vmpackc.low %vm2067, %vm2067
          %v2104 = vsel %vm2072, 65537, 0
          %v2105 = vsel %vm2073, 65537, 0
          %v2106 = vsel %vm2074, 65537, 0
          %v2107 = vsel %vm2075, 65537, 0
          %v2108 = vsel %vm2076, 65537, 0
          %v2109 = vsel %vm2077, 65537, 0
          %v2110 = vsel %vm2078, 65537, 0
          %v2111 = vsel %vm2079, 65537, 0
          %v2112 = vsel %vm2080, 65537, 0
          %v2113 = vsel %vm2081, 65537, 0
          %v2114 = vsel %vm2082, 65537, 0
          %v2115 = vsel %vm2083, 65537, 0
          %v2116 = vsel %vm2084, 65537, 0
          %v2117 = vsel %vm2085, 65537, 0
          %v2118 = vsel %vm2086, 65537, 0
          %v2119 = vsel %vm2087, 65537, 0
          %v2120 = vsel %vm2088, 65537, 0
          %v2121 = vsel %vm2089, 65537, 0
          %v2122 = vsel %vm2090, 65537, 0
          %v2123 = vsel %vm2091, 65537, 0
          %v2124 = vsel %vm2092, 65537, 0
          %v2125 = vsel %vm2093, 65537, 0
          %v2126 = vsel %vm2094, 65537, 0
          %v2127 = vsel %vm2095, 65537, 0
          %v2128 = vsel %vm2096, 65537, 0
          %v2129 = vsel %vm2097, 65537, 0
          %v2130 = vsel %vm2098, 65537, 0
          %v2131 = vsel %vm2099, 65537, 0
          %v2132 = vsel %vm2100, 65537, 0
          %v2133 = vsel %vm2101, 65537, 0
          %v2134 = vsel %vm2102, 65537, 0
          %v2135 = vsel %vm2103, 65537, 0
          %v2136 = vunpack.c.l.b16 %v2104
          %v2137 = vunpack.c.l.b16 %v2105
          %v2138 = vunpack.c.l.b16 %v2106
          %v2139 = vunpack.c.l.b16 %v2107
          %v2140 = vunpack.c.l.b16 %v2108
          %v2141 = vunpack.c.l.b16 %v2109
          %v2142 = vunpack.c.l.b16 %v2110
          %v2143 = vunpack.c.l.b16 %v2111
          %v2144 = vunpack.c.l.b16 %v2112
          %v2145 = vunpack.c.l.b16 %v2113
          %v2146 = vunpack.c.l.b16 %v2114
          %v2147 = vunpack.c.l.b16 %v2115
          %v2148 = vunpack.c.l.b16 %v2116
          %v2149 = vunpack.c.l.b16 %v2117
          %v2150 = vunpack.c.l.b16 %v2118
          %v2151 = vunpack.c.l.b16 %v2119
          %v2152 = vunpack.c.l.b16 %v2120
          %v2153 = vunpack.c.l.b16 %v2121
          %v2154 = vunpack.c.l.b16 %v2122
          %v2155 = vunpack.c.l.b16 %v2123
          %v2156 = vunpack.c.l.b16 %v2124
          %v2157 = vunpack.c.l.b16 %v2125
          %v2158 = vunpack.c.l.b16 %v2126
          %v2159 = vunpack.c.l.b16 %v2127
          %v2160 = vunpack.c.l.b16 %v2128
          %v2161 = vunpack.c.l.b16 %v2129
          %v2162 = vunpack.c.l.b16 %v2130
          %v2163 = vunpack.c.l.b16 %v2131
          %v2164 = vunpack.c.l.b16 %v2132
          %v2165 = vunpack.c.l.b16 %v2133
          %v2166 = vunpack.c.l.b16 %v2134
          %v2167 = vunpack.c.l.b16 %v2135
          %v2168 = vpack.c.b16 %v2137, %v2136
          %v2169 = vpack.c.b16 %v2139, %v2138
          %v2170 = vpack.c.b16 %v2141, %v2140
          %v2171 = vpack.c.b16 %v2143, %v2142
          %v2172 = vpack.c.b16 %v2145, %v2144
          %v2173 = vpack.c.b16 %v2147, %v2146
          %v2174 = vpack.c.b16 %v2149, %v2148
          %v2175 = vpack.c.b16 %v2151, %v2150
          %v2176 = vpack.c.b16 %v2153, %v2152
          %v2177 = vpack.c.b16 %v2155, %v2154
          %v2178 = vpack.c.b16 %v2157, %v2156
          %v2179 = vpack.c.b16 %v2159, %v2158
          %v2180 = vpack.c.b16 %v2161, %v2160
          %v2181 = vpack.c.b16 %v2163, %v2162
          %v2182 = vpack.c.b16 %v2165, %v2164
          %v2183 = vpack.c.b16 %v2167, %v2166
          %v2184 = vunpack.c.l.b16 %v2168
          %v2185 = vunpack.c.h.b16 %v2168
          %v2186 = vunpack.c.l.b16 0
          %v2187 = vunpack.c.h.b16 0
          %vm2188 = vcmp.ne.s32.totalorder %v2184, %v2186
          %vm2189 = vcmp.ne.s32.totalorder %v2185, %v2187
          %vm2190 = vmpackc.low %vm2189, %vm2188
          %v2191 = vunpack.c.l.b16 %v2169
          %v2192 = vunpack.c.h.b16 %v2169
          %v2193 = vunpack.c.l.b16 0
          %v2194 = vunpack.c.h.b16 0
          %vm2195 = vcmp.ne.s32.totalorder %v2191, %v2193
          %vm2196 = vcmp.ne.s32.totalorder %v2192, %v2194
          %vm2197 = vmpackc.low %vm2196, %vm2195
          %v2198 = vunpack.c.l.b16 %v2170
          %v2199 = vunpack.c.h.b16 %v2170
          %v2200 = vunpack.c.l.b16 0
          %v2201 = vunpack.c.h.b16 0
          %vm2202 = vcmp.ne.s32.totalorder %v2198, %v2200
          %vm2203 = vcmp.ne.s32.totalorder %v2199, %v2201
          %vm2204 = vmpackc.low %vm2203, %vm2202
          %v2205 = vunpack.c.l.b16 %v2171
          %v2206 = vunpack.c.h.b16 %v2171
          %v2207 = vunpack.c.l.b16 0
          %v2208 = vunpack.c.h.b16 0
          %vm2209 = vcmp.ne.s32.totalorder %v2205, %v2207
          %vm2210 = vcmp.ne.s32.totalorder %v2206, %v2208
          %vm2211 = vmpackc.low %vm2210, %vm2209
          %v2212 = vunpack.c.l.b16 %v2172
          %v2213 = vunpack.c.h.b16 %v2172
          %v2214 = vunpack.c.l.b16 0
          %v2215 = vunpack.c.h.b16 0
          %vm2216 = vcmp.ne.s32.totalorder %v2212, %v2214
          %vm2217 = vcmp.ne.s32.totalorder %v2213, %v2215
          %vm2218 = vmpackc.low %vm2217, %vm2216
          %v2219 = vunpack.c.l.b16 %v2173
          %v2220 = vunpack.c.h.b16 %v2173
          %v2221 = vunpack.c.l.b16 0
          %v2222 = vunpack.c.h.b16 0
          %vm2223 = vcmp.ne.s32.totalorder %v2219, %v2221
          %vm2224 = vcmp.ne.s32.totalorder %v2220, %v2222
          %vm2225 = vmpackc.low %vm2224, %vm2223
          %v2226 = vunpack.c.l.b16 %v2174
          %v2227 = vunpack.c.h.b16 %v2174
          %v2228 = vunpack.c.l.b16 0
          %v2229 = vunpack.c.h.b16 0
          %vm2230 = vcmp.ne.s32.totalorder %v2226, %v2228
          %vm2231 = vcmp.ne.s32.totalorder %v2227, %v2229
          %vm2232 = vmpackc.low %vm2231, %vm2230
          %v2233 = vunpack.c.l.b16 %v2175
          %v2234 = vunpack.c.h.b16 %v2175
          %v2235 = vunpack.c.l.b16 0
          %v2236 = vunpack.c.h.b16 0
          %vm2237 = vcmp.ne.s32.totalorder %v2233, %v2235
          %vm2238 = vcmp.ne.s32.totalorder %v2234, %v2236
          %vm2239 = vmpackc.low %vm2238, %vm2237
          %v2240 = vunpack.c.l.b16 %v2176
          %v2241 = vunpack.c.h.b16 %v2176
          %v2242 = vunpack.c.l.b16 0
          %v2243 = vunpack.c.h.b16 0
          %vm2244 = vcmp.ne.s32.totalorder %v2240, %v2242
          %vm2245 = vcmp.ne.s32.totalorder %v2241, %v2243
          %vm2246 = vmpackc.low %vm2245, %vm2244
          %v2247 = vunpack.c.l.b16 %v2177
          %v2248 = vunpack.c.h.b16 %v2177
          %v2249 = vunpack.c.l.b16 0
          %v2250 = vunpack.c.h.b16 0
          %vm2251 = vcmp.ne.s32.totalorder %v2247, %v2249
          %vm2252 = vcmp.ne.s32.totalorder %v2248, %v2250
          %vm2253 = vmpackc.low %vm2252, %vm2251
          %v2254 = vunpack.c.l.b16 %v2178
          %v2255 = vunpack.c.h.b16 %v2178
          %v2256 = vunpack.c.l.b16 0
          %v2257 = vunpack.c.h.b16 0
          %vm2258 = vcmp.ne.s32.totalorder %v2254, %v2256
          %vm2259 = vcmp.ne.s32.totalorder %v2255, %v2257
          %vm2260 = vmpackc.low %vm2259, %vm2258
          %v2261 = vunpack.c.l.b16 %v2179
          %v2262 = vunpack.c.h.b16 %v2179
          %v2263 = vunpack.c.l.b16 0
          %v2264 = vunpack.c.h.b16 0
          %vm2265 = vcmp.ne.s32.totalorder %v2261, %v2263
          %vm2266 = vcmp.ne.s32.totalorder %v2262, %v2264
          %vm2267 = vmpackc.low %vm2266, %vm2265
          %v2268 = vunpack.c.l.b16 %v2180
          %v2269 = vunpack.c.h.b16 %v2180
          %v2270 = vunpack.c.l.b16 0
          %v2271 = vunpack.c.h.b16 0
          %vm2272 = vcmp.ne.s32.totalorder %v2268, %v2270
          %vm2273 = vcmp.ne.s32.totalorder %v2269, %v2271
          %vm2274 = vmpackc.low %vm2273, %vm2272
          %v2275 = vunpack.c.l.b16 %v2181
          %v2276 = vunpack.c.h.b16 %v2181
          %v2277 = vunpack.c.l.b16 0
          %v2278 = vunpack.c.h.b16 0
          %vm2279 = vcmp.ne.s32.totalorder %v2275, %v2277
          %vm2280 = vcmp.ne.s32.totalorder %v2276, %v2278
          %vm2281 = vmpackc.low %vm2280, %vm2279
          %v2282 = vunpack.c.l.b16 %v2182
          %v2283 = vunpack.c.h.b16 %v2182
          %v2284 = vunpack.c.l.b16 0
          %v2285 = vunpack.c.h.b16 0
          %vm2286 = vcmp.ne.s32.totalorder %v2282, %v2284
          %vm2287 = vcmp.ne.s32.totalorder %v2283, %v2285
          %vm2288 = vmpackc.low %vm2287, %vm2286
          %v2289 = vunpack.c.l.b16 %v2183
          %v2290 = vunpack.c.h.b16 %v2183
          %v2291 = vunpack.c.l.b16 0
          %v2292 = vunpack.c.h.b16 0
          %vm2293 = vcmp.ne.s32.totalorder %v2289, %v2291
          %vm2294 = vcmp.ne.s32.totalorder %v2290, %v2292
          %vm2295 = vmpackc.low %vm2294, %vm2293
          %v2296 = vsel %vm2190, %v1993, %v2070
          %v2297 = vsel %vm2197, %v1862, %v2070
          %v2298 = vsel %vm2204, %v1870, %v2070
          %v2299 = vsel %vm2211, %v1878, %v2070
          %v2300 = vsel %vm2218, %v1886, %v2070
          %v2301 = vsel %vm2225, %v1894, %v2070
          %v2302 = vsel %vm2232, %v1902, %v2070
          %v2303 = vsel %vm2239, %v1910, %v2070
          %v2304 = vsel %vm2246, %v1918, %v2070
          %v2305 = vsel %vm2253, %v1926, %v2070
          %v2306 = vsel %vm2260, %v1934, %v2070
          %v2307 = vsel %vm2267, %v1942, %v2070
          %v2308 = vsel %vm2274, %v1950, %v2070
          %v2309 = vsel %vm2281, %v1958, %v2070
          %v2310 = vsel %vm2288, %v1966, %v2070
          %v2311 = vsel %vm2295, %v1974, %v2070
          %v2312 = vunpack.c.l.bf16 %v1175
          %v2313 = vunpack.c.l.bf16 %v1176
          %v2314 = vunpack.c.l.bf16 %v1177
          %v2315 = vunpack.c.l.bf16 %v1178
          %v2316 = vunpack.c.l.bf16 %v1179
          %v2317 = vunpack.c.l.bf16 %v1180
          %v2318 = vunpack.c.l.bf16 %v1181
          %v2319 = vunpack.c.l.bf16 %v1182
          %v2320 = vunpack.c.l.bf16 %v1183
          %v2321 = vunpack.c.l.bf16 %v1184
          %v2322 = vunpack.c.l.bf16 %v1185
          %v2323 = vunpack.c.l.bf16 %v1186
          %v2324 = vunpack.c.l.bf16 %v1187
          %v2325 = vunpack.c.l.bf16 %v1188
          %v2326 = vunpack.c.l.bf16 %v1189
          %v2327 = vunpack.c.l.bf16 %v1190
          %v2328 = vunpack.c.l.bf16 %v1191
          %v2329 = vunpack.c.l.bf16 %v1192
          %v2330 = vunpack.c.l.bf16 %v1193
          %v2331 = vunpack.c.l.bf16 %v1194
          %v2332 = vunpack.c.l.bf16 %v1195
          %v2333 = vunpack.c.l.bf16 %v1196
          %v2334 = vunpack.c.l.bf16 %v1197
          %v2335 = vunpack.c.l.bf16 %v1198
          %v2336 = vunpack.c.l.bf16 %v1199
          %v2337 = vunpack.c.l.bf16 %v1200
          %v2338 = vunpack.c.l.bf16 %v1201
          %v2339 = vunpack.c.l.bf16 %v1202
          %v2340 = vunpack.c.l.bf16 %v1203
          %v2341 = vunpack.c.l.bf16 %v1204
          %v2342 = vunpack.c.l.bf16 %v1205
          %v2343 = vunpack.c.l.bf16 %v1206
          %v2344 = vunpack.c.l.bf16 %v2296
          %v2345 = vunpack.c.h.bf16 %v2296
          %v2346 = vunpack.c.l.bf16 %v2297
          %v2347 = vunpack.c.h.bf16 %v2297
          %v2348 = vunpack.c.l.bf16 %v2298
          %v2349 = vunpack.c.h.bf16 %v2298
          %v2350 = vunpack.c.l.bf16 %v2299
          %v2351 = vunpack.c.h.bf16 %v2299
          %v2352 = vunpack.c.l.bf16 %v2300
          %v2353 = vunpack.c.h.bf16 %v2300
          %v2354 = vunpack.c.l.bf16 %v2301
          %v2355 = vunpack.c.h.bf16 %v2301
          %v2356 = vunpack.c.l.bf16 %v2302
          %v2357 = vunpack.c.h.bf16 %v2302
          %v2358 = vunpack.c.l.bf16 %v2303
          %v2359 = vunpack.c.h.bf16 %v2303
          %v2360 = vunpack.c.l.bf16 %v2304
          %v2361 = vunpack.c.h.bf16 %v2304
          %v2362 = vunpack.c.l.bf16 %v2305
          %v2363 = vunpack.c.h.bf16 %v2305
          %v2364 = vunpack.c.l.bf16 %v2306
          %v2365 = vunpack.c.h.bf16 %v2306
          %v2366 = vunpack.c.l.bf16 %v2307
          %v2367 = vunpack.c.h.bf16 %v2307
          %v2368 = vunpack.c.l.bf16 %v2308
          %v2369 = vunpack.c.h.bf16 %v2308
          %v2370 = vunpack.c.l.bf16 %v2309
          %v2371 = vunpack.c.h.bf16 %v2309
          %v2372 = vunpack.c.l.bf16 %v2310
          %v2373 = vunpack.c.h.bf16 %v2310
          %v2374 = vunpack.c.l.bf16 %v2311
          %v2375 = vunpack.c.h.bf16 %v2311
          %v2376 = vmax.f32 %v2312, %v2344
          %v2377 = vmax.f32 %v2313, %v2345
          %v2378 = vmax.f32 %v2314, %v2346
          %v2379 = vmax.f32 %v2315, %v2347
          %v2380 = vmax.f32 %v2316, %v2348
          %v2381 = vmax.f32 %v2317, %v2349
          %v2382 = vmax.f32 %v2318, %v2350
          %v2383 = vmax.f32 %v2319, %v2351
          %v2384 = vmax.f32 %v2320, %v2352
          %v2385 = vmax.f32 %v2321, %v2353
          %v2386 = vmax.f32 %v2322, %v2354
          %v2387 = vmax.f32 %v2323, %v2355
          %v2388 = vmax.f32 %v2324, %v2356
          %v2389 = vmax.f32 %v2325, %v2357
          %v2390 = vmax.f32 %v2326, %v2358
          %v2391 = vmax.f32 %v2327, %v2359
          %v2392 = vmax.f32 %v2328, %v2360
          %v2393 = vmax.f32 %v2329, %v2361
          %v2394 = vmax.f32 %v2330, %v2362
          %v2395 = vmax.f32 %v2331, %v2363
          %v2396 = vmax.f32 %v2332, %v2364
          %v2397 = vmax.f32 %v2333, %v2365
          %v2398 = vmax.f32 %v2334, %v2366
          %v2399 = vmax.f32 %v2335, %v2367
          %v2400 = vmax.f32 %v2336, %v2368
          %v2401 = vmax.f32 %v2337, %v2369
          %v2402 = vmax.f32 %v2338, %v2370
          %v2403 = vmax.f32 %v2339, %v2371
          %v2404 = vmax.f32 %v2340, %v2372
          %v2405 = vmax.f32 %v2341, %v2373
          %v2406 = vmax.f32 %v2342, %v2374
          %v2407 = vmax.f32 %v2343, %v2375
          %v2408 = vpack.c.bf16 %v2376, %v2376
          %v2409 = vpack.c.bf16 %v2377, %v2377
          %v2410 = vpack.c.bf16 %v2378, %v2378
          %v2411 = vpack.c.bf16 %v2379, %v2379
          %v2412 = vpack.c.bf16 %v2380, %v2380
          %v2413 = vpack.c.bf16 %v2381, %v2381
          %v2414 = vpack.c.bf16 %v2382, %v2382
          %v2415 = vpack.c.bf16 %v2383, %v2383
          %v2416 = vpack.c.bf16 %v2384, %v2384
          %v2417 = vpack.c.bf16 %v2385, %v2385
          %v2418 = vpack.c.bf16 %v2386, %v2386
          %v2419 = vpack.c.bf16 %v2387, %v2387
          %v2420 = vpack.c.bf16 %v2388, %v2388
          %v2421 = vpack.c.bf16 %v2389, %v2389
          %v2422 = vpack.c.bf16 %v2390, %v2390
          %v2423 = vpack.c.bf16 %v2391, %v2391
          %v2424 = vpack.c.bf16 %v2392, %v2392
          %v2425 = vpack.c.bf16 %v2393, %v2393
          %v2426 = vpack.c.bf16 %v2394, %v2394
          %v2427 = vpack.c.bf16 %v2395, %v2395
          %v2428 = vpack.c.bf16 %v2396, %v2396
          %v2429 = vpack.c.bf16 %v2397, %v2397
          %v2430 = vpack.c.bf16 %v2398, %v2398
          %v2431 = vpack.c.bf16 %v2399, %v2399
          %v2432 = vpack.c.bf16 %v2400, %v2400
          %v2433 = vpack.c.bf16 %v2401, %v2401
          %v2434 = vpack.c.bf16 %v2402, %v2402
          %v2435 = vpack.c.bf16 %v2403, %v2403
          %v2436 = vpack.c.bf16 %v2404, %v2404
          %v2437 = vpack.c.bf16 %v2405, %v2405
          %v2438 = vpack.c.bf16 %v2406, %v2406
          %v2439 = vpack.c.bf16 %v2407, %v2407
          %v2440 = vrot.slane %v1763, 3
          %v2441 = vrot.slane %v1831, 7
          %v2442 = vrot.slane %v1832, 7
          %v2443 = vsel %vm1991, %v2441, %v2442
          %v2444 = vrot.slane %v1833, 7
          %v2445 = vsel %vm1991, %v2442, %v2444
          %v2446 = vrot.slane %v1834, 7
          %v2447 = vsel %vm1991, %v2444, %v2446
          %v2448 = vrot.slane %v1835, 7
          %v2449 = vsel %vm1991, %v2446, %v2448
          %v2450 = vrot.slane %v1836, 7
          %v2451 = vsel %vm1991, %v2448, %v2450
          %v2452 = vrot.slane %v1837, 7
          %v2453 = vsel %vm1991, %v2450, %v2452
          %v2454 = vrot.slane %v1838, 7
          %v2455 = vsel %vm1991, %v2452, %v2454
          %v2456 = vrot.slane %v1839, 7
          %v2457 = vsel %vm1991, %v2454, %v2456
          %v2458 = vrot.slane %v1840, 7
          %v2459 = vsel %vm1991, %v2456, %v2458
          %v2460 = vrot.slane %v1841, 7
          %v2461 = vsel %vm1991, %v2458, %v2460
          %v2462 = vrot.slane %v1842, 7
          %v2463 = vsel %vm1991, %v2460, %v2462
          %v2464 = vrot.slane %v1843, 7
          %v2465 = vsel %vm1991, %v2462, %v2464
          %v2466 = vrot.slane %v1844, 7
          %v2467 = vsel %vm1991, %v2464, %v2466
          %v2468 = vrot.slane %v1845, 7
          %v2469 = vsel %vm1991, %v2466, %v2468
          %v2470 = vrot.slane %v1846, 7
          %v2471 = vsel %vm1991, %v2468, %v2470
          %vm2487 = vcmask 1040384
          %v2490 = vsel %vm2487, %v2440, %v2441
          %v2492 = vsel %vm1656, 1, 0
          %v2493 = vsel %vm1657, 1, 0
          %v2494 = vsel %vm1658, 1, 0
          %v2495 = vsel %vm1659, 1, 0
          %v2496 = vsel %vm1660, 1, 0
          %v2497 = vsel %vm1661, 1, 0
          %v2498 = vsel %vm1662, 1, 0
          %v2499 = vsel %vm1663, 1, 0
          %v2500 = vsel %vm1664, 1, 0
          %v2501 = vsel %vm1665, 1, 0
          %v2502 = vsel %vm1666, 1, 0
          %v2503 = vsel %vm1667, 1, 0
          %v2504 = vsel %vm1668, 1, 0
          %v2505 = vsel %vm1669, 1, 0
          %v2506 = vsel %vm1670, 1, 0
          %v2507 = vsel %vm1671, 1, 0
          %v2508 = vsel %vm1672, 1, 0
          %v2509 = vsel %vm1673, 1, 0
          %v2510 = vsel %vm1674, 1, 0
          %v2511 = vsel %vm1675, 1, 0
          %v2512 = vsel %vm1676, 1, 0
          %v2513 = vsel %vm1677, 1, 0
          %v2514 = vsel %vm1678, 1, 0
          %v2515 = vsel %vm1679, 1, 0
          %v2516 = vsel %vm1680, 1, 0
          %v2517 = vsel %vm1681, 1, 0
          %v2518 = vsel %vm1682, 1, 0
          %v2519 = vsel %vm1683, 1, 0
          %v2520 = vsel %vm1684, 1, 0
          %v2521 = vsel %vm1685, 1, 0
          %v2522 = vsel %vm1686, 1, 0
          %v2523 = vsel %vm1687, 1, 0
          %vm2524 = vcmp.eq.s32.totalorder %v2492, 1
          %vm2525 = vcmp.eq.s32.totalorder %v2493, 1
          %vm2526 = vcmp.eq.s32.totalorder %v2494, 1
          %vm2527 = vcmp.eq.s32.totalorder %v2495, 1
          %vm2528 = vcmp.eq.s32.totalorder %v2496, 1
          %vm2529 = vcmp.eq.s32.totalorder %v2497, 1
          %vm2530 = vcmp.eq.s32.totalorder %v2498, 1
          %vm2531 = vcmp.eq.s32.totalorder %v2499, 1
          %vm2532 = vcmp.eq.s32.totalorder %v2500, 1
          %vm2533 = vcmp.eq.s32.totalorder %v2501, 1
          %vm2534 = vcmp.eq.s32.totalorder %v2502, 1
          %vm2535 = vcmp.eq.s32.totalorder %v2503, 1
          %vm2536 = vcmp.eq.s32.totalorder %v2504, 1
          %vm2537 = vcmp.eq.s32.totalorder %v2505, 1
          %vm2538 = vcmp.eq.s32.totalorder %v2506, 1
          %vm2539 = vcmp.eq.s32.totalorder %v2507, 1
          %vm2540 = vcmp.eq.s32.totalorder %v2508, 1
          %vm2541 = vcmp.eq.s32.totalorder %v2509, 1
          %vm2542 = vcmp.eq.s32.totalorder %v2510, 1
          %vm2543 = vcmp.eq.s32.totalorder %v2511, 1
          %vm2544 = vcmp.eq.s32.totalorder %v2512, 1
          %vm2545 = vcmp.eq.s32.totalorder %v2513, 1
          %vm2546 = vcmp.eq.s32.totalorder %v2514, 1
          %vm2547 = vcmp.eq.s32.totalorder %v2515, 1
          %vm2548 = vcmp.eq.s32.totalorder %v2516, 1
          %vm2549 = vcmp.eq.s32.totalorder %v2517, 1
          %vm2550 = vcmp.eq.s32.totalorder %v2518, 1
          %vm2551 = vcmp.eq.s32.totalorder %v2519, 1
          %vm2552 = vcmp.eq.s32.totalorder %v2520, 1
          %vm2553 = vcmp.eq.s32.totalorder %v2521, 1
          %vm2554 = vcmp.eq.s32.totalorder %v2522, 1
          %vm2555 = vcmp.eq.s32.totalorder %v2523, 1
          %vm2556 = vmpackc.low %vm2524, %vm2524
          %vm2557 = vmpackc.low %vm2525, %vm2525
          %vm2558 = vmpackc.low %vm2526, %vm2526
          %vm2559 = vmpackc.low %vm2527, %vm2527
          %vm2560 = vmpackc.low %vm2528, %vm2528
          %vm2561 = vmpackc.low %vm2529, %vm2529
          %vm2562 = vmpackc.low %vm2530, %vm2530
          %vm2563 = vmpackc.low %vm2531, %vm2531
          %vm2564 = vmpackc.low %vm2532, %vm2532
          %vm2565 = vmpackc.low %vm2533, %vm2533
          %vm2566 = vmpackc.low %vm2534, %vm2534
          %vm2567 = vmpackc.low %vm2535, %vm2535
          %vm2568 = vmpackc.low %vm2536, %vm2536
          %vm2569 = vmpackc.low %vm2537, %vm2537
          %vm2570 = vmpackc.low %vm2538, %vm2538
          %vm2571 = vmpackc.low %vm2539, %vm2539
          %vm2572 = vmpackc.low %vm2540, %vm2540
          %vm2573 = vmpackc.low %vm2541, %vm2541
          %vm2574 = vmpackc.low %vm2542, %vm2542
          %vm2575 = vmpackc.low %vm2543, %vm2543
          %vm2576 = vmpackc.low %vm2544, %vm2544
          %vm2577 = vmpackc.low %vm2545, %vm2545
          %vm2578 = vmpackc.low %vm2546, %vm2546
          %vm2579 = vmpackc.low %vm2547, %vm2547
          %vm2580 = vmpackc.low %vm2548, %vm2548
          %vm2581 = vmpackc.low %vm2549, %vm2549
          %vm2582 = vmpackc.low %vm2550, %vm2550
          %vm2583 = vmpackc.low %vm2551, %vm2551
          %vm2584 = vmpackc.low %vm2552, %vm2552
          %vm2585 = vmpackc.low %vm2553, %vm2553
          %vm2586 = vmpackc.low %vm2554, %vm2554
          %vm2587 = vmpackc.low %vm2555, %vm2555
          %v2588 = vsel %vm2556, 65537, 0
          %v2589 = vsel %vm2557, 65537, 0
          %v2590 = vsel %vm2558, 65537, 0
          %v2591 = vsel %vm2559, 65537, 0
          %v2592 = vsel %vm2560, 65537, 0
          %v2593 = vsel %vm2561, 65537, 0
          %v2594 = vsel %vm2562, 65537, 0
          %v2595 = vsel %vm2563, 65537, 0
          %v2596 = vsel %vm2564, 65537, 0
          %v2597 = vsel %vm2565, 65537, 0
          %v2598 = vsel %vm2566, 65537, 0
          %v2599 = vsel %vm2567, 65537, 0
          %v2600 = vsel %vm2568, 65537, 0
          %v2601 = vsel %vm2569, 65537, 0
          %v2602 = vsel %vm2570, 65537, 0
          %v2603 = vsel %vm2571, 65537, 0
          %v2604 = vsel %vm2572, 65537, 0
          %v2605 = vsel %vm2573, 65537, 0
          %v2606 = vsel %vm2574, 65537, 0
          %v2607 = vsel %vm2575, 65537, 0
          %v2608 = vsel %vm2576, 65537, 0
          %v2609 = vsel %vm2577, 65537, 0
          %v2610 = vsel %vm2578, 65537, 0
          %v2611 = vsel %vm2579, 65537, 0
          %v2612 = vsel %vm2580, 65537, 0
          %v2613 = vsel %vm2581, 65537, 0
          %v2614 = vsel %vm2582, 65537, 0
          %v2615 = vsel %vm2583, 65537, 0
          %v2616 = vsel %vm2584, 65537, 0
          %v2617 = vsel %vm2585, 65537, 0
          %v2618 = vsel %vm2586, 65537, 0
          %v2619 = vsel %vm2587, 65537, 0
          %v2620 = vunpack.c.l.b16 %v2588
          %v2621 = vunpack.c.l.b16 %v2589
          %v2622 = vunpack.c.l.b16 %v2590
          %v2623 = vunpack.c.l.b16 %v2591
          %v2624 = vunpack.c.l.b16 %v2592
          %v2625 = vunpack.c.l.b16 %v2593
          %v2626 = vunpack.c.l.b16 %v2594
          %v2627 = vunpack.c.l.b16 %v2595
          %v2628 = vunpack.c.l.b16 %v2596
          %v2629 = vunpack.c.l.b16 %v2597
          %v2630 = vunpack.c.l.b16 %v2598
          %v2631 = vunpack.c.l.b16 %v2599
          %v2632 = vunpack.c.l.b16 %v2600
          %v2633 = vunpack.c.l.b16 %v2601
          %v2634 = vunpack.c.l.b16 %v2602
          %v2635 = vunpack.c.l.b16 %v2603
          %v2636 = vunpack.c.l.b16 %v2604
          %v2637 = vunpack.c.l.b16 %v2605
          %v2638 = vunpack.c.l.b16 %v2606
          %v2639 = vunpack.c.l.b16 %v2607
          %v2640 = vunpack.c.l.b16 %v2608
          %v2641 = vunpack.c.l.b16 %v2609
          %v2642 = vunpack.c.l.b16 %v2610
          %v2643 = vunpack.c.l.b16 %v2611
          %v2644 = vunpack.c.l.b16 %v2612
          %v2645 = vunpack.c.l.b16 %v2613
          %v2646 = vunpack.c.l.b16 %v2614
          %v2647 = vunpack.c.l.b16 %v2615
          %v2648 = vunpack.c.l.b16 %v2616
          %v2649 = vunpack.c.l.b16 %v2617
          %v2650 = vunpack.c.l.b16 %v2618
          %v2651 = vunpack.c.l.b16 %v2619
          %v2652 = vpack.c.b16 %v2621, %v2620
          %v2653 = vpack.c.b16 %v2623, %v2622
          %v2654 = vpack.c.b16 %v2625, %v2624
          %v2655 = vpack.c.b16 %v2627, %v2626
          %v2656 = vpack.c.b16 %v2629, %v2628
          %v2657 = vpack.c.b16 %v2631, %v2630
          %v2658 = vpack.c.b16 %v2633, %v2632
          %v2659 = vpack.c.b16 %v2635, %v2634
          %v2660 = vpack.c.b16 %v2637, %v2636
          %v2661 = vpack.c.b16 %v2639, %v2638
          %v2662 = vpack.c.b16 %v2641, %v2640
          %v2663 = vpack.c.b16 %v2643, %v2642
          %v2664 = vpack.c.b16 %v2645, %v2644
          %v2665 = vpack.c.b16 %v2647, %v2646
          %v2666 = vpack.c.b16 %v2649, %v2648
          %v2667 = vpack.c.b16 %v2651, %v2650
          %v2668 = vunpack.c.l.b16 %v2652
          %v2669 = vunpack.c.h.b16 %v2652
          %v2670 = vunpack.c.l.b16 0
          %v2671 = vunpack.c.h.b16 0
          %vm2672 = vcmp.ne.s32.totalorder %v2668, %v2670
          %vm2673 = vcmp.ne.s32.totalorder %v2669, %v2671
          %vm2674 = vmpackc.low %vm2673, %vm2672
          %v2675 = vunpack.c.l.b16 %v2653
          %v2676 = vunpack.c.h.b16 %v2653
          %v2677 = vunpack.c.l.b16 0
          %v2678 = vunpack.c.h.b16 0
          %vm2679 = vcmp.ne.s32.totalorder %v2675, %v2677
          %vm2680 = vcmp.ne.s32.totalorder %v2676, %v2678
          %vm2681 = vmpackc.low %vm2680, %vm2679
          %v2682 = vunpack.c.l.b16 %v2654
          %v2683 = vunpack.c.h.b16 %v2654
          %v2684 = vunpack.c.l.b16 0
          %v2685 = vunpack.c.h.b16 0
          %vm2686 = vcmp.ne.s32.totalorder %v2682, %v2684
          %vm2687 = vcmp.ne.s32.totalorder %v2683, %v2685
          %vm2688 = vmpackc.low %vm2687, %vm2686
          %v2689 = vunpack.c.l.b16 %v2655
          %v2690 = vunpack.c.h.b16 %v2655
          %v2691 = vunpack.c.l.b16 0
          %v2692 = vunpack.c.h.b16 0
          %vm2693 = vcmp.ne.s32.totalorder %v2689, %v2691
          %vm2694 = vcmp.ne.s32.totalorder %v2690, %v2692
          %vm2695 = vmpackc.low %vm2694, %vm2693
          %v2696 = vunpack.c.l.b16 %v2656
          %v2697 = vunpack.c.h.b16 %v2656
          %v2698 = vunpack.c.l.b16 0
          %v2699 = vunpack.c.h.b16 0
          %vm2700 = vcmp.ne.s32.totalorder %v2696, %v2698
          %vm2701 = vcmp.ne.s32.totalorder %v2697, %v2699
          %vm2702 = vmpackc.low %vm2701, %vm2700
          %v2703 = vunpack.c.l.b16 %v2657
          %v2704 = vunpack.c.h.b16 %v2657
          %v2705 = vunpack.c.l.b16 0
          %v2706 = vunpack.c.h.b16 0
          %vm2707 = vcmp.ne.s32.totalorder %v2703, %v2705
          %vm2708 = vcmp.ne.s32.totalorder %v2704, %v2706
          %vm2709 = vmpackc.low %vm2708, %vm2707
          %v2710 = vunpack.c.l.b16 %v2658
          %v2711 = vunpack.c.h.b16 %v2658
          %v2712 = vunpack.c.l.b16 0
          %v2713 = vunpack.c.h.b16 0
          %vm2714 = vcmp.ne.s32.totalorder %v2710, %v2712
          %vm2715 = vcmp.ne.s32.totalorder %v2711, %v2713
          %vm2716 = vmpackc.low %vm2715, %vm2714
          %v2717 = vunpack.c.l.b16 %v2659
          %v2718 = vunpack.c.h.b16 %v2659
          %v2719 = vunpack.c.l.b16 0
          %v2720 = vunpack.c.h.b16 0
          %vm2721 = vcmp.ne.s32.totalorder %v2717, %v2719
          %vm2722 = vcmp.ne.s32.totalorder %v2718, %v2720
          %vm2723 = vmpackc.low %vm2722, %vm2721
          %v2724 = vunpack.c.l.b16 %v2660
          %v2725 = vunpack.c.h.b16 %v2660
          %v2726 = vunpack.c.l.b16 0
          %v2727 = vunpack.c.h.b16 0
          %vm2728 = vcmp.ne.s32.totalorder %v2724, %v2726
          %vm2729 = vcmp.ne.s32.totalorder %v2725, %v2727
          %vm2730 = vmpackc.low %vm2729, %vm2728
          %v2731 = vunpack.c.l.b16 %v2661
          %v2732 = vunpack.c.h.b16 %v2661
          %v2733 = vunpack.c.l.b16 0
          %v2734 = vunpack.c.h.b16 0
          %vm2735 = vcmp.ne.s32.totalorder %v2731, %v2733
          %vm2736 = vcmp.ne.s32.totalorder %v2732, %v2734
          %vm2737 = vmpackc.low %vm2736, %vm2735
          %v2738 = vunpack.c.l.b16 %v2662
          %v2739 = vunpack.c.h.b16 %v2662
          %v2740 = vunpack.c.l.b16 0
          %v2741 = vunpack.c.h.b16 0
          %vm2742 = vcmp.ne.s32.totalorder %v2738, %v2740
          %vm2743 = vcmp.ne.s32.totalorder %v2739, %v2741
          %vm2744 = vmpackc.low %vm2743, %vm2742
          %v2745 = vunpack.c.l.b16 %v2663
          %v2746 = vunpack.c.h.b16 %v2663
          %v2747 = vunpack.c.l.b16 0
          %v2748 = vunpack.c.h.b16 0
          %vm2749 = vcmp.ne.s32.totalorder %v2745, %v2747
          %vm2750 = vcmp.ne.s32.totalorder %v2746, %v2748
          %vm2751 = vmpackc.low %vm2750, %vm2749
          %v2752 = vunpack.c.l.b16 %v2664
          %v2753 = vunpack.c.h.b16 %v2664
          %v2754 = vunpack.c.l.b16 0
          %v2755 = vunpack.c.h.b16 0
          %vm2756 = vcmp.ne.s32.totalorder %v2752, %v2754
          %vm2757 = vcmp.ne.s32.totalorder %v2753, %v2755
          %vm2758 = vmpackc.low %vm2757, %vm2756
          %v2759 = vunpack.c.l.b16 %v2665
          %v2760 = vunpack.c.h.b16 %v2665
          %v2761 = vunpack.c.l.b16 0
          %v2762 = vunpack.c.h.b16 0
          %vm2763 = vcmp.ne.s32.totalorder %v2759, %v2761
          %vm2764 = vcmp.ne.s32.totalorder %v2760, %v2762
          %vm2765 = vmpackc.low %vm2764, %vm2763
          %v2766 = vunpack.c.l.b16 %v2666
          %v2767 = vunpack.c.h.b16 %v2666
          %v2768 = vunpack.c.l.b16 0
          %v2769 = vunpack.c.h.b16 0
          %vm2770 = vcmp.ne.s32.totalorder %v2766, %v2768
          %vm2771 = vcmp.ne.s32.totalorder %v2767, %v2769
          %vm2772 = vmpackc.low %vm2771, %vm2770
          %v2773 = vunpack.c.l.b16 %v2667
          %v2774 = vunpack.c.h.b16 %v2667
          %v2775 = vunpack.c.l.b16 0
          %v2776 = vunpack.c.h.b16 0
          %vm2777 = vcmp.ne.s32.totalorder %v2773, %v2775
          %vm2778 = vcmp.ne.s32.totalorder %v2774, %v2776
          %vm2779 = vmpackc.low %vm2778, %vm2777
          %v2780 = vsel %vm2674, %v2490, %v2070
          %v2781 = vsel %vm2681, %v2443, %v2070
          %v2782 = vsel %vm2688, %v2445, %v2070
          %v2783 = vsel %vm2695, %v2447, %v2070
          %v2784 = vsel %vm2702, %v2449, %v2070
          %v2785 = vsel %vm2709, %v2451, %v2070
          %v2786 = vsel %vm2716, %v2453, %v2070
          %v2787 = vsel %vm2723, %v2455, %v2070
          %v2788 = vsel %vm2730, %v2457, %v2070
          %v2789 = vsel %vm2737, %v2459, %v2070
          %v2790 = vsel %vm2744, %v2461, %v2070
          %v2791 = vsel %vm2751, %v2463, %v2070
          %v2792 = vsel %vm2758, %v2465, %v2070
          %v2793 = vsel %vm2765, %v2467, %v2070
          %v2794 = vsel %vm2772, %v2469, %v2070
          %v2795 = vsel %vm2779, %v2471, %v2070
          %v2796 = vunpack.c.l.bf16 %v2408
          %v2797 = vunpack.c.l.bf16 %v2409
          %v2798 = vunpack.c.l.bf16 %v2410
          %v2799 = vunpack.c.l.bf16 %v2411
          %v2800 = vunpack.c.l.bf16 %v2412
          %v2801 = vunpack.c.l.bf16 %v2413
          %v2802 = vunpack.c.l.bf16 %v2414
          %v2803 = vunpack.c.l.bf16 %v2415
          %v2804 = vunpack.c.l.bf16 %v2416
          %v2805 = vunpack.c.l.bf16 %v2417
          %v2806 = vunpack.c.l.bf16 %v2418
          %v2807 = vunpack.c.l.bf16 %v2419
          %v2808 = vunpack.c.l.bf16 %v2420
          %v2809 = vunpack.c.l.bf16 %v2421
          %v2810 = vunpack.c.l.bf16 %v2422
          %v2811 = vunpack.c.l.bf16 %v2423
          %v2812 = vunpack.c.l.bf16 %v2424
          %v2813 = vunpack.c.l.bf16 %v2425
          %v2814 = vunpack.c.l.bf16 %v2426
          %v2815 = vunpack.c.l.bf16 %v2427
          %v2816 = vunpack.c.l.bf16 %v2428
          %v2817 = vunpack.c.l.bf16 %v2429
          %v2818 = vunpack.c.l.bf16 %v2430
          %v2819 = vunpack.c.l.bf16 %v2431
          %v2820 = vunpack.c.l.bf16 %v2432
          %v2821 = vunpack.c.l.bf16 %v2433
          %v2822 = vunpack.c.l.bf16 %v2434
          %v2823 = vunpack.c.l.bf16 %v2435
          %v2824 = vunpack.c.l.bf16 %v2436
          %v2825 = vunpack.c.l.bf16 %v2437
          %v2826 = vunpack.c.l.bf16 %v2438
          %v2827 = vunpack.c.l.bf16 %v2439
          %v2828 = vunpack.c.l.bf16 %v2780
          %v2829 = vunpack.c.h.bf16 %v2780
          %v2830 = vunpack.c.l.bf16 %v2781
          %v2831 = vunpack.c.h.bf16 %v2781
          %v2832 = vunpack.c.l.bf16 %v2782
          %v2833 = vunpack.c.h.bf16 %v2782
          %v2834 = vunpack.c.l.bf16 %v2783
          %v2835 = vunpack.c.h.bf16 %v2783
          %v2836 = vunpack.c.l.bf16 %v2784
          %v2837 = vunpack.c.h.bf16 %v2784
          %v2838 = vunpack.c.l.bf16 %v2785
          %v2839 = vunpack.c.h.bf16 %v2785
          %v2840 = vunpack.c.l.bf16 %v2786
          %v2841 = vunpack.c.h.bf16 %v2786
          %v2842 = vunpack.c.l.bf16 %v2787
          %v2843 = vunpack.c.h.bf16 %v2787
          %v2844 = vunpack.c.l.bf16 %v2788
          %v2845 = vunpack.c.h.bf16 %v2788
          %v2846 = vunpack.c.l.bf16 %v2789
          %v2847 = vunpack.c.h.bf16 %v2789
          %v2848 = vunpack.c.l.bf16 %v2790
          %v2849 = vunpack.c.h.bf16 %v2790
          %v2850 = vunpack.c.l.bf16 %v2791
          %v2851 = vunpack.c.h.bf16 %v2791
          %v2852 = vunpack.c.l.bf16 %v2792
          %v2853 = vunpack.c.h.bf16 %v2792
          %v2854 = vunpack.c.l.bf16 %v2793
          %v2855 = vunpack.c.h.bf16 %v2793
          %v2856 = vunpack.c.l.bf16 %v2794
          %v2857 = vunpack.c.h.bf16 %v2794
          %v2858 = vunpack.c.l.bf16 %v2795
          %v2859 = vunpack.c.h.bf16 %v2795
          %v2860 = vmax.f32 %v2796, %v2828
          %v2861 = vmax.f32 %v2797, %v2829
          %v2862 = vmax.f32 %v2798, %v2830
          %v2863 = vmax.f32 %v2799, %v2831
          %v2864 = vmax.f32 %v2800, %v2832
          %v2865 = vmax.f32 %v2801, %v2833
          %v2866 = vmax.f32 %v2802, %v2834
          %v2867 = vmax.f32 %v2803, %v2835
          %v2868 = vmax.f32 %v2804, %v2836
          %v2869 = vmax.f32 %v2805, %v2837
          %v2870 = vmax.f32 %v2806, %v2838
          %v2871 = vmax.f32 %v2807, %v2839
          %v2872 = vmax.f32 %v2808, %v2840
          %v2873 = vmax.f32 %v2809, %v2841
          %v2874 = vmax.f32 %v2810, %v2842
          %v2875 = vmax.f32 %v2811, %v2843
          %v2876 = vmax.f32 %v2812, %v2844
          %v2877 = vmax.f32 %v2813, %v2845
          %v2878 = vmax.f32 %v2814, %v2846
          %v2879 = vmax.f32 %v2815, %v2847
          %v2880 = vmax.f32 %v2816, %v2848
          %v2881 = vmax.f32 %v2817, %v2849
          %v2882 = vmax.f32 %v2818, %v2850
          %v2883 = vmax.f32 %v2819, %v2851
          %v2884 = vmax.f32 %v2820, %v2852
          %v2885 = vmax.f32 %v2821, %v2853
          %v2886 = vmax.f32 %v2822, %v2854
          %v2887 = vmax.f32 %v2823, %v2855
          %v2888 = vmax.f32 %v2824, %v2856
          %v2889 = vmax.f32 %v2825, %v2857
          %v2890 = vmax.f32 %v2826, %v2858
          %v2891 = vmax.f32 %v2827, %v2859
          %v2892 = vpack.c.bf16 %v2860, %v2860
          %v2893 = vpack.c.bf16 %v2861, %v2861
          %v2894 = vpack.c.bf16 %v2862, %v2862
          %v2895 = vpack.c.bf16 %v2863, %v2863
          %v2896 = vpack.c.bf16 %v2864, %v2864
          %v2897 = vpack.c.bf16 %v2865, %v2865
          %v2898 = vpack.c.bf16 %v2866, %v2866
          %v2899 = vpack.c.bf16 %v2867, %v2867
          %v2900 = vpack.c.bf16 %v2868, %v2868
          %v2901 = vpack.c.bf16 %v2869, %v2869
          %v2902 = vpack.c.bf16 %v2870, %v2870
          %v2903 = vpack.c.bf16 %v2871, %v2871
          %v2904 = vpack.c.bf16 %v2872, %v2872
          %v2905 = vpack.c.bf16 %v2873, %v2873
          %v2906 = vpack.c.bf16 %v2874, %v2874
          %v2907 = vpack.c.bf16 %v2875, %v2875
          %v2908 = vpack.c.bf16 %v2876, %v2876
          %v2909 = vpack.c.bf16 %v2877, %v2877
          %v2910 = vpack.c.bf16 %v2878, %v2878
          %v2911 = vpack.c.bf16 %v2879, %v2879
          %v2912 = vpack.c.bf16 %v2880, %v2880
          %v2913 = vpack.c.bf16 %v2881, %v2881
          %v2914 = vpack.c.bf16 %v2882, %v2882
          %v2915 = vpack.c.bf16 %v2883, %v2883
          %v2916 = vpack.c.bf16 %v2884, %v2884
          %v2917 = vpack.c.bf16 %v2885, %v2885
          %v2918 = vpack.c.bf16 %v2886, %v2886
          %v2919 = vpack.c.bf16 %v2887, %v2887
          %v2920 = vpack.c.bf16 %v2888, %v2888
          %v2921 = vpack.c.bf16 %v2889, %v2889
          %v2922 = vpack.c.bf16 %v2890, %v2890
          %v2923 = vpack.c.bf16 %v2891, %v2891
          %vm2924 = vsmask.f32 7424
          %v2925 = vrot.slane %v1852, 1
          %v2926 = vor.u32 %v1849, %v2925
          %v2927 = vrot.slane %v1859, 1
          %v2928 = vsel %vm2924, %v2926, %v2927
          %v2929 = vor.u32 %v1856, %v2927
          %v2930 = vrot.slane %v1867, 1
          %v2931 = vsel %vm2924, %v2929, %v2930
          %v2932 = vor.u32 %v1864, %v2930
          %v2933 = vrot.slane %v1875, 1
          %v2934 = vsel %vm2924, %v2932, %v2933
          %v2935 = vor.u32 %v1872, %v2933
          %v2936 = vrot.slane %v1883, 1
          %v2937 = vsel %vm2924, %v2935, %v2936
          %v2938 = vor.u32 %v1880, %v2936
          %v2939 = vrot.slane %v1891, 1
          %v2940 = vsel %vm2924, %v2938, %v2939
          %v2941 = vor.u32 %v1888, %v2939
          %v2942 = vrot.slane %v1899, 1
          %v2943 = vsel %vm2924, %v2941, %v2942
          %v2944 = vor.u32 %v1896, %v2942
          %v2945 = vrot.slane %v1907, 1
          %v2946 = vsel %vm2924, %v2944, %v2945
          %v2947 = vor.u32 %v1904, %v2945
          %v2948 = vrot.slane %v1915, 1
          %v2949 = vsel %vm2924, %v2947, %v2948
          %v2950 = vor.u32 %v1912, %v2948
          %v2951 = vrot.slane %v1923, 1
          %v2952 = vsel %vm2924, %v2950, %v2951
          %v2953 = vor.u32 %v1920, %v2951
          %v2954 = vrot.slane %v1931, 1
          %v2955 = vsel %vm2924, %v2953, %v2954
          %v2956 = vor.u32 %v1928, %v2954
          %v2957 = vrot.slane %v1939, 1
          %v2958 = vsel %vm2924, %v2956, %v2957
          %v2959 = vor.u32 %v1936, %v2957
          %v2960 = vrot.slane %v1947, 1
          %v2961 = vsel %vm2924, %v2959, %v2960
          %v2962 = vor.u32 %v1944, %v2960
          %v2963 = vrot.slane %v1955, 1
          %v2964 = vsel %vm2924, %v2962, %v2963
          %v2965 = vor.u32 %v1952, %v2963
          %v2966 = vrot.slane %v1963, 1
          %v2967 = vsel %vm2924, %v2965, %v2966
          %v2968 = vor.u32 %v1960, %v2966
          %v2969 = vrot.slane %v1971, 1
          %v2970 = vsel %vm2924, %v2968, %v2969
          %v2971 = vor.u32 %v1968, %v2969
          %v2988 = vpack.c.b16 %v1800, %v1800
          %v2990 = vshll.u32 %v2988, 16
          %v2992 = vrot.slane %v2990, 1
          %vm2994 = vcmask 1047552
          %vm2995 = vmand %vm2994, %vm2924
          %v2996 = vsel %vm2995, %v2971, %v2992
          %v2997 = vsel %vm1688, 1, 0
          %v2998 = vsel %vm1689, 1, 0
          %v2999 = vsel %vm1690, 1, 0
          %v3000 = vsel %vm1691, 1, 0
          %v3001 = vsel %vm1692, 1, 0
          %v3002 = vsel %vm1693, 1, 0
          %v3003 = vsel %vm1694, 1, 0
          %v3004 = vsel %vm1695, 1, 0
          %v3005 = vsel %vm1696, 1, 0
          %v3006 = vsel %vm1697, 1, 0
          %v3007 = vsel %vm1698, 1, 0
          %v3008 = vsel %vm1699, 1, 0
          %v3009 = vsel %vm1700, 1, 0
          %v3010 = vsel %vm1701, 1, 0
          %v3011 = vsel %vm1702, 1, 0
          %v3012 = vsel %vm1703, 1, 0
          %v3013 = vsel %vm1704, 1, 0
          %v3014 = vsel %vm1705, 1, 0
          %v3015 = vsel %vm1706, 1, 0
          %v3016 = vsel %vm1707, 1, 0
          %v3017 = vsel %vm1708, 1, 0
          %v3018 = vsel %vm1709, 1, 0
          %v3019 = vsel %vm1710, 1, 0
          %v3020 = vsel %vm1711, 1, 0
          %v3021 = vsel %vm1712, 1, 0
          %v3022 = vsel %vm1713, 1, 0
          %v3023 = vsel %vm1714, 1, 0
          %v3024 = vsel %vm1715, 1, 0
          %v3025 = vsel %vm1716, 1, 0
          %v3026 = vsel %vm1717, 1, 0
          %v3027 = vsel %vm1718, 1, 0
          %v3028 = vsel %vm1719, 1, 0
          %vm3029 = vcmp.eq.s32.totalorder %v2997, 1
          %vm3030 = vcmp.eq.s32.totalorder %v2998, 1
          %vm3031 = vcmp.eq.s32.totalorder %v2999, 1
          %vm3032 = vcmp.eq.s32.totalorder %v3000, 1
          %vm3033 = vcmp.eq.s32.totalorder %v3001, 1
          %vm3034 = vcmp.eq.s32.totalorder %v3002, 1
          %vm3035 = vcmp.eq.s32.totalorder %v3003, 1
          %vm3036 = vcmp.eq.s32.totalorder %v3004, 1
          %vm3037 = vcmp.eq.s32.totalorder %v3005, 1
          %vm3038 = vcmp.eq.s32.totalorder %v3006, 1
          %vm3039 = vcmp.eq.s32.totalorder %v3007, 1
          %vm3040 = vcmp.eq.s32.totalorder %v3008, 1
          %vm3041 = vcmp.eq.s32.totalorder %v3009, 1
          %vm3042 = vcmp.eq.s32.totalorder %v3010, 1
          %vm3043 = vcmp.eq.s32.totalorder %v3011, 1
          %vm3044 = vcmp.eq.s32.totalorder %v3012, 1
          %vm3045 = vcmp.eq.s32.totalorder %v3013, 1
          %vm3046 = vcmp.eq.s32.totalorder %v3014, 1
          %vm3047 = vcmp.eq.s32.totalorder %v3015, 1
          %vm3048 = vcmp.eq.s32.totalorder %v3016, 1
          %vm3049 = vcmp.eq.s32.totalorder %v3017, 1
          %vm3050 = vcmp.eq.s32.totalorder %v3018, 1
          %vm3051 = vcmp.eq.s32.totalorder %v3019, 1
          %vm3052 = vcmp.eq.s32.totalorder %v3020, 1
          %vm3053 = vcmp.eq.s32.totalorder %v3021, 1
          %vm3054 = vcmp.eq.s32.totalorder %v3022, 1
          %vm3055 = vcmp.eq.s32.totalorder %v3023, 1
          %vm3056 = vcmp.eq.s32.totalorder %v3024, 1
          %vm3057 = vcmp.eq.s32.totalorder %v3025, 1
          %vm3058 = vcmp.eq.s32.totalorder %v3026, 1
          %vm3059 = vcmp.eq.s32.totalorder %v3027, 1
          %vm3060 = vcmp.eq.s32.totalorder %v3028, 1
          %vm3061 = vmpackc.low %vm3029, %vm3029
          %vm3062 = vmpackc.low %vm3030, %vm3030
          %vm3063 = vmpackc.low %vm3031, %vm3031
          %vm3064 = vmpackc.low %vm3032, %vm3032
          %vm3065 = vmpackc.low %vm3033, %vm3033
          %vm3066 = vmpackc.low %vm3034, %vm3034
          %vm3067 = vmpackc.low %vm3035, %vm3035
          %vm3068 = vmpackc.low %vm3036, %vm3036
          %vm3069 = vmpackc.low %vm3037, %vm3037
          %vm3070 = vmpackc.low %vm3038, %vm3038
          %vm3071 = vmpackc.low %vm3039, %vm3039
          %vm3072 = vmpackc.low %vm3040, %vm3040
          %vm3073 = vmpackc.low %vm3041, %vm3041
          %vm3074 = vmpackc.low %vm3042, %vm3042
          %vm3075 = vmpackc.low %vm3043, %vm3043
          %vm3076 = vmpackc.low %vm3044, %vm3044
          %vm3077 = vmpackc.low %vm3045, %vm3045
          %vm3078 = vmpackc.low %vm3046, %vm3046
          %vm3079 = vmpackc.low %vm3047, %vm3047
          %vm3080 = vmpackc.low %vm3048, %vm3048
          %vm3081 = vmpackc.low %vm3049, %vm3049
          %vm3082 = vmpackc.low %vm3050, %vm3050
          %vm3083 = vmpackc.low %vm3051, %vm3051
          %vm3084 = vmpackc.low %vm3052, %vm3052
          %vm3085 = vmpackc.low %vm3053, %vm3053
          %vm3086 = vmpackc.low %vm3054, %vm3054
          %vm3087 = vmpackc.low %vm3055, %vm3055
          %vm3088 = vmpackc.low %vm3056, %vm3056
          %vm3089 = vmpackc.low %vm3057, %vm3057
          %vm3090 = vmpackc.low %vm3058, %vm3058
          %vm3091 = vmpackc.low %vm3059, %vm3059
          %vm3092 = vmpackc.low %vm3060, %vm3060
          %v3093 = vsel %vm3061, 65537, 0
          %v3094 = vsel %vm3062, 65537, 0
          %v3095 = vsel %vm3063, 65537, 0
          %v3096 = vsel %vm3064, 65537, 0
          %v3097 = vsel %vm3065, 65537, 0
          %v3098 = vsel %vm3066, 65537, 0
          %v3099 = vsel %vm3067, 65537, 0
          %v3100 = vsel %vm3068, 65537, 0
          %v3101 = vsel %vm3069, 65537, 0
          %v3102 = vsel %vm3070, 65537, 0
          %v3103 = vsel %vm3071, 65537, 0
          %v3104 = vsel %vm3072, 65537, 0
          %v3105 = vsel %vm3073, 65537, 0
          %v3106 = vsel %vm3074, 65537, 0
          %v3107 = vsel %vm3075, 65537, 0
          %v3108 = vsel %vm3076, 65537, 0
          %v3109 = vsel %vm3077, 65537, 0
          %v3110 = vsel %vm3078, 65537, 0
          %v3111 = vsel %vm3079, 65537, 0
          %v3112 = vsel %vm3080, 65537, 0
          %v3113 = vsel %vm3081, 65537, 0
          %v3114 = vsel %vm3082, 65537, 0
          %v3115 = vsel %vm3083, 65537, 0
          %v3116 = vsel %vm3084, 65537, 0
          %v3117 = vsel %vm3085, 65537, 0
          %v3118 = vsel %vm3086, 65537, 0
          %v3119 = vsel %vm3087, 65537, 0
          %v3120 = vsel %vm3088, 65537, 0
          %v3121 = vsel %vm3089, 65537, 0
          %v3122 = vsel %vm3090, 65537, 0
          %v3123 = vsel %vm3091, 65537, 0
          %v3124 = vsel %vm3092, 65537, 0
          %v3125 = vunpack.c.l.b16 %v3093
          %v3126 = vunpack.c.l.b16 %v3094
          %v3127 = vunpack.c.l.b16 %v3095
          %v3128 = vunpack.c.l.b16 %v3096
          %v3129 = vunpack.c.l.b16 %v3097
          %v3130 = vunpack.c.l.b16 %v3098
          %v3131 = vunpack.c.l.b16 %v3099
          %v3132 = vunpack.c.l.b16 %v3100
          %v3133 = vunpack.c.l.b16 %v3101
          %v3134 = vunpack.c.l.b16 %v3102
          %v3135 = vunpack.c.l.b16 %v3103
          %v3136 = vunpack.c.l.b16 %v3104
          %v3137 = vunpack.c.l.b16 %v3105
          %v3138 = vunpack.c.l.b16 %v3106
          %v3139 = vunpack.c.l.b16 %v3107
          %v3140 = vunpack.c.l.b16 %v3108
          %v3141 = vunpack.c.l.b16 %v3109
          %v3142 = vunpack.c.l.b16 %v3110
          %v3143 = vunpack.c.l.b16 %v3111
          %v3144 = vunpack.c.l.b16 %v3112
          %v3145 = vunpack.c.l.b16 %v3113
          %v3146 = vunpack.c.l.b16 %v3114
          %v3147 = vunpack.c.l.b16 %v3115
          %v3148 = vunpack.c.l.b16 %v3116
          %v3149 = vunpack.c.l.b16 %v3117
          %v3150 = vunpack.c.l.b16 %v3118
          %v3151 = vunpack.c.l.b16 %v3119
          %v3152 = vunpack.c.l.b16 %v3120
          %v3153 = vunpack.c.l.b16 %v3121
          %v3154 = vunpack.c.l.b16 %v3122
          %v3155 = vunpack.c.l.b16 %v3123
          %v3156 = vunpack.c.l.b16 %v3124
          %v3157 = vpack.c.b16 %v3126, %v3125
          %v3158 = vpack.c.b16 %v3128, %v3127
          %v3159 = vpack.c.b16 %v3130, %v3129
          %v3160 = vpack.c.b16 %v3132, %v3131
          %v3161 = vpack.c.b16 %v3134, %v3133
          %v3162 = vpack.c.b16 %v3136, %v3135
          %v3163 = vpack.c.b16 %v3138, %v3137
          %v3164 = vpack.c.b16 %v3140, %v3139
          %v3165 = vpack.c.b16 %v3142, %v3141
          %v3166 = vpack.c.b16 %v3144, %v3143
          %v3167 = vpack.c.b16 %v3146, %v3145
          %v3168 = vpack.c.b16 %v3148, %v3147
          %v3169 = vpack.c.b16 %v3150, %v3149
          %v3170 = vpack.c.b16 %v3152, %v3151
          %v3171 = vpack.c.b16 %v3154, %v3153
          %v3172 = vpack.c.b16 %v3156, %v3155
          %v3173 = vunpack.c.l.b16 %v3157
          %v3174 = vunpack.c.h.b16 %v3157
          %v3175 = vunpack.c.l.b16 0
          %v3176 = vunpack.c.h.b16 0
          %vm3177 = vcmp.ne.s32.totalorder %v3173, %v3175
          %vm3178 = vcmp.ne.s32.totalorder %v3174, %v3176
          %vm3179 = vmpackc.low %vm3178, %vm3177
          %v3180 = vunpack.c.l.b16 %v3158
          %v3181 = vunpack.c.h.b16 %v3158
          %v3182 = vunpack.c.l.b16 0
          %v3183 = vunpack.c.h.b16 0
          %vm3184 = vcmp.ne.s32.totalorder %v3180, %v3182
          %vm3185 = vcmp.ne.s32.totalorder %v3181, %v3183
          %vm3186 = vmpackc.low %vm3185, %vm3184
          %v3187 = vunpack.c.l.b16 %v3159
          %v3188 = vunpack.c.h.b16 %v3159
          %v3189 = vunpack.c.l.b16 0
          %v3190 = vunpack.c.h.b16 0
          %vm3191 = vcmp.ne.s32.totalorder %v3187, %v3189
          %vm3192 = vcmp.ne.s32.totalorder %v3188, %v3190
          %vm3193 = vmpackc.low %vm3192, %vm3191
          %v3194 = vunpack.c.l.b16 %v3160
          %v3195 = vunpack.c.h.b16 %v3160
          %v3196 = vunpack.c.l.b16 0
          %v3197 = vunpack.c.h.b16 0
          %vm3198 = vcmp.ne.s32.totalorder %v3194, %v3196
          %vm3199 = vcmp.ne.s32.totalorder %v3195, %v3197
          %vm3200 = vmpackc.low %vm3199, %vm3198
          %v3201 = vunpack.c.l.b16 %v3161
          %v3202 = vunpack.c.h.b16 %v3161
          %v3203 = vunpack.c.l.b16 0
          %v3204 = vunpack.c.h.b16 0
          %vm3205 = vcmp.ne.s32.totalorder %v3201, %v3203
          %vm3206 = vcmp.ne.s32.totalorder %v3202, %v3204
          %vm3207 = vmpackc.low %vm3206, %vm3205
          %v3208 = vunpack.c.l.b16 %v3162
          %v3209 = vunpack.c.h.b16 %v3162
          %v3210 = vunpack.c.l.b16 0
          %v3211 = vunpack.c.h.b16 0
          %vm3212 = vcmp.ne.s32.totalorder %v3208, %v3210
          %vm3213 = vcmp.ne.s32.totalorder %v3209, %v3211
          %vm3214 = vmpackc.low %vm3213, %vm3212
          %v3215 = vunpack.c.l.b16 %v3163
          %v3216 = vunpack.c.h.b16 %v3163
          %v3217 = vunpack.c.l.b16 0
          %v3218 = vunpack.c.h.b16 0
          %vm3219 = vcmp.ne.s32.totalorder %v3215, %v3217
          %vm3220 = vcmp.ne.s32.totalorder %v3216, %v3218
          %vm3221 = vmpackc.low %vm3220, %vm3219
          %v3222 = vunpack.c.l.b16 %v3164
          %v3223 = vunpack.c.h.b16 %v3164
          %v3224 = vunpack.c.l.b16 0
          %v3225 = vunpack.c.h.b16 0
          %vm3226 = vcmp.ne.s32.totalorder %v3222, %v3224
          %vm3227 = vcmp.ne.s32.totalorder %v3223, %v3225
          %vm3228 = vmpackc.low %vm3227, %vm3226
          %v3229 = vunpack.c.l.b16 %v3165
          %v3230 = vunpack.c.h.b16 %v3165
          %v3231 = vunpack.c.l.b16 0
          %v3232 = vunpack.c.h.b16 0
          %vm3233 = vcmp.ne.s32.totalorder %v3229, %v3231
          %vm3234 = vcmp.ne.s32.totalorder %v3230, %v3232
          %vm3235 = vmpackc.low %vm3234, %vm3233
          %v3236 = vunpack.c.l.b16 %v3166
          %v3237 = vunpack.c.h.b16 %v3166
          %v3238 = vunpack.c.l.b16 0
          %v3239 = vunpack.c.h.b16 0
          %vm3240 = vcmp.ne.s32.totalorder %v3236, %v3238
          %vm3241 = vcmp.ne.s32.totalorder %v3237, %v3239
          %vm3242 = vmpackc.low %vm3241, %vm3240
          %v3243 = vunpack.c.l.b16 %v3167
          %v3244 = vunpack.c.h.b16 %v3167
          %v3245 = vunpack.c.l.b16 0
          %v3246 = vunpack.c.h.b16 0
          %vm3247 = vcmp.ne.s32.totalorder %v3243, %v3245
          %vm3248 = vcmp.ne.s32.totalorder %v3244, %v3246
          %vm3249 = vmpackc.low %vm3248, %vm3247
          %v3250 = vunpack.c.l.b16 %v3168
          %v3251 = vunpack.c.h.b16 %v3168
          %v3252 = vunpack.c.l.b16 0
          %v3253 = vunpack.c.h.b16 0
          %vm3254 = vcmp.ne.s32.totalorder %v3250, %v3252
          %vm3255 = vcmp.ne.s32.totalorder %v3251, %v3253
          %vm3256 = vmpackc.low %vm3255, %vm3254
          %v3257 = vunpack.c.l.b16 %v3169
          %v3258 = vunpack.c.h.b16 %v3169
          %v3259 = vunpack.c.l.b16 0
          %v3260 = vunpack.c.h.b16 0
          %vm3261 = vcmp.ne.s32.totalorder %v3257, %v3259
          %vm3262 = vcmp.ne.s32.totalorder %v3258, %v3260
          %vm3263 = vmpackc.low %vm3262, %vm3261
          %v3264 = vunpack.c.l.b16 %v3170
          %v3265 = vunpack.c.h.b16 %v3170
          %v3266 = vunpack.c.l.b16 0
          %v3267 = vunpack.c.h.b16 0
          %vm3268 = vcmp.ne.s32.totalorder %v3264, %v3266
          %vm3269 = vcmp.ne.s32.totalorder %v3265, %v3267
          %vm3270 = vmpackc.low %vm3269, %vm3268
          %v3271 = vunpack.c.l.b16 %v3171
          %v3272 = vunpack.c.h.b16 %v3171
          %v3273 = vunpack.c.l.b16 0
          %v3274 = vunpack.c.h.b16 0
          %vm3275 = vcmp.ne.s32.totalorder %v3271, %v3273
          %vm3276 = vcmp.ne.s32.totalorder %v3272, %v3274
          %vm3277 = vmpackc.low %vm3276, %vm3275
          %v3278 = vunpack.c.l.b16 %v3172
          %v3279 = vunpack.c.h.b16 %v3172
          %v3280 = vunpack.c.l.b16 0
          %v3281 = vunpack.c.h.b16 0
          %vm3282 = vcmp.ne.s32.totalorder %v3278, %v3280
          %vm3283 = vcmp.ne.s32.totalorder %v3279, %v3281
          %vm3284 = vmpackc.low %vm3283, %vm3282
          %v3285 = vsel %vm3179, %v2928, %v2070
          %v3286 = vsel %vm3186, %v2931, %v2070
          %v3287 = vsel %vm3193, %v2934, %v2070
          %v3288 = vsel %vm3200, %v2937, %v2070
          %v3289 = vsel %vm3207, %v2940, %v2070
          %v3290 = vsel %vm3214, %v2943, %v2070
          %v3291 = vsel %vm3221, %v2946, %v2070
          %v3292 = vsel %vm3228, %v2949, %v2070
          %v3293 = vsel %vm3235, %v2952, %v2070
          %v3294 = vsel %vm3242, %v2955, %v2070
          %v3295 = vsel %vm3249, %v2958, %v2070
          %v3296 = vsel %vm3256, %v2961, %v2070
          %v3297 = vsel %vm3263, %v2964, %v2070
          %v3298 = vsel %vm3270, %v2967, %v2070
          %v3299 = vsel %vm3277, %v2970, %v2070
          %v3300 = vsel %vm3284, %v2996, %v2070
          %v3301 = vunpack.c.l.bf16 %v2892
          %v3302 = vunpack.c.l.bf16 %v2893
          %v3303 = vunpack.c.l.bf16 %v2894
          %v3304 = vunpack.c.l.bf16 %v2895
          %v3305 = vunpack.c.l.bf16 %v2896
          %v3306 = vunpack.c.l.bf16 %v2897
          %v3307 = vunpack.c.l.bf16 %v2898
          %v3308 = vunpack.c.l.bf16 %v2899
          %v3309 = vunpack.c.l.bf16 %v2900
          %v3310 = vunpack.c.l.bf16 %v2901
          %v3311 = vunpack.c.l.bf16 %v2902
          %v3312 = vunpack.c.l.bf16 %v2903
          %v3313 = vunpack.c.l.bf16 %v2904
          %v3314 = vunpack.c.l.bf16 %v2905
          %v3315 = vunpack.c.l.bf16 %v2906
          %v3316 = vunpack.c.l.bf16 %v2907
          %v3317 = vunpack.c.l.bf16 %v2908
          %v3318 = vunpack.c.l.bf16 %v2909
          %v3319 = vunpack.c.l.bf16 %v2910
          %v3320 = vunpack.c.l.bf16 %v2911
          %v3321 = vunpack.c.l.bf16 %v2912
          %v3322 = vunpack.c.l.bf16 %v2913
          %v3323 = vunpack.c.l.bf16 %v2914
          %v3324 = vunpack.c.l.bf16 %v2915
          %v3325 = vunpack.c.l.bf16 %v2916
          %v3326 = vunpack.c.l.bf16 %v2917
          %v3327 = vunpack.c.l.bf16 %v2918
          %v3328 = vunpack.c.l.bf16 %v2919
          %v3329 = vunpack.c.l.bf16 %v2920
          %v3330 = vunpack.c.l.bf16 %v2921
          %v3331 = vunpack.c.l.bf16 %v2922
          %v3332 = vunpack.c.l.bf16 %v2923
          %v3333 = vunpack.c.l.bf16 %v3285
          %v3334 = vunpack.c.h.bf16 %v3285
          %v3335 = vunpack.c.l.bf16 %v3286
          %v3336 = vunpack.c.h.bf16 %v3286
          %v3337 = vunpack.c.l.bf16 %v3287
          %v3338 = vunpack.c.h.bf16 %v3287
          %v3339 = vunpack.c.l.bf16 %v3288
          %v3340 = vunpack.c.h.bf16 %v3288
          %v3341 = vunpack.c.l.bf16 %v3289
          %v3342 = vunpack.c.h.bf16 %v3289
          %v3343 = vunpack.c.l.bf16 %v3290
          %v3344 = vunpack.c.h.bf16 %v3290
          %v3345 = vunpack.c.l.bf16 %v3291
          %v3346 = vunpack.c.h.bf16 %v3291
          %v3347 = vunpack.c.l.bf16 %v3292
          %v3348 = vunpack.c.h.bf16 %v3292
          %v3349 = vunpack.c.l.bf16 %v3293
          %v3350 = vunpack.c.h.bf16 %v3293
          %v3351 = vunpack.c.l.bf16 %v3294
          %v3352 = vunpack.c.h.bf16 %v3294
          %v3353 = vunpack.c.l.bf16 %v3295
          %v3354 = vunpack.c.h.bf16 %v3295
          %v3355 = vunpack.c.l.bf16 %v3296
          %v3356 = vunpack.c.h.bf16 %v3296
          %v3357 = vunpack.c.l.bf16 %v3297
          %v3358 = vunpack.c.h.bf16 %v3297
          %v3359 = vunpack.c.l.bf16 %v3298
          %v3360 = vunpack.c.h.bf16 %v3298
          %v3361 = vunpack.c.l.bf16 %v3299
          %v3362 = vunpack.c.h.bf16 %v3299
          %v3363 = vunpack.c.l.bf16 %v3300
          %v3364 = vunpack.c.h.bf16 %v3300
          %v3365 = vmax.f32 %v3301, %v3333
          %v3366 = vmax.f32 %v3302, %v3334
          %v3367 = vmax.f32 %v3303, %v3335
          %v3368 = vmax.f32 %v3304, %v3336
          %v3369 = vmax.f32 %v3305, %v3337
          %v3370 = vmax.f32 %v3306, %v3338
          %v3371 = vmax.f32 %v3307, %v3339
          %v3372 = vmax.f32 %v3308, %v3340
          %v3373 = vmax.f32 %v3309, %v3341
          %v3374 = vmax.f32 %v3310, %v3342
          %v3375 = vmax.f32 %v3311, %v3343
          %v3376 = vmax.f32 %v3312, %v3344
          %v3377 = vmax.f32 %v3313, %v3345
          %v3378 = vmax.f32 %v3314, %v3346
          %v3379 = vmax.f32 %v3315, %v3347
          %v3380 = vmax.f32 %v3316, %v3348
          %v3381 = vmax.f32 %v3317, %v3349
          %v3382 = vmax.f32 %v3318, %v3350
          %v3383 = vmax.f32 %v3319, %v3351
          %v3384 = vmax.f32 %v3320, %v3352
          %v3385 = vmax.f32 %v3321, %v3353
          %v3386 = vmax.f32 %v3322, %v3354
          %v3387 = vmax.f32 %v3323, %v3355
          %v3388 = vmax.f32 %v3324, %v3356
          %v3389 = vmax.f32 %v3325, %v3357
          %v3390 = vmax.f32 %v3326, %v3358
          %v3391 = vmax.f32 %v3327, %v3359
          %v3392 = vmax.f32 %v3328, %v3360
          %v3393 = vmax.f32 %v3329, %v3361
          %v3394 = vmax.f32 %v3330, %v3362
          %v3395 = vmax.f32 %v3331, %v3363
          %v3396 = vmax.f32 %v3332, %v3364
          %v3397 = vpack.c.bf16 %v3365, %v3365
          %v3398 = vpack.c.bf16 %v3366, %v3366
          %v3399 = vpack.c.bf16 %v3367, %v3367
          %v3400 = vpack.c.bf16 %v3368, %v3368
          %v3401 = vpack.c.bf16 %v3369, %v3369
          %v3402 = vpack.c.bf16 %v3370, %v3370
          %v3403 = vpack.c.bf16 %v3371, %v3371
          %v3404 = vpack.c.bf16 %v3372, %v3372
          %v3405 = vpack.c.bf16 %v3373, %v3373
          %v3406 = vpack.c.bf16 %v3374, %v3374
          %v3407 = vpack.c.bf16 %v3375, %v3375
          %v3408 = vpack.c.bf16 %v3376, %v3376
          %v3409 = vpack.c.bf16 %v3377, %v3377
          %v3410 = vpack.c.bf16 %v3378, %v3378
          %v3411 = vpack.c.bf16 %v3379, %v3379
          %v3412 = vpack.c.bf16 %v3380, %v3380
          %v3413 = vpack.c.bf16 %v3381, %v3381
          %v3414 = vpack.c.bf16 %v3382, %v3382
          %v3415 = vpack.c.bf16 %v3383, %v3383
          %v3416 = vpack.c.bf16 %v3384, %v3384
          %v3417 = vpack.c.bf16 %v3385, %v3385
          %v3418 = vpack.c.bf16 %v3386, %v3386
          %v3419 = vpack.c.bf16 %v3387, %v3387
          %v3420 = vpack.c.bf16 %v3388, %v3388
          %v3421 = vpack.c.bf16 %v3389, %v3389
          %v3422 = vpack.c.bf16 %v3390, %v3390
          %v3423 = vpack.c.bf16 %v3391, %v3391
          %v3424 = vpack.c.bf16 %v3392, %v3392
          %v3425 = vpack.c.bf16 %v3393, %v3393
          %v3426 = vpack.c.bf16 %v3394, %v3394
          %v3427 = vpack.c.bf16 %v3395, %v3395
          %v3428 = vpack.c.bf16 %v3396, %v3396
          %vm3429 = vcmask 1046528
          %v3430 = vrot.slane %v1831, 1
          %v3431 = vrot.slane %v1832, 1
          %v3432 = vsel %vm3429, %v3430, %v3431
          %v3433 = vrot.slane %v1833, 1
          %v3434 = vsel %vm3429, %v3431, %v3433
          %v3435 = vrot.slane %v1834, 1
          %v3436 = vsel %vm3429, %v3433, %v3435
          %v3437 = vrot.slane %v1835, 1
          %v3438 = vsel %vm3429, %v3435, %v3437
          %v3439 = vrot.slane %v1836, 1
          %v3440 = vsel %vm3429, %v3437, %v3439
          %v3441 = vrot.slane %v1837, 1
          %v3442 = vsel %vm3429, %v3439, %v3441
          %v3443 = vrot.slane %v1838, 1
          %v3444 = vsel %vm3429, %v3441, %v3443
          %v3445 = vrot.slane %v1839, 1
          %v3446 = vsel %vm3429, %v3443, %v3445
          %v3447 = vrot.slane %v1840, 1
          %v3448 = vsel %vm3429, %v3445, %v3447
          %v3449 = vrot.slane %v1841, 1
          %v3450 = vsel %vm3429, %v3447, %v3449
          %v3451 = vrot.slane %v1842, 1
          %v3452 = vsel %vm3429, %v3449, %v3451
          %v3453 = vrot.slane %v1843, 1
          %v3454 = vsel %vm3429, %v3451, %v3453
          %v3455 = vrot.slane %v1844, 1
          %v3456 = vsel %vm3429, %v3453, %v3455
          %v3457 = vrot.slane %v1845, 1
          %v3458 = vsel %vm3429, %v3455, %v3457
          %v3459 = vrot.slane %v1846, 1
          %v3460 = vsel %vm3429, %v3457, %v3459
          %v3476 = vrot.slane %v2988, 1
          %vm3477 = vcmask 1046528
          %v3480 = vsel %vm3477, %v3459, %v3476
          %v3482 = vsel %vm1720, 1, 0
          %v3483 = vsel %vm1721, 1, 0
          %v3484 = vsel %vm1722, 1, 0
          %v3485 = vsel %vm1723, 1, 0
          %v3486 = vsel %vm1724, 1, 0
          %v3487 = vsel %vm1725, 1, 0
          %v3488 = vsel %vm1726, 1, 0
          %v3489 = vsel %vm1727, 1, 0
          %v3490 = vsel %vm1728, 1, 0
          %v3491 = vsel %vm1729, 1, 0
          %v3492 = vsel %vm1730, 1, 0
          %v3493 = vsel %vm1731, 1, 0
          %v3494 = vsel %vm1732, 1, 0
          %v3495 = vsel %vm1733, 1, 0
          %v3496 = vsel %vm1734, 1, 0
          %v3497 = vsel %vm1735, 1, 0
          %v3498 = vsel %vm1736, 1, 0
          %v3499 = vsel %vm1737, 1, 0
          %v3500 = vsel %vm1738, 1, 0
          %v3501 = vsel %vm1739, 1, 0
          %v3502 = vsel %vm1740, 1, 0
          %v3503 = vsel %vm1741, 1, 0
          %v3504 = vsel %vm1742, 1, 0
          %v3505 = vsel %vm1743, 1, 0
          %v3506 = vsel %vm1744, 1, 0
          %v3507 = vsel %vm1745, 1, 0
          %v3508 = vsel %vm1746, 1, 0
          %v3509 = vsel %vm1747, 1, 0
          %v3510 = vsel %vm1748, 1, 0
          %v3511 = vsel %vm1749, 1, 0
          %v3512 = vsel %vm1750, 1, 0
          %v3513 = vsel %vm1751, 1, 0
          %vm3514 = vcmp.eq.s32.totalorder %v3482, 1
          %vm3515 = vcmp.eq.s32.totalorder %v3483, 1
          %vm3516 = vcmp.eq.s32.totalorder %v3484, 1
          %vm3517 = vcmp.eq.s32.totalorder %v3485, 1
          %vm3518 = vcmp.eq.s32.totalorder %v3486, 1
          %vm3519 = vcmp.eq.s32.totalorder %v3487, 1
          %vm3520 = vcmp.eq.s32.totalorder %v3488, 1
          %vm3521 = vcmp.eq.s32.totalorder %v3489, 1
          %vm3522 = vcmp.eq.s32.totalorder %v3490, 1
          %vm3523 = vcmp.eq.s32.totalorder %v3491, 1
          %vm3524 = vcmp.eq.s32.totalorder %v3492, 1
          %vm3525 = vcmp.eq.s32.totalorder %v3493, 1
          %vm3526 = vcmp.eq.s32.totalorder %v3494, 1
          %vm3527 = vcmp.eq.s32.totalorder %v3495, 1
          %vm3528 = vcmp.eq.s32.totalorder %v3496, 1
          %vm3529 = vcmp.eq.s32.totalorder %v3497, 1
          %vm3530 = vcmp.eq.s32.totalorder %v3498, 1
          %vm3531 = vcmp.eq.s32.totalorder %v3499, 1
          %vm3532 = vcmp.eq.s32.totalorder %v3500, 1
          %vm3533 = vcmp.eq.s32.totalorder %v3501, 1
          %vm3534 = vcmp.eq.s32.totalorder %v3502, 1
          %vm3535 = vcmp.eq.s32.totalorder %v3503, 1
          %vm3536 = vcmp.eq.s32.totalorder %v3504, 1
          %vm3537 = vcmp.eq.s32.totalorder %v3505, 1
          %vm3538 = vcmp.eq.s32.totalorder %v3506, 1
          %vm3539 = vcmp.eq.s32.totalorder %v3507, 1
          %vm3540 = vcmp.eq.s32.totalorder %v3508, 1
          %vm3541 = vcmp.eq.s32.totalorder %v3509, 1
          %vm3542 = vcmp.eq.s32.totalorder %v3510, 1
          %vm3543 = vcmp.eq.s32.totalorder %v3511, 1
          %vm3544 = vcmp.eq.s32.totalorder %v3512, 1
          %vm3545 = vcmp.eq.s32.totalorder %v3513, 1
          %vm3546 = vmpackc.low %vm3514, %vm3514
          %vm3547 = vmpackc.low %vm3515, %vm3515
          %vm3548 = vmpackc.low %vm3516, %vm3516
          %vm3549 = vmpackc.low %vm3517, %vm3517
          %vm3550 = vmpackc.low %vm3518, %vm3518
          %vm3551 = vmpackc.low %vm3519, %vm3519
          %vm3552 = vmpackc.low %vm3520, %vm3520
          %vm3553 = vmpackc.low %vm3521, %vm3521
          %vm3554 = vmpackc.low %vm3522, %vm3522
          %vm3555 = vmpackc.low %vm3523, %vm3523
          %vm3556 = vmpackc.low %vm3524, %vm3524
          %vm3557 = vmpackc.low %vm3525, %vm3525
          %vm3558 = vmpackc.low %vm3526, %vm3526
          %vm3559 = vmpackc.low %vm3527, %vm3527
          %vm3560 = vmpackc.low %vm3528, %vm3528
          %vm3561 = vmpackc.low %vm3529, %vm3529
          %vm3562 = vmpackc.low %vm3530, %vm3530
          %vm3563 = vmpackc.low %vm3531, %vm3531
          %vm3564 = vmpackc.low %vm3532, %vm3532
          %vm3565 = vmpackc.low %vm3533, %vm3533
          %vm3566 = vmpackc.low %vm3534, %vm3534
          %vm3567 = vmpackc.low %vm3535, %vm3535
          %vm3568 = vmpackc.low %vm3536, %vm3536
          %vm3569 = vmpackc.low %vm3537, %vm3537
          %vm3570 = vmpackc.low %vm3538, %vm3538
          %vm3571 = vmpackc.low %vm3539, %vm3539
          %vm3572 = vmpackc.low %vm3540, %vm3540
          %vm3573 = vmpackc.low %vm3541, %vm3541
          %vm3574 = vmpackc.low %vm3542, %vm3542
          %vm3575 = vmpackc.low %vm3543, %vm3543
          %vm3576 = vmpackc.low %vm3544, %vm3544
          %vm3577 = vmpackc.low %vm3545, %vm3545
          %v3578 = vsel %vm3546, 65537, 0
          %v3579 = vsel %vm3547, 65537, 0
          %v3580 = vsel %vm3548, 65537, 0
          %v3581 = vsel %vm3549, 65537, 0
          %v3582 = vsel %vm3550, 65537, 0
          %v3583 = vsel %vm3551, 65537, 0
          %v3584 = vsel %vm3552, 65537, 0
          %v3585 = vsel %vm3553, 65537, 0
          %v3586 = vsel %vm3554, 65537, 0
          %v3587 = vsel %vm3555, 65537, 0
          %v3588 = vsel %vm3556, 65537, 0
          %v3589 = vsel %vm3557, 65537, 0
          %v3590 = vsel %vm3558, 65537, 0
          %v3591 = vsel %vm3559, 65537, 0
          %v3592 = vsel %vm3560, 65537, 0
          %v3593 = vsel %vm3561, 65537, 0
          %v3594 = vsel %vm3562, 65537, 0
          %v3595 = vsel %vm3563, 65537, 0
          %v3596 = vsel %vm3564, 65537, 0
          %v3597 = vsel %vm3565, 65537, 0
          %v3598 = vsel %vm3566, 65537, 0
          %v3599 = vsel %vm3567, 65537, 0
          %v3600 = vsel %vm3568, 65537, 0
          %v3601 = vsel %vm3569, 65537, 0
          %v3602 = vsel %vm3570, 65537, 0
          %v3603 = vsel %vm3571, 65537, 0
          %v3604 = vsel %vm3572, 65537, 0
          %v3605 = vsel %vm3573, 65537, 0
          %v3606 = vsel %vm3574, 65537, 0
          %v3607 = vsel %vm3575, 65537, 0
          %v3608 = vsel %vm3576, 65537, 0
          %v3609 = vsel %vm3577, 65537, 0
          %v3610 = vunpack.c.l.b16 %v3578
          %v3611 = vunpack.c.l.b16 %v3579
          %v3612 = vunpack.c.l.b16 %v3580
          %v3613 = vunpack.c.l.b16 %v3581
          %v3614 = vunpack.c.l.b16 %v3582
          %v3615 = vunpack.c.l.b16 %v3583
          %v3616 = vunpack.c.l.b16 %v3584
          %v3617 = vunpack.c.l.b16 %v3585
          %v3618 = vunpack.c.l.b16 %v3586
          %v3619 = vunpack.c.l.b16 %v3587
          %v3620 = vunpack.c.l.b16 %v3588
          %v3621 = vunpack.c.l.b16 %v3589
          %v3622 = vunpack.c.l.b16 %v3590
          %v3623 = vunpack.c.l.b16 %v3591
          %v3624 = vunpack.c.l.b16 %v3592
          %v3625 = vunpack.c.l.b16 %v3593
          %v3626 = vunpack.c.l.b16 %v3594
          %v3627 = vunpack.c.l.b16 %v3595
          %v3628 = vunpack.c.l.b16 %v3596
          %v3629 = vunpack.c.l.b16 %v3597
          %v3630 = vunpack.c.l.b16 %v3598
          %v3631 = vunpack.c.l.b16 %v3599
          %v3632 = vunpack.c.l.b16 %v3600
          %v3633 = vunpack.c.l.b16 %v3601
          %v3634 = vunpack.c.l.b16 %v3602
          %v3635 = vunpack.c.l.b16 %v3603
          %v3636 = vunpack.c.l.b16 %v3604
          %v3637 = vunpack.c.l.b16 %v3605
          %v3638 = vunpack.c.l.b16 %v3606
          %v3639 = vunpack.c.l.b16 %v3607
          %v3640 = vunpack.c.l.b16 %v3608
          %v3641 = vunpack.c.l.b16 %v3609
          %v3642 = vpack.c.b16 %v3611, %v3610
          %v3643 = vpack.c.b16 %v3613, %v3612
          %v3644 = vpack.c.b16 %v3615, %v3614
          %v3645 = vpack.c.b16 %v3617, %v3616
          %v3646 = vpack.c.b16 %v3619, %v3618
          %v3647 = vpack.c.b16 %v3621, %v3620
          %v3648 = vpack.c.b16 %v3623, %v3622
          %v3649 = vpack.c.b16 %v3625, %v3624
          %v3650 = vpack.c.b16 %v3627, %v3626
          %v3651 = vpack.c.b16 %v3629, %v3628
          %v3652 = vpack.c.b16 %v3631, %v3630
          %v3653 = vpack.c.b16 %v3633, %v3632
          %v3654 = vpack.c.b16 %v3635, %v3634
          %v3655 = vpack.c.b16 %v3637, %v3636
          %v3656 = vpack.c.b16 %v3639, %v3638
          %v3657 = vpack.c.b16 %v3641, %v3640
          %v3658 = vunpack.c.l.b16 %v3642
          %v3659 = vunpack.c.h.b16 %v3642
          %v3660 = vunpack.c.l.b16 0
          %v3661 = vunpack.c.h.b16 0
          %vm3662 = vcmp.ne.s32.totalorder %v3658, %v3660
          %vm3663 = vcmp.ne.s32.totalorder %v3659, %v3661
          %vm3664 = vmpackc.low %vm3663, %vm3662
          %v3665 = vunpack.c.l.b16 %v3643
          %v3666 = vunpack.c.h.b16 %v3643
          %v3667 = vunpack.c.l.b16 0
          %v3668 = vunpack.c.h.b16 0
          %vm3669 = vcmp.ne.s32.totalorder %v3665, %v3667
          %vm3670 = vcmp.ne.s32.totalorder %v3666, %v3668
          %vm3671 = vmpackc.low %vm3670, %vm3669
          %v3672 = vunpack.c.l.b16 %v3644
          %v3673 = vunpack.c.h.b16 %v3644
          %v3674 = vunpack.c.l.b16 0
          %v3675 = vunpack.c.h.b16 0
          %vm3676 = vcmp.ne.s32.totalorder %v3672, %v3674
          %vm3677 = vcmp.ne.s32.totalorder %v3673, %v3675
          %vm3678 = vmpackc.low %vm3677, %vm3676
          %v3679 = vunpack.c.l.b16 %v3645
          %v3680 = vunpack.c.h.b16 %v3645
          %v3681 = vunpack.c.l.b16 0
          %v3682 = vunpack.c.h.b16 0
          %vm3683 = vcmp.ne.s32.totalorder %v3679, %v3681
          %vm3684 = vcmp.ne.s32.totalorder %v3680, %v3682
          %vm3685 = vmpackc.low %vm3684, %vm3683
          %v3686 = vunpack.c.l.b16 %v3646
          %v3687 = vunpack.c.h.b16 %v3646
          %v3688 = vunpack.c.l.b16 0
          %v3689 = vunpack.c.h.b16 0
          %vm3690 = vcmp.ne.s32.totalorder %v3686, %v3688
          %vm3691 = vcmp.ne.s32.totalorder %v3687, %v3689
          %vm3692 = vmpackc.low %vm3691, %vm3690
          %v3693 = vunpack.c.l.b16 %v3647
          %v3694 = vunpack.c.h.b16 %v3647
          %v3695 = vunpack.c.l.b16 0
          %v3696 = vunpack.c.h.b16 0
          %vm3697 = vcmp.ne.s32.totalorder %v3693, %v3695
          %vm3698 = vcmp.ne.s32.totalorder %v3694, %v3696
          %vm3699 = vmpackc.low %vm3698, %vm3697
          %v3700 = vunpack.c.l.b16 %v3648
          %v3701 = vunpack.c.h.b16 %v3648
          %v3702 = vunpack.c.l.b16 0
          %v3703 = vunpack.c.h.b16 0
          %vm3704 = vcmp.ne.s32.totalorder %v3700, %v3702
          %vm3705 = vcmp.ne.s32.totalorder %v3701, %v3703
          %vm3706 = vmpackc.low %vm3705, %vm3704
          %v3707 = vunpack.c.l.b16 %v3649
          %v3708 = vunpack.c.h.b16 %v3649
          %v3709 = vunpack.c.l.b16 0
          %v3710 = vunpack.c.h.b16 0
          %vm3711 = vcmp.ne.s32.totalorder %v3707, %v3709
          %vm3712 = vcmp.ne.s32.totalorder %v3708, %v3710
          %vm3713 = vmpackc.low %vm3712, %vm3711
          %v3714 = vunpack.c.l.b16 %v3650
          %v3715 = vunpack.c.h.b16 %v3650
          %v3716 = vunpack.c.l.b16 0
          %v3717 = vunpack.c.h.b16 0
          %vm3718 = vcmp.ne.s32.totalorder %v3714, %v3716
          %vm3719 = vcmp.ne.s32.totalorder %v3715, %v3717
          %vm3720 = vmpackc.low %vm3719, %vm3718
          %v3721 = vunpack.c.l.b16 %v3651
          %v3722 = vunpack.c.h.b16 %v3651
          %v3723 = vunpack.c.l.b16 0
          %v3724 = vunpack.c.h.b16 0
          %vm3725 = vcmp.ne.s32.totalorder %v3721, %v3723
          %vm3726 = vcmp.ne.s32.totalorder %v3722, %v3724
          %vm3727 = vmpackc.low %vm3726, %vm3725
          %v3728 = vunpack.c.l.b16 %v3652
          %v3729 = vunpack.c.h.b16 %v3652
          %v3730 = vunpack.c.l.b16 0
          %v3731 = vunpack.c.h.b16 0
          %vm3732 = vcmp.ne.s32.totalorder %v3728, %v3730
          %vm3733 = vcmp.ne.s32.totalorder %v3729, %v3731
          %vm3734 = vmpackc.low %vm3733, %vm3732
          %v3735 = vunpack.c.l.b16 %v3653
          %v3736 = vunpack.c.h.b16 %v3653
          %v3737 = vunpack.c.l.b16 0
          %v3738 = vunpack.c.h.b16 0
          %vm3739 = vcmp.ne.s32.totalorder %v3735, %v3737
          %vm3740 = vcmp.ne.s32.totalorder %v3736, %v3738
          %vm3741 = vmpackc.low %vm3740, %vm3739
          %v3742 = vunpack.c.l.b16 %v3654
          %v3743 = vunpack.c.h.b16 %v3654
          %v3744 = vunpack.c.l.b16 0
          %v3745 = vunpack.c.h.b16 0
          %vm3746 = vcmp.ne.s32.totalorder %v3742, %v3744
          %vm3747 = vcmp.ne.s32.totalorder %v3743, %v3745
          %vm3748 = vmpackc.low %vm3747, %vm3746
          %v3749 = vunpack.c.l.b16 %v3655
          %v3750 = vunpack.c.h.b16 %v3655
          %v3751 = vunpack.c.l.b16 0
          %v3752 = vunpack.c.h.b16 0
          %vm3753 = vcmp.ne.s32.totalorder %v3749, %v3751
          %vm3754 = vcmp.ne.s32.totalorder %v3750, %v3752
          %vm3755 = vmpackc.low %vm3754, %vm3753
          %v3756 = vunpack.c.l.b16 %v3656
          %v3757 = vunpack.c.h.b16 %v3656
          %v3758 = vunpack.c.l.b16 0
          %v3759 = vunpack.c.h.b16 0
          %vm3760 = vcmp.ne.s32.totalorder %v3756, %v3758
          %vm3761 = vcmp.ne.s32.totalorder %v3757, %v3759
          %vm3762 = vmpackc.low %vm3761, %vm3760
          %v3763 = vunpack.c.l.b16 %v3657
          %v3764 = vunpack.c.h.b16 %v3657
          %v3765 = vunpack.c.l.b16 0
          %v3766 = vunpack.c.h.b16 0
          %vm3767 = vcmp.ne.s32.totalorder %v3763, %v3765
          %vm3768 = vcmp.ne.s32.totalorder %v3764, %v3766
          %vm3769 = vmpackc.low %vm3768, %vm3767
          %v3770 = vsel %vm3664, %v3432, %v2070
          %v3771 = vsel %vm3671, %v3434, %v2070
          %v3772 = vsel %vm3678, %v3436, %v2070
          %v3773 = vsel %vm3685, %v3438, %v2070
          %v3774 = vsel %vm3692, %v3440, %v2070
          %v3775 = vsel %vm3699, %v3442, %v2070
          %v3776 = vsel %vm3706, %v3444, %v2070
          %v3777 = vsel %vm3713, %v3446, %v2070
          %v3778 = vsel %vm3720, %v3448, %v2070
          %v3779 = vsel %vm3727, %v3450, %v2070
          %v3780 = vsel %vm3734, %v3452, %v2070
          %v3781 = vsel %vm3741, %v3454, %v2070
          %v3782 = vsel %vm3748, %v3456, %v2070
          %v3783 = vsel %vm3755, %v3458, %v2070
          %v3784 = vsel %vm3762, %v3460, %v2070
          %v3785 = vsel %vm3769, %v3480, %v2070
          %v3786 = vunpack.c.l.bf16 %v3397
          %v3787 = vunpack.c.l.bf16 %v3398
          %v3788 = vunpack.c.l.bf16 %v3399
          %v3789 = vunpack.c.l.bf16 %v3400
          %v3790 = vunpack.c.l.bf16 %v3401
          %v3791 = vunpack.c.l.bf16 %v3402
          %v3792 = vunpack.c.l.bf16 %v3403
          %v3793 = vunpack.c.l.bf16 %v3404
          %v3794 = vunpack.c.l.bf16 %v3405
          %v3795 = vunpack.c.l.bf16 %v3406
          %v3796 = vunpack.c.l.bf16 %v3407
          %v3797 = vunpack.c.l.bf16 %v3408
          %v3798 = vunpack.c.l.bf16 %v3409
          %v3799 = vunpack.c.l.bf16 %v3410
          %v3800 = vunpack.c.l.bf16 %v3411
          %v3801 = vunpack.c.l.bf16 %v3412
          %v3802 = vunpack.c.l.bf16 %v3413
          %v3803 = vunpack.c.l.bf16 %v3414
          %v3804 = vunpack.c.l.bf16 %v3415
          %v3805 = vunpack.c.l.bf16 %v3416
          %v3806 = vunpack.c.l.bf16 %v3417
          %v3807 = vunpack.c.l.bf16 %v3418
          %v3808 = vunpack.c.l.bf16 %v3419
          %v3809 = vunpack.c.l.bf16 %v3420
          %v3810 = vunpack.c.l.bf16 %v3421
          %v3811 = vunpack.c.l.bf16 %v3422
          %v3812 = vunpack.c.l.bf16 %v3423
          %v3813 = vunpack.c.l.bf16 %v3424
          %v3814 = vunpack.c.l.bf16 %v3425
          %v3815 = vunpack.c.l.bf16 %v3426
          %v3816 = vunpack.c.l.bf16 %v3427
          %v3817 = vunpack.c.l.bf16 %v3428
          %v3818 = vunpack.c.l.bf16 %v3770
          %v3819 = vunpack.c.h.bf16 %v3770
          %v3820 = vunpack.c.l.bf16 %v3771
          %v3821 = vunpack.c.h.bf16 %v3771
          %v3822 = vunpack.c.l.bf16 %v3772
          %v3823 = vunpack.c.h.bf16 %v3772
          %v3824 = vunpack.c.l.bf16 %v3773
          %v3825 = vunpack.c.h.bf16 %v3773
          %v3826 = vunpack.c.l.bf16 %v3774
          %v3827 = vunpack.c.h.bf16 %v3774
          %v3828 = vunpack.c.l.bf16 %v3775
          %v3829 = vunpack.c.h.bf16 %v3775
          %v3830 = vunpack.c.l.bf16 %v3776
          %v3831 = vunpack.c.h.bf16 %v3776
          %v3832 = vunpack.c.l.bf16 %v3777
          %v3833 = vunpack.c.h.bf16 %v3777
          %v3834 = vunpack.c.l.bf16 %v3778
          %v3835 = vunpack.c.h.bf16 %v3778
          %v3836 = vunpack.c.l.bf16 %v3779
          %v3837 = vunpack.c.h.bf16 %v3779
          %v3838 = vunpack.c.l.bf16 %v3780
          %v3839 = vunpack.c.h.bf16 %v3780
          %v3840 = vunpack.c.l.bf16 %v3781
          %v3841 = vunpack.c.h.bf16 %v3781
          %v3842 = vunpack.c.l.bf16 %v3782
          %v3843 = vunpack.c.h.bf16 %v3782
          %v3844 = vunpack.c.l.bf16 %v3783
          %v3845 = vunpack.c.h.bf16 %v3783
          %v3846 = vunpack.c.l.bf16 %v3784
          %v3847 = vunpack.c.h.bf16 %v3784
          %v3848 = vunpack.c.l.bf16 %v3785
          %v3849 = vunpack.c.h.bf16 %v3785
          %v3850 = vmax.f32 %v3786, %v3818
          %v3851 = vmax.f32 %v3787, %v3819
          %v3852 = vmax.f32 %v3788, %v3820
          %v3853 = vmax.f32 %v3789, %v3821
          %v3854 = vmax.f32 %v3790, %v3822
          %v3855 = vmax.f32 %v3791, %v3823
          %v3856 = vmax.f32 %v3792, %v3824
          %v3857 = vmax.f32 %v3793, %v3825
          %v3858 = vmax.f32 %v3794, %v3826
          %v3859 = vmax.f32 %v3795, %v3827
          %v3860 = vmax.f32 %v3796, %v3828
          %v3861 = vmax.f32 %v3797, %v3829
          %v3862 = vmax.f32 %v3798, %v3830
          %v3863 = vmax.f32 %v3799, %v3831
          %v3864 = vmax.f32 %v3800, %v3832
          %v3865 = vmax.f32 %v3801, %v3833
          %v3866 = vmax.f32 %v3802, %v3834
          %v3867 = vmax.f32 %v3803, %v3835
          %v3868 = vmax.f32 %v3804, %v3836
          %v3869 = vmax.f32 %v3805, %v3837
          %v3870 = vmax.f32 %v3806, %v3838
          %v3871 = vmax.f32 %v3807, %v3839
          %v3872 = vmax.f32 %v3808, %v3840
          %v3873 = vmax.f32 %v3809, %v3841
          %v3874 = vmax.f32 %v3810, %v3842
          %v3875 = vmax.f32 %v3811, %v3843
          %v3876 = vmax.f32 %v3812, %v3844
          %v3877 = vmax.f32 %v3813, %v3845
          %v3878 = vmax.f32 %v3814, %v3846
          %v3879 = vmax.f32 %v3815, %v3847
          %v3880 = vmax.f32 %v3816, %v3848
          %v3881 = vmax.f32 %v3817, %v3849
          %v3882 = vpack.c.bf16 %v3850, %v3850
          %v3883 = vpack.c.bf16 %v3851, %v3851
          %v3884 = vpack.c.bf16 %v3852, %v3852
          %v3885 = vpack.c.bf16 %v3853, %v3853
          %v3886 = vpack.c.bf16 %v3854, %v3854
          %v3887 = vpack.c.bf16 %v3855, %v3855
          %v3888 = vpack.c.bf16 %v3856, %v3856
          %v3889 = vpack.c.bf16 %v3857, %v3857
          %v3890 = vpack.c.bf16 %v3858, %v3858
          %v3891 = vpack.c.bf16 %v3859, %v3859
          %v3892 = vpack.c.bf16 %v3860, %v3860
          %v3893 = vpack.c.bf16 %v3861, %v3861
          %v3894 = vpack.c.bf16 %v3862, %v3862
          %v3895 = vpack.c.bf16 %v3863, %v3863
          %v3896 = vpack.c.bf16 %v3864, %v3864
          %v3897 = vpack.c.bf16 %v3865, %v3865
          %v3898 = vpack.c.bf16 %v3866, %v3866
          %v3899 = vpack.c.bf16 %v3867, %v3867
          %v3900 = vpack.c.bf16 %v3868, %v3868
          %v3901 = vpack.c.bf16 %v3869, %v3869
          %v3902 = vpack.c.bf16 %v3870, %v3870
          %v3903 = vpack.c.bf16 %v3871, %v3871
          %v3904 = vpack.c.bf16 %v3872, %v3872
          %v3905 = vpack.c.bf16 %v3873, %v3873
          %v3906 = vpack.c.bf16 %v3874, %v3874
          %v3907 = vpack.c.bf16 %v3875, %v3875
          %v3908 = vpack.c.bf16 %v3876, %v3876
          %v3909 = vpack.c.bf16 %v3877, %v3877
          %v3910 = vpack.c.bf16 %v3878, %v3878
          %v3911 = vpack.c.bf16 %v3879, %v3879
          %v3912 = vpack.c.bf16 %v3880, %v3880
          %v3913 = vpack.c.bf16 %v3881, %v3881
          %3914 = vst.msk [vmem:[#allocation3 + $0x10] sm:$0xf] %vm1752, %v3882
          %3915 = vst.msk [vmem:[#allocation3 + $0x14] sm:$0xf] %vm1752, %v3883
          %3916 = vst.msk [vmem:[#allocation3 + $0x18] sm:$0xf] %vm1752, %v3884
          %3917 = vst.msk [vmem:[#allocation3 + $0x1c] sm:$0xf] %vm1752, %v3885
          %3918 = vst.msk [vmem:[#allocation3 + $0x20] sm:$0xf] %vm1752, %v3886
          %3919 = vst.msk [vmem:[#allocation3 + $0x24] sm:$0xf] %vm1752, %v3887
          %3920 = vst.msk [vmem:[#allocation3 + $0x28] sm:$0xf] %vm1752, %v3888
          %3921 = vst.msk [vmem:[#allocation3 + $0x2c] sm:$0xf] %vm1752, %v3889
          %3922 = vst.msk [vmem:[#allocation3 + $0x30] sm:$0xf] %vm1752, %v3890
          %3923 = vst.msk [vmem:[#allocation3 + $0x34] sm:$0xf] %vm1752, %v3891
          %3924 = vst.msk [vmem:[#allocation3 + $0x38] sm:$0xf] %vm1752, %v3892
          %3925 = vst.msk [vmem:[#allocation3 + $0x3c] sm:$0xf] %vm1752, %v3893
          %3926 = vst.msk [vmem:[#allocation3 + $0x40] sm:$0xf] %vm1752, %v3894
          %3927 = vst.msk [vmem:[#allocation3 + $0x44] sm:$0xf] %vm1752, %v3895
          %3928 = vst.msk [vmem:[#allocation3 + $0x48] sm:$0xf] %vm1752, %v3896
          %3929 = vst.msk [vmem:[#allocation3 + $0x4c] sm:$0xf] %vm1752, %v3897
          %3930 = vst.msk [vmem:[#allocation3 + $0x50] sm:$0xf] %vm1752, %v3898
          %3931 = vst.msk [vmem:[#allocation3 + $0x54] sm:$0xf] %vm1752, %v3899
          %3932 = vst.msk [vmem:[#allocation3 + $0x58] sm:$0xf] %vm1752, %v3900
          %3933 = vst.msk [vmem:[#allocation3 + $0x5c] sm:$0xf] %vm1752, %v3901
          %3934 = vst.msk [vmem:[#allocation3 + $0x60] sm:$0xf] %vm1752, %v3902
          %3935 = vst.msk [vmem:[#allocation3 + $0x64] sm:$0xf] %vm1752, %v3903
          %3936 = vst.msk [vmem:[#allocation3 + $0x68] sm:$0xf] %vm1752, %v3904
          %3937 = vst.msk [vmem:[#allocation3 + $0x6c] sm:$0xf] %vm1752, %v3905
          %3938 = vst.msk [vmem:[#allocation3 + $0x70] sm:$0xf] %vm1752, %v3906
          %3939 = vst.msk [vmem:[#allocation3 + $0x74] sm:$0xf] %vm1752, %v3907
          %3940 = vst.msk [vmem:[#allocation3 + $0x78] sm:$0xf] %vm1752, %v3908
          %3941 = vst.msk [vmem:[#allocation3 + $0x7c] sm:$0xf] %vm1752, %v3909
          %3942 = vst.msk [vmem:[#allocation3 + $0x80] sm:$0xf] %vm1752, %v3910
          %3943 = vst.msk [vmem:[#allocation3 + $0x84] sm:$0xf] %vm1752, %v3911
          %3944 = vst.msk [vmem:[#allocation3 + $0x88] sm:$0xf] %vm1752, %v3912
          %3945 = vst.msk [vmem:[#allocation3 + $0x8c] sm:$0xf] %vm1752, %v3913
          %v3946 = vld [vmem:[#allocation3 + $0x8] sm:$0xf]
          %v3947 = vld [vmem:[#allocation3 + $0xc] sm:$0xf]
          %v3948 = vld [vmem:[#allocation3 + $0x10] sm:$0xf]
          %v3949 = vld [vmem:[#allocation3 + $0x14] sm:$0xf]
          %v3950 = vld [vmem:[#allocation3 + $0x18] sm:$0xf]
          %v3951 = vld [vmem:[#allocation3 + $0x1c] sm:$0xf]
          %v3952 = vld [vmem:[#allocation3 + $0x20] sm:$0xf]
          %v3953 = vld [vmem:[#allocation3 + $0x24] sm:$0xf]
          %v3954 = vld [vmem:[#allocation3 + $0x28] sm:$0xf]
          %v3955 = vld [vmem:[#allocation3 + $0x2c] sm:$0xf]
          %v3956 = vld [vmem:[#allocation3 + $0x30] sm:$0xf]
          %v3957 = vld [vmem:[#allocation3 + $0x34] sm:$0xf]
          %v3958 = vld [vmem:[#allocation3 + $0x38] sm:$0xf]
          %v3959 = vld [vmem:[#allocation3 + $0x3c] sm:$0xf]
          %v3960 = vld [vmem:[#allocation3 + $0x40] sm:$0xf]
          %v3961 = vld [vmem:[#allocation3 + $0x44] sm:$0xf]
          %v3962 = vld [vmem:[#allocation3 + $0x48] sm:$0xf]
          %v3963 = vld [vmem:[#allocation3 + $0x4c] sm:$0xf]
          %v3964 = vld [vmem:[#allocation3 + $0x50] sm:$0xf]
          %v3965 = vld [vmem:[#allocation3 + $0x54] sm:$0xf]
          %v3966 = vld [vmem:[#allocation3 + $0x58] sm:$0xf]
          %v3967 = vld [vmem:[#allocation3 + $0x5c] sm:$0xf]
          %v3968 = vld [vmem:[#allocation3 + $0x60] sm:$0xf]
          %v3969 = vld [vmem:[#allocation3 + $0x64] sm:$0xf]
          %v3970 = vld [vmem:[#allocation3 + $0x68] sm:$0xf]
          %v3971 = vld [vmem:[#allocation3 + $0x6c] sm:$0xf]
          %v3972 = vld [vmem:[#allocation3 + $0x70] sm:$0xf]
          %v3973 = vld [vmem:[#allocation3 + $0x74] sm:$0xf]
          %v3974 = vld [vmem:[#allocation3 + $0x78] sm:$0xf]
          %v3975 = vld [vmem:[#allocation3 + $0x7c] sm:$0xf]
          %v3976 = vld [vmem:[#allocation3 + $0x80] sm:$0xf]
          %v3977 = vld [vmem:[#allocation3 + $0x84] sm:$0xf]
          %v3978 = vunpack.c.l.bf16 %v3882
          %v3979 = vunpack.c.l.bf16 %v3883
          %v3980 = vunpack.c.l.bf16 %v3884
          %v3981 = vunpack.c.l.bf16 %v3885
          %v3982 = vunpack.c.l.bf16 %v3886
          %v3983 = vunpack.c.l.bf16 %v3887
          %v3984 = vunpack.c.l.bf16 %v3888
          %v3985 = vunpack.c.l.bf16 %v3889
          %v3986 = vunpack.c.l.bf16 %v3890
          %v3987 = vunpack.c.l.bf16 %v3891
          %v3988 = vunpack.c.l.bf16 %v3892
          %v3989 = vunpack.c.l.bf16 %v3893
          %v3990 = vunpack.c.l.bf16 %v3894
          %v3991 = vunpack.c.l.bf16 %v3895
          %v3992 = vunpack.c.l.bf16 %v3896
          %v3993 = vunpack.c.l.bf16 %v3897
          %v3994 = vunpack.c.l.bf16 %v3898
          %v3995 = vunpack.c.l.bf16 %v3899
          %v3996 = vunpack.c.l.bf16 %v3900
          %v3997 = vunpack.c.l.bf16 %v3901
          %v3998 = vunpack.c.l.bf16 %v3902
          %v3999 = vunpack.c.l.bf16 %v3903
          %v4000 = vunpack.c.l.bf16 %v3904
          %v4001 = vunpack.c.l.bf16 %v3905
          %v4002 = vunpack.c.l.bf16 %v3906
          %v4003 = vunpack.c.l.bf16 %v3907
          %v4004 = vunpack.c.l.bf16 %v3908
          %v4005 = vunpack.c.l.bf16 %v3909
          %v4006 = vunpack.c.l.bf16 %v3910
          %v4007 = vunpack.c.l.bf16 %v3911
          %v4008 = vunpack.c.l.bf16 %v3912
          %v4009 = vunpack.c.l.bf16 %v3913
          %v4010 = vunpack.c.l.bf16 %v3946
          %v4011 = vunpack.c.l.bf16 %v3947
          %v4012 = vunpack.c.l.bf16 %v3948
          %v4013 = vunpack.c.l.bf16 %v3949
          %v4014 = vunpack.c.l.bf16 %v3950
          %v4015 = vunpack.c.l.bf16 %v3951
          %v4016 = vunpack.c.l.bf16 %v3952
          %v4017 = vunpack.c.l.bf16 %v3953
          %v4018 = vunpack.c.l.bf16 %v3954
          %v4019 = vunpack.c.l.bf16 %v3955
          %v4020 = vunpack.c.l.bf16 %v3956
          %v4021 = vunpack.c.l.bf16 %v3957
          %v4022 = vunpack.c.l.bf16 %v3958
          %v4023 = vunpack.c.l.bf16 %v3959
          %v4024 = vunpack.c.l.bf16 %v3960
          %v4025 = vunpack.c.l.bf16 %v3961
          %v4026 = vunpack.c.l.bf16 %v3962
          %v4027 = vunpack.c.l.bf16 %v3963
          %v4028 = vunpack.c.l.bf16 %v3964
          %v4029 = vunpack.c.l.bf16 %v3965
          %v4030 = vunpack.c.l.bf16 %v3966
          %v4031 = vunpack.c.l.bf16 %v3967
          %v4032 = vunpack.c.l.bf16 %v3968
          %v4033 = vunpack.c.l.bf16 %v3969
          %v4034 = vunpack.c.l.bf16 %v3970
          %v4035 = vunpack.c.l.bf16 %v3971
          %v4036 = vunpack.c.l.bf16 %v3972
          %v4037 = vunpack.c.l.bf16 %v3973
          %v4038 = vunpack.c.l.bf16 %v3974
          %v4039 = vunpack.c.l.bf16 %v3975
          %v4040 = vunpack.c.l.bf16 %v3976
          %v4041 = vunpack.c.l.bf16 %v3977
          %v4042 = vmax.f32 %v3978, %v4010
          %v4043 = vmax.f32 %v3979, %v4011
          %v4044 = vmax.f32 %v3980, %v4012
          %v4045 = vmax.f32 %v3981, %v4013
          %v4046 = vmax.f32 %v3982, %v4014
          %v4047 = vmax.f32 %v3983, %v4015
          %v4048 = vmax.f32 %v3984, %v4016
          %v4049 = vmax.f32 %v3985, %v4017
          %v4050 = vmax.f32 %v3986, %v4018
          %v4051 = vmax.f32 %v3987, %v4019
          %v4052 = vmax.f32 %v3988, %v4020
          %v4053 = vmax.f32 %v3989, %v4021
          %v4054 = vmax.f32 %v3990, %v4022
          %v4055 = vmax.f32 %v3991, %v4023
          %v4056 = vmax.f32 %v3992, %v4024
          %v4057 = vmax.f32 %v3993, %v4025
          %v4058 = vmax.f32 %v3994, %v4026
          %v4059 = vmax.f32 %v3995, %v4027
          %v4060 = vmax.f32 %v3996, %v4028
          %v4061 = vmax.f32 %v3997, %v4029
          %v4062 = vmax.f32 %v3998, %v4030
          %v4063 = vmax.f32 %v3999, %v4031
          %v4064 = vmax.f32 %v4000, %v4032
          %v4065 = vmax.f32 %v4001, %v4033
          %v4066 = vmax.f32 %v4002, %v4034
          %v4067 = vmax.f32 %v4003, %v4035
          %v4068 = vmax.f32 %v4004, %v4036
          %v4069 = vmax.f32 %v4005, %v4037
          %v4070 = vmax.f32 %v4006, %v4038
          %v4071 = vmax.f32 %v4007, %v4039
          %v4072 = vmax.f32 %v4008, %v4040
          %v4073 = vmax.f32 %v4009, %v4041
          %v4074 = vpack.c.bf16 %v4042, %v4042
          %v4075 = vpack.c.bf16 %v4043, %v4043
          %v4076 = vpack.c.bf16 %v4044, %v4044
          %v4077 = vpack.c.bf16 %v4045, %v4045
          %v4078 = vpack.c.bf16 %v4046, %v4046
          %v4079 = vpack.c.bf16 %v4047, %v4047
          %v4080 = vpack.c.bf16 %v4048, %v4048
          %v4081 = vpack.c.bf16 %v4049, %v4049
          %v4082 = vpack.c.bf16 %v4050, %v4050
          %v4083 = vpack.c.bf16 %v4051, %v4051
          %v4084 = vpack.c.bf16 %v4052, %v4052
          %v4085 = vpack.c.bf16 %v4053, %v4053
          %v4086 = vpack.c.bf16 %v4054, %v4054
          %v4087 = vpack.c.bf16 %v4055, %v4055
          %v4088 = vpack.c.bf16 %v4056, %v4056
          %v4089 = vpack.c.bf16 %v4057, %v4057
          %v4090 = vpack.c.bf16 %v4058, %v4058
          %v4091 = vpack.c.bf16 %v4059, %v4059
          %v4092 = vpack.c.bf16 %v4060, %v4060
          %v4093 = vpack.c.bf16 %v4061, %v4061
          %v4094 = vpack.c.bf16 %v4062, %v4062
          %v4095 = vpack.c.bf16 %v4063, %v4063
          %v4096 = vpack.c.bf16 %v4064, %v4064
          %v4097 = vpack.c.bf16 %v4065, %v4065
          %v4098 = vpack.c.bf16 %v4066, %v4066
          %v4099 = vpack.c.bf16 %v4067, %v4067
          %v4100 = vpack.c.bf16 %v4068, %v4068
          %v4101 = vpack.c.bf16 %v4069, %v4069
          %v4102 = vpack.c.bf16 %v4070, %v4070
          %v4103 = vpack.c.bf16 %v4071, %v4071
          %v4104 = vpack.c.bf16 %v4072, %v4072
          %v4105 = vpack.c.bf16 %v4073, %v4073
          %v4106 = vld [vmem:[#allocation3] sm:$0xf]
          %v4107 = vld [vmem:[#allocation3 + $0x4] sm:$0xf]
          %v4108 = vunpack.c.l.bf16 %v4074
          %v4109 = vunpack.c.l.bf16 %v4075
          %v4110 = vunpack.c.l.bf16 %v4076
          %v4111 = vunpack.c.l.bf16 %v4077
          %v4112 = vunpack.c.l.bf16 %v4078
          %v4113 = vunpack.c.l.bf16 %v4079
          %v4114 = vunpack.c.l.bf16 %v4080
          %v4115 = vunpack.c.l.bf16 %v4081
          %v4116 = vunpack.c.l.bf16 %v4082
          %v4117 = vunpack.c.l.bf16 %v4083
          %v4118 = vunpack.c.l.bf16 %v4084
          %v4119 = vunpack.c.l.bf16 %v4085
          %v4120 = vunpack.c.l.bf16 %v4086
          %v4121 = vunpack.c.l.bf16 %v4087
          %v4122 = vunpack.c.l.bf16 %v4088
          %v4123 = vunpack.c.l.bf16 %v4089
          %v4124 = vunpack.c.l.bf16 %v4090
          %v4125 = vunpack.c.l.bf16 %v4091
          %v4126 = vunpack.c.l.bf16 %v4092
          %v4127 = vunpack.c.l.bf16 %v4093
          %v4128 = vunpack.c.l.bf16 %v4094
          %v4129 = vunpack.c.l.bf16 %v4095
          %v4130 = vunpack.c.l.bf16 %v4096
          %v4131 = vunpack.c.l.bf16 %v4097
          %v4132 = vunpack.c.l.bf16 %v4098
          %v4133 = vunpack.c.l.bf16 %v4099
          %v4134 = vunpack.c.l.bf16 %v4100
          %v4135 = vunpack.c.l.bf16 %v4101
          %v4136 = vunpack.c.l.bf16 %v4102
          %v4137 = vunpack.c.l.bf16 %v4103
          %v4138 = vunpack.c.l.bf16 %v4104
          %v4139 = vunpack.c.l.bf16 %v4105
          %v4140 = vunpack.c.l.bf16 %v4106
          %v4141 = vunpack.c.l.bf16 %v4107
          %v4142 = vmax.f32 %v4108, %v4140
          %v4143 = vmax.f32 %v4109, %v4141
          %v4144 = vmax.f32 %v4110, %v4010
          %v4145 = vmax.f32 %v4111, %v4011
          %v4146 = vmax.f32 %v4112, %v4012
          %v4147 = vmax.f32 %v4113, %v4013
          %v4148 = vmax.f32 %v4114, %v4014
          %v4149 = vmax.f32 %v4115, %v4015
          %v4150 = vmax.f32 %v4116, %v4016
          %v4151 = vmax.f32 %v4117, %v4017
          %v4152 = vmax.f32 %v4118, %v4018
          %v4153 = vmax.f32 %v4119, %v4019
          %v4154 = vmax.f32 %v4120, %v4020
          %v4155 = vmax.f32 %v4121, %v4021
          %v4156 = vmax.f32 %v4122, %v4022
          %v4157 = vmax.f32 %v4123, %v4023
          %v4158 = vmax.f32 %v4124, %v4024
          %v4159 = vmax.f32 %v4125, %v4025
          %v4160 = vmax.f32 %v4126, %v4026
          %v4161 = vmax.f32 %v4127, %v4027
          %v4162 = vmax.f32 %v4128, %v4028
          %v4163 = vmax.f32 %v4129, %v4029
          %v4164 = vmax.f32 %v4130, %v4030
          %v4165 = vmax.f32 %v4131, %v4031
          %v4166 = vmax.f32 %v4132, %v4032
          %v4167 = vmax.f32 %v4133, %v4033
          %v4168 = vmax.f32 %v4134, %v4034
          %v4169 = vmax.f32 %v4135, %v4035
          %v4170 = vmax.f32 %v4136, %v4036
          %v4171 = vmax.f32 %v4137, %v4037
          %v4172 = vmax.f32 %v4138, %v4038
          %v4173 = vmax.f32 %v4139, %v4039
          %v4174 = vpack.c.bf16 %v4142, %v4142
          %v4175 = vpack.c.bf16 %v4143, %v4143
          %v4176 = vpack.c.bf16 %v4144, %v4144
          %v4177 = vpack.c.bf16 %v4145, %v4145
          %v4178 = vpack.c.bf16 %v4146, %v4146
          %v4179 = vpack.c.bf16 %v4147, %v4147
          %v4180 = vpack.c.bf16 %v4148, %v4148
          %v4181 = vpack.c.bf16 %v4149, %v4149
          %v4182 = vpack.c.bf16 %v4150, %v4150
          %v4183 = vpack.c.bf16 %v4151, %v4151
          %v4184 = vpack.c.bf16 %v4152, %v4152
          %v4185 = vpack.c.bf16 %v4153, %v4153
          %v4186 = vpack.c.bf16 %v4154, %v4154
          %v4187 = vpack.c.bf16 %v4155, %v4155
          %v4188 = vpack.c.bf16 %v4156, %v4156
          %v4189 = vpack.c.bf16 %v4157, %v4157
          %v4190 = vpack.c.bf16 %v4158, %v4158
          %v4191 = vpack.c.bf16 %v4159, %v4159
          %v4192 = vpack.c.bf16 %v4160, %v4160
          %v4193 = vpack.c.bf16 %v4161, %v4161
          %v4194 = vpack.c.bf16 %v4162, %v4162
          %v4195 = vpack.c.bf16 %v4163, %v4163
          %v4196 = vpack.c.bf16 %v4164, %v4164
          %v4197 = vpack.c.bf16 %v4165, %v4165
          %v4198 = vpack.c.bf16 %v4166, %v4166
          %v4199 = vpack.c.bf16 %v4167, %v4167
          %v4200 = vpack.c.bf16 %v4168, %v4168
          %v4201 = vpack.c.bf16 %v4169, %v4169
          %v4202 = vpack.c.bf16 %v4170, %v4170
          %v4203 = vpack.c.bf16 %v4171, %v4171
          %v4204 = vpack.c.bf16 %v4172, %v4172
          %v4205 = vpack.c.bf16 %v4173, %v4173
          %v4206 = vld [vmem:[#allocation3 + $0x88] sm:$0xf]
          %v4207 = vld [vmem:[#allocation3 + $0x8c] sm:$0xf]
          %v4208 = vld [vmem:[#allocation3 + $0x90] sm:$0xf]
          %v4209 = vld [vmem:[#allocation3 + $0x94] sm:$0xf]
          %v4210 = vunpack.c.l.bf16 %v4174
          %v4211 = vunpack.c.l.bf16 %v4175
          %v4212 = vunpack.c.l.bf16 %v4176
          %v4213 = vunpack.c.l.bf16 %v4177
          %v4214 = vunpack.c.l.bf16 %v4178
          %v4215 = vunpack.c.l.bf16 %v4179
          %v4216 = vunpack.c.l.bf16 %v4180
          %v4217 = vunpack.c.l.bf16 %v4181
          %v4218 = vunpack.c.l.bf16 %v4182
          %v4219 = vunpack.c.l.bf16 %v4183
          %v4220 = vunpack.c.l.bf16 %v4184
          %v4221 = vunpack.c.l.bf16 %v4185
          %v4222 = vunpack.c.l.bf16 %v4186
          %v4223 = vunpack.c.l.bf16 %v4187
          %v4224 = vunpack.c.l.bf16 %v4188
          %v4225 = vunpack.c.l.bf16 %v4189
          %v4226 = vunpack.c.l.bf16 %v4190
          %v4227 = vunpack.c.l.bf16 %v4191
          %v4228 = vunpack.c.l.bf16 %v4192
          %v4229 = vunpack.c.l.bf16 %v4193
          %v4230 = vunpack.c.l.bf16 %v4194
          %v4231 = vunpack.c.l.bf16 %v4195
          %v4232 = vunpack.c.l.bf16 %v4196
          %v4233 = vunpack.c.l.bf16 %v4197
          %v4234 = vunpack.c.l.bf16 %v4198
          %v4235 = vunpack.c.l.bf16 %v4199
          %v4236 = vunpack.c.l.bf16 %v4200
          %v4237 = vunpack.c.l.bf16 %v4201
          %v4238 = vunpack.c.l.bf16 %v4202
          %v4239 = vunpack.c.l.bf16 %v4203
          %v4240 = vunpack.c.l.bf16 %v4204
          %v4241 = vunpack.c.l.bf16 %v4205
          %v4242 = vunpack.c.l.bf16 %v4206
          %v4243 = vunpack.c.l.bf16 %v4207
          %v4244 = vunpack.c.l.bf16 %v4208
          %v4245 = vunpack.c.l.bf16 %v4209
          %v4246 = vmax.f32 %v4210, %v4014
          %v4247 = vmax.f32 %v4211, %v4015
          %v4248 = vmax.f32 %v4212, %v4016
          %v4249 = vmax.f32 %v4213, %v4017
          %v4250 = vmax.f32 %v4214, %v4018
          %v4251 = vmax.f32 %v4215, %v4019
          %v4252 = vmax.f32 %v4216, %v4020
          %v4253 = vmax.f32 %v4217, %v4021
          %v4254 = vmax.f32 %v4218, %v4022
          %v4255 = vmax.f32 %v4219, %v4023
          %v4256 = vmax.f32 %v4220, %v4024
          %v4257 = vmax.f32 %v4221, %v4025
          %v4258 = vmax.f32 %v4222, %v4026
          %v4259 = vmax.f32 %v4223, %v4027
          %v4260 = vmax.f32 %v4224, %v4028
          %v4261 = vmax.f32 %v4225, %v4029
          %v4262 = vmax.f32 %v4226, %v4030
          %v4263 = vmax.f32 %v4227, %v4031
          %v4264 = vmax.f32 %v4228, %v4032
          %v4265 = vmax.f32 %v4229, %v4033
          %v4266 = vmax.f32 %v4230, %v4034
          %v4267 = vmax.f32 %v4231, %v4035
          %v4268 = vmax.f32 %v4232, %v4036
          %v4269 = vmax.f32 %v4233, %v4037
          %v4270 = vmax.f32 %v4234, %v4038
          %v4271 = vmax.f32 %v4235, %v4039
          %v4272 = vmax.f32 %v4236, %v4040
          %v4273 = vmax.f32 %v4237, %v4041
          %v4274 = vmax.f32 %v4238, %v4242
          %v4275 = vmax.f32 %v4239, %v4243
          %v4276 = vmax.f32 %v4240, %v4244
          %v4277 = vmax.f32 %v4241, %v4245
          %v4278 = vpack.c.bf16 %v4246, %v4246
          %v4279 = vpack.c.bf16 %v4247, %v4247
          %v4280 = vpack.c.bf16 %v4248, %v4248
          %v4281 = vpack.c.bf16 %v4249, %v4249
          %v4282 = vpack.c.bf16 %v4250, %v4250
          %v4283 = vpack.c.bf16 %v4251, %v4251
          %v4284 = vpack.c.bf16 %v4252, %v4252
          %v4285 = vpack.c.bf16 %v4253, %v4253
          %v4286 = vpack.c.bf16 %v4254, %v4254
          %v4287 = vpack.c.bf16 %v4255, %v4255
          %v4288 = vpack.c.bf16 %v4256, %v4256
          %v4289 = vpack.c.bf16 %v4257, %v4257
          %v4290 = vpack.c.bf16 %v4258, %v4258
          %v4291 = vpack.c.bf16 %v4259, %v4259
          %v4292 = vpack.c.bf16 %v4260, %v4260
          %v4293 = vpack.c.bf16 %v4261, %v4261
          %v4294 = vpack.c.bf16 %v4262, %v4262
          %v4295 = vpack.c.bf16 %v4263, %v4263
          %v4296 = vpack.c.bf16 %v4264, %v4264
          %v4297 = vpack.c.bf16 %v4265, %v4265
          %v4298 = vpack.c.bf16 %v4266, %v4266
          %v4299 = vpack.c.bf16 %v4267, %v4267
          %v4300 = vpack.c.bf16 %v4268, %v4268
          %v4301 = vpack.c.bf16 %v4269, %v4269
          %v4302 = vpack.c.bf16 %v4270, %v4270
          %v4303 = vpack.c.bf16 %v4271, %v4271
          %v4304 = vpack.c.bf16 %v4272, %v4272
          %v4305 = vpack.c.bf16 %v4273, %v4273
          %v4306 = vpack.c.bf16 %v4274, %v4274
          %v4307 = vpack.c.bf16 %v4275, %v4275
          %v4308 = vpack.c.bf16 %v4276, %v4276
          %v4309 = vpack.c.bf16 %v4277, %v4277
          %v4310 = vld [vmem:[#allocation3 + $0x98] sm:$0xf]
          %v4311 = vld [vmem:[#allocation3 + $0x9c] sm:$0xf]
          %v4312 = vunpack.c.l.bf16 %v4278
          %v4313 = vunpack.c.l.bf16 %v4279
          %v4314 = vunpack.c.l.bf16 %v4280
          %v4315 = vunpack.c.l.bf16 %v4281
          %v4316 = vunpack.c.l.bf16 %v4282
          %v4317 = vunpack.c.l.bf16 %v4283
          %v4318 = vunpack.c.l.bf16 %v4284
          %v4319 = vunpack.c.l.bf16 %v4285
          %v4320 = vunpack.c.l.bf16 %v4286
          %v4321 = vunpack.c.l.bf16 %v4287
          %v4322 = vunpack.c.l.bf16 %v4288
          %v4323 = vunpack.c.l.bf16 %v4289
          %v4324 = vunpack.c.l.bf16 %v4290
          %v4325 = vunpack.c.l.bf16 %v4291
          %v4326 = vunpack.c.l.bf16 %v4292
          %v4327 = vunpack.c.l.bf16 %v4293
          %v4328 = vunpack.c.l.bf16 %v4294
          %v4329 = vunpack.c.l.bf16 %v4295
          %v4330 = vunpack.c.l.bf16 %v4296
          %v4331 = vunpack.c.l.bf16 %v4297
          %v4332 = vunpack.c.l.bf16 %v4298
          %v4333 = vunpack.c.l.bf16 %v4299
          %v4334 = vunpack.c.l.bf16 %v4300
          %v4335 = vunpack.c.l.bf16 %v4301
          %v4336 = vunpack.c.l.bf16 %v4302
          %v4337 = vunpack.c.l.bf16 %v4303
          %v4338 = vunpack.c.l.bf16 %v4304
          %v4339 = vunpack.c.l.bf16 %v4305
          %v4340 = vunpack.c.l.bf16 %v4306
          %v4341 = vunpack.c.l.bf16 %v4307
          %v4342 = vunpack.c.l.bf16 %v4308
          %v4343 = vunpack.c.l.bf16 %v4309
          %v4344 = vunpack.c.l.bf16 %v4310
          %v4345 = vunpack.c.l.bf16 %v4311
          %v4346 = vmax.f32 %v4312, %v4016
          %v4347 = vmax.f32 %v4313, %v4017
          %v4348 = vmax.f32 %v4314, %v4018
          %v4349 = vmax.f32 %v4315, %v4019
          %v4350 = vmax.f32 %v4316, %v4020
          %v4351 = vmax.f32 %v4317, %v4021
          %v4352 = vmax.f32 %v4318, %v4022
          %v4353 = vmax.f32 %v4319, %v4023
          %v4354 = vmax.f32 %v4320, %v4024
          %v4355 = vmax.f32 %v4321, %v4025
          %v4356 = vmax.f32 %v4322, %v4026
          %v4357 = vmax.f32 %v4323, %v4027
          %v4358 = vmax.f32 %v4324, %v4028
          %v4359 = vmax.f32 %v4325, %v4029
          %v4360 = vmax.f32 %v4326, %v4030
          %v4361 = vmax.f32 %v4327, %v4031
          %v4362 = vmax.f32 %v4328, %v4032
          %v4363 = vmax.f32 %v4329, %v4033
          %v4364 = vmax.f32 %v4330, %v4034
          %v4365 = vmax.f32 %v4331, %v4035
          %v4366 = vmax.f32 %v4332, %v4036
          %v4367 = vmax.f32 %v4333, %v4037
          %v4368 = vmax.f32 %v4334, %v4038
          %v4369 = vmax.f32 %v4335, %v4039
          %v4370 = vmax.f32 %v4336, %v4040
          %v4371 = vmax.f32 %v4337, %v4041
          %v4372 = vmax.f32 %v4338, %v4242
          %v4373 = vmax.f32 %v4339, %v4243
          %v4374 = vmax.f32 %v4340, %v4244
          %v4375 = vmax.f32 %v4341, %v4245
          %v4376 = vmax.f32 %v4342, %v4344
          %v4377 = vmax.f32 %v4343, %v4345
          %v4378 = vpack.c.bf16 %v4346, %v4346
          %v4379 = vpack.c.bf16 %v4347, %v4347
          %v4380 = vpack.c.bf16 %v4348, %v4348
          %v4381 = vpack.c.bf16 %v4349, %v4349
          %v4382 = vpack.c.bf16 %v4350, %v4350
          %v4383 = vpack.c.bf16 %v4351, %v4351
          %v4384 = vpack.c.bf16 %v4352, %v4352
          %v4385 = vpack.c.bf16 %v4353, %v4353
          %v4386 = vpack.c.bf16 %v4354, %v4354
          %v4387 = vpack.c.bf16 %v4355, %v4355
          %v4388 = vpack.c.bf16 %v4356, %v4356
          %v4389 = vpack.c.bf16 %v4357, %v4357
          %v4390 = vpack.c.bf16 %v4358, %v4358
          %v4391 = vpack.c.bf16 %v4359, %v4359
          %v4392 = vpack.c.bf16 %v4360, %v4360
          %v4393 = vpack.c.bf16 %v4361, %v4361
          %v4394 = vpack.c.bf16 %v4362, %v4362
          %v4395 = vpack.c.bf16 %v4363, %v4363
          %v4396 = vpack.c.bf16 %v4364, %v4364
          %v4397 = vpack.c.bf16 %v4365, %v4365
          %v4398 = vpack.c.bf16 %v4366, %v4366
          %v4399 = vpack.c.bf16 %v4367, %v4367
          %v4400 = vpack.c.bf16 %v4368, %v4368
          %v4401 = vpack.c.bf16 %v4369, %v4369
          %v4402 = vpack.c.bf16 %v4370, %v4370
          %v4403 = vpack.c.bf16 %v4371, %v4371
          %v4404 = vpack.c.bf16 %v4372, %v4372
          %v4405 = vpack.c.bf16 %v4373, %v4373
          %v4406 = vpack.c.bf16 %v4374, %v4374
          %v4407 = vpack.c.bf16 %v4375, %v4375
          %v4408 = vpack.c.bf16 %v4376, %v4376
          %v4409 = vpack.c.bf16 %v4377, %v4377
          %v4411 = vunpack.c.l.b16 %v4409
          %v4412 = vpack.c.b16 %v4411, %v4411
          %v4414 = vshrl.u32 %v4412, 16
          %v4416 = vrot.slane %v4414, 3
          %v4449 = vunpack.c.l.b16 %v4378
          %v4450 = vunpack.c.l.b16 %v4379
          %v4451 = vunpack.c.l.b16 %v4380
          %v4452 = vunpack.c.l.b16 %v4381
          %v4453 = vunpack.c.l.b16 %v4382
          %v4454 = vunpack.c.l.b16 %v4383
          %v4455 = vunpack.c.l.b16 %v4384
          %v4456 = vunpack.c.l.b16 %v4385
          %v4457 = vunpack.c.l.b16 %v4386
          %v4458 = vunpack.c.l.b16 %v4387
          %v4459 = vunpack.c.l.b16 %v4388
          %v4460 = vunpack.c.l.b16 %v4389
          %v4461 = vunpack.c.l.b16 %v4390
          %v4462 = vunpack.c.l.b16 %v4391
          %v4463 = vunpack.c.l.b16 %v4392
          %v4464 = vunpack.c.l.b16 %v4393
          %v4465 = vunpack.c.l.b16 %v4394
          %v4466 = vunpack.c.l.b16 %v4395
          %v4467 = vunpack.c.l.b16 %v4396
          %v4468 = vunpack.c.l.b16 %v4397
          %v4469 = vunpack.c.l.b16 %v4398
          %v4470 = vunpack.c.l.b16 %v4399
          %v4471 = vunpack.c.l.b16 %v4400
          %v4472 = vunpack.c.l.b16 %v4401
          %v4473 = vunpack.c.l.b16 %v4402
          %v4474 = vunpack.c.l.b16 %v4403
          %v4475 = vunpack.c.l.b16 %v4404
          %v4476 = vunpack.c.l.b16 %v4405
          %v4477 = vunpack.c.l.b16 %v4406
          %v4478 = vunpack.c.l.b16 %v4407
          %v4479 = vunpack.c.l.b16 %v4408
          %v4480 = vpack.c.b16 %v4450, %v4449
          %v4481 = vpack.c.b16 %v4452, %v4451
          %v4482 = vpack.c.b16 %v4454, %v4453
          %v4483 = vpack.c.b16 %v4456, %v4455
          %v4484 = vpack.c.b16 %v4458, %v4457
          %v4485 = vpack.c.b16 %v4460, %v4459
          %v4486 = vpack.c.b16 %v4462, %v4461
          %v4487 = vpack.c.b16 %v4464, %v4463
          %v4488 = vpack.c.b16 %v4466, %v4465
          %v4489 = vpack.c.b16 %v4468, %v4467
          %v4490 = vpack.c.b16 %v4470, %v4469
          %v4491 = vpack.c.b16 %v4472, %v4471
          %v4492 = vpack.c.b16 %v4474, %v4473
          %v4493 = vpack.c.b16 %v4476, %v4475
          %v4494 = vpack.c.b16 %v4478, %v4477
          %v4495 = vpack.c.b16 %v4411, %v4479
          %v4497 = vshrl.u32 %v4480, 16
          %v4499 = vrot.slane %v4497, 7
          %v4500 = vshll.u32 %v4480, 16
          %v4502 = vor.u32 %v4499, %v4500
          %v4504 = vshrl.u32 %v4481, 16
          %v4506 = vrot.slane %v4504, 7
          %v4507 = vshll.u32 %v4481, 16
          %v4509 = vor.u32 %v4506, %v4507
          %v4510 = vsel %vm1847, %v4499, %v4509
          %v4512 = vshrl.u32 %v4482, 16
          %v4514 = vrot.slane %v4512, 7
          %v4515 = vshll.u32 %v4482, 16
          %v4517 = vor.u32 %v4514, %v4515
          %v4518 = vsel %vm1847, %v4506, %v4517
          %v4520 = vshrl.u32 %v4483, 16
          %v4522 = vrot.slane %v4520, 7
          %v4523 = vshll.u32 %v4483, 16
          %v4525 = vor.u32 %v4522, %v4523
          %v4526 = vsel %vm1847, %v4514, %v4525
          %v4528 = vshrl.u32 %v4484, 16
          %v4530 = vrot.slane %v4528, 7
          %v4531 = vshll.u32 %v4484, 16
          %v4533 = vor.u32 %v4530, %v4531
          %v4534 = vsel %vm1847, %v4522, %v4533
          %v4536 = vshrl.u32 %v4485, 16
          %v4538 = vrot.slane %v4536, 7
          %v4539 = vshll.u32 %v4485, 16
          %v4541 = vor.u32 %v4538, %v4539
          %v4542 = vsel %vm1847, %v4530, %v4541
          %v4544 = vshrl.u32 %v4486, 16
          %v4546 = vrot.slane %v4544, 7
          %v4547 = vshll.u32 %v4486, 16
          %v4549 = vor.u32 %v4546, %v4547
          %v4550 = vsel %vm1847, %v4538, %v4549
          %v4552 = vshrl.u32 %v4487, 16
          %v4554 = vrot.slane %v4552, 7
          %v4555 = vshll.u32 %v4487, 16
          %v4557 = vor.u32 %v4554, %v4555
          %v4558 = vsel %vm1847, %v4546, %v4557
          %v4560 = vshrl.u32 %v4488, 16
          %v4562 = vrot.slane %v4560, 7
          %v4563 = vshll.u32 %v4488, 16
          %v4565 = vor.u32 %v4562, %v4563
          %v4566 = vsel %vm1847, %v4554, %v4565
          %v4568 = vshrl.u32 %v4489, 16
          %v4570 = vrot.slane %v4568, 7
          %v4571 = vshll.u32 %v4489, 16
          %v4573 = vor.u32 %v4570, %v4571
          %v4574 = vsel %vm1847, %v4562, %v4573
          %v4576 = vshrl.u32 %v4490, 16
          %v4578 = vrot.slane %v4576, 7
          %v4579 = vshll.u32 %v4490, 16
          %v4581 = vor.u32 %v4578, %v4579
          %v4582 = vsel %vm1847, %v4570, %v4581
          %v4584 = vshrl.u32 %v4491, 16
          %v4586 = vrot.slane %v4584, 7
          %v4587 = vshll.u32 %v4491, 16
          %v4589 = vor.u32 %v4586, %v4587
          %v4590 = vsel %vm1847, %v4578, %v4589
          %v4592 = vshrl.u32 %v4492, 16
          %v4594 = vrot.slane %v4592, 7
          %v4595 = vshll.u32 %v4492, 16
          %v4597 = vor.u32 %v4594, %v4595
          %v4598 = vsel %vm1847, %v4586, %v4597
          %v4600 = vshrl.u32 %v4493, 16
          %v4602 = vrot.slane %v4600, 7
          %v4603 = vshll.u32 %v4493, 16
          %v4605 = vor.u32 %v4602, %v4603
          %v4606 = vsel %vm1847, %v4594, %v4605
          %v4608 = vshrl.u32 %v4494, 16
          %v4610 = vrot.slane %v4608, 7
          %v4611 = vshll.u32 %v4494, 16
          %v4613 = vor.u32 %v4610, %v4611
          %v4614 = vsel %vm1847, %v4602, %v4613
          %v4616 = vshrl.u32 %v4495, 16
          %v4618 = vrot.slane %v4616, 7
          %v4619 = vshll.u32 %v4495, 16
          %v4621 = vor.u32 %v4618, %v4619
          %v4622 = vsel %vm1847, %v4610, %v4621
          %v4639 = vsel %vm1992, %v4416, %v4502
          %v4640 = vsel %vm2190, %v4639, %v2070
          %v4641 = vsel %vm2197, %v4510, %v2070
          %v4642 = vsel %vm2204, %v4518, %v2070
          %v4643 = vsel %vm2211, %v4526, %v2070
          %v4644 = vsel %vm2218, %v4534, %v2070
          %v4645 = vsel %vm2225, %v4542, %v2070
          %v4646 = vsel %vm2232, %v4550, %v2070
          %v4647 = vsel %vm2239, %v4558, %v2070
          %v4648 = vsel %vm2246, %v4566, %v2070
          %v4649 = vsel %vm2253, %v4574, %v2070
          %v4650 = vsel %vm2260, %v4582, %v2070
          %v4651 = vsel %vm2267, %v4590, %v2070
          %v4652 = vsel %vm2274, %v4598, %v2070
          %v4653 = vsel %vm2281, %v4606, %v2070
          %v4654 = vsel %vm2288, %v4614, %v2070
          %v4655 = vsel %vm2295, %v4622, %v2070
          %v4656 = vunpack.c.l.bf16 %v4378
          %v4657 = vunpack.c.l.bf16 %v4379
          %v4658 = vunpack.c.l.bf16 %v4380
          %v4659 = vunpack.c.l.bf16 %v4381
          %v4660 = vunpack.c.l.bf16 %v4382
          %v4661 = vunpack.c.l.bf16 %v4383
          %v4662 = vunpack.c.l.bf16 %v4384
          %v4663 = vunpack.c.l.bf16 %v4385
          %v4664 = vunpack.c.l.bf16 %v4386
          %v4665 = vunpack.c.l.bf16 %v4387
          %v4666 = vunpack.c.l.bf16 %v4388
          %v4667 = vunpack.c.l.bf16 %v4389
          %v4668 = vunpack.c.l.bf16 %v4390
          %v4669 = vunpack.c.l.bf16 %v4391
          %v4670 = vunpack.c.l.bf16 %v4392
          %v4671 = vunpack.c.l.bf16 %v4393
          %v4672 = vunpack.c.l.bf16 %v4394
          %v4673 = vunpack.c.l.bf16 %v4395
          %v4674 = vunpack.c.l.bf16 %v4396
          %v4675 = vunpack.c.l.bf16 %v4397
          %v4676 = vunpack.c.l.bf16 %v4398
          %v4677 = vunpack.c.l.bf16 %v4399
          %v4678 = vunpack.c.l.bf16 %v4400
          %v4679 = vunpack.c.l.bf16 %v4401
          %v4680 = vunpack.c.l.bf16 %v4402
          %v4681 = vunpack.c.l.bf16 %v4403
          %v4682 = vunpack.c.l.bf16 %v4404
          %v4683 = vunpack.c.l.bf16 %v4405
          %v4684 = vunpack.c.l.bf16 %v4406
          %v4685 = vunpack.c.l.bf16 %v4407
          %v4686 = vunpack.c.l.bf16 %v4408
          %v4687 = vunpack.c.l.bf16 %v4409
          %v4688 = vunpack.c.l.bf16 %v4640
          %v4689 = vunpack.c.h.bf16 %v4640
          %v4690 = vunpack.c.l.bf16 %v4641
          %v4691 = vunpack.c.h.bf16 %v4641
          %v4692 = vunpack.c.l.bf16 %v4642
          %v4693 = vunpack.c.h.bf16 %v4642
          %v4694 = vunpack.c.l.bf16 %v4643
          %v4695 = vunpack.c.h.bf16 %v4643
          %v4696 = vunpack.c.l.bf16 %v4644
          %v4697 = vunpack.c.h.bf16 %v4644
          %v4698 = vunpack.c.l.bf16 %v4645
          %v4699 = vunpack.c.h.bf16 %v4645
          %v4700 = vunpack.c.l.bf16 %v4646
          %v4701 = vunpack.c.h.bf16 %v4646
          %v4702 = vunpack.c.l.bf16 %v4647
          %v4703 = vunpack.c.h.bf16 %v4647
          %v4704 = vunpack.c.l.bf16 %v4648
          %v4705 = vunpack.c.h.bf16 %v4648
          %v4706 = vunpack.c.l.bf16 %v4649
          %v4707 = vunpack.c.h.bf16 %v4649
          %v4708 = vunpack.c.l.bf16 %v4650
          %v4709 = vunpack.c.h.bf16 %v4650
          %v4710 = vunpack.c.l.bf16 %v4651
          %v4711 = vunpack.c.h.bf16 %v4651
          %v4712 = vunpack.c.l.bf16 %v4652
          %v4713 = vunpack.c.h.bf16 %v4652
          %v4714 = vunpack.c.l.bf16 %v4653
          %v4715 = vunpack.c.h.bf16 %v4653
          %v4716 = vunpack.c.l.bf16 %v4654
          %v4717 = vunpack.c.h.bf16 %v4654
          %v4718 = vunpack.c.l.bf16 %v4655
          %v4719 = vunpack.c.h.bf16 %v4655
          %v4720 = vmax.f32 %v4656, %v4688
          %v4721 = vmax.f32 %v4657, %v4689
          %v4722 = vmax.f32 %v4658, %v4690
          %v4723 = vmax.f32 %v4659, %v4691
          %v4724 = vmax.f32 %v4660, %v4692
          %v4725 = vmax.f32 %v4661, %v4693
          %v4726 = vmax.f32 %v4662, %v4694
          %v4727 = vmax.f32 %v4663, %v4695
          %v4728 = vmax.f32 %v4664, %v4696
          %v4729 = vmax.f32 %v4665, %v4697
          %v4730 = vmax.f32 %v4666, %v4698
          %v4731 = vmax.f32 %v4667, %v4699
          %v4732 = vmax.f32 %v4668, %v4700
          %v4733 = vmax.f32 %v4669, %v4701
          %v4734 = vmax.f32 %v4670, %v4702
          %v4735 = vmax.f32 %v4671, %v4703
          %v4736 = vmax.f32 %v4672, %v4704
          %v4737 = vmax.f32 %v4673, %v4705
          %v4738 = vmax.f32 %v4674, %v4706
          %v4739 = vmax.f32 %v4675, %v4707
          %v4740 = vmax.f32 %v4676, %v4708
          %v4741 = vmax.f32 %v4677, %v4709
          %v4742 = vmax.f32 %v4678, %v4710
          %v4743 = vmax.f32 %v4679, %v4711
          %v4744 = vmax.f32 %v4680, %v4712
          %v4745 = vmax.f32 %v4681, %v4713
          %v4746 = vmax.f32 %v4682, %v4714
          %v4747 = vmax.f32 %v4683, %v4715
          %v4748 = vmax.f32 %v4684, %v4716
          %v4749 = vmax.f32 %v4685, %v4717
          %v4750 = vmax.f32 %v4686, %v4718
          %v4751 = vmax.f32 %v4687, %v4719
          %v4752 = vpack.c.bf16 %v4720, %v4720
          %v4753 = vpack.c.bf16 %v4721, %v4721
          %v4754 = vpack.c.bf16 %v4722, %v4722
          %v4755 = vpack.c.bf16 %v4723, %v4723
          %v4756 = vpack.c.bf16 %v4724, %v4724
          %v4757 = vpack.c.bf16 %v4725, %v4725
          %v4758 = vpack.c.bf16 %v4726, %v4726
          %v4759 = vpack.c.bf16 %v4727, %v4727
          %v4760 = vpack.c.bf16 %v4728, %v4728
          %v4761 = vpack.c.bf16 %v4729, %v4729
          %v4762 = vpack.c.bf16 %v4730, %v4730
          %v4763 = vpack.c.bf16 %v4731, %v4731
          %v4764 = vpack.c.bf16 %v4732, %v4732
          %v4765 = vpack.c.bf16 %v4733, %v4733
          %v4766 = vpack.c.bf16 %v4734, %v4734
          %v4767 = vpack.c.bf16 %v4735, %v4735
          %v4768 = vpack.c.bf16 %v4736, %v4736
          %v4769 = vpack.c.bf16 %v4737, %v4737
          %v4770 = vpack.c.bf16 %v4738, %v4738
          %v4771 = vpack.c.bf16 %v4739, %v4739
          %v4772 = vpack.c.bf16 %v4740, %v4740
          %v4773 = vpack.c.bf16 %v4741, %v4741
          %v4774 = vpack.c.bf16 %v4742, %v4742
          %v4775 = vpack.c.bf16 %v4743, %v4743
          %v4776 = vpack.c.bf16 %v4744, %v4744
          %v4777 = vpack.c.bf16 %v4745, %v4745
          %v4778 = vpack.c.bf16 %v4746, %v4746
          %v4779 = vpack.c.bf16 %v4747, %v4747
          %v4780 = vpack.c.bf16 %v4748, %v4748
          %v4781 = vpack.c.bf16 %v4749, %v4749
          %v4782 = vpack.c.bf16 %v4750, %v4750
          %v4783 = vpack.c.bf16 %v4751, %v4751
          %v4784 = vrot.slane %v4412, 3
          %v4785 = vrot.slane %v4480, 7
          %v4786 = vrot.slane %v4481, 7
          %v4787 = vsel %vm1991, %v4785, %v4786
          %v4788 = vrot.slane %v4482, 7
          %v4789 = vsel %vm1991, %v4786, %v4788
          %v4790 = vrot.slane %v4483, 7
          %v4791 = vsel %vm1991, %v4788, %v4790
          %v4792 = vrot.slane %v4484, 7
          %v4793 = vsel %vm1991, %v4790, %v4792
          %v4794 = vrot.slane %v4485, 7
          %v4795 = vsel %vm1991, %v4792, %v4794
          %v4796 = vrot.slane %v4486, 7
          %v4797 = vsel %vm1991, %v4794, %v4796
          %v4798 = vrot.slane %v4487, 7
          %v4799 = vsel %vm1991, %v4796, %v4798
          %v4800 = vrot.slane %v4488, 7
          %v4801 = vsel %vm1991, %v4798, %v4800
          %v4802 = vrot.slane %v4489, 7
          %v4803 = vsel %vm1991, %v4800, %v4802
          %v4804 = vrot.slane %v4490, 7
          %v4805 = vsel %vm1991, %v4802, %v4804
          %v4806 = vrot.slane %v4491, 7
          %v4807 = vsel %vm1991, %v4804, %v4806
          %v4808 = vrot.slane %v4492, 7
          %v4809 = vsel %vm1991, %v4806, %v4808
          %v4810 = vrot.slane %v4493, 7
          %v4811 = vsel %vm1991, %v4808, %v4810
          %v4812 = vrot.slane %v4494, 7
          %v4813 = vsel %vm1991, %v4810, %v4812
          %v4814 = vrot.slane %v4495, 7
          %v4815 = vsel %vm1991, %v4812, %v4814
          %v4833 = vsel %vm2487, %v4784, %v4785
          %v4835 = vsel %vm2674, %v4833, %v2070
          %v4836 = vsel %vm2681, %v4787, %v2070
          %v4837 = vsel %vm2688, %v4789, %v2070
          %v4838 = vsel %vm2695, %v4791, %v2070
          %v4839 = vsel %vm2702, %v4793, %v2070
          %v4840 = vsel %vm2709, %v4795, %v2070
          %v4841 = vsel %vm2716, %v4797, %v2070
          %v4842 = vsel %vm2723, %v4799, %v2070
          %v4843 = vsel %vm2730, %v4801, %v2070
          %v4844 = vsel %vm2737, %v4803, %v2070
          %v4845 = vsel %vm2744, %v4805, %v2070
          %v4846 = vsel %vm2751, %v4807, %v2070
          %v4847 = vsel %vm2758, %v4809, %v2070
          %v4848 = vsel %vm2765, %v4811, %v2070
          %v4849 = vsel %vm2772, %v4813, %v2070
          %v4850 = vsel %vm2779, %v4815, %v2070
          %v4851 = vunpack.c.l.bf16 %v4752
          %v4852 = vunpack.c.l.bf16 %v4753
          %v4853 = vunpack.c.l.bf16 %v4754
          %v4854 = vunpack.c.l.bf16 %v4755
          %v4855 = vunpack.c.l.bf16 %v4756
          %v4856 = vunpack.c.l.bf16 %v4757
          %v4857 = vunpack.c.l.bf16 %v4758
          %v4858 = vunpack.c.l.bf16 %v4759
          %v4859 = vunpack.c.l.bf16 %v4760
          %v4860 = vunpack.c.l.bf16 %v4761
          %v4861 = vunpack.c.l.bf16 %v4762
          %v4862 = vunpack.c.l.bf16 %v4763
          %v4863 = vunpack.c.l.bf16 %v4764
          %v4864 = vunpack.c.l.bf16 %v4765
          %v4865 = vunpack.c.l.bf16 %v4766
          %v4866 = vunpack.c.l.bf16 %v4767
          %v4867 = vunpack.c.l.bf16 %v4768
          %v4868 = vunpack.c.l.bf16 %v4769
          %v4869 = vunpack.c.l.bf16 %v4770
          %v4870 = vunpack.c.l.bf16 %v4771
          %v4871 = vunpack.c.l.bf16 %v4772
          %v4872 = vunpack.c.l.bf16 %v4773
          %v4873 = vunpack.c.l.bf16 %v4774
          %v4874 = vunpack.c.l.bf16 %v4775
          %v4875 = vunpack.c.l.bf16 %v4776
          %v4876 = vunpack.c.l.bf16 %v4777
          %v4877 = vunpack.c.l.bf16 %v4778
          %v4878 = vunpack.c.l.bf16 %v4779
          %v4879 = vunpack.c.l.bf16 %v4780
          %v4880 = vunpack.c.l.bf16 %v4781
          %v4881 = vunpack.c.l.bf16 %v4782
          %v4882 = vunpack.c.l.bf16 %v4783
          %v4883 = vunpack.c.l.bf16 %v4835
          %v4884 = vunpack.c.h.bf16 %v4835
          %v4885 = vunpack.c.l.bf16 %v4836
          %v4886 = vunpack.c.h.bf16 %v4836
          %v4887 = vunpack.c.l.bf16 %v4837
          %v4888 = vunpack.c.h.bf16 %v4837
          %v4889 = vunpack.c.l.bf16 %v4838
          %v4890 = vunpack.c.h.bf16 %v4838
          %v4891 = vunpack.c.l.bf16 %v4839
          %v4892 = vunpack.c.h.bf16 %v4839
          %v4893 = vunpack.c.l.bf16 %v4840
          %v4894 = vunpack.c.h.bf16 %v4840
          %v4895 = vunpack.c.l.bf16 %v4841
          %v4896 = vunpack.c.h.bf16 %v4841
          %v4897 = vunpack.c.l.bf16 %v4842
          %v4898 = vunpack.c.h.bf16 %v4842
          %v4899 = vunpack.c.l.bf16 %v4843
          %v4900 = vunpack.c.h.bf16 %v4843
          %v4901 = vunpack.c.l.bf16 %v4844
          %v4902 = vunpack.c.h.bf16 %v4844
          %v4903 = vunpack.c.l.bf16 %v4845
          %v4904 = vunpack.c.h.bf16 %v4845
          %v4905 = vunpack.c.l.bf16 %v4846
          %v4906 = vunpack.c.h.bf16 %v4846
          %v4907 = vunpack.c.l.bf16 %v4847
          %v4908 = vunpack.c.h.bf16 %v4847
          %v4909 = vunpack.c.l.bf16 %v4848
          %v4910 = vunpack.c.h.bf16 %v4848
          %v4911 = vunpack.c.l.bf16 %v4849
          %v4912 = vunpack.c.h.bf16 %v4849
          %v4913 = vunpack.c.l.bf16 %v4850
          %v4914 = vunpack.c.h.bf16 %v4850
          %v4915 = vmax.f32 %v4851, %v4883
          %v4916 = vmax.f32 %v4852, %v4884
          %v4917 = vmax.f32 %v4853, %v4885
          %v4918 = vmax.f32 %v4854, %v4886
          %v4919 = vmax.f32 %v4855, %v4887
          %v4920 = vmax.f32 %v4856, %v4888
          %v4921 = vmax.f32 %v4857, %v4889
          %v4922 = vmax.f32 %v4858, %v4890
          %v4923 = vmax.f32 %v4859, %v4891
          %v4924 = vmax.f32 %v4860, %v4892
          %v4925 = vmax.f32 %v4861, %v4893
          %v4926 = vmax.f32 %v4862, %v4894
          %v4927 = vmax.f32 %v4863, %v4895
          %v4928 = vmax.f32 %v4864, %v4896
          %v4929 = vmax.f32 %v4865, %v4897
          %v4930 = vmax.f32 %v4866, %v4898
          %v4931 = vmax.f32 %v4867, %v4899
          %v4932 = vmax.f32 %v4868, %v4900
          %v4933 = vmax.f32 %v4869, %v4901
          %v4934 = vmax.f32 %v4870, %v4902
          %v4935 = vmax.f32 %v4871, %v4903
          %v4936 = vmax.f32 %v4872, %v4904
          %v4937 = vmax.f32 %v4873, %v4905
          %v4938 = vmax.f32 %v4874, %v4906
          %v4939 = vmax.f32 %v4875, %v4907
          %v4940 = vmax.f32 %v4876, %v4908
          %v4941 = vmax.f32 %v4877, %v4909
          %v4942 = vmax.f32 %v4878, %v4910
          %v4943 = vmax.f32 %v4879, %v4911
          %v4944 = vmax.f32 %v4880, %v4912
          %v4945 = vmax.f32 %v4881, %v4913
          %v4946 = vmax.f32 %v4882, %v4914
          %v4947 = vpack.c.bf16 %v4915, %v4915
          %v4948 = vpack.c.bf16 %v4916, %v4916
          %v4949 = vpack.c.bf16 %v4917, %v4917
          %v4950 = vpack.c.bf16 %v4918, %v4918
          %v4951 = vpack.c.bf16 %v4919, %v4919
          %v4952 = vpack.c.bf16 %v4920, %v4920
          %v4953 = vpack.c.bf16 %v4921, %v4921
          %v4954 = vpack.c.bf16 %v4922, %v4922
          %v4955 = vpack.c.bf16 %v4923, %v4923
          %v4956 = vpack.c.bf16 %v4924, %v4924
          %v4957 = vpack.c.bf16 %v4925, %v4925
          %v4958 = vpack.c.bf16 %v4926, %v4926
          %v4959 = vpack.c.bf16 %v4927, %v4927
          %v4960 = vpack.c.bf16 %v4928, %v4928
          %v4961 = vpack.c.bf16 %v4929, %v4929
          %v4962 = vpack.c.bf16 %v4930, %v4930
          %v4963 = vpack.c.bf16 %v4931, %v4931
          %v4964 = vpack.c.bf16 %v4932, %v4932
          %v4965 = vpack.c.bf16 %v4933, %v4933
          %v4966 = vpack.c.bf16 %v4934, %v4934
          %v4967 = vpack.c.bf16 %v4935, %v4935
          %v4968 = vpack.c.bf16 %v4936, %v4936
          %v4969 = vpack.c.bf16 %v4937, %v4937
          %v4970 = vpack.c.bf16 %v4938, %v4938
          %v4971 = vpack.c.bf16 %v4939, %v4939
          %v4972 = vpack.c.bf16 %v4940, %v4940
          %v4973 = vpack.c.bf16 %v4941, %v4941
          %v4974 = vpack.c.bf16 %v4942, %v4942
          %v4975 = vpack.c.bf16 %v4943, %v4943
          %v4976 = vpack.c.bf16 %v4944, %v4944
          %v4977 = vpack.c.bf16 %v4945, %v4945
          %v4978 = vpack.c.bf16 %v4946, %v4946
          %v4979 = vrot.slane %v4500, 1
          %v4980 = vor.u32 %v4497, %v4979
          %v4981 = vrot.slane %v4507, 1
          %v4982 = vsel %vm2924, %v4980, %v4981
          %v4983 = vor.u32 %v4504, %v4981
          %v4984 = vrot.slane %v4515, 1
          %v4985 = vsel %vm2924, %v4983, %v4984
          %v4986 = vor.u32 %v4512, %v4984
          %v4987 = vrot.slane %v4523, 1
          %v4988 = vsel %vm2924, %v4986, %v4987
          %v4989 = vor.u32 %v4520, %v4987
          %v4990 = vrot.slane %v4531, 1
          %v4991 = vsel %vm2924, %v4989, %v4990
          %v4992 = vor.u32 %v4528, %v4990
          %v4993 = vrot.slane %v4539, 1
          %v4994 = vsel %vm2924, %v4992, %v4993
          %v4995 = vor.u32 %v4536, %v4993
          %v4996 = vrot.slane %v4547, 1
          %v4997 = vsel %vm2924, %v4995, %v4996
          %v4998 = vor.u32 %v4544, %v4996
          %v4999 = vrot.slane %v4555, 1
          %v5000 = vsel %vm2924, %v4998, %v4999
          %v5001 = vor.u32 %v4552, %v4999
          %v5002 = vrot.slane %v4563, 1
          %v5003 = vsel %vm2924, %v5001, %v5002
          %v5004 = vor.u32 %v4560, %v5002
          %v5005 = vrot.slane %v4571, 1
          %v5006 = vsel %vm2924, %v5004, %v5005
          %v5007 = vor.u32 %v4568, %v5005
          %v5008 = vrot.slane %v4579, 1
          %v5009 = vsel %vm2924, %v5007, %v5008
          %v5010 = vor.u32 %v4576, %v5008
          %v5011 = vrot.slane %v4587, 1
          %v5012 = vsel %vm2924, %v5010, %v5011
          %v5013 = vor.u32 %v4584, %v5011
          %v5014 = vrot.slane %v4595, 1
          %v5015 = vsel %vm2924, %v5013, %v5014
          %v5016 = vor.u32 %v4592, %v5014
          %v5017 = vrot.slane %v4603, 1
          %v5018 = vsel %vm2924, %v5016, %v5017
          %v5019 = vor.u32 %v4600, %v5017
          %v5020 = vrot.slane %v4611, 1
          %v5021 = vsel %vm2924, %v5019, %v5020
          %v5022 = vor.u32 %v4608, %v5020
          %v5023 = vrot.slane %v4619, 1
          %v5024 = vsel %vm2924, %v5022, %v5023
          %v5025 = vor.u32 %v4616, %v5023
          %v5042 = vpack.c.b16 %v4449, %v4449
          %v5044 = vshll.u32 %v5042, 16
          %v5046 = vrot.slane %v5044, 1
          %v5048 = vsel %vm2995, %v5025, %v5046
          %v5049 = vsel %vm3179, %v4982, %v2070
          %v5050 = vsel %vm3186, %v4985, %v2070
          %v5051 = vsel %vm3193, %v4988, %v2070
          %v5052 = vsel %vm3200, %v4991, %v2070
          %v5053 = vsel %vm3207, %v4994, %v2070
          %v5054 = vsel %vm3214, %v4997, %v2070
          %v5055 = vsel %vm3221, %v5000, %v2070
          %v5056 = vsel %vm3228, %v5003, %v2070
          %v5057 = vsel %vm3235, %v5006, %v2070
          %v5058 = vsel %vm3242, %v5009, %v2070
          %v5059 = vsel %vm3249, %v5012, %v2070
          %v5060 = vsel %vm3256, %v5015, %v2070
          %v5061 = vsel %vm3263, %v5018, %v2070
          %v5062 = vsel %vm3270, %v5021, %v2070
          %v5063 = vsel %vm3277, %v5024, %v2070
          %v5064 = vsel %vm3284, %v5048, %v2070
          %v5065 = vunpack.c.l.bf16 %v4947
          %v5066 = vunpack.c.l.bf16 %v4948
          %v5067 = vunpack.c.l.bf16 %v4949
          %v5068 = vunpack.c.l.bf16 %v4950
          %v5069 = vunpack.c.l.bf16 %v4951
          %v5070 = vunpack.c.l.bf16 %v4952
          %v5071 = vunpack.c.l.bf16 %v4953
          %v5072 = vunpack.c.l.bf16 %v4954
          %v5073 = vunpack.c.l.bf16 %v4955
          %v5074 = vunpack.c.l.bf16 %v4956
          %v5075 = vunpack.c.l.bf16 %v4957
          %v5076 = vunpack.c.l.bf16 %v4958
          %v5077 = vunpack.c.l.bf16 %v4959
          %v5078 = vunpack.c.l.bf16 %v4960
          %v5079 = vunpack.c.l.bf16 %v4961
          %v5080 = vunpack.c.l.bf16 %v4962
          %v5081 = vunpack.c.l.bf16 %v4963
          %v5082 = vunpack.c.l.bf16 %v4964
          %v5083 = vunpack.c.l.bf16 %v4965
          %v5084 = vunpack.c.l.bf16 %v4966
          %v5085 = vunpack.c.l.bf16 %v4967
          %v5086 = vunpack.c.l.bf16 %v4968
          %v5087 = vunpack.c.l.bf16 %v4969
          %v5088 = vunpack.c.l.bf16 %v4970
          %v5089 = vunpack.c.l.bf16 %v4971
          %v5090 = vunpack.c.l.bf16 %v4972
          %v5091 = vunpack.c.l.bf16 %v4973
          %v5092 = vunpack.c.l.bf16 %v4974
          %v5093 = vunpack.c.l.bf16 %v4975
          %v5094 = vunpack.c.l.bf16 %v4976
          %v5095 = vunpack.c.l.bf16 %v4977
          %v5096 = vunpack.c.l.bf16 %v4978
          %v5097 = vunpack.c.l.bf16 %v5049
          %v5098 = vunpack.c.h.bf16 %v5049
          %v5099 = vunpack.c.l.bf16 %v5050
          %v5100 = vunpack.c.h.bf16 %v5050
          %v5101 = vunpack.c.l.bf16 %v5051
          %v5102 = vunpack.c.h.bf16 %v5051
          %v5103 = vunpack.c.l.bf16 %v5052
          %v5104 = vunpack.c.h.bf16 %v5052
          %v5105 = vunpack.c.l.bf16 %v5053
          %v5106 = vunpack.c.h.bf16 %v5053
          %v5107 = vunpack.c.l.bf16 %v5054
          %v5108 = vunpack.c.h.bf16 %v5054
          %v5109 = vunpack.c.l.bf16 %v5055
          %v5110 = vunpack.c.h.bf16 %v5055
          %v5111 = vunpack.c.l.bf16 %v5056
          %v5112 = vunpack.c.h.bf16 %v5056
          %v5113 = vunpack.c.l.bf16 %v5057
          %v5114 = vunpack.c.h.bf16 %v5057
          %v5115 = vunpack.c.l.bf16 %v5058
          %v5116 = vunpack.c.h.bf16 %v5058
          %v5117 = vunpack.c.l.bf16 %v5059
          %v5118 = vunpack.c.h.bf16 %v5059
          %v5119 = vunpack.c.l.bf16 %v5060
          %v5120 = vunpack.c.h.bf16 %v5060
          %v5121 = vunpack.c.l.bf16 %v5061
          %v5122 = vunpack.c.h.bf16 %v5061
          %v5123 = vunpack.c.l.bf16 %v5062
          %v5124 = vunpack.c.h.bf16 %v5062
          %v5125 = vunpack.c.l.bf16 %v5063
          %v5126 = vunpack.c.h.bf16 %v5063
          %v5127 = vunpack.c.l.bf16 %v5064
          %v5128 = vunpack.c.h.bf16 %v5064
          %v5129 = vmax.f32 %v5065, %v5097
          %v5130 = vmax.f32 %v5066, %v5098
          %v5131 = vmax.f32 %v5067, %v5099
          %v5132 = vmax.f32 %v5068, %v5100
          %v5133 = vmax.f32 %v5069, %v5101
          %v5134 = vmax.f32 %v5070, %v5102
          %v5135 = vmax.f32 %v5071, %v5103
          %v5136 = vmax.f32 %v5072, %v5104
          %v5137 = vmax.f32 %v5073, %v5105
          %v5138 = vmax.f32 %v5074, %v5106
          %v5139 = vmax.f32 %v5075, %v5107
          %v5140 = vmax.f32 %v5076, %v5108
          %v5141 = vmax.f32 %v5077, %v5109
          %v5142 = vmax.f32 %v5078, %v5110
          %v5143 = vmax.f32 %v5079, %v5111
          %v5144 = vmax.f32 %v5080, %v5112
          %v5145 = vmax.f32 %v5081, %v5113
          %v5146 = vmax.f32 %v5082, %v5114
          %v5147 = vmax.f32 %v5083, %v5115
          %v5148 = vmax.f32 %v5084, %v5116
          %v5149 = vmax.f32 %v5085, %v5117
          %v5150 = vmax.f32 %v5086, %v5118
          %v5151 = vmax.f32 %v5087, %v5119
          %v5152 = vmax.f32 %v5088, %v5120
          %v5153 = vmax.f32 %v5089, %v5121
          %v5154 = vmax.f32 %v5090, %v5122
          %v5155 = vmax.f32 %v5091, %v5123
          %v5156 = vmax.f32 %v5092, %v5124
          %v5157 = vmax.f32 %v5093, %v5125
          %v5158 = vmax.f32 %v5094, %v5126
          %v5159 = vmax.f32 %v5095, %v5127
          %v5160 = vmax.f32 %v5096, %v5128
          %v5161 = vpack.c.bf16 %v5129, %v5129
          %v5162 = vpack.c.bf16 %v5130, %v5130
          %v5163 = vpack.c.bf16 %v5131, %v5131
          %v5164 = vpack.c.bf16 %v5132, %v5132
          %v5165 = vpack.c.bf16 %v5133, %v5133
          %v5166 = vpack.c.bf16 %v5134, %v5134
          %v5167 = vpack.c.bf16 %v5135, %v5135
          %v5168 = vpack.c.bf16 %v5136, %v5136
          %v5169 = vpack.c.bf16 %v5137, %v5137
          %v5170 = vpack.c.bf16 %v5138, %v5138
          %v5171 = vpack.c.bf16 %v5139, %v5139
          %v5172 = vpack.c.bf16 %v5140, %v5140
          %v5173 = vpack.c.bf16 %v5141, %v5141
          %v5174 = vpack.c.bf16 %v5142, %v5142
          %v5175 = vpack.c.bf16 %v5143, %v5143
          %v5176 = vpack.c.bf16 %v5144, %v5144
          %v5177 = vpack.c.bf16 %v5145, %v5145
          %v5178 = vpack.c.bf16 %v5146, %v5146
          %v5179 = vpack.c.bf16 %v5147, %v5147
          %v5180 = vpack.c.bf16 %v5148, %v5148
          %v5181 = vpack.c.bf16 %v5149, %v5149
          %v5182 = vpack.c.bf16 %v5150, %v5150
          %v5183 = vpack.c.bf16 %v5151, %v5151
          %v5184 = vpack.c.bf16 %v5152, %v5152
          %v5185 = vpack.c.bf16 %v5153, %v5153
          %v5186 = vpack.c.bf16 %v5154, %v5154
          %v5187 = vpack.c.bf16 %v5155, %v5155
          %v5188 = vpack.c.bf16 %v5156, %v5156
          %v5189 = vpack.c.bf16 %v5157, %v5157
          %v5190 = vpack.c.bf16 %v5158, %v5158
          %v5191 = vpack.c.bf16 %v5159, %v5159
          %v5192 = vpack.c.bf16 %v5160, %v5160
          %v5193 = vrot.slane %v4480, 1
          %v5194 = vrot.slane %v4481, 1
          %v5195 = vsel %vm3429, %v5193, %v5194
          %v5196 = vrot.slane %v4482, 1
          %v5197 = vsel %vm3429, %v5194, %v5196
          %v5198 = vrot.slane %v4483, 1
          %v5199 = vsel %vm3429, %v5196, %v5198
          %v5200 = vrot.slane %v4484, 1
          %v5201 = vsel %vm3429, %v5198, %v5200
          %v5202 = vrot.slane %v4485, 1
          %v5203 = vsel %vm3429, %v5200, %v5202
          %v5204 = vrot.slane %v4486, 1
          %v5205 = vsel %vm3429, %v5202, %v5204
          %v5206 = vrot.slane %v4487, 1
          %v5207 = vsel %vm3429, %v5204, %v5206
          %v5208 = vrot.slane %v4488, 1
          %v5209 = vsel %vm3429, %v5206, %v5208
          %v5210 = vrot.slane %v4489, 1
          %v5211 = vsel %vm3429, %v5208, %v5210
          %v5212 = vrot.slane %v4490, 1
          %v5213 = vsel %vm3429, %v5210, %v5212
          %v5214 = vrot.slane %v4491, 1
          %v5215 = vsel %vm3429, %v5212, %v5214
          %v5216 = vrot.slane %v4492, 1
          %v5217 = vsel %vm3429, %v5214, %v5216
          %v5218 = vrot.slane %v4493, 1
          %v5219 = vsel %vm3429, %v5216, %v5218
          %v5220 = vrot.slane %v4494, 1
          %v5221 = vsel %vm3429, %v5218, %v5220
          %v5222 = vrot.slane %v4495, 1
          %v5223 = vsel %vm3429, %v5220, %v5222
          %v5239 = vrot.slane %v5042, 1
          %v5242 = vsel %vm3477, %v5222, %v5239
          %v5244 = vsel %vm3664, %v5195, %v2070
          %v5245 = vsel %vm3671, %v5197, %v2070
          %v5246 = vsel %vm3678, %v5199, %v2070
          %v5247 = vsel %vm3685, %v5201, %v2070
          %v5248 = vsel %vm3692, %v5203, %v2070
          %v5249 = vsel %vm3699, %v5205, %v2070
          %v5250 = vsel %vm3706, %v5207, %v2070
          %v5251 = vsel %vm3713, %v5209, %v2070
          %v5252 = vsel %vm3720, %v5211, %v2070
          %v5253 = vsel %vm3727, %v5213, %v2070
          %v5254 = vsel %vm3734, %v5215, %v2070
          %v5255 = vsel %vm3741, %v5217, %v2070
          %v5256 = vsel %vm3748, %v5219, %v2070
          %v5257 = vsel %vm3755, %v5221, %v2070
          %v5258 = vsel %vm3762, %v5223, %v2070
          %v5259 = vsel %vm3769, %v5242, %v2070
          %v5260 = vunpack.c.l.bf16 %v5161
          %v5261 = vunpack.c.l.bf16 %v5162
          %v5262 = vunpack.c.l.bf16 %v5163
          %v5263 = vunpack.c.l.bf16 %v5164
          %v5264 = vunpack.c.l.bf16 %v5165
          %v5265 = vunpack.c.l.bf16 %v5166
          %v5266 = vunpack.c.l.bf16 %v5167
          %v5267 = vunpack.c.l.bf16 %v5168
          %v5268 = vunpack.c.l.bf16 %v5169
          %v5269 = vunpack.c.l.bf16 %v5170
          %v5270 = vunpack.c.l.bf16 %v5171
          %v5271 = vunpack.c.l.bf16 %v5172
          %v5272 = vunpack.c.l.bf16 %v5173
          %v5273 = vunpack.c.l.bf16 %v5174
          %v5274 = vunpack.c.l.bf16 %v5175
          %v5275 = vunpack.c.l.bf16 %v5176
          %v5276 = vunpack.c.l.bf16 %v5177
          %v5277 = vunpack.c.l.bf16 %v5178
          %v5278 = vunpack.c.l.bf16 %v5179
          %v5279 = vunpack.c.l.bf16 %v5180
          %v5280 = vunpack.c.l.bf16 %v5181
          %v5281 = vunpack.c.l.bf16 %v5182
          %v5282 = vunpack.c.l.bf16 %v5183
          %v5283 = vunpack.c.l.bf16 %v5184
          %v5284 = vunpack.c.l.bf16 %v5185
          %v5285 = vunpack.c.l.bf16 %v5186
          %v5286 = vunpack.c.l.bf16 %v5187
          %v5287 = vunpack.c.l.bf16 %v5188
          %v5288 = vunpack.c.l.bf16 %v5189
          %v5289 = vunpack.c.l.bf16 %v5190
          %v5290 = vunpack.c.l.bf16 %v5191
          %v5291 = vunpack.c.l.bf16 %v5192
          %v5292 = vunpack.c.l.bf16 %v5244
          %v5293 = vunpack.c.h.bf16 %v5244
          %v5294 = vunpack.c.l.bf16 %v5245
          %v5295 = vunpack.c.h.bf16 %v5245
          %v5296 = vunpack.c.l.bf16 %v5246
          %v5297 = vunpack.c.h.bf16 %v5246
          %v5298 = vunpack.c.l.bf16 %v5247
          %v5299 = vunpack.c.h.bf16 %v5247
          %v5300 = vunpack.c.l.bf16 %v5248
          %v5301 = vunpack.c.h.bf16 %v5248
          %v5302 = vunpack.c.l.bf16 %v5249
          %v5303 = vunpack.c.h.bf16 %v5249
          %v5304 = vunpack.c.l.bf16 %v5250
          %v5305 = vunpack.c.h.bf16 %v5250
          %v5306 = vunpack.c.l.bf16 %v5251
          %v5307 = vunpack.c.h.bf16 %v5251
          %v5308 = vunpack.c.l.bf16 %v5252
          %v5309 = vunpack.c.h.bf16 %v5252
          %v5310 = vunpack.c.l.bf16 %v5253
          %v5311 = vunpack.c.h.bf16 %v5253
          %v5312 = vunpack.c.l.bf16 %v5254
          %v5313 = vunpack.c.h.bf16 %v5254
          %v5314 = vunpack.c.l.bf16 %v5255
          %v5315 = vunpack.c.h.bf16 %v5255
          %v5316 = vunpack.c.l.bf16 %v5256
          %v5317 = vunpack.c.h.bf16 %v5256
          %v5318 = vunpack.c.l.bf16 %v5257
          %v5319 = vunpack.c.h.bf16 %v5257
          %v5320 = vunpack.c.l.bf16 %v5258
          %v5321 = vunpack.c.h.bf16 %v5258
          %v5322 = vunpack.c.l.bf16 %v5259
          %v5323 = vunpack.c.h.bf16 %v5259
          %v5324 = vmax.f32 %v5260, %v5292
          %v5325 = vmax.f32 %v5261, %v5293
          %v5326 = vmax.f32 %v5262, %v5294
          %v5327 = vmax.f32 %v5263, %v5295
          %v5328 = vmax.f32 %v5264, %v5296
          %v5329 = vmax.f32 %v5265, %v5297
          %v5330 = vmax.f32 %v5266, %v5298
          %v5331 = vmax.f32 %v5267, %v5299
          %v5332 = vmax.f32 %v5268, %v5300
          %v5333 = vmax.f32 %v5269, %v5301
          %v5334 = vmax.f32 %v5270, %v5302
          %v5335 = vmax.f32 %v5271, %v5303
          %v5336 = vmax.f32 %v5272, %v5304
          %v5337 = vmax.f32 %v5273, %v5305
          %v5338 = vmax.f32 %v5274, %v5306
          %v5339 = vmax.f32 %v5275, %v5307
          %v5340 = vmax.f32 %v5276, %v5308
          %v5341 = vmax.f32 %v5277, %v5309
          %v5342 = vmax.f32 %v5278, %v5310
          %v5343 = vmax.f32 %v5279, %v5311
          %v5344 = vmax.f32 %v5280, %v5312
          %v5345 = vmax.f32 %v5281, %v5313
          %v5346 = vmax.f32 %v5282, %v5314
          %v5347 = vmax.f32 %v5283, %v5315
          %v5348 = vmax.f32 %v5284, %v5316
          %v5349 = vmax.f32 %v5285, %v5317
          %v5350 = vmax.f32 %v5286, %v5318
          %v5351 = vmax.f32 %v5287, %v5319
          %v5352 = vmax.f32 %v5288, %v5320
          %v5353 = vmax.f32 %v5289, %v5321
          %v5354 = vmax.f32 %v5290, %v5322
          %v5355 = vmax.f32 %v5291, %v5323
          %v5356 = vpack.c.bf16 %v5324, %v5324
          %v5357 = vpack.c.bf16 %v5325, %v5325
          %v5358 = vpack.c.bf16 %v5326, %v5326
          %v5359 = vpack.c.bf16 %v5327, %v5327
          %v5360 = vpack.c.bf16 %v5328, %v5328
          %v5361 = vpack.c.bf16 %v5329, %v5329
          %v5362 = vpack.c.bf16 %v5330, %v5330
          %v5363 = vpack.c.bf16 %v5331, %v5331
          %v5364 = vpack.c.bf16 %v5332, %v5332
          %v5365 = vpack.c.bf16 %v5333, %v5333
          %v5366 = vpack.c.bf16 %v5334, %v5334
          %v5367 = vpack.c.bf16 %v5335, %v5335
          %v5368 = vpack.c.bf16 %v5336, %v5336
          %v5369 = vpack.c.bf16 %v5337, %v5337
          %v5370 = vpack.c.bf16 %v5338, %v5338
          %v5371 = vpack.c.bf16 %v5339, %v5339
          %v5372 = vpack.c.bf16 %v5340, %v5340
          %v5373 = vpack.c.bf16 %v5341, %v5341
          %v5374 = vpack.c.bf16 %v5342, %v5342
          %v5375 = vpack.c.bf16 %v5343, %v5343
          %v5376 = vpack.c.bf16 %v5344, %v5344
          %v5377 = vpack.c.bf16 %v5345, %v5345
          %v5378 = vpack.c.bf16 %v5346, %v5346
          %v5379 = vpack.c.bf16 %v5347, %v5347
          %v5380 = vpack.c.bf16 %v5348, %v5348
          %v5381 = vpack.c.bf16 %v5349, %v5349
          %v5382 = vpack.c.bf16 %v5350, %v5350
          %v5383 = vpack.c.bf16 %v5351, %v5351
          %v5384 = vpack.c.bf16 %v5352, %v5352
          %v5385 = vpack.c.bf16 %v5353, %v5353
          %v5386 = vpack.c.bf16 %v5354, %v5354
          %v5387 = vpack.c.bf16 %v5355, %v5355
          %5388 = vst.msk [vmem:[#allocation3 + $0x10] sm:$0xf] %vm1752, %v5356
          %5389 = vst.msk [vmem:[#allocation3 + $0x14] sm:$0xf] %vm1752, %v5357
          %5390 = vst.msk [vmem:[#allocation3 + $0x18] sm:$0xf] %vm1752, %v5358
          %5391 = vst.msk [vmem:[#allocation3 + $0x1c] sm:$0xf] %vm1752, %v5359
          %5392 = vst.msk [vmem:[#allocation3 + $0x20] sm:$0xf] %vm1752, %v5360
          %5393 = vst.msk [vmem:[#allocation3 + $0x24] sm:$0xf] %vm1752, %v5361
          %5394 = vst.msk [vmem:[#allocation3 + $0x28] sm:$0xf] %vm1752, %v5362
          %5395 = vst.msk [vmem:[#allocation3 + $0x2c] sm:$0xf] %vm1752, %v5363
          %5396 = vst.msk [vmem:[#allocation3 + $0x30] sm:$0xf] %vm1752, %v5364
          %5397 = vst.msk [vmem:[#allocation3 + $0x34] sm:$0xf] %vm1752, %v5365
          %5398 = vst.msk [vmem:[#allocation3 + $0x38] sm:$0xf] %vm1752, %v5366
          %5399 = vst.msk [vmem:[#allocation3 + $0x3c] sm:$0xf] %vm1752, %v5367
          %5400 = vst.msk [vmem:[#allocation3 + $0x40] sm:$0xf] %vm1752, %v5368
          %5401 = vst.msk [vmem:[#allocation3 + $0x44] sm:$0xf] %vm1752, %v5369
          %5402 = vst.msk [vmem:[#allocation3 + $0x48] sm:$0xf] %vm1752, %v5370
          %5403 = vst.msk [vmem:[#allocation3 + $0x4c] sm:$0xf] %vm1752, %v5371
          %5404 = vst.msk [vmem:[#allocation3 + $0x50] sm:$0xf] %vm1752, %v5372
          %5405 = vst.msk [vmem:[#allocation3 + $0x54] sm:$0xf] %vm1752, %v5373
          %5406 = vst.msk [vmem:[#allocation3 + $0x58] sm:$0xf] %vm1752, %v5374
          %5407 = vst.msk [vmem:[#allocation3 + $0x5c] sm:$0xf] %vm1752, %v5375
          %5408 = vst.msk [vmem:[#allocation3 + $0x60] sm:$0xf] %vm1752, %v5376
          %5409 = vst.msk [vmem:[#allocation3 + $0x64] sm:$0xf] %vm1752, %v5377
          %5410 = vst.msk [vmem:[#allocation3 + $0x68] sm:$0xf] %vm1752, %v5378
          %5411 = vst.msk [vmem:[#allocation3 + $0x6c] sm:$0xf] %vm1752, %v5379
          %5412 = vst.msk [vmem:[#allocation3 + $0x70] sm:$0xf] %vm1752, %v5380
          %5413 = vst.msk [vmem:[#allocation3 + $0x74] sm:$0xf] %vm1752, %v5381
          %5414 = vst.msk [vmem:[#allocation3 + $0x78] sm:$0xf] %vm1752, %v5382
          %5415 = vst.msk [vmem:[#allocation3 + $0x7c] sm:$0xf] %vm1752, %v5383
          %5416 = vst.msk [vmem:[#allocation3 + $0x80] sm:$0xf] %vm1752, %v5384
          %5417 = vst.msk [vmem:[#allocation3 + $0x84] sm:$0xf] %vm1752, %v5385
          %5418 = vst.msk [vmem:[#allocation3 + $0x88] sm:$0xf] %vm1752, %v5386
          %5419 = vst.msk [vmem:[#allocation3 + $0x8c] sm:$0xf] %vm1752, %v5387
          %v5420 = vld [vmem:[#allocation3 + $0x8] sm:$0xf]
          %v5421 = vld [vmem:[#allocation3 + $0xc] sm:$0xf]
          %v5422 = vld [vmem:[#allocation3 + $0x10] sm:$0xf]
          %v5423 = vld [vmem:[#allocation3 + $0x14] sm:$0xf]
          %v5424 = vld [vmem:[#allocation3 + $0x18] sm:$0xf]
          %v5425 = vld [vmem:[#allocation3 + $0x1c] sm:$0xf]
          %v5426 = vld [vmem:[#allocation3 + $0x20] sm:$0xf]
          %v5427 = vld [vmem:[#allocation3 + $0x24] sm:$0xf]
          %v5428 = vld [vmem:[#allocation3 + $0x28] sm:$0xf]
          %v5429 = vld [vmem:[#allocation3 + $0x2c] sm:$0xf]
          %v5430 = vld [vmem:[#allocation3 + $0x30] sm:$0xf]
          %v5431 = vld [vmem:[#allocation3 + $0x34] sm:$0xf]
          %v5432 = vld [vmem:[#allocation3 + $0x38] sm:$0xf]
          %v5433 = vld [vmem:[#allocation3 + $0x3c] sm:$0xf]
          %v5434 = vld [vmem:[#allocation3 + $0x40] sm:$0xf]
          %v5435 = vld [vmem:[#allocation3 + $0x44] sm:$0xf]
          %v5436 = vld [vmem:[#allocation3 + $0x48] sm:$0xf]
          %v5437 = vld [vmem:[#allocation3 + $0x4c] sm:$0xf]
          %v5438 = vld [vmem:[#allocation3 + $0x50] sm:$0xf]
          %v5439 = vld [vmem:[#allocation3 + $0x54] sm:$0xf]
          %v5440 = vld [vmem:[#allocation3 + $0x58] sm:$0xf]
          %v5441 = vld [vmem:[#allocation3 + $0x5c] sm:$0xf]
          %v5442 = vld [vmem:[#allocation3 + $0x60] sm:$0xf]
          %v5443 = vld [vmem:[#allocation3 + $0x64] sm:$0xf]
          %v5444 = vld [vmem:[#allocation3 + $0x68] sm:$0xf]
          %v5445 = vld [vmem:[#allocation3 + $0x6c] sm:$0xf]
          %v5446 = vld [vmem:[#allocation3 + $0x70] sm:$0xf]
          %v5447 = vld [vmem:[#allocation3 + $0x74] sm:$0xf]
          %v5448 = vld [vmem:[#allocation3 + $0x78] sm:$0xf]
          %v5449 = vld [vmem:[#allocation3 + $0x7c] sm:$0xf]
          %v5450 = vld [vmem:[#allocation3 + $0x80] sm:$0xf]
          %v5451 = vld [vmem:[#allocation3 + $0x84] sm:$0xf]
          %v5452 = vunpack.c.l.bf16 %v5356
          %v5453 = vunpack.c.l.bf16 %v5357
          %v5454 = vunpack.c.l.bf16 %v5358
          %v5455 = vunpack.c.l.bf16 %v5359
          %v5456 = vunpack.c.l.bf16 %v5360
          %v5457 = vunpack.c.l.bf16 %v5361
          %v5458 = vunpack.c.l.bf16 %v5362
          %v5459 = vunpack.c.l.bf16 %v5363
          %v5460 = vunpack.c.l.bf16 %v5364
          %v5461 = vunpack.c.l.bf16 %v5365
          %v5462 = vunpack.c.l.bf16 %v5366
          %v5463 = vunpack.c.l.bf16 %v5367
          %v5464 = vunpack.c.l.bf16 %v5368
          %v5465 = vunpack.c.l.bf16 %v5369
          %v5466 = vunpack.c.l.bf16 %v5370
          %v5467 = vunpack.c.l.bf16 %v5371
          %v5468 = vunpack.c.l.bf16 %v5372
          %v5469 = vunpack.c.l.bf16 %v5373
          %v5470 = vunpack.c.l.bf16 %v5374
          %v5471 = vunpack.c.l.bf16 %v5375
          %v5472 = vunpack.c.l.bf16 %v5376
          %v5473 = vunpack.c.l.bf16 %v5377
          %v5474 = vunpack.c.l.bf16 %v5378
          %v5475 = vunpack.c.l.bf16 %v5379
          %v5476 = vunpack.c.l.bf16 %v5380
          %v5477 = vunpack.c.l.bf16 %v5381
          %v5478 = vunpack.c.l.bf16 %v5382
          %v5479 = vunpack.c.l.bf16 %v5383
          %v5480 = vunpack.c.l.bf16 %v5384
          %v5481 = vunpack.c.l.bf16 %v5385
          %v5482 = vunpack.c.l.bf16 %v5386
          %v5483 = vunpack.c.l.bf16 %v5387
          %v5484 = vunpack.c.l.bf16 %v5420
          %v5485 = vunpack.c.l.bf16 %v5421
          %v5486 = vunpack.c.l.bf16 %v5422
          %v5487 = vunpack.c.l.bf16 %v5423
          %v5488 = vunpack.c.l.bf16 %v5424
          %v5489 = vunpack.c.l.bf16 %v5425
          %v5490 = vunpack.c.l.bf16 %v5426
          %v5491 = vunpack.c.l.bf16 %v5427
          %v5492 = vunpack.c.l.bf16 %v5428
          %v5493 = vunpack.c.l.bf16 %v5429
          %v5494 = vunpack.c.l.bf16 %v5430
          %v5495 = vunpack.c.l.bf16 %v5431
          %v5496 = vunpack.c.l.bf16 %v5432
          %v5497 = vunpack.c.l.bf16 %v5433
          %v5498 = vunpack.c.l.bf16 %v5434
          %v5499 = vunpack.c.l.bf16 %v5435
          %v5500 = vunpack.c.l.bf16 %v5436
          %v5501 = vunpack.c.l.bf16 %v5437
          %v5502 = vunpack.c.l.bf16 %v5438
          %v5503 = vunpack.c.l.bf16 %v5439
          %v5504 = vunpack.c.l.bf16 %v5440
          %v5505 = vunpack.c.l.bf16 %v5441
          %v5506 = vunpack.c.l.bf16 %v5442
          %v5507 = vunpack.c.l.bf16 %v5443
          %v5508 = vunpack.c.l.bf16 %v5444
          %v5509 = vunpack.c.l.bf16 %v5445
          %v5510 = vunpack.c.l.bf16 %v5446
          %v5511 = vunpack.c.l.bf16 %v5447
          %v5512 = vunpack.c.l.bf16 %v5448
          %v5513 = vunpack.c.l.bf16 %v5449
          %v5514 = vunpack.c.l.bf16 %v5450
          %v5515 = vunpack.c.l.bf16 %v5451
          %v5516 = vmax.f32 %v5452, %v5484
          %v5517 = vmax.f32 %v5453, %v5485
          %v5518 = vmax.f32 %v5454, %v5486
          %v5519 = vmax.f32 %v5455, %v5487
          %v5520 = vmax.f32 %v5456, %v5488
          %v5521 = vmax.f32 %v5457, %v5489
          %v5522 = vmax.f32 %v5458, %v5490
          %v5523 = vmax.f32 %v5459, %v5491
          %v5524 = vmax.f32 %v5460, %v5492
          %v5525 = vmax.f32 %v5461, %v5493
          %v5526 = vmax.f32 %v5462, %v5494
          %v5527 = vmax.f32 %v5463, %v5495
          %v5528 = vmax.f32 %v5464, %v5496
          %v5529 = vmax.f32 %v5465, %v5497
          %v5530 = vmax.f32 %v5466, %v5498
          %v5531 = vmax.f32 %v5467, %v5499
          %v5532 = vmax.f32 %v5468, %v5500
          %v5533 = vmax.f32 %v5469, %v5501
          %v5534 = vmax.f32 %v5470, %v5502
          %v5535 = vmax.f32 %v5471, %v5503
          %v5536 = vmax.f32 %v5472, %v5504
          %v5537 = vmax.f32 %v5473, %v5505
          %v5538 = vmax.f32 %v5474, %v5506
          %v5539 = vmax.f32 %v5475, %v5507
          %v5540 = vmax.f32 %v5476, %v5508
          %v5541 = vmax.f32 %v5477, %v5509
          %v5542 = vmax.f32 %v5478, %v5510
          %v5543 = vmax.f32 %v5479, %v5511
          %v5544 = vmax.f32 %v5480, %v5512
          %v5545 = vmax.f32 %v5481, %v5513
          %v5546 = vmax.f32 %v5482, %v5514
          %v5547 = vmax.f32 %v5483, %v5515
          %v5548 = vpack.c.bf16 %v5516, %v5516
          %v5549 = vpack.c.bf16 %v5517, %v5517
          %v5550 = vpack.c.bf16 %v5518, %v5518
          %v5551 = vpack.c.bf16 %v5519, %v5519
          %v5552 = vpack.c.bf16 %v5520, %v5520
          %v5553 = vpack.c.bf16 %v5521, %v5521
          %v5554 = vpack.c.bf16 %v5522, %v5522
          %v5555 = vpack.c.bf16 %v5523, %v5523
          %v5556 = vpack.c.bf16 %v5524, %v5524
          %v5557 = vpack.c.bf16 %v5525, %v5525
          %v5558 = vpack.c.bf16 %v5526, %v5526
          %v5559 = vpack.c.bf16 %v5527, %v5527
          %v5560 = vpack.c.bf16 %v5528, %v5528
          %v5561 = vpack.c.bf16 %v5529, %v5529
          %v5562 = vpack.c.bf16 %v5530, %v5530
          %v5563 = vpack.c.bf16 %v5531, %v5531
          %v5564 = vpack.c.bf16 %v5532, %v5532
          %v5565 = vpack.c.bf16 %v5533, %v5533
          %v5566 = vpack.c.bf16 %v5534, %v5534
          %v5567 = vpack.c.bf16 %v5535, %v5535
          %v5568 = vpack.c.bf16 %v5536, %v5536
          %v5569 = vpack.c.bf16 %v5537, %v5537
          %v5570 = vpack.c.bf16 %v5538, %v5538
          %v5571 = vpack.c.bf16 %v5539, %v5539
          %v5572 = vpack.c.bf16 %v5540, %v5540
          %v5573 = vpack.c.bf16 %v5541, %v5541
          %v5574 = vpack.c.bf16 %v5542, %v5542
          %v5575 = vpack.c.bf16 %v5543, %v5543
          %v5576 = vpack.c.bf16 %v5544, %v5544
          %v5577 = vpack.c.bf16 %v5545, %v5545
          %v5578 = vpack.c.bf16 %v5546, %v5546
          %v5579 = vpack.c.bf16 %v5547, %v5547
          %v5580 = vld [vmem:[#allocation3] sm:$0xf]
          %v5581 = vld [vmem:[#allocation3 + $0x4] sm:$0xf]
          %v5582 = vunpack.c.l.bf16 %v5548
          %v5583 = vunpack.c.l.bf16 %v5549
          %v5584 = vunpack.c.l.bf16 %v5550
          %v5585 = vunpack.c.l.bf16 %v5551
          %v5586 = vunpack.c.l.bf16 %v5552
          %v5587 = vunpack.c.l.bf16 %v5553
          %v5588 = vunpack.c.l.bf16 %v5554
          %v5589 = vunpack.c.l.bf16 %v5555
          %v5590 = vunpack.c.l.bf16 %v5556
          %v5591 = vunpack.c.l.bf16 %v5557
          %v5592 = vunpack.c.l.bf16 %v5558
          %v5593 = vunpack.c.l.bf16 %v5559
          %v5594 = vunpack.c.l.bf16 %v5560
          %v5595 = vunpack.c.l.bf16 %v5561
          %v5596 = vunpack.c.l.bf16 %v5562
          %v5597 = vunpack.c.l.bf16 %v5563
          %v5598 = vunpack.c.l.bf16 %v5564
          %v5599 = vunpack.c.l.bf16 %v5565
          %v5600 = vunpack.c.l.bf16 %v5566
          %v5601 = vunpack.c.l.bf16 %v5567
          %v5602 = vunpack.c.l.bf16 %v5568
          %v5603 = vunpack.c.l.bf16 %v5569
          %v5604 = vunpack.c.l.bf16 %v5570
          %v5605 = vunpack.c.l.bf16 %v5571
          %v5606 = vunpack.c.l.bf16 %v5572
          %v5607 = vunpack.c.l.bf16 %v5573
          %v5608 = vunpack.c.l.bf16 %v5574
          %v5609 = vunpack.c.l.bf16 %v5575
          %v5610 = vunpack.c.l.bf16 %v5576
          %v5611 = vunpack.c.l.bf16 %v5577
          %v5612 = vunpack.c.l.bf16 %v5578
          %v5613 = vunpack.c.l.bf16 %v5579
          %v5614 = vunpack.c.l.bf16 %v5580
          %v5615 = vunpack.c.l.bf16 %v5581
          %v5616 = vmax.f32 %v5582, %v5614
          %v5617 = vmax.f32 %v5583, %v5615
          %v5618 = vmax.f32 %v5584, %v5484
          %v5619 = vmax.f32 %v5585, %v5485
          %v5620 = vmax.f32 %v5586, %v5486
          %v5621 = vmax.f32 %v5587, %v5487
          %v5622 = vmax.f32 %v5588, %v5488
          %v5623 = vmax.f32 %v5589, %v5489
          %v5624 = vmax.f32 %v5590, %v5490
          %v5625 = vmax.f32 %v5591, %v5491
          %v5626 = vmax.f32 %v5592, %v5492
          %v5627 = vmax.f32 %v5593, %v5493
          %v5628 = vmax.f32 %v5594, %v5494
          %v5629 = vmax.f32 %v5595, %v5495
          %v5630 = vmax.f32 %v5596, %v5496
          %v5631 = vmax.f32 %v5597, %v5497
          %v5632 = vmax.f32 %v5598, %v5498
          %v5633 = vmax.f32 %v5599, %v5499
          %v5634 = vmax.f32 %v5600, %v5500
          %v5635 = vmax.f32 %v5601, %v5501
          %v5636 = vmax.f32 %v5602, %v5502
          %v5637 = vmax.f32 %v5603, %v5503
          %v5638 = vmax.f32 %v5604, %v5504
          %v5639 = vmax.f32 %v5605, %v5505
          %v5640 = vmax.f32 %v5606, %v5506
          %v5641 = vmax.f32 %v5607, %v5507
          %v5642 = vmax.f32 %v5608, %v5508
          %v5643 = vmax.f32 %v5609, %v5509
          %v5644 = vmax.f32 %v5610, %v5510
          %v5645 = vmax.f32 %v5611, %v5511
          %v5646 = vmax.f32 %v5612, %v5512
          %v5647 = vmax.f32 %v5613, %v5513
          %v5648 = vpack.c.bf16 %v5616, %v5616
          %v5649 = vpack.c.bf16 %v5617, %v5617
          %v5650 = vpack.c.bf16 %v5618, %v5618
          %v5651 = vpack.c.bf16 %v5619, %v5619
          %v5652 = vpack.c.bf16 %v5620, %v5620
          %v5653 = vpack.c.bf16 %v5621, %v5621
          %v5654 = vpack.c.bf16 %v5622, %v5622
          %v5655 = vpack.c.bf16 %v5623, %v5623
          %v5656 = vpack.c.bf16 %v5624, %v5624
          %v5657 = vpack.c.bf16 %v5625, %v5625
          %v5658 = vpack.c.bf16 %v5626, %v5626
          %v5659 = vpack.c.bf16 %v5627, %v5627
          %v5660 = vpack.c.bf16 %v5628, %v5628
          %v5661 = vpack.c.bf16 %v5629, %v5629
          %v5662 = vpack.c.bf16 %v5630, %v5630
          %v5663 = vpack.c.bf16 %v5631, %v5631
          %v5664 = vpack.c.bf16 %v5632, %v5632
          %v5665 = vpack.c.bf16 %v5633, %v5633
          %v5666 = vpack.c.bf16 %v5634, %v5634
          %v5667 = vpack.c.bf16 %v5635, %v5635
          %v5668 = vpack.c.bf16 %v5636, %v5636
          %v5669 = vpack.c.bf16 %v5637, %v5637
          %v5670 = vpack.c.bf16 %v5638, %v5638
          %v5671 = vpack.c.bf16 %v5639, %v5639
          %v5672 = vpack.c.bf16 %v5640, %v5640
          %v5673 = vpack.c.bf16 %v5641, %v5641
          %v5674 = vpack.c.bf16 %v5642, %v5642
          %v5675 = vpack.c.bf16 %v5643, %v5643
          %v5676 = vpack.c.bf16 %v5644, %v5644
          %v5677 = vpack.c.bf16 %v5645, %v5645
          %v5678 = vpack.c.bf16 %v5646, %v5646
          %v5679 = vpack.c.bf16 %v5647, %v5647
          %v5680 = vld [vmem:[#allocation3 + $0x88] sm:$0xf]
          %v5681 = vld [vmem:[#allocation3 + $0x8c] sm:$0xf]
          %v5682 = vld [vmem:[#allocation3 + $0x90] sm:$0xf]
          %v5683 = vld [vmem:[#allocation3 + $0x94] sm:$0xf]
          %v5684 = vunpack.c.l.bf16 %v5648
          %v5685 = vunpack.c.l.bf16 %v5649
          %v5686 = vunpack.c.l.bf16 %v5650
          %v5687 = vunpack.c.l.bf16 %v5651
          %v5688 = vunpack.c.l.bf16 %v5652
          %v5689 = vunpack.c.l.bf16 %v5653
          %v5690 = vunpack.c.l.bf16 %v5654
          %v5691 = vunpack.c.l.bf16 %v5655
          %v5692 = vunpack.c.l.bf16 %v5656
          %v5693 = vunpack.c.l.bf16 %v5657
          %v5694 = vunpack.c.l.bf16 %v5658
          %v5695 = vunpack.c.l.bf16 %v5659
          %v5696 = vunpack.c.l.bf16 %v5660
          %v5697 = vunpack.c.l.bf16 %v5661
          %v5698 = vunpack.c.l.bf16 %v5662
          %v5699 = vunpack.c.l.bf16 %v5663
          %v5700 = vunpack.c.l.bf16 %v5664
          %v5701 = vunpack.c.l.bf16 %v5665
          %v5702 = vunpack.c.l.bf16 %v5666
          %v5703 = vunpack.c.l.bf16 %v5667
          %v5704 = vunpack.c.l.bf16 %v5668
          %v5705 = vunpack.c.l.bf16 %v5669
          %v5706 = vunpack.c.l.bf16 %v5670
          %v5707 = vunpack.c.l.bf16 %v5671
          %v5708 = vunpack.c.l.bf16 %v5672
          %v5709 = vunpack.c.l.bf16 %v5673
          %v5710 = vunpack.c.l.bf16 %v5674
          %v5711 = vunpack.c.l.bf16 %v5675
          %v5712 = vunpack.c.l.bf16 %v5676
          %v5713 = vunpack.c.l.bf16 %v5677
          %v5714 = vunpack.c.l.bf16 %v5678
          %v5715 = vunpack.c.l.bf16 %v5679
          %v5716 = vunpack.c.l.bf16 %v5680
          %v5717 = vunpack.c.l.bf16 %v5681
          %v5718 = vunpack.c.l.bf16 %v5682
          %v5719 = vunpack.c.l.bf16 %v5683
          %v5720 = vmax.f32 %v5684, %v5488
          %v5721 = vmax.f32 %v5685, %v5489
          %v5722 = vmax.f32 %v5686, %v5490
          %v5723 = vmax.f32 %v5687, %v5491
          %v5724 = vmax.f32 %v5688, %v5492
          %v5725 = vmax.f32 %v5689, %v5493
          %v5726 = vmax.f32 %v5690, %v5494
          %v5727 = vmax.f32 %v5691, %v5495
          %v5728 = vmax.f32 %v5692, %v5496
          %v5729 = vmax.f32 %v5693, %v5497
          %v5730 = vmax.f32 %v5694, %v5498
          %v5731 = vmax.f32 %v5695, %v5499
          %v5732 = vmax.f32 %v5696, %v5500
          %v5733 = vmax.f32 %v5697, %v5501
          %v5734 = vmax.f32 %v5698, %v5502
          %v5735 = vmax.f32 %v5699, %v5503
          %v5736 = vmax.f32 %v5700, %v5504
          %v5737 = vmax.f32 %v5701, %v5505
          %v5738 = vmax.f32 %v5702, %v5506
          %v5739 = vmax.f32 %v5703, %v5507
          %v5740 = vmax.f32 %v5704, %v5508
          %v5741 = vmax.f32 %v5705, %v5509
          %v5742 = vmax.f32 %v5706, %v5510
          %v5743 = vmax.f32 %v5707, %v5511
          %v5744 = vmax.f32 %v5708, %v5512
          %v5745 = vmax.f32 %v5709, %v5513
          %v5746 = vmax.f32 %v5710, %v5514
          %v5747 = vmax.f32 %v5711, %v5515
          %v5748 = vmax.f32 %v5712, %v5716
          %v5749 = vmax.f32 %v5713, %v5717
          %v5750 = vmax.f32 %v5714, %v5718
          %v5751 = vmax.f32 %v5715, %v5719
          %v5752 = vpack.c.bf16 %v5720, %v5720
          %v5753 = vpack.c.bf16 %v5721, %v5721
          %v5754 = vpack.c.bf16 %v5722, %v5722
          %v5755 = vpack.c.bf16 %v5723, %v5723
          %v5756 = vpack.c.bf16 %v5724, %v5724
          %v5757 = vpack.c.bf16 %v5725, %v5725
          %v5758 = vpack.c.bf16 %v5726, %v5726
          %v5759 = vpack.c.bf16 %v5727, %v5727
          %v5760 = vpack.c.bf16 %v5728, %v5728
          %v5761 = vpack.c.bf16 %v5729, %v5729
          %v5762 = vpack.c.bf16 %v5730, %v5730
          %v5763 = vpack.c.bf16 %v5731, %v5731
          %v5764 = vpack.c.bf16 %v5732, %v5732
          %v5765 = vpack.c.bf16 %v5733, %v5733
          %v5766 = vpack.c.bf16 %v5734, %v5734
          %v5767 = vpack.c.bf16 %v5735, %v5735
          %v5768 = vpack.c.bf16 %v5736, %v5736
          %v5769 = vpack.c.bf16 %v5737, %v5737
          %v5770 = vpack.c.bf16 %v5738, %v5738
          %v5771 = vpack.c.bf16 %v5739, %v5739
          %v5772 = vpack.c.bf16 %v5740, %v5740
          %v5773 = vpack.c.bf16 %v5741, %v5741
          %v5774 = vpack.c.bf16 %v5742, %v5742
          %v5775 = vpack.c.bf16 %v5743, %v5743
          %v5776 = vpack.c.bf16 %v5744, %v5744
          %v5777 = vpack.c.bf16 %v5745, %v5745
          %v5778 = vpack.c.bf16 %v5746, %v5746
          %v5779 = vpack.c.bf16 %v5747, %v5747
          %v5780 = vpack.c.bf16 %v5748, %v5748
          %v5781 = vpack.c.bf16 %v5749, %v5749
          %v5782 = vpack.c.bf16 %v5750, %v5750
          %v5783 = vpack.c.bf16 %v5751, %v5751
          %v5784 = vld [vmem:[#allocation3 + $0x98] sm:$0xf]
          %v5785 = vld [vmem:[#allocation3 + $0x9c] sm:$0xf]
          %v5786 = vunpack.c.l.bf16 %v5752
          %v5787 = vunpack.c.l.bf16 %v5753
          %v5788 = vunpack.c.l.bf16 %v5754
          %v5789 = vunpack.c.l.bf16 %v5755
          %v5790 = vunpack.c.l.bf16 %v5756
          %v5791 = vunpack.c.l.bf16 %v5757
          %v5792 = vunpack.c.l.bf16 %v5758
          %v5793 = vunpack.c.l.bf16 %v5759
          %v5794 = vunpack.c.l.bf16 %v5760
          %v5795 = vunpack.c.l.bf16 %v5761
          %v5796 = vunpack.c.l.bf16 %v5762
          %v5797 = vunpack.c.l.bf16 %v5763
          %v5798 = vunpack.c.l.bf16 %v5764
          %v5799 = vunpack.c.l.bf16 %v5765
          %v5800 = vunpack.c.l.bf16 %v5766
          %v5801 = vunpack.c.l.bf16 %v5767
          %v5802 = vunpack.c.l.bf16 %v5768
          %v5803 = vunpack.c.l.bf16 %v5769
          %v5804 = vunpack.c.l.bf16 %v5770
          %v5805 = vunpack.c.l.bf16 %v5771
          %v5806 = vunpack.c.l.bf16 %v5772
          %v5807 = vunpack.c.l.bf16 %v5773
          %v5808 = vunpack.c.l.bf16 %v5774
          %v5809 = vunpack.c.l.bf16 %v5775
          %v5810 = vunpack.c.l.bf16 %v5776
          %v5811 = vunpack.c.l.bf16 %v5777
          %v5812 = vunpack.c.l.bf16 %v5778
          %v5813 = vunpack.c.l.bf16 %v5779
          %v5814 = vunpack.c.l.bf16 %v5780
          %v5815 = vunpack.c.l.bf16 %v5781
          %v5816 = vunpack.c.l.bf16 %v5782
          %v5817 = vunpack.c.l.bf16 %v5783
          %v5818 = vunpack.c.l.bf16 %v5784
          %v5819 = vunpack.c.l.bf16 %v5785
          %v5820 = vmax.f32 %v5786, %v5490
          %v5821 = vmax.f32 %v5787, %v5491
          %v5822 = vmax.f32 %v5788, %v5492
          %v5823 = vmax.f32 %v5789, %v5493
          %v5824 = vmax.f32 %v5790, %v5494
          %v5825 = vmax.f32 %v5791, %v5495
          %v5826 = vmax.f32 %v5792, %v5496
          %v5827 = vmax.f32 %v5793, %v5497
          %v5828 = vmax.f32 %v5794, %v5498
          %v5829 = vmax.f32 %v5795, %v5499
          %v5830 = vmax.f32 %v5796, %v5500
          %v5831 = vmax.f32 %v5797, %v5501
          %v5832 = vmax.f32 %v5798, %v5502
          %v5833 = vmax.f32 %v5799, %v5503
          %v5834 = vmax.f32 %v5800, %v5504
          %v5835 = vmax.f32 %v5801, %v5505
          %v5836 = vmax.f32 %v5802, %v5506
          %v5837 = vmax.f32 %v5803, %v5507
          %v5838 = vmax.f32 %v5804, %v5508
          %v5839 = vmax.f32 %v5805, %v5509
          %v5840 = vmax.f32 %v5806, %v5510
          %v5841 = vmax.f32 %v5807, %v5511
          %v5842 = vmax.f32 %v5808, %v5512
          %v5843 = vmax.f32 %v5809, %v5513
          %v5844 = vmax.f32 %v5810, %v5514
          %v5845 = vmax.f32 %v5811, %v5515
          %v5846 = vmax.f32 %v5812, %v5716
          %v5847 = vmax.f32 %v5813, %v5717
          %v5848 = vmax.f32 %v5814, %v5718
          %v5849 = vmax.f32 %v5815, %v5719
          %v5850 = vmax.f32 %v5816, %v5818
          %v5851 = vmax.f32 %v5817, %v5819
          %v5852 = vpack.c.bf16 %v5820, %v5820
          %v5853 = vpack.c.bf16 %v5821, %v5821
          %v5854 = vpack.c.bf16 %v5822, %v5822
          %v5855 = vpack.c.bf16 %v5823, %v5823
          %v5856 = vpack.c.bf16 %v5824, %v5824
          %v5857 = vpack.c.bf16 %v5825, %v5825
          %v5858 = vpack.c.bf16 %v5826, %v5826
          %v5859 = vpack.c.bf16 %v5827, %v5827
          %v5860 = vpack.c.bf16 %v5828, %v5828
          %v5861 = vpack.c.bf16 %v5829, %v5829
          %v5862 = vpack.c.bf16 %v5830, %v5830
          %v5863 = vpack.c.bf16 %v5831, %v5831
          %v5864 = vpack.c.bf16 %v5832, %v5832
          %v5865 = vpack.c.bf16 %v5833, %v5833
          %v5866 = vpack.c.bf16 %v5834, %v5834
          %v5867 = vpack.c.bf16 %v5835, %v5835
          %v5868 = vpack.c.bf16 %v5836, %v5836
          %v5869 = vpack.c.bf16 %v5837, %v5837
          %v5870 = vpack.c.bf16 %v5838, %v5838
          %v5871 = vpack.c.bf16 %v5839, %v5839
          %v5872 = vpack.c.bf16 %v5840, %v5840
          %v5873 = vpack.c.bf16 %v5841, %v5841
          %v5874 = vpack.c.bf16 %v5842, %v5842
          %v5875 = vpack.c.bf16 %v5843, %v5843
          %v5876 = vpack.c.bf16 %v5844, %v5844
          %v5877 = vpack.c.bf16 %v5845, %v5845
          %v5878 = vpack.c.bf16 %v5846, %v5846
          %v5879 = vpack.c.bf16 %v5847, %v5847
          %v5880 = vpack.c.bf16 %v5848, %v5848
          %v5881 = vpack.c.bf16 %v5849, %v5849
          %v5882 = vpack.c.bf16 %v5850, %v5850
          %v5883 = vpack.c.bf16 %v5851, %v5851
          %v5885 = vunpack.c.l.b16 %v5883
          %v5886 = vpack.c.b16 %v5885, %v5885
          %v5888 = vshrl.u32 %v5886, 16
          %v5890 = vrot.slane %v5888, 3
          %v5923 = vunpack.c.l.b16 %v5852
          %v5924 = vunpack.c.l.b16 %v5853
          %v5925 = vunpack.c.l.b16 %v5854
          %v5926 = vunpack.c.l.b16 %v5855
          %v5927 = vunpack.c.l.b16 %v5856
          %v5928 = vunpack.c.l.b16 %v5857
          %v5929 = vunpack.c.l.b16 %v5858
          %v5930 = vunpack.c.l.b16 %v5859
          %v5931 = vunpack.c.l.b16 %v5860
          %v5932 = vunpack.c.l.b16 %v5861
          %v5933 = vunpack.c.l.b16 %v5862
          %v5934 = vunpack.c.l.b16 %v5863
          %v5935 = vunpack.c.l.b16 %v5864
          %v5936 = vunpack.c.l.b16 %v5865
          %v5937 = vunpack.c.l.b16 %v5866
          %v5938 = vunpack.c.l.b16 %v5867
          %v5939 = vunpack.c.l.b16 %v5868
          %v5940 = vunpack.c.l.b16 %v5869
          %v5941 = vunpack.c.l.b16 %v5870
          %v5942 = vunpack.c.l.b16 %v5871
          %v5943 = vunpack.c.l.b16 %v5872
          %v5944 = vunpack.c.l.b16 %v5873
          %v5945 = vunpack.c.l.b16 %v5874
          %v5946 = vunpack.c.l.b16 %v5875
          %v5947 = vunpack.c.l.b16 %v5876
          %v5948 = vunpack.c.l.b16 %v5877
          %v5949 = vunpack.c.l.b16 %v5878
          %v5950 = vunpack.c.l.b16 %v5879
          %v5951 = vunpack.c.l.b16 %v5880
          %v5952 = vunpack.c.l.b16 %v5881
          %v5953 = vunpack.c.l.b16 %v5882
          %v5954 = vpack.c.b16 %v5924, %v5923
          %v5955 = vpack.c.b16 %v5926, %v5925
          %v5956 = vpack.c.b16 %v5928, %v5927
          %v5957 = vpack.c.b16 %v5930, %v5929
          %v5958 = vpack.c.b16 %v5932, %v5931
          %v5959 = vpack.c.b16 %v5934, %v5933
          %v5960 = vpack.c.b16 %v5936, %v5935
          %v5961 = vpack.c.b16 %v5938, %v5937
          %v5962 = vpack.c.b16 %v5940, %v5939
          %v5963 = vpack.c.b16 %v5942, %v5941
          %v5964 = vpack.c.b16 %v5944, %v5943
          %v5965 = vpack.c.b16 %v5946, %v5945
          %v5966 = vpack.c.b16 %v5948, %v5947
          %v5967 = vpack.c.b16 %v5950, %v5949
          %v5968 = vpack.c.b16 %v5952, %v5951
          %v5969 = vpack.c.b16 %v5885, %v5953
          %v5971 = vshrl.u32 %v5954, 16
          %v5973 = vrot.slane %v5971, 7
          %v5974 = vshll.u32 %v5954, 16
          %v5976 = vor.u32 %v5973, %v5974
          %v5978 = vshrl.u32 %v5955, 16
          %v5980 = vrot.slane %v5978, 7
          %v5981 = vshll.u32 %v5955, 16
          %v5983 = vor.u32 %v5980, %v5981
          %v5984 = vsel %vm1847, %v5973, %v5983
          %v5986 = vshrl.u32 %v5956, 16
          %v5988 = vrot.slane %v5986, 7
          %v5989 = vshll.u32 %v5956, 16
          %v5991 = vor.u32 %v5988, %v5989
          %v5992 = vsel %vm1847, %v5980, %v5991
          %v5994 = vshrl.u32 %v5957, 16
          %v5996 = vrot.slane %v5994, 7
          %v5997 = vshll.u32 %v5957, 16
          %v5999 = vor.u32 %v5996, %v5997
          %v6000 = vsel %vm1847, %v5988, %v5999
          %v6002 = vshrl.u32 %v5958, 16
          %v6004 = vrot.slane %v6002, 7
          %v6005 = vshll.u32 %v5958, 16
          %v6007 = vor.u32 %v6004, %v6005
          %v6008 = vsel %vm1847, %v5996, %v6007
          %v6010 = vshrl.u32 %v5959, 16
          %v6012 = vrot.slane %v6010, 7
          %v6013 = vshll.u32 %v5959, 16
          %v6015 = vor.u32 %v6012, %v6013
          %v6016 = vsel %vm1847, %v6004, %v6015
          %v6018 = vshrl.u32 %v5960, 16
          %v6020 = vrot.slane %v6018, 7
          %v6021 = vshll.u32 %v5960, 16
          %v6023 = vor.u32 %v6020, %v6021
          %v6024 = vsel %vm1847, %v6012, %v6023
          %v6026 = vshrl.u32 %v5961, 16
          %v6028 = vrot.slane %v6026, 7
          %v6029 = vshll.u32 %v5961, 16
          %v6031 = vor.u32 %v6028, %v6029
          %v6032 = vsel %vm1847, %v6020, %v6031
          %v6034 = vshrl.u32 %v5962, 16
          %v6036 = vrot.slane %v6034, 7
          %v6037 = vshll.u32 %v5962, 16
          %v6039 = vor.u32 %v6036, %v6037
          %v6040 = vsel %vm1847, %v6028, %v6039
          %v6042 = vshrl.u32 %v5963, 16
          %v6044 = vrot.slane %v6042, 7
          %v6045 = vshll.u32 %v5963, 16
          %v6047 = vor.u32 %v6044, %v6045
          %v6048 = vsel %vm1847, %v6036, %v6047
          %v6050 = vshrl.u32 %v5964, 16
          %v6052 = vrot.slane %v6050, 7
          %v6053 = vshll.u32 %v5964, 16
          %v6055 = vor.u32 %v6052, %v6053
          %v6056 = vsel %vm1847, %v6044, %v6055
          %v6058 = vshrl.u32 %v5965, 16
          %v6060 = vrot.slane %v6058, 7
          %v6061 = vshll.u32 %v5965, 16
          %v6063 = vor.u32 %v6060, %v6061
          %v6064 = vsel %vm1847, %v6052, %v6063
          %v6066 = vshrl.u32 %v5966, 16
          %v6068 = vrot.slane %v6066, 7
          %v6069 = vshll.u32 %v5966, 16
          %v6071 = vor.u32 %v6068, %v6069
          %v6072 = vsel %vm1847, %v6060, %v6071
          %v6074 = vshrl.u32 %v5967, 16
          %v6076 = vrot.slane %v6074, 7
          %v6077 = vshll.u32 %v5967, 16
          %v6079 = vor.u32 %v6076, %v6077
          %v6080 = vsel %vm1847, %v6068, %v6079
          %v6082 = vshrl.u32 %v5968, 16
          %v6084 = vrot.slane %v6082, 7
          %v6085 = vshll.u32 %v5968, 16
          %v6087 = vor.u32 %v6084, %v6085
          %v6088 = vsel %vm1847, %v6076, %v6087
          %v6090 = vshrl.u32 %v5969, 16
          %v6092 = vrot.slane %v6090, 7
          %v6093 = vshll.u32 %v5969, 16
          %v6095 = vor.u32 %v6092, %v6093
          %v6096 = vsel %vm1847, %v6084, %v6095
          %v6113 = vsel %vm1992, %v5890, %v5976
          %v6114 = vsel %vm2190, %v6113, %v2070
          %v6115 = vsel %vm2197, %v5984, %v2070
          %v6116 = vsel %vm2204, %v5992, %v2070
          %v6117 = vsel %vm2211, %v6000, %v2070
          %v6118 = vsel %vm2218, %v6008, %v2070
          %v6119 = vsel %vm2225, %v6016, %v2070
          %v6120 = vsel %vm2232, %v6024, %v2070
          %v6121 = vsel %vm2239, %v6032, %v2070
          %v6122 = vsel %vm2246, %v6040, %v2070
          %v6123 = vsel %vm2253, %v6048, %v2070
          %v6124 = vsel %vm2260, %v6056, %v2070
          %v6125 = vsel %vm2267, %v6064, %v2070
          %v6126 = vsel %vm2274, %v6072, %v2070
          %v6127 = vsel %vm2281, %v6080, %v2070
          %v6128 = vsel %vm2288, %v6088, %v2070
          %v6129 = vsel %vm2295, %v6096, %v2070
          %v6130 = vunpack.c.l.bf16 %v5852
          %v6131 = vunpack.c.l.bf16 %v5853
          %v6132 = vunpack.c.l.bf16 %v5854
          %v6133 = vunpack.c.l.bf16 %v5855
          %v6134 = vunpack.c.l.bf16 %v5856
          %v6135 = vunpack.c.l.bf16 %v5857
          %v6136 = vunpack.c.l.bf16 %v5858
          %v6137 = vunpack.c.l.bf16 %v5859
          %v6138 = vunpack.c.l.bf16 %v5860
          %v6139 = vunpack.c.l.bf16 %v5861
          %v6140 = vunpack.c.l.bf16 %v5862
          %v6141 = vunpack.c.l.bf16 %v5863
          %v6142 = vunpack.c.l.bf16 %v5864
          %v6143 = vunpack.c.l.bf16 %v5865
          %v6144 = vunpack.c.l.bf16 %v5866
          %v6145 = vunpack.c.l.bf16 %v5867
          %v6146 = vunpack.c.l.bf16 %v5868
          %v6147 = vunpack.c.l.bf16 %v5869
          %v6148 = vunpack.c.l.bf16 %v5870
          %v6149 = vunpack.c.l.bf16 %v5871
          %v6150 = vunpack.c.l.bf16 %v5872
          %v6151 = vunpack.c.l.bf16 %v5873
          %v6152 = vunpack.c.l.bf16 %v5874
          %v6153 = vunpack.c.l.bf16 %v5875
          %v6154 = vunpack.c.l.bf16 %v5876
          %v6155 = vunpack.c.l.bf16 %v5877
          %v6156 = vunpack.c.l.bf16 %v5878
          %v6157 = vunpack.c.l.bf16 %v5879
          %v6158 = vunpack.c.l.bf16 %v5880
          %v6159 = vunpack.c.l.bf16 %v5881
          %v6160 = vunpack.c.l.bf16 %v5882
          %v6161 = vunpack.c.l.bf16 %v5883
          %v6162 = vunpack.c.l.bf16 %v6114
          %v6163 = vunpack.c.h.bf16 %v6114
          %v6164 = vunpack.c.l.bf16 %v6115
          %v6165 = vunpack.c.h.bf16 %v6115
          %v6166 = vunpack.c.l.bf16 %v6116
          %v6167 = vunpack.c.h.bf16 %v6116
          %v6168 = vunpack.c.l.bf16 %v6117
          %v6169 = vunpack.c.h.bf16 %v6117
          %v6170 = vunpack.c.l.bf16 %v6118
          %v6171 = vunpack.c.h.bf16 %v6118
          %v6172 = vunpack.c.l.bf16 %v6119
          %v6173 = vunpack.c.h.bf16 %v6119
          %v6174 = vunpack.c.l.bf16 %v6120
          %v6175 = vunpack.c.h.bf16 %v6120
          %v6176 = vunpack.c.l.bf16 %v6121
          %v6177 = vunpack.c.h.bf16 %v6121
          %v6178 = vunpack.c.l.bf16 %v6122
          %v6179 = vunpack.c.h.bf16 %v6122
          %v6180 = vunpack.c.l.bf16 %v6123
          %v6181 = vunpack.c.h.bf16 %v6123
          %v6182 = vunpack.c.l.bf16 %v6124
          %v6183 = vunpack.c.h.bf16 %v6124
          %v6184 = vunpack.c.l.bf16 %v6125
          %v6185 = vunpack.c.h.bf16 %v6125
          %v6186 = vunpack.c.l.bf16 %v6126
          %v6187 = vunpack.c.h.bf16 %v6126
          %v6188 = vunpack.c.l.bf16 %v6127
          %v6189 = vunpack.c.h.bf16 %v6127
          %v6190 = vunpack.c.l.bf16 %v6128
          %v6191 = vunpack.c.h.bf16 %v6128
          %v6192 = vunpack.c.l.bf16 %v6129
          %v6193 = vunpack.c.h.bf16 %v6129
          %v6194 = vmax.f32 %v6130, %v6162
          %v6195 = vmax.f32 %v6131, %v6163
          %v6196 = vmax.f32 %v6132, %v6164
          %v6197 = vmax.f32 %v6133, %v6165
          %v6198 = vmax.f32 %v6134, %v6166
          %v6199 = vmax.f32 %v6135, %v6167
          %v6200 = vmax.f32 %v6136, %v6168
          %v6201 = vmax.f32 %v6137, %v6169
          %v6202 = vmax.f32 %v6138, %v6170
          %v6203 = vmax.f32 %v6139, %v6171
          %v6204 = vmax.f32 %v6140, %v6172
          %v6205 = vmax.f32 %v6141, %v6173
          %v6206 = vmax.f32 %v6142, %v6174
          %v6207 = vmax.f32 %v6143, %v6175
          %v6208 = vmax.f32 %v6144, %v6176
          %v6209 = vmax.f32 %v6145, %v6177
          %v6210 = vmax.f32 %v6146, %v6178
          %v6211 = vmax.f32 %v6147, %v6179
          %v6212 = vmax.f32 %v6148, %v6180
          %v6213 = vmax.f32 %v6149, %v6181
          %v6214 = vmax.f32 %v6150, %v6182
          %v6215 = vmax.f32 %v6151, %v6183
          %v6216 = vmax.f32 %v6152, %v6184
          %v6217 = vmax.f32 %v6153, %v6185
          %v6218 = vmax.f32 %v6154, %v6186
          %v6219 = vmax.f32 %v6155, %v6187
          %v6220 = vmax.f32 %v6156, %v6188
          %v6221 = vmax.f32 %v6157, %v6189
          %v6222 = vmax.f32 %v6158, %v6190
          %v6223 = vmax.f32 %v6159, %v6191
          %v6224 = vmax.f32 %v6160, %v6192
          %v6225 = vmax.f32 %v6161, %v6193
          %v6226 = vpack.c.bf16 %v6194, %v6194
          %v6227 = vpack.c.bf16 %v6195, %v6195
          %v6228 = vpack.c.bf16 %v6196, %v6196
          %v6229 = vpack.c.bf16 %v6197, %v6197
          %v6230 = vpack.c.bf16 %v6198, %v6198
          %v6231 = vpack.c.bf16 %v6199, %v6199
          %v6232 = vpack.c.bf16 %v6200, %v6200
          %v6233 = vpack.c.bf16 %v6201, %v6201
          %v6234 = vpack.c.bf16 %v6202, %v6202
          %v6235 = vpack.c.bf16 %v6203, %v6203
          %v6236 = vpack.c.bf16 %v6204, %v6204
          %v6237 = vpack.c.bf16 %v6205, %v6205
          %v6238 = vpack.c.bf16 %v6206, %v6206
          %v6239 = vpack.c.bf16 %v6207, %v6207
          %v6240 = vpack.c.bf16 %v6208, %v6208
          %v6241 = vpack.c.bf16 %v6209, %v6209
          %v6242 = vpack.c.bf16 %v6210, %v6210
          %v6243 = vpack.c.bf16 %v6211, %v6211
          %v6244 = vpack.c.bf16 %v6212, %v6212
          %v6245 = vpack.c.bf16 %v6213, %v6213
          %v6246 = vpack.c.bf16 %v6214, %v6214
          %v6247 = vpack.c.bf16 %v6215, %v6215
          %v6248 = vpack.c.bf16 %v6216, %v6216
          %v6249 = vpack.c.bf16 %v6217, %v6217
          %v6250 = vpack.c.bf16 %v6218, %v6218
          %v6251 = vpack.c.bf16 %v6219, %v6219
          %v6252 = vpack.c.bf16 %v6220, %v6220
          %v6253 = vpack.c.bf16 %v6221, %v6221
          %v6254 = vpack.c.bf16 %v6222, %v6222
          %v6255 = vpack.c.bf16 %v6223, %v6223
          %v6256 = vpack.c.bf16 %v6224, %v6224
          %v6257 = vpack.c.bf16 %v6225, %v6225
          %v6258 = vrot.slane %v5886, 3
          %v6259 = vrot.slane %v5954, 7
          %v6260 = vrot.slane %v5955, 7
          %v6261 = vsel %vm1991, %v6259, %v6260
          %v6262 = vrot.slane %v5956, 7
          %v6263 = vsel %vm1991, %v6260, %v6262
          %v6264 = vrot.slane %v5957, 7
          %v6265 = vsel %vm1991, %v6262, %v6264
          %v6266 = vrot.slane %v5958, 7
          %v6267 = vsel %vm1991, %v6264, %v6266
          %v6268 = vrot.slane %v5959, 7
          %v6269 = vsel %vm1991, %v6266, %v6268
          %v6270 = vrot.slane %v5960, 7
          %v6271 = vsel %vm1991, %v6268, %v6270
          %v6272 = vrot.slane %v5961, 7
          %v6273 = vsel %vm1991, %v6270, %v6272
          %v6274 = vrot.slane %v5962, 7
          %v6275 = vsel %vm1991, %v6272, %v6274
          %v6276 = vrot.slane %v5963, 7
          %v6277 = vsel %vm1991, %v6274, %v6276
          %v6278 = vrot.slane %v5964, 7
          %v6279 = vsel %vm1991, %v6276, %v6278
          %v6280 = vrot.slane %v5965, 7
          %v6281 = vsel %vm1991, %v6278, %v6280
          %v6282 = vrot.slane %v5966, 7
          %v6283 = vsel %vm1991, %v6280, %v6282
          %v6284 = vrot.slane %v5967, 7
          %v6285 = vsel %vm1991, %v6282, %v6284
          %v6286 = vrot.slane %v5968, 7
          %v6287 = vsel %vm1991, %v6284, %v6286
          %v6288 = vrot.slane %v5969, 7
          %v6289 = vsel %vm1991, %v6286, %v6288
          %v6307 = vsel %vm2487, %v6258, %v6259
          %v6309 = vsel %vm2674, %v6307, %v2070
          %v6310 = vsel %vm2681, %v6261, %v2070
          %v6311 = vsel %vm2688, %v6263, %v2070
          %v6312 = vsel %vm2695, %v6265, %v2070
          %v6313 = vsel %vm2702, %v6267, %v2070
          %v6314 = vsel %vm2709, %v6269, %v2070
          %v6315 = vsel %vm2716, %v6271, %v2070
          %v6316 = vsel %vm2723, %v6273, %v2070
          %v6317 = vsel %vm2730, %v6275, %v2070
          %v6318 = vsel %vm2737, %v6277, %v2070
          %v6319 = vsel %vm2744, %v6279, %v2070
          %v6320 = vsel %vm2751, %v6281, %v2070
          %v6321 = vsel %vm2758, %v6283, %v2070
          %v6322 = vsel %vm2765, %v6285, %v2070
          %v6323 = vsel %vm2772, %v6287, %v2070
          %v6324 = vsel %vm2779, %v6289, %v2070
          %v6325 = vunpack.c.l.bf16 %v6226
          %v6326 = vunpack.c.l.bf16 %v6227
          %v6327 = vunpack.c.l.bf16 %v6228
          %v6328 = vunpack.c.l.bf16 %v6229
          %v6329 = vunpack.c.l.bf16 %v6230
          %v6330 = vunpack.c.l.bf16 %v6231
          %v6331 = vunpack.c.l.bf16 %v6232
          %v6332 = vunpack.c.l.bf16 %v6233
          %v6333 = vunpack.c.l.bf16 %v6234
          %v6334 = vunpack.c.l.bf16 %v6235
          %v6335 = vunpack.c.l.bf16 %v6236
          %v6336 = vunpack.c.l.bf16 %v6237
          %v6337 = vunpack.c.l.bf16 %v6238
          %v6338 = vunpack.c.l.bf16 %v6239
          %v6339 = vunpack.c.l.bf16 %v6240
          %v6340 = vunpack.c.l.bf16 %v6241
          %v6341 = vunpack.c.l.bf16 %v6242
          %v6342 = vunpack.c.l.bf16 %v6243
          %v6343 = vunpack.c.l.bf16 %v6244
          %v6344 = vunpack.c.l.bf16 %v6245
          %v6345 = vunpack.c.l.bf16 %v6246
          %v6346 = vunpack.c.l.bf16 %v6247
          %v6347 = vunpack.c.l.bf16 %v6248
          %v6348 = vunpack.c.l.bf16 %v6249
          %v6349 = vunpack.c.l.bf16 %v6250
          %v6350 = vunpack.c.l.bf16 %v6251
          %v6351 = vunpack.c.l.bf16 %v6252
          %v6352 = vunpack.c.l.bf16 %v6253
          %v6353 = vunpack.c.l.bf16 %v6254
          %v6354 = vunpack.c.l.bf16 %v6255
          %v6355 = vunpack.c.l.bf16 %v6256
          %v6356 = vunpack.c.l.bf16 %v6257
          %v6357 = vunpack.c.l.bf16 %v6309
          %v6358 = vunpack.c.h.bf16 %v6309
          %v6359 = vunpack.c.l.bf16 %v6310
          %v6360 = vunpack.c.h.bf16 %v6310
          %v6361 = vunpack.c.l.bf16 %v6311
          %v6362 = vunpack.c.h.bf16 %v6311
          %v6363 = vunpack.c.l.bf16 %v6312
          %v6364 = vunpack.c.h.bf16 %v6312
          %v6365 = vunpack.c.l.bf16 %v6313
          %v6366 = vunpack.c.h.bf16 %v6313
          %v6367 = vunpack.c.l.bf16 %v6314
          %v6368 = vunpack.c.h.bf16 %v6314
          %v6369 = vunpack.c.l.bf16 %v6315
          %v6370 = vunpack.c.h.bf16 %v6315
          %v6371 = vunpack.c.l.bf16 %v6316
          %v6372 = vunpack.c.h.bf16 %v6316
          %v6373 = vunpack.c.l.bf16 %v6317
          %v6374 = vunpack.c.h.bf16 %v6317
          %v6375 = vunpack.c.l.bf16 %v6318
          %v6376 = vunpack.c.h.bf16 %v6318
          %v6377 = vunpack.c.l.bf16 %v6319
          %v6378 = vunpack.c.h.bf16 %v6319
          %v6379 = vunpack.c.l.bf16 %v6320
          %v6380 = vunpack.c.h.bf16 %v6320
          %v6381 = vunpack.c.l.bf16 %v6321
          %v6382 = vunpack.c.h.bf16 %v6321
          %v6383 = vunpack.c.l.bf16 %v6322
          %v6384 = vunpack.c.h.bf16 %v6322
          %v6385 = vunpack.c.l.bf16 %v6323
          %v6386 = vunpack.c.h.bf16 %v6323
          %v6387 = vunpack.c.l.bf16 %v6324
          %v6388 = vunpack.c.h.bf16 %v6324
          %v6389 = vmax.f32 %v6325, %v6357
          %v6390 = vmax.f32 %v6326, %v6358
          %v6391 = vmax.f32 %v6327, %v6359
          %v6392 = vmax.f32 %v6328, %v6360
          %v6393 = vmax.f32 %v6329, %v6361
          %v6394 = vmax.f32 %v6330, %v6362
          %v6395 = vmax.f32 %v6331, %v6363
          %v6396 = vmax.f32 %v6332, %v6364
          %v6397 = vmax.f32 %v6333, %v6365
          %v6398 = vmax.f32 %v6334, %v6366
          %v6399 = vmax.f32 %v6335, %v6367
          %v6400 = vmax.f32 %v6336, %v6368
          %v6401 = vmax.f32 %v6337, %v6369
          %v6402 = vmax.f32 %v6338, %v6370
          %v6403 = vmax.f32 %v6339, %v6371
          %v6404 = vmax.f32 %v6340, %v6372
          %v6405 = vmax.f32 %v6341, %v6373
          %v6406 = vmax.f32 %v6342, %v6374
          %v6407 = vmax.f32 %v6343, %v6375
          %v6408 = vmax.f32 %v6344, %v6376
          %v6409 = vmax.f32 %v6345, %v6377
          %v6410 = vmax.f32 %v6346, %v6378
          %v6411 = vmax.f32 %v6347, %v6379
          %v6412 = vmax.f32 %v6348, %v6380
          %v6413 = vmax.f32 %v6349, %v6381
          %v6414 = vmax.f32 %v6350, %v6382
          %v6415 = vmax.f32 %v6351, %v6383
          %v6416 = vmax.f32 %v6352, %v6384
          %v6417 = vmax.f32 %v6353, %v6385
          %v6418 = vmax.f32 %v6354, %v6386
          %v6419 = vmax.f32 %v6355, %v6387
          %v6420 = vmax.f32 %v6356, %v6388
          %v6421 = vpack.c.bf16 %v6389, %v6389
          %v6422 = vpack.c.bf16 %v6390, %v6390
          %v6423 = vpack.c.bf16 %v6391, %v6391
          %v6424 = vpack.c.bf16 %v6392, %v6392
          %v6425 = vpack.c.bf16 %v6393, %v6393
          %v6426 = vpack.c.bf16 %v6394, %v6394
          %v6427 = vpack.c.bf16 %v6395, %v6395
          %v6428 = vpack.c.bf16 %v6396, %v6396
          %v6429 = vpack.c.bf16 %v6397, %v6397
          %v6430 = vpack.c.bf16 %v6398, %v6398
          %v6431 = vpack.c.bf16 %v6399, %v6399
          %v6432 = vpack.c.bf16 %v6400, %v6400
          %v6433 = vpack.c.bf16 %v6401, %v6401
          %v6434 = vpack.c.bf16 %v6402, %v6402
          %v6435 = vpack.c.bf16 %v6403, %v6403
          %v6436 = vpack.c.bf16 %v6404, %v6404
          %v6437 = vpack.c.bf16 %v6405, %v6405
          %v6438 = vpack.c.bf16 %v6406, %v6406
          %v6439 = vpack.c.bf16 %v6407, %v6407
          %v6440 = vpack.c.bf16 %v6408, %v6408
          %v6441 = vpack.c.bf16 %v6409, %v6409
          %v6442 = vpack.c.bf16 %v6410, %v6410
          %v6443 = vpack.c.bf16 %v6411, %v6411
          %v6444 = vpack.c.bf16 %v6412, %v6412
          %v6445 = vpack.c.bf16 %v6413, %v6413
          %v6446 = vpack.c.bf16 %v6414, %v6414
          %v6447 = vpack.c.bf16 %v6415, %v6415
          %v6448 = vpack.c.bf16 %v6416, %v6416
          %v6449 = vpack.c.bf16 %v6417, %v6417
          %v6450 = vpack.c.bf16 %v6418, %v6418
          %v6451 = vpack.c.bf16 %v6419, %v6419
          %v6452 = vpack.c.bf16 %v6420, %v6420
          %v6453 = vrot.slane %v5974, 1
          %v6454 = vor.u32 %v5971, %v6453
          %v6455 = vrot.slane %v5981, 1
          %v6456 = vsel %vm2924, %v6454, %v6455
          %v6457 = vor.u32 %v5978, %v6455
          %v6458 = vrot.slane %v5989, 1
          %v6459 = vsel %vm2924, %v6457, %v6458
          %v6460 = vor.u32 %v5986, %v6458
          %v6461 = vrot.slane %v5997, 1
          %v6462 = vsel %vm2924, %v6460, %v6461
          %v6463 = vor.u32 %v5994, %v6461
          %v6464 = vrot.slane %v6005, 1
          %v6465 = vsel %vm2924, %v6463, %v6464
          %v6466 = vor.u32 %v6002, %v6464
          %v6467 = vrot.slane %v6013, 1
          %v6468 = vsel %vm2924, %v6466, %v6467
          %v6469 = vor.u32 %v6010, %v6467
          %v6470 = vrot.slane %v6021, 1
          %v6471 = vsel %vm2924, %v6469, %v6470
          %v6472 = vor.u32 %v6018, %v6470
          %v6473 = vrot.slane %v6029, 1
          %v6474 = vsel %vm2924, %v6472, %v6473
          %v6475 = vor.u32 %v6026, %v6473
          %v6476 = vrot.slane %v6037, 1
          %v6477 = vsel %vm2924, %v6475, %v6476
          %v6478 = vor.u32 %v6034, %v6476
          %v6479 = vrot.slane %v6045, 1
          %v6480 = vsel %vm2924, %v6478, %v6479
          %v6481 = vor.u32 %v6042, %v6479
          %v6482 = vrot.slane %v6053, 1
          %v6483 = vsel %vm2924, %v6481, %v6482
          %v6484 = vor.u32 %v6050, %v6482
          %v6485 = vrot.slane %v6061, 1
          %v6486 = vsel %vm2924, %v6484, %v6485
          %v6487 = vor.u32 %v6058, %v6485
          %v6488 = vrot.slane %v6069, 1
          %v6489 = vsel %vm2924, %v6487, %v6488
          %v6490 = vor.u32 %v6066, %v6488
          %v6491 = vrot.slane %v6077, 1
          %v6492 = vsel %vm2924, %v6490, %v6491
          %v6493 = vor.u32 %v6074, %v6491
          %v6494 = vrot.slane %v6085, 1
          %v6495 = vsel %vm2924, %v6493, %v6494
          %v6496 = vor.u32 %v6082, %v6494
          %v6497 = vrot.slane %v6093, 1
          %v6498 = vsel %vm2924, %v6496, %v6497
          %v6499 = vor.u32 %v6090, %v6497
          %v6516 = vpack.c.b16 %v5923, %v5923
          %v6518 = vshll.u32 %v6516, 16
          %v6520 = vrot.slane %v6518, 1
          %v6522 = vsel %vm2995, %v6499, %v6520
          %v6523 = vsel %vm3179, %v6456, %v2070
          %v6524 = vsel %vm3186, %v6459, %v2070
          %v6525 = vsel %vm3193, %v6462, %v2070
          %v6526 = vsel %vm3200, %v6465, %v2070
          %v6527 = vsel %vm3207, %v6468, %v2070
          %v6528 = vsel %vm3214, %v6471, %v2070
          %v6529 = vsel %vm3221, %v6474, %v2070
          %v6530 = vsel %vm3228, %v6477, %v2070
          %v6531 = vsel %vm3235, %v6480, %v2070
          %v6532 = vsel %vm3242, %v6483, %v2070
          %v6533 = vsel %vm3249, %v6486, %v2070
          %v6534 = vsel %vm3256, %v6489, %v2070
          %v6535 = vsel %vm3263, %v6492, %v2070
          %v6536 = vsel %vm3270, %v6495, %v2070
          %v6537 = vsel %vm3277, %v6498, %v2070
          %v6538 = vsel %vm3284, %v6522, %v2070
          %v6539 = vunpack.c.l.bf16 %v6421
          %v6540 = vunpack.c.l.bf16 %v6422
          %v6541 = vunpack.c.l.bf16 %v6423
          %v6542 = vunpack.c.l.bf16 %v6424
          %v6543 = vunpack.c.l.bf16 %v6425
          %v6544 = vunpack.c.l.bf16 %v6426
          %v6545 = vunpack.c.l.bf16 %v6427
          %v6546 = vunpack.c.l.bf16 %v6428
          %v6547 = vunpack.c.l.bf16 %v6429
          %v6548 = vunpack.c.l.bf16 %v6430
          %v6549 = vunpack.c.l.bf16 %v6431
          %v6550 = vunpack.c.l.bf16 %v6432
          %v6551 = vunpack.c.l.bf16 %v6433
          %v6552 = vunpack.c.l.bf16 %v6434
          %v6553 = vunpack.c.l.bf16 %v6435
          %v6554 = vunpack.c.l.bf16 %v6436
          %v6555 = vunpack.c.l.bf16 %v6437
          %v6556 = vunpack.c.l.bf16 %v6438
          %v6557 = vunpack.c.l.bf16 %v6439
          %v6558 = vunpack.c.l.bf16 %v6440
          %v6559 = vunpack.c.l.bf16 %v6441
          %v6560 = vunpack.c.l.bf16 %v6442
          %v6561 = vunpack.c.l.bf16 %v6443
          %v6562 = vunpack.c.l.bf16 %v6444
          %v6563 = vunpack.c.l.bf16 %v6445
          %v6564 = vunpack.c.l.bf16 %v6446
          %v6565 = vunpack.c.l.bf16 %v6447
          %v6566 = vunpack.c.l.bf16 %v6448
          %v6567 = vunpack.c.l.bf16 %v6449
          %v6568 = vunpack.c.l.bf16 %v6450
          %v6569 = vunpack.c.l.bf16 %v6451
          %v6570 = vunpack.c.l.bf16 %v6452
          %v6571 = vunpack.c.l.bf16 %v6523
          %v6572 = vunpack.c.h.bf16 %v6523
          %v6573 = vunpack.c.l.bf16 %v6524
          %v6574 = vunpack.c.h.bf16 %v6524
          %v6575 = vunpack.c.l.bf16 %v6525
          %v6576 = vunpack.c.h.bf16 %v6525
          %v6577 = vunpack.c.l.bf16 %v6526
          %v6578 = vunpack.c.h.bf16 %v6526
          %v6579 = vunpack.c.l.bf16 %v6527
          %v6580 = vunpack.c.h.bf16 %v6527
          %v6581 = vunpack.c.l.bf16 %v6528
          %v6582 = vunpack.c.h.bf16 %v6528
          %v6583 = vunpack.c.l.bf16 %v6529
          %v6584 = vunpack.c.h.bf16 %v6529
          %v6585 = vunpack.c.l.bf16 %v6530
          %v6586 = vunpack.c.h.bf16 %v6530
          %v6587 = vunpack.c.l.bf16 %v6531
          %v6588 = vunpack.c.h.bf16 %v6531
          %v6589 = vunpack.c.l.bf16 %v6532
          %v6590 = vunpack.c.h.bf16 %v6532
          %v6591 = vunpack.c.l.bf16 %v6533
          %v6592 = vunpack.c.h.bf16 %v6533
          %v6593 = vunpack.c.l.bf16 %v6534
          %v6594 = vunpack.c.h.bf16 %v6534
          %v6595 = vunpack.c.l.bf16 %v6535
          %v6596 = vunpack.c.h.bf16 %v6535
          %v6597 = vunpack.c.l.bf16 %v6536
          %v6598 = vunpack.c.h.bf16 %v6536
          %v6599 = vunpack.c.l.bf16 %v6537
          %v6600 = vunpack.c.h.bf16 %v6537
          %v6601 = vunpack.c.l.bf16 %v6538
          %v6602 = vunpack.c.h.bf16 %v6538
          %v6603 = vmax.f32 %v6539, %v6571
          %v6604 = vmax.f32 %v6540, %v6572
          %v6605 = vmax.f32 %v6541, %v6573
          %v6606 = vmax.f32 %v6542, %v6574
          %v6607 = vmax.f32 %v6543, %v6575
          %v6608 = vmax.f32 %v6544, %v6576
          %v6609 = vmax.f32 %v6545, %v6577
          %v6610 = vmax.f32 %v6546, %v6578
          %v6611 = vmax.f32 %v6547, %v6579
          %v6612 = vmax.f32 %v6548, %v6580
          %v6613 = vmax.f32 %v6549, %v6581
          %v6614 = vmax.f32 %v6550, %v6582
          %v6615 = vmax.f32 %v6551, %v6583
          %v6616 = vmax.f32 %v6552, %v6584
          %v6617 = vmax.f32 %v6553, %v6585
          %v6618 = vmax.f32 %v6554, %v6586
          %v6619 = vmax.f32 %v6555, %v6587
          %v6620 = vmax.f32 %v6556, %v6588
          %v6621 = vmax.f32 %v6557, %v6589
          %v6622 = vmax.f32 %v6558, %v6590
          %v6623 = vmax.f32 %v6559, %v6591
          %v6624 = vmax.f32 %v6560, %v6592
          %v6625 = vmax.f32 %v6561, %v6593
          %v6626 = vmax.f32 %v6562, %v6594
          %v6627 = vmax.f32 %v6563, %v6595
          %v6628 = vmax.f32 %v6564, %v6596
          %v6629 = vmax.f32 %v6565, %v6597
          %v6630 = vmax.f32 %v6566, %v6598
          %v6631 = vmax.f32 %v6567, %v6599
          %v6632 = vmax.f32 %v6568, %v6600
          %v6633 = vmax.f32 %v6569, %v6601
          %v6634 = vmax.f32 %v6570, %v6602
          %v6635 = vpack.c.bf16 %v6603, %v6603
          %v6636 = vpack.c.bf16 %v6604, %v6604
          %v6637 = vpack.c.bf16 %v6605, %v6605
          %v6638 = vpack.c.bf16 %v6606, %v6606
          %v6639 = vpack.c.bf16 %v6607, %v6607
          %v6640 = vpack.c.bf16 %v6608, %v6608
          %v6641 = vpack.c.bf16 %v6609, %v6609
          %v6642 = vpack.c.bf16 %v6610, %v6610
          %v6643 = vpack.c.bf16 %v6611, %v6611
          %v6644 = vpack.c.bf16 %v6612, %v6612
          %v6645 = vpack.c.bf16 %v6613, %v6613
          %v6646 = vpack.c.bf16 %v6614, %v6614
          %v6647 = vpack.c.bf16 %v6615, %v6615
          %v6648 = vpack.c.bf16 %v6616, %v6616
          %v6649 = vpack.c.bf16 %v6617, %v6617
          %v6650 = vpack.c.bf16 %v6618, %v6618
          %v6651 = vpack.c.bf16 %v6619, %v6619
          %v6652 = vpack.c.bf16 %v6620, %v6620
          %v6653 = vpack.c.bf16 %v6621, %v6621
          %v6654 = vpack.c.bf16 %v6622, %v6622
          %v6655 = vpack.c.bf16 %v6623, %v6623
          %v6656 = vpack.c.bf16 %v6624, %v6624
          %v6657 = vpack.c.bf16 %v6625, %v6625
          %v6658 = vpack.c.bf16 %v6626, %v6626
          %v6659 = vpack.c.bf16 %v6627, %v6627
          %v6660 = vpack.c.bf16 %v6628, %v6628
          %v6661 = vpack.c.bf16 %v6629, %v6629
          %v6662 = vpack.c.bf16 %v6630, %v6630
          %v6663 = vpack.c.bf16 %v6631, %v6631
          %v6664 = vpack.c.bf16 %v6632, %v6632
          %v6665 = vpack.c.bf16 %v6633, %v6633
          %v6666 = vpack.c.bf16 %v6634, %v6634
          %v6667 = vrot.slane %v5954, 1
          %v6668 = vrot.slane %v5955, 1
          %v6669 = vsel %vm3429, %v6667, %v6668
          %v6670 = vrot.slane %v5956, 1
          %v6671 = vsel %vm3429, %v6668, %v6670
          %v6672 = vrot.slane %v5957, 1
          %v6673 = vsel %vm3429, %v6670, %v6672
          %v6674 = vrot.slane %v5958, 1
          %v6675 = vsel %vm3429, %v6672, %v6674
          %v6676 = vrot.slane %v5959, 1
          %v6677 = vsel %vm3429, %v6674, %v6676
          %v6678 = vrot.slane %v5960, 1
          %v6679 = vsel %vm3429, %v6676, %v6678
          %v6680 = vrot.slane %v5961, 1
          %v6681 = vsel %vm3429, %v6678, %v6680
          %v6682 = vrot.slane %v5962, 1
          %v6683 = vsel %vm3429, %v6680, %v6682
          %v6684 = vrot.slane %v5963, 1
          %v6685 = vsel %vm3429, %v6682, %v6684
          %v6686 = vrot.slane %v5964, 1
          %v6687 = vsel %vm3429, %v6684, %v6686
          %v6688 = vrot.slane %v5965, 1
          %v6689 = vsel %vm3429, %v6686, %v6688
          %v6690 = vrot.slane %v5966, 1
          %v6691 = vsel %vm3429, %v6688, %v6690
          %v6692 = vrot.slane %v5967, 1
          %v6693 = vsel %vm3429, %v6690, %v6692
          %v6694 = vrot.slane %v5968, 1
          %v6695 = vsel %vm3429, %v6692, %v6694
          %v6696 = vrot.slane %v5969, 1
          %v6697 = vsel %vm3429, %v6694, %v6696
          %v6713 = vrot.slane %v6516, 1
          %v6716 = vsel %vm3477, %v6696, %v6713
          %v6718 = vsel %vm3664, %v6669, %v2070
          %v6719 = vsel %vm3671, %v6671, %v2070
          %v6720 = vsel %vm3678, %v6673, %v2070
          %v6721 = vsel %vm3685, %v6675, %v2070
          %v6722 = vsel %vm3692, %v6677, %v2070
          %v6723 = vsel %vm3699, %v6679, %v2070
          %v6724 = vsel %vm3706, %v6681, %v2070
          %v6725 = vsel %vm3713, %v6683, %v2070
          %v6726 = vsel %vm3720, %v6685, %v2070
          %v6727 = vsel %vm3727, %v6687, %v2070
          %v6728 = vsel %vm3734, %v6689, %v2070
          %v6729 = vsel %vm3741, %v6691, %v2070
          %v6730 = vsel %vm3748, %v6693, %v2070
          %v6731 = vsel %vm3755, %v6695, %v2070
          %v6732 = vsel %vm3762, %v6697, %v2070
          %v6733 = vsel %vm3769, %v6716, %v2070
          %v6734 = vunpack.c.l.bf16 %v6635
          %v6735 = vunpack.c.l.bf16 %v6636
          %v6736 = vunpack.c.l.bf16 %v6637
          %v6737 = vunpack.c.l.bf16 %v6638
          %v6738 = vunpack.c.l.bf16 %v6639
          %v6739 = vunpack.c.l.bf16 %v6640
          %v6740 = vunpack.c.l.bf16 %v6641
          %v6741 = vunpack.c.l.bf16 %v6642
          %v6742 = vunpack.c.l.bf16 %v6643
          %v6743 = vunpack.c.l.bf16 %v6644
          %v6744 = vunpack.c.l.bf16 %v6645
          %v6745 = vunpack.c.l.bf16 %v6646
          %v6746 = vunpack.c.l.bf16 %v6647
          %v6747 = vunpack.c.l.bf16 %v6648
          %v6748 = vunpack.c.l.bf16 %v6649
          %v6749 = vunpack.c.l.bf16 %v6650
          %v6750 = vunpack.c.l.bf16 %v6651
          %v6751 = vunpack.c.l.bf16 %v6652
          %v6752 = vunpack.c.l.bf16 %v6653
          %v6753 = vunpack.c.l.bf16 %v6654
          %v6754 = vunpack.c.l.bf16 %v6655
          %v6755 = vunpack.c.l.bf16 %v6656
          %v6756 = vunpack.c.l.bf16 %v6657
          %v6757 = vunpack.c.l.bf16 %v6658
          %v6758 = vunpack.c.l.bf16 %v6659
          %v6759 = vunpack.c.l.bf16 %v6660
          %v6760 = vunpack.c.l.bf16 %v6661
          %v6761 = vunpack.c.l.bf16 %v6662
          %v6762 = vunpack.c.l.bf16 %v6663
          %v6763 = vunpack.c.l.bf16 %v6664
          %v6764 = vunpack.c.l.bf16 %v6665
          %v6765 = vunpack.c.l.bf16 %v6666
          %v6766 = vunpack.c.l.bf16 %v6718
          %v6767 = vunpack.c.h.bf16 %v6718
          %v6768 = vunpack.c.l.bf16 %v6719
          %v6769 = vunpack.c.h.bf16 %v6719
          %v6770 = vunpack.c.l.bf16 %v6720
          %v6771 = vunpack.c.h.bf16 %v6720
          %v6772 = vunpack.c.l.bf16 %v6721
          %v6773 = vunpack.c.h.bf16 %v6721
          %v6774 = vunpack.c.l.bf16 %v6722
          %v6775 = vunpack.c.h.bf16 %v6722
          %v6776 = vunpack.c.l.bf16 %v6723
          %v6777 = vunpack.c.h.bf16 %v6723
          %v6778 = vunpack.c.l.bf16 %v6724
          %v6779 = vunpack.c.h.bf16 %v6724
          %v6780 = vunpack.c.l.bf16 %v6725
          %v6781 = vunpack.c.h.bf16 %v6725
          %v6782 = vunpack.c.l.bf16 %v6726
          %v6783 = vunpack.c.h.bf16 %v6726
          %v6784 = vunpack.c.l.bf16 %v6727
          %v6785 = vunpack.c.h.bf16 %v6727
          %v6786 = vunpack.c.l.bf16 %v6728
          %v6787 = vunpack.c.h.bf16 %v6728
          %v6788 = vunpack.c.l.bf16 %v6729
          %v6789 = vunpack.c.h.bf16 %v6729
          %v6790 = vunpack.c.l.bf16 %v6730
          %v6791 = vunpack.c.h.bf16 %v6730
          %v6792 = vunpack.c.l.bf16 %v6731
          %v6793 = vunpack.c.h.bf16 %v6731
          %v6794 = vunpack.c.l.bf16 %v6732
          %v6795 = vunpack.c.h.bf16 %v6732
          %v6796 = vunpack.c.l.bf16 %v6733
          %v6797 = vunpack.c.h.bf16 %v6733
          %v6798 = vmax.f32 %v6734, %v6766
          %v6799 = vmax.f32 %v6735, %v6767
          %v6800 = vmax.f32 %v6736, %v6768
          %v6801 = vmax.f32 %v6737, %v6769
          %v6802 = vmax.f32 %v6738, %v6770
          %v6803 = vmax.f32 %v6739, %v6771
          %v6804 = vmax.f32 %v6740, %v6772
          %v6805 = vmax.f32 %v6741, %v6773
          %v6806 = vmax.f32 %v6742, %v6774
          %v6807 = vmax.f32 %v6743, %v6775
          %v6808 = vmax.f32 %v6744, %v6776
          %v6809 = vmax.f32 %v6745, %v6777
          %v6810 = vmax.f32 %v6746, %v6778
          %v6811 = vmax.f32 %v6747, %v6779
          %v6812 = vmax.f32 %v6748, %v6780
          %v6813 = vmax.f32 %v6749, %v6781
          %v6814 = vmax.f32 %v6750, %v6782
          %v6815 = vmax.f32 %v6751, %v6783
          %v6816 = vmax.f32 %v6752, %v6784
          %v6817 = vmax.f32 %v6753, %v6785
          %v6818 = vmax.f32 %v6754, %v6786
          %v6819 = vmax.f32 %v6755, %v6787
          %v6820 = vmax.f32 %v6756, %v6788
          %v6821 = vmax.f32 %v6757, %v6789
          %v6822 = vmax.f32 %v6758, %v6790
          %v6823 = vmax.f32 %v6759, %v6791
          %v6824 = vmax.f32 %v6760, %v6792
          %v6825 = vmax.f32 %v6761, %v6793
          %v6826 = vmax.f32 %v6762, %v6794
          %v6827 = vmax.f32 %v6763, %v6795
          %v6828 = vmax.f32 %v6764, %v6796
          %v6829 = vmax.f32 %v6765, %v6797
          %v6830 = vpack.c.bf16 %v6798, %v6798
          %v6831 = vpack.c.bf16 %v6799, %v6799
          %v6832 = vpack.c.bf16 %v6800, %v6800
          %v6833 = vpack.c.bf16 %v6801, %v6801
          %v6834 = vpack.c.bf16 %v6802, %v6802
          %v6835 = vpack.c.bf16 %v6803, %v6803
          %v6836 = vpack.c.bf16 %v6804, %v6804
          %v6837 = vpack.c.bf16 %v6805, %v6805
          %v6838 = vpack.c.bf16 %v6806, %v6806
          %v6839 = vpack.c.bf16 %v6807, %v6807
          %v6840 = vpack.c.bf16 %v6808, %v6808
          %v6841 = vpack.c.bf16 %v6809, %v6809
          %v6842 = vpack.c.bf16 %v6810, %v6810
          %v6843 = vpack.c.bf16 %v6811, %v6811
          %v6844 = vpack.c.bf16 %v6812, %v6812
          %v6845 = vpack.c.bf16 %v6813, %v6813
          %v6846 = vpack.c.bf16 %v6814, %v6814
          %v6847 = vpack.c.bf16 %v6815, %v6815
          %v6848 = vpack.c.bf16 %v6816, %v6816
          %v6849 = vpack.c.bf16 %v6817, %v6817
          %v6850 = vpack.c.bf16 %v6818, %v6818
          %v6851 = vpack.c.bf16 %v6819, %v6819
          %v6852 = vpack.c.bf16 %v6820, %v6820
          %v6853 = vpack.c.bf16 %v6821, %v6821
          %v6854 = vpack.c.bf16 %v6822, %v6822
          %v6855 = vpack.c.bf16 %v6823, %v6823
          %v6856 = vpack.c.bf16 %v6824, %v6824
          %v6857 = vpack.c.bf16 %v6825, %v6825
          %v6858 = vpack.c.bf16 %v6826, %v6826
          %v6859 = vpack.c.bf16 %v6827, %v6827
          %v6860 = vpack.c.bf16 %v6828, %v6828
          %v6861 = vpack.c.bf16 %v6829, %v6829
          %6862 = vst.msk [vmem:[#allocation3 + $0x10] sm:$0xf] %vm1752, %v6830
          %6863 = vst.msk [vmem:[#allocation3 + $0x14] sm:$0xf] %vm1752, %v6831
          %6864 = vst.msk [vmem:[#allocation3 + $0x18] sm:$0xf] %vm1752, %v6832
          %6865 = vst.msk [vmem:[#allocation3 + $0x1c] sm:$0xf] %vm1752, %v6833
          %6866 = vst.msk [vmem:[#allocation3 + $0x20] sm:$0xf] %vm1752, %v6834
          %6867 = vst.msk [vmem:[#allocation3 + $0x24] sm:$0xf] %vm1752, %v6835
          %6868 = vst.msk [vmem:[#allocation3 + $0x28] sm:$0xf] %vm1752, %v6836
          %6869 = vst.msk [vmem:[#allocation3 + $0x2c] sm:$0xf] %vm1752, %v6837
          %6870 = vst.msk [vmem:[#allocation3 + $0x30] sm:$0xf] %vm1752, %v6838
          %6871 = vst.msk [vmem:[#allocation3 + $0x34] sm:$0xf] %vm1752, %v6839
          %6872 = vst.msk [vmem:[#allocation3 + $0x38] sm:$0xf] %vm1752, %v6840
          %6873 = vst.msk [vmem:[#allocation3 + $0x3c] sm:$0xf] %vm1752, %v6841
          %6874 = vst.msk [vmem:[#allocation3 + $0x40] sm:$0xf] %vm1752, %v6842
          %6875 = vst.msk [vmem:[#allocation3 + $0x44] sm:$0xf] %vm1752, %v6843
          %6876 = vst.msk [vmem:[#allocation3 + $0x48] sm:$0xf] %vm1752, %v6844
          %6877 = vst.msk [vmem:[#allocation3 + $0x4c] sm:$0xf] %vm1752, %v6845
          %6878 = vst.msk [vmem:[#allocation3 + $0x50] sm:$0xf] %vm1752, %v6846
          %6879 = vst.msk [vmem:[#allocation3 + $0x54] sm:$0xf] %vm1752, %v6847
          %6880 = vst.msk [vmem:[#allocation3 + $0x58] sm:$0xf] %vm1752, %v6848
          %6881 = vst.msk [vmem:[#allocation3 + $0x5c] sm:$0xf] %vm1752, %v6849
          %6882 = vst.msk [vmem:[#allocation3 + $0x60] sm:$0xf] %vm1752, %v6850
          %6883 = vst.msk [vmem:[#allocation3 + $0x64] sm:$0xf] %vm1752, %v6851
          %6884 = vst.msk [vmem:[#allocation3 + $0x68] sm:$0xf] %vm1752, %v6852
          %6885 = vst.msk [vmem:[#allocation3 + $0x6c] sm:$0xf] %vm1752, %v6853
          %6886 = vst.msk [vmem:[#allocation3 + $0x70] sm:$0xf] %vm1752, %v6854
          %6887 = vst.msk [vmem:[#allocation3 + $0x74] sm:$0xf] %vm1752, %v6855
          %6888 = vst.msk [vmem:[#allocation3 + $0x78] sm:$0xf] %vm1752, %v6856
          %6889 = vst.msk [vmem:[#allocation3 + $0x7c] sm:$0xf] %vm1752, %v6857
          %6890 = vst.msk [vmem:[#allocation3 + $0x80] sm:$0xf] %vm1752, %v6858
          %6891 = vst.msk [vmem:[#allocation3 + $0x84] sm:$0xf] %vm1752, %v6859
          %6892 = vst.msk [vmem:[#allocation3 + $0x88] sm:$0xf] %vm1752, %v6860
          %6893 = vst.msk [vmem:[#allocation3 + $0x8c] sm:$0xf] %vm1752, %v6861
          %v6894 = vld [vmem:[#allocation3 + $0x8] sm:$0xf]
          %v6895 = vld [vmem:[#allocation3 + $0xc] sm:$0xf]
          %v6896 = vld [vmem:[#allocation3 + $0x10] sm:$0xf]
          %v6897 = vld [vmem:[#allocation3 + $0x14] sm:$0xf]
          %v6898 = vld [vmem:[#allocation3 + $0x18] sm:$0xf]
          %v6899 = vld [vmem:[#allocation3 + $0x1c] sm:$0xf]
          %v6900 = vld [vmem:[#allocation3 + $0x20] sm:$0xf]
          %v6901 = vld [vmem:[#allocation3 + $0x24] sm:$0xf]
          %v6902 = vld [vmem:[#allocation3 + $0x28] sm:$0xf]
          %v6903 = vld [vmem:[#allocation3 + $0x2c] sm:$0xf]
          %v6904 = vld [vmem:[#allocation3 + $0x30] sm:$0xf]
          %v6905 = vld [vmem:[#allocation3 + $0x34] sm:$0xf]
          %v6906 = vld [vmem:[#allocation3 + $0x38] sm:$0xf]
          %v6907 = vld [vmem:[#allocation3 + $0x3c] sm:$0xf]
          %v6908 = vld [vmem:[#allocation3 + $0x40] sm:$0xf]
          %v6909 = vld [vmem:[#allocation3 + $0x44] sm:$0xf]
          %v6910 = vld [vmem:[#allocation3 + $0x48] sm:$0xf]
          %v6911 = vld [vmem:[#allocation3 + $0x4c] sm:$0xf]
          %v6912 = vld [vmem:[#allocation3 + $0x50] sm:$0xf]
          %v6913 = vld [vmem:[#allocation3 + $0x54] sm:$0xf]
          %v6914 = vld [vmem:[#allocation3 + $0x58] sm:$0xf]
          %v6915 = vld [vmem:[#allocation3 + $0x5c] sm:$0xf]
          %v6916 = vld [vmem:[#allocation3 + $0x60] sm:$0xf]
          %v6917 = vld [vmem:[#allocation3 + $0x64] sm:$0xf]
          %v6918 = vld [vmem:[#allocation3 + $0x68] sm:$0xf]
          %v6919 = vld [vmem:[#allocation3 + $0x6c] sm:$0xf]
          %v6920 = vld [vmem:[#allocation3 + $0x70] sm:$0xf]
          %v6921 = vld [vmem:[#allocation3 + $0x74] sm:$0xf]
          %v6922 = vld [vmem:[#allocation3 + $0x78] sm:$0xf]
          %v6923 = vld [vmem:[#allocation3 + $0x7c] sm:$0xf]
          %v6924 = vld [vmem:[#allocation3 + $0x80] sm:$0xf]
          %v6925 = vld [vmem:[#allocation3 + $0x84] sm:$0xf]
          %v6926 = vunpack.c.l.bf16 %v6830
          %v6927 = vunpack.c.l.bf16 %v6831
          %v6928 = vunpack.c.l.bf16 %v6832
          %v6929 = vunpack.c.l.bf16 %v6833
          %v6930 = vunpack.c.l.bf16 %v6834
          %v6931 = vunpack.c.l.bf16 %v6835
          %v6932 = vunpack.c.l.bf16 %v6836
          %v6933 = vunpack.c.l.bf16 %v6837
          %v6934 = vunpack.c.l.bf16 %v6838
          %v6935 = vunpack.c.l.bf16 %v6839
          %v6936 = vunpack.c.l.bf16 %v6840
          %v6937 = vunpack.c.l.bf16 %v6841
          %v6938 = vunpack.c.l.bf16 %v6842
          %v6939 = vunpack.c.l.bf16 %v6843
          %v6940 = vunpack.c.l.bf16 %v6844
          %v6941 = vunpack.c.l.bf16 %v6845
          %v6942 = vunpack.c.l.bf16 %v6846
          %v6943 = vunpack.c.l.bf16 %v6847
          %v6944 = vunpack.c.l.bf16 %v6848
          %v6945 = vunpack.c.l.bf16 %v6849
          %v6946 = vunpack.c.l.bf16 %v6850
          %v6947 = vunpack.c.l.bf16 %v6851
          %v6948 = vunpack.c.l.bf16 %v6852
          %v6949 = vunpack.c.l.bf16 %v6853
          %v6950 = vunpack.c.l.bf16 %v6854
          %v6951 = vunpack.c.l.bf16 %v6855
          %v6952 = vunpack.c.l.bf16 %v6856
          %v6953 = vunpack.c.l.bf16 %v6857
          %v6954 = vunpack.c.l.bf16 %v6858
          %v6955 = vunpack.c.l.bf16 %v6859
          %v6956 = vunpack.c.l.bf16 %v6860
          %v6957 = vunpack.c.l.bf16 %v6861
          %v6958 = vunpack.c.l.bf16 %v6894
          %v6959 = vunpack.c.l.bf16 %v6895
          %v6960 = vunpack.c.l.bf16 %v6896
          %v6961 = vunpack.c.l.bf16 %v6897
          %v6962 = vunpack.c.l.bf16 %v6898
          %v6963 = vunpack.c.l.bf16 %v6899
          %v6964 = vunpack.c.l.bf16 %v6900
          %v6965 = vunpack.c.l.bf16 %v6901
          %v6966 = vunpack.c.l.bf16 %v6902
          %v6967 = vunpack.c.l.bf16 %v6903
          %v6968 = vunpack.c.l.bf16 %v6904
          %v6969 = vunpack.c.l.bf16 %v6905
          %v6970 = vunpack.c.l.bf16 %v6906
          %v6971 = vunpack.c.l.bf16 %v6907
          %v6972 = vunpack.c.l.bf16 %v6908
          %v6973 = vunpack.c.l.bf16 %v6909
          %v6974 = vunpack.c.l.bf16 %v6910
          %v6975 = vunpack.c.l.bf16 %v6911
          %v6976 = vunpack.c.l.bf16 %v6912
          %v6977 = vunpack.c.l.bf16 %v6913
          %v6978 = vunpack.c.l.bf16 %v6914
          %v6979 = vunpack.c.l.bf16 %v6915
          %v6980 = vunpack.c.l.bf16 %v6916
          %v6981 = vunpack.c.l.bf16 %v6917
          %v6982 = vunpack.c.l.bf16 %v6918
          %v6983 = vunpack.c.l.bf16 %v6919
          %v6984 = vunpack.c.l.bf16 %v6920
          %v6985 = vunpack.c.l.bf16 %v6921
          %v6986 = vunpack.c.l.bf16 %v6922
          %v6987 = vunpack.c.l.bf16 %v6923
          %v6988 = vunpack.c.l.bf16 %v6924
          %v6989 = vunpack.c.l.bf16 %v6925
          %v6990 = vmax.f32 %v6926, %v6958
          %v6991 = vmax.f32 %v6927, %v6959
          %v6992 = vmax.f32 %v6928, %v6960
          %v6993 = vmax.f32 %v6929, %v6961
          %v6994 = vmax.f32 %v6930, %v6962
          %v6995 = vmax.f32 %v6931, %v6963
          %v6996 = vmax.f32 %v6932, %v6964
          %v6997 = vmax.f32 %v6933, %v6965
          %v6998 = vmax.f32 %v6934, %v6966
          %v6999 = vmax.f32 %v6935, %v6967
          %v7000 = vmax.f32 %v6936, %v6968
          %v7001 = vmax.f32 %v6937, %v6969
          %v7002 = vmax.f32 %v6938, %v6970
          %v7003 = vmax.f32 %v6939, %v6971
          %v7004 = vmax.f32 %v6940, %v6972
          %v7005 = vmax.f32 %v6941, %v6973
          %v7006 = vmax.f32 %v6942, %v6974
          %v7007 = vmax.f32 %v6943, %v6975
          %v7008 = vmax.f32 %v6944, %v6976
          %v7009 = vmax.f32 %v6945, %v6977
          %v7010 = vmax.f32 %v6946, %v6978
          %v7011 = vmax.f32 %v6947, %v6979
          %v7012 = vmax.f32 %v6948, %v6980
          %v7013 = vmax.f32 %v6949, %v6981
          %v7014 = vmax.f32 %v6950, %v6982
          %v7015 = vmax.f32 %v6951, %v6983
          %v7016 = vmax.f32 %v6952, %v6984
          %v7017 = vmax.f32 %v6953, %v6985
          %v7018 = vmax.f32 %v6954, %v6986
          %v7019 = vmax.f32 %v6955, %v6987
          %v7020 = vmax.f32 %v6956, %v6988
          %v7021 = vmax.f32 %v6957, %v6989
          %v7022 = vpack.c.bf16 %v6990, %v6990
          %v7023 = vpack.c.bf16 %v6991, %v6991
          %v7024 = vpack.c.bf16 %v6992, %v6992
          %v7025 = vpack.c.bf16 %v6993, %v6993
          %v7026 = vpack.c.bf16 %v6994, %v6994
          %v7027 = vpack.c.bf16 %v6995, %v6995
          %v7028 = vpack.c.bf16 %v6996, %v6996
          %v7029 = vpack.c.bf16 %v6997, %v6997
          %v7030 = vpack.c.bf16 %v6998, %v6998
          %v7031 = vpack.c.bf16 %v6999, %v6999
          %v7032 = vpack.c.bf16 %v7000, %v7000
          %v7033 = vpack.c.bf16 %v7001, %v7001
          %v7034 = vpack.c.bf16 %v7002, %v7002
          %v7035 = vpack.c.bf16 %v7003, %v7003
          %v7036 = vpack.c.bf16 %v7004, %v7004
          %v7037 = vpack.c.bf16 %v7005, %v7005
          %v7038 = vpack.c.bf16 %v7006, %v7006
          %v7039 = vpack.c.bf16 %v7007, %v7007
          %v7040 = vpack.c.bf16 %v7008, %v7008
          %v7041 = vpack.c.bf16 %v7009, %v7009
          %v7042 = vpack.c.bf16 %v7010, %v7010
          %v7043 = vpack.c.bf16 %v7011, %v7011
          %v7044 = vpack.c.bf16 %v7012, %v7012
          %v7045 = vpack.c.bf16 %v7013, %v7013
          %v7046 = vpack.c.bf16 %v7014, %v7014
          %v7047 = vpack.c.bf16 %v7015, %v7015
          %v7048 = vpack.c.bf16 %v7016, %v7016
          %v7049 = vpack.c.bf16 %v7017, %v7017
          %v7050 = vpack.c.bf16 %v7018, %v7018
          %v7051 = vpack.c.bf16 %v7019, %v7019
          %v7052 = vpack.c.bf16 %v7020, %v7020
          %v7053 = vpack.c.bf16 %v7021, %v7021
          %v7054 = vld [vmem:[#allocation3] sm:$0xf]
          %v7055 = vld [vmem:[#allocation3 + $0x4] sm:$0xf]
          %v7056 = vunpack.c.l.bf16 %v7022
          %v7057 = vunpack.c.l.bf16 %v7023
          %v7058 = vunpack.c.l.bf16 %v7024
          %v7059 = vunpack.c.l.bf16 %v7025
          %v7060 = vunpack.c.l.bf16 %v7026
          %v7061 = vunpack.c.l.bf16 %v7027
          %v7062 = vunpack.c.l.bf16 %v7028
          %v7063 = vunpack.c.l.bf16 %v7029
          %v7064 = vunpack.c.l.bf16 %v7030
          %v7065 = vunpack.c.l.bf16 %v7031
          %v7066 = vunpack.c.l.bf16 %v7032
          %v7067 = vunpack.c.l.bf16 %v7033
          %v7068 = vunpack.c.l.bf16 %v7034
          %v7069 = vunpack.c.l.bf16 %v7035
          %v7070 = vunpack.c.l.bf16 %v7036
          %v7071 = vunpack.c.l.bf16 %v7037
          %v7072 = vunpack.c.l.bf16 %v7038
          %v7073 = vunpack.c.l.bf16 %v7039
          %v7074 = vunpack.c.l.bf16 %v7040
          %v7075 = vunpack.c.l.bf16 %v7041
          %v7076 = vunpack.c.l.bf16 %v7042
          %v7077 = vunpack.c.l.bf16 %v7043
          %v7078 = vunpack.c.l.bf16 %v7044
          %v7079 = vunpack.c.l.bf16 %v7045
          %v7080 = vunpack.c.l.bf16 %v7046
          %v7081 = vunpack.c.l.bf16 %v7047
          %v7082 = vunpack.c.l.bf16 %v7048
          %v7083 = vunpack.c.l.bf16 %v7049
          %v7084 = vunpack.c.l.bf16 %v7050
          %v7085 = vunpack.c.l.bf16 %v7051
          %v7086 = vunpack.c.l.bf16 %v7052
          %v7087 = vunpack.c.l.bf16 %v7053
          %v7088 = vunpack.c.l.bf16 %v7054
          %v7089 = vunpack.c.l.bf16 %v7055
          %v7090 = vmax.f32 %v7056, %v7088
          %v7091 = vmax.f32 %v7057, %v7089
          %v7092 = vmax.f32 %v7058, %v6958
          %v7093 = vmax.f32 %v7059, %v6959
          %v7094 = vmax.f32 %v7060, %v6960
          %v7095 = vmax.f32 %v7061, %v6961
          %v7096 = vmax.f32 %v7062, %v6962
          %v7097 = vmax.f32 %v7063, %v6963
          %v7098 = vmax.f32 %v7064, %v6964
          %v7099 = vmax.f32 %v7065, %v6965
          %v7100 = vmax.f32 %v7066, %v6966
          %v7101 = vmax.f32 %v7067, %v6967
          %v7102 = vmax.f32 %v7068, %v6968
          %v7103 = vmax.f32 %v7069, %v6969
          %v7104 = vmax.f32 %v7070, %v6970
          %v7105 = vmax.f32 %v7071, %v6971
          %v7106 = vmax.f32 %v7072, %v6972
          %v7107 = vmax.f32 %v7073, %v6973
          %v7108 = vmax.f32 %v7074, %v6974
          %v7109 = vmax.f32 %v7075, %v6975
          %v7110 = vmax.f32 %v7076, %v6976
          %v7111 = vmax.f32 %v7077, %v6977
          %v7112 = vmax.f32 %v7078, %v6978
          %v7113 = vmax.f32 %v7079, %v6979
          %v7114 = vmax.f32 %v7080, %v6980
          %v7115 = vmax.f32 %v7081, %v6981
          %v7116 = vmax.f32 %v7082, %v6982
          %v7117 = vmax.f32 %v7083, %v6983
          %v7118 = vmax.f32 %v7084, %v6984
          %v7119 = vmax.f32 %v7085, %v6985
          %v7120 = vmax.f32 %v7086, %v6986
          %v7121 = vmax.f32 %v7087, %v6987
          %v7122 = vpack.c.bf16 %v7090, %v7090
          %v7123 = vpack.c.bf16 %v7091, %v7091
          %v7124 = vpack.c.bf16 %v7092, %v7092
          %v7125 = vpack.c.bf16 %v7093, %v7093
          %v7126 = vpack.c.bf16 %v7094, %v7094
          %v7127 = vpack.c.bf16 %v7095, %v7095
          %v7128 = vpack.c.bf16 %v7096, %v7096
          %v7129 = vpack.c.bf16 %v7097, %v7097
          %v7130 = vpack.c.bf16 %v7098, %v7098
          %v7131 = vpack.c.bf16 %v7099, %v7099
          %v7132 = vpack.c.bf16 %v7100, %v7100
          %v7133 = vpack.c.bf16 %v7101, %v7101
          %v7134 = vpack.c.bf16 %v7102, %v7102
          %v7135 = vpack.c.bf16 %v7103, %v7103
          %v7136 = vpack.c.bf16 %v7104, %v7104
          %v7137 = vpack.c.bf16 %v7105, %v7105
          %v7138 = vpack.c.bf16 %v7106, %v7106
          %v7139 = vpack.c.bf16 %v7107, %v7107
          %v7140 = vpack.c.bf16 %v7108, %v7108
          %v7141 = vpack.c.bf16 %v7109, %v7109
          %v7142 = vpack.c.bf16 %v7110, %v7110
          %v7143 = vpack.c.bf16 %v7111, %v7111
          %v7144 = vpack.c.bf16 %v7112, %v7112
          %v7145 = vpack.c.bf16 %v7113, %v7113
          %v7146 = vpack.c.bf16 %v7114, %v7114
          %v7147 = vpack.c.bf16 %v7115, %v7115
          %v7148 = vpack.c.bf16 %v7116, %v7116
          %v7149 = vpack.c.bf16 %v7117, %v7117
          %v7150 = vpack.c.bf16 %v7118, %v7118
          %v7151 = vpack.c.bf16 %v7119, %v7119
          %v7152 = vpack.c.bf16 %v7120, %v7120
          %v7153 = vpack.c.bf16 %v7121, %v7121
          %v7154 = vld [vmem:[#allocation3 + $0x88] sm:$0xf]
          %v7155 = vld [vmem:[#allocation3 + $0x8c] sm:$0xf]
          %v7156 = vld [vmem:[#allocation3 + $0x90] sm:$0xf]
          %v7157 = vld [vmem:[#allocation3 + $0x94] sm:$0xf]
          %v7158 = vunpack.c.l.bf16 %v7122
          %v7159 = vunpack.c.l.bf16 %v7123
          %v7160 = vunpack.c.l.bf16 %v7124
          %v7161 = vunpack.c.l.bf16 %v7125
          %v7162 = vunpack.c.l.bf16 %v7126
          %v7163 = vunpack.c.l.bf16 %v7127
          %v7164 = vunpack.c.l.bf16 %v7128
          %v7165 = vunpack.c.l.bf16 %v7129
          %v7166 = vunpack.c.l.bf16 %v7130
          %v7167 = vunpack.c.l.bf16 %v7131
          %v7168 = vunpack.c.l.bf16 %v7132
          %v7169 = vunpack.c.l.bf16 %v7133
          %v7170 = vunpack.c.l.bf16 %v7134
          %v7171 = vunpack.c.l.bf16 %v7135
          %v7172 = vunpack.c.l.bf16 %v7136
          %v7173 = vunpack.c.l.bf16 %v7137
          %v7174 = vunpack.c.l.bf16 %v7138
          %v7175 = vunpack.c.l.bf16 %v7139
          %v7176 = vunpack.c.l.bf16 %v7140
          %v7177 = vunpack.c.l.bf16 %v7141
          %v7178 = vunpack.c.l.bf16 %v7142
          %v7179 = vunpack.c.l.bf16 %v7143
          %v7180 = vunpack.c.l.bf16 %v7144
          %v7181 = vunpack.c.l.bf16 %v7145
          %v7182 = vunpack.c.l.bf16 %v7146
          %v7183 = vunpack.c.l.bf16 %v7147
          %v7184 = vunpack.c.l.bf16 %v7148
          %v7185 = vunpack.c.l.bf16 %v7149
          %v7186 = vunpack.c.l.bf16 %v7150
          %v7187 = vunpack.c.l.bf16 %v7151
          %v7188 = vunpack.c.l.bf16 %v7152
          %v7189 = vunpack.c.l.bf16 %v7153
          %v7190 = vunpack.c.l.bf16 %v7154
          %v7191 = vunpack.c.l.bf16 %v7155
          %v7192 = vunpack.c.l.bf16 %v7156
          %v7193 = vunpack.c.l.bf16 %v7157
          %v7194 = vmax.f32 %v7158, %v6962
          %v7195 = vmax.f32 %v7159, %v6963
          %v7196 = vmax.f32 %v7160, %v6964
          %v7197 = vmax.f32 %v7161, %v6965
          %v7198 = vmax.f32 %v7162, %v6966
          %v7199 = vmax.f32 %v7163, %v6967
          %v7200 = vmax.f32 %v7164, %v6968
          %v7201 = vmax.f32 %v7165, %v6969
          %v7202 = vmax.f32 %v7166, %v6970
          %v7203 = vmax.f32 %v7167, %v6971
          %v7204 = vmax.f32 %v7168, %v6972
          %v7205 = vmax.f32 %v7169, %v6973
          %v7206 = vmax.f32 %v7170, %v6974
          %v7207 = vmax.f32 %v7171, %v6975
          %v7208 = vmax.f32 %v7172, %v6976
          %v7209 = vmax.f32 %v7173, %v6977
          %v7210 = vmax.f32 %v7174, %v6978
          %v7211 = vmax.f32 %v7175, %v6979
          %v7212 = vmax.f32 %v7176, %v6980
          %v7213 = vmax.f32 %v7177, %v6981
          %v7214 = vmax.f32 %v7178, %v6982
          %v7215 = vmax.f32 %v7179, %v6983
          %v7216 = vmax.f32 %v7180, %v6984
          %v7217 = vmax.f32 %v7181, %v6985
          %v7218 = vmax.f32 %v7182, %v6986
          %v7219 = vmax.f32 %v7183, %v6987
          %v7220 = vmax.f32 %v7184, %v6988
          %v7221 = vmax.f32 %v7185, %v6989
          %v7222 = vmax.f32 %v7186, %v7190
          %v7223 = vmax.f32 %v7187, %v7191
          %v7224 = vmax.f32 %v7188, %v7192
          %v7225 = vmax.f32 %v7189, %v7193
          %v7226 = vpack.c.bf16 %v7194, %v7194
          %v7227 = vpack.c.bf16 %v7195, %v7195
          %v7228 = vpack.c.bf16 %v7196, %v7196
          %v7229 = vpack.c.bf16 %v7197, %v7197
          %v7230 = vpack.c.bf16 %v7198, %v7198
          %v7231 = vpack.c.bf16 %v7199, %v7199
          %v7232 = vpack.c.bf16 %v7200, %v7200
          %v7233 = vpack.c.bf16 %v7201, %v7201
          %v7234 = vpack.c.bf16 %v7202, %v7202
          %v7235 = vpack.c.bf16 %v7203, %v7203
          %v7236 = vpack.c.bf16 %v7204, %v7204
          %v7237 = vpack.c.bf16 %v7205, %v7205
          %v7238 = vpack.c.bf16 %v7206, %v7206
          %v7239 = vpack.c.bf16 %v7207, %v7207
          %v7240 = vpack.c.bf16 %v7208, %v7208
          %v7241 = vpack.c.bf16 %v7209, %v7209
          %v7242 = vpack.c.bf16 %v7210, %v7210
          %v7243 = vpack.c.bf16 %v7211, %v7211
          %v7244 = vpack.c.bf16 %v7212, %v7212
          %v7245 = vpack.c.bf16 %v7213, %v7213
          %v7246 = vpack.c.bf16 %v7214, %v7214
          %v7247 = vpack.c.bf16 %v7215, %v7215
          %v7248 = vpack.c.bf16 %v7216, %v7216
          %v7249 = vpack.c.bf16 %v7217, %v7217
          %v7250 = vpack.c.bf16 %v7218, %v7218
          %v7251 = vpack.c.bf16 %v7219, %v7219
          %v7252 = vpack.c.bf16 %v7220, %v7220
          %v7253 = vpack.c.bf16 %v7221, %v7221
          %v7254 = vpack.c.bf16 %v7222, %v7222
          %v7255 = vpack.c.bf16 %v7223, %v7223
          %v7256 = vpack.c.bf16 %v7224, %v7224
          %v7257 = vpack.c.bf16 %v7225, %v7225
          %v7258 = vld [vmem:[#allocation3 + $0x98] sm:$0xf]
          %v7259 = vld [vmem:[#allocation3 + $0x9c] sm:$0xf]
          %v7260 = vunpack.c.l.bf16 %v7226
          %v7261 = vunpack.c.l.bf16 %v7227
          %v7262 = vunpack.c.l.bf16 %v7228
          %v7263 = vunpack.c.l.bf16 %v7229
          %v7264 = vunpack.c.l.bf16 %v7230
          %v7265 = vunpack.c.l.bf16 %v7231
          %v7266 = vunpack.c.l.bf16 %v7232
          %v7267 = vunpack.c.l.bf16 %v7233
          %v7268 = vunpack.c.l.bf16 %v7234
          %v7269 = vunpack.c.l.bf16 %v7235
          %v7270 = vunpack.c.l.bf16 %v7236
          %v7271 = vunpack.c.l.bf16 %v7237
          %v7272 = vunpack.c.l.bf16 %v7238
          %v7273 = vunpack.c.l.bf16 %v7239
          %v7274 = vunpack.c.l.bf16 %v7240
          %v7275 = vunpack.c.l.bf16 %v7241
          %v7276 = vunpack.c.l.bf16 %v7242
          %v7277 = vunpack.c.l.bf16 %v7243
          %v7278 = vunpack.c.l.bf16 %v7244
          %v7279 = vunpack.c.l.bf16 %v7245
          %v7280 = vunpack.c.l.bf16 %v7246
          %v7281 = vunpack.c.l.bf16 %v7247
          %v7282 = vunpack.c.l.bf16 %v7248
          %v7283 = vunpack.c.l.bf16 %v7249
          %v7284 = vunpack.c.l.bf16 %v7250
          %v7285 = vunpack.c.l.bf16 %v7251
          %v7286 = vunpack.c.l.bf16 %v7252
          %v7287 = vunpack.c.l.bf16 %v7253
          %v7288 = vunpack.c.l.bf16 %v7254
          %v7289 = vunpack.c.l.bf16 %v7255
          %v7290 = vunpack.c.l.bf16 %v7256
          %v7291 = vunpack.c.l.bf16 %v7257
          %v7292 = vunpack.c.l.bf16 %v7258
          %v7293 = vunpack.c.l.bf16 %v7259
          %v7294 = vmax.f32 %v7260, %v6964
          %v7295 = vmax.f32 %v7261, %v6965
          %v7296 = vmax.f32 %v7262, %v6966
          %v7297 = vmax.f32 %v7263, %v6967
          %v7298 = vmax.f32 %v7264, %v6968
          %v7299 = vmax.f32 %v7265, %v6969
          %v7300 = vmax.f32 %v7266, %v6970
          %v7301 = vmax.f32 %v7267, %v6971
          %v7302 = vmax.f32 %v7268, %v6972
          %v7303 = vmax.f32 %v7269, %v6973
          %v7304 = vmax.f32 %v7270, %v6974
          %v7305 = vmax.f32 %v7271, %v6975
          %v7306 = vmax.f32 %v7272, %v6976
          %v7307 = vmax.f32 %v7273, %v6977
          %v7308 = vmax.f32 %v7274, %v6978
          %v7309 = vmax.f32 %v7275, %v6979
          %v7310 = vmax.f32 %v7276, %v6980
          %v7311 = vmax.f32 %v7277, %v6981
          %v7312 = vmax.f32 %v7278, %v6982
          %v7313 = vmax.f32 %v7279, %v6983
          %v7314 = vmax.f32 %v7280, %v6984
          %v7315 = vmax.f32 %v7281, %v6985
          %v7316 = vmax.f32 %v7282, %v6986
          %v7317 = vmax.f32 %v7283, %v6987
          %v7318 = vmax.f32 %v7284, %v6988
          %v7319 = vmax.f32 %v7285, %v6989
          %v7320 = vmax.f32 %v7286, %v7190
          %v7321 = vmax.f32 %v7287, %v7191
          %v7322 = vmax.f32 %v7288, %v7192
          %v7323 = vmax.f32 %v7289, %v7193
          %v7324 = vmax.f32 %v7290, %v7292
          %v7325 = vmax.f32 %v7291, %v7293
          %v7326 = vpack.c.bf16 %v7294, %v7294
          %v7327 = vpack.c.bf16 %v7295, %v7295
          %v7328 = vpack.c.bf16 %v7296, %v7296
          %v7329 = vpack.c.bf16 %v7297, %v7297
          %v7330 = vpack.c.bf16 %v7298, %v7298
          %v7331 = vpack.c.bf16 %v7299, %v7299
          %v7332 = vpack.c.bf16 %v7300, %v7300
          %v7333 = vpack.c.bf16 %v7301, %v7301
          %v7334 = vpack.c.bf16 %v7302, %v7302
          %v7335 = vpack.c.bf16 %v7303, %v7303
          %v7336 = vpack.c.bf16 %v7304, %v7304
          %v7337 = vpack.c.bf16 %v7305, %v7305
          %v7338 = vpack.c.bf16 %v7306, %v7306
          %v7339 = vpack.c.bf16 %v7307, %v7307
          %v7340 = vpack.c.bf16 %v7308, %v7308
          %v7341 = vpack.c.bf16 %v7309, %v7309
          %v7342 = vpack.c.bf16 %v7310, %v7310
          %v7343 = vpack.c.bf16 %v7311, %v7311
          %v7344 = vpack.c.bf16 %v7312, %v7312
          %v7345 = vpack.c.bf16 %v7313, %v7313
          %v7346 = vpack.c.bf16 %v7314, %v7314
          %v7347 = vpack.c.bf16 %v7315, %v7315
          %v7348 = vpack.c.bf16 %v7316, %v7316
          %v7349 = vpack.c.bf16 %v7317, %v7317
          %v7350 = vpack.c.bf16 %v7318, %v7318
          %v7351 = vpack.c.bf16 %v7319, %v7319
          %v7352 = vpack.c.bf16 %v7320, %v7320
          %v7353 = vpack.c.bf16 %v7321, %v7321
          %v7354 = vpack.c.bf16 %v7322, %v7322
          %v7355 = vpack.c.bf16 %v7323, %v7323
          %v7356 = vpack.c.bf16 %v7324, %v7324
          %v7357 = vpack.c.bf16 %v7325, %v7325
          %7358 = vst.msk [vmem:[#allocation2] sm:$0xf] %vm1752, %v1175
          %7359 = vst.msk [vmem:[#allocation2 + $0x4] sm:$0xf] %vm1752, %v1176
          %7360 = vst.msk [vmem:[#allocation2 + $0x8] sm:$0xf] %vm1752, %v1177
          %7361 = vst.msk [vmem:[#allocation2 + $0xc] sm:$0xf] %vm1752, %v1178
          %7362 = vst.msk [vmem:[#allocation2 + $0x10] sm:$0xf] %vm1752, %v1179
          %7363 = vst.msk [vmem:[#allocation2 + $0x14] sm:$0xf] %vm1752, %v1180
          %7364 = vst.msk [vmem:[#allocation2 + $0x18] sm:$0xf] %vm1752, %v1181
          %7365 = vst.msk [vmem:[#allocation2 + $0x1c] sm:$0xf] %vm1752, %v1182
          %7366 = vst.msk [vmem:[#allocation2 + $0x20] sm:$0xf] %vm1752, %v1183
          %7367 = vst.msk [vmem:[#allocation2 + $0x24] sm:$0xf] %vm1752, %v1184
          %7368 = vst.msk [vmem:[#allocation2 + $0x28] sm:$0xf] %vm1752, %v1185
          %7369 = vst.msk [vmem:[#allocation2 + $0x2c] sm:$0xf] %vm1752, %v1186
          %7370 = vst.msk [vmem:[#allocation2 + $0x30] sm:$0xf] %vm1752, %v1187
          %7371 = vst.msk [vmem:[#allocation2 + $0x34] sm:$0xf] %vm1752, %v1188
          %7372 = vst.msk [vmem:[#allocation2 + $0x38] sm:$0xf] %vm1752, %v1189
          %7373 = vst.msk [vmem:[#allocation2 + $0x3c] sm:$0xf] %vm1752, %v1190
          %7374 = vst.msk [vmem:[#allocation2 + $0x40] sm:$0xf] %vm1752, %v1191
          %7375 = vst.msk [vmem:[#allocation2 + $0x44] sm:$0xf] %vm1752, %v1192
          %7376 = vst.msk [vmem:[#allocation2 + $0x48] sm:$0xf] %vm1752, %v1193
          %7377 = vst.msk [vmem:[#allocation2 + $0x4c] sm:$0xf] %vm1752, %v1194
          %7378 = vst.msk [vmem:[#allocation2 + $0x50] sm:$0xf] %vm1752, %v1195
          %7379 = vst.msk [vmem:[#allocation2 + $0x54] sm:$0xf] %vm1752, %v1196
          %7380 = vst.msk [vmem:[#allocation2 + $0x58] sm:$0xf] %vm1752, %v1197
          %7381 = vst.msk [vmem:[#allocation2 + $0x5c] sm:$0xf] %vm1752, %v1198
          %7382 = vst.msk [vmem:[#allocation2 + $0x60] sm:$0xf] %vm1752, %v1199
          %7383 = vst.msk [vmem:[#allocation2 + $0x64] sm:$0xf] %vm1752, %v1200
          %7384 = vst.msk [vmem:[#allocation2 + $0x68] sm:$0xf] %vm1752, %v1201
          %7385 = vst.msk [vmem:[#allocation2 + $0x6c] sm:$0xf] %vm1752, %v1202
          %7386 = vst.msk [vmem:[#allocation2 + $0x70] sm:$0xf] %vm1752, %v1203
          %7387 = vst.msk [vmem:[#allocation2 + $0x74] sm:$0xf] %vm1752, %v1204
          %7388 = vst.msk [vmem:[#allocation2 + $0x78] sm:$0xf] %vm1752, %v1205
          %7389 = vst.msk [vmem:[#allocation2 + $0x7c] sm:$0xf] %vm1752, %v1206
          %7390 = vrot.lane.b32.xlu0 %v4378, 4
          %v7391 = vpop.permute.xlu0 %7390
          %7392 = vrot.lane.b32.xlu0 %v4379, 4
          %v7393 = vpop.permute.xlu0 %7392
          %7394 = vrot.lane.b32.xlu0 %v4380, 4
          %v7395 = vpop.permute.xlu0 %7394
          %7396 = vrot.lane.b32.xlu0 %v4381, 4
          %v7397 = vpop.permute.xlu0 %7396
          %7398 = vrot.lane.b32.xlu0 %v4382, 4
          %v7399 = vpop.permute.xlu0 %7398
          %7400 = vrot.lane.b32.xlu0 %v4383, 4
          %v7401 = vpop.permute.xlu0 %7400
          %7402 = vrot.lane.b32.xlu0 %v4384, 4
          %v7403 = vpop.permute.xlu0 %7402
          %7404 = vrot.lane.b32.xlu0 %v4385, 4
          %v7405 = vpop.permute.xlu0 %7404
          %7406 = vrot.lane.b32.xlu0 %v4386, 4
          %v7407 = vpop.permute.xlu0 %7406
          %7408 = vrot.lane.b32.xlu0 %v4387, 4
          %v7409 = vpop.permute.xlu0 %7408
          %7410 = vrot.lane.b32.xlu0 %v4388, 4
          %v7411 = vpop.permute.xlu0 %7410
          %7412 = vrot.lane.b32.xlu0 %v4389, 4
          %v7413 = vpop.permute.xlu0 %7412
          %7414 = vrot.lane.b32.xlu0 %v4390, 4
          %v7415 = vpop.permute.xlu0 %7414
          %7416 = vrot.lane.b32.xlu0 %v4391, 4
          %v7417 = vpop.permute.xlu0 %7416
          %7418 = vrot.lane.b32.xlu0 %v4392, 4
          %v7419 = vpop.permute.xlu0 %7418
          %7420 = vrot.lane.b32.xlu0 %v4393, 4
          %v7421 = vpop.permute.xlu0 %7420
          %7422 = vrot.lane.b32.xlu0 %v4394, 4
          %v7423 = vpop.permute.xlu0 %7422
          %7424 = vrot.lane.b32.xlu0 %v4395, 4
          %v7425 = vpop.permute.xlu0 %7424
          %7426 = vrot.lane.b32.xlu0 %v4396, 4
          %v7427 = vpop.permute.xlu0 %7426
          %7428 = vrot.lane.b32.xlu0 %v4397, 4
          %v7429 = vpop.permute.xlu0 %7428
          %7430 = vrot.lane.b32.xlu0 %v4398, 4
          %v7431 = vpop.permute.xlu0 %7430
          %7432 = vrot.lane.b32.xlu0 %v4399, 4
          %v7433 = vpop.permute.xlu0 %7432
          %7434 = vrot.lane.b32.xlu0 %v4400, 4
          %v7435 = vpop.permute.xlu0 %7434
          %7436 = vrot.lane.b32.xlu0 %v4401, 4
          %v7437 = vpop.permute.xlu0 %7436
          %7438 = vrot.lane.b32.xlu0 %v4402, 4
          %v7439 = vpop.permute.xlu0 %7438
          %7440 = vrot.lane.b32.xlu0 %v4403, 4
          %v7441 = vpop.permute.xlu0 %7440
          %7442 = vrot.lane.b32.xlu0 %v4404, 4
          %v7443 = vpop.permute.xlu0 %7442
          %7444 = vrot.lane.b32.xlu0 %v4405, 4
          %v7445 = vpop.permute.xlu0 %7444
          %7446 = vrot.lane.b32.xlu0 %v4406, 4
          %v7447 = vpop.permute.xlu0 %7446
          %7448 = vrot.lane.b32.xlu0 %v4407, 4
          %v7449 = vpop.permute.xlu0 %7448
          %7450 = vrot.lane.b32.xlu0 %v4408, 4
          %v7451 = vpop.permute.xlu0 %7450
          %7452 = vrot.lane.b32.xlu0 %v4409, 4
          %v7453 = vpop.permute.xlu0 %7452
          %vm7486 = vcmask 60448
          %7487 = vst.msk [vmem:[#allocation2] sm:$0xf] %vm7486, %v7391
          %7488 = vst.msk [vmem:[#allocation2 + $0x4] sm:$0xf] %vm7486, %v7393
          %7489 = vst.msk [vmem:[#allocation2 + $0x8] sm:$0xf] %vm7486, %v7395
          %7490 = vst.msk [vmem:[#allocation2 + $0xc] sm:$0xf] %vm7486, %v7397
          %7491 = vst.msk [vmem:[#allocation2 + $0x10] sm:$0xf] %vm7486, %v7399
          %7492 = vst.msk [vmem:[#allocation2 + $0x14] sm:$0xf] %vm7486, %v7401
          %7493 = vst.msk [vmem:[#allocation2 + $0x18] sm:$0xf] %vm7486, %v7403
          %7494 = vst.msk [vmem:[#allocation2 + $0x1c] sm:$0xf] %vm7486, %v7405
          %7495 = vst.msk [vmem:[#allocation2 + $0x20] sm:$0xf] %vm7486, %v7407
          %7496 = vst.msk [vmem:[#allocation2 + $0x24] sm:$0xf] %vm7486, %v7409
          %7497 = vst.msk [vmem:[#allocation2 + $0x28] sm:$0xf] %vm7486, %v7411
          %7498 = vst.msk [vmem:[#allocation2 + $0x2c] sm:$0xf] %vm7486, %v7413
          %7499 = vst.msk [vmem:[#allocation2 + $0x30] sm:$0xf] %vm7486, %v7415
          %7500 = vst.msk [vmem:[#allocation2 + $0x34] sm:$0xf] %vm7486, %v7417
          %7501 = vst.msk [vmem:[#allocation2 + $0x38] sm:$0xf] %vm7486, %v7419
          %7502 = vst.msk [vmem:[#allocation2 + $0x3c] sm:$0xf] %vm7486, %v7421
          %7503 = vst.msk [vmem:[#allocation2 + $0x40] sm:$0xf] %vm7486, %v7423
          %7504 = vst.msk [vmem:[#allocation2 + $0x44] sm:$0xf] %vm7486, %v7425
          %7505 = vst.msk [vmem:[#allocation2 + $0x48] sm:$0xf] %vm7486, %v7427
          %7506 = vst.msk [vmem:[#allocation2 + $0x4c] sm:$0xf] %vm7486, %v7429
          %7507 = vst.msk [vmem:[#allocation2 + $0x50] sm:$0xf] %vm7486, %v7431
          %7508 = vst.msk [vmem:[#allocation2 + $0x54] sm:$0xf] %vm7486, %v7433
          %7509 = vst.msk [vmem:[#allocation2 + $0x58] sm:$0xf] %vm7486, %v7435
          %7510 = vst.msk [vmem:[#allocation2 + $0x5c] sm:$0xf] %vm7486, %v7437
          %7511 = vst.msk [vmem:[#allocation2 + $0x60] sm:$0xf] %vm7486, %v7439
          %7512 = vst.msk [vmem:[#allocation2 + $0x64] sm:$0xf] %vm7486, %v7441
          %7513 = vst.msk [vmem:[#allocation2 + $0x68] sm:$0xf] %vm7486, %v7443
          %7514 = vst.msk [vmem:[#allocation2 + $0x6c] sm:$0xf] %vm7486, %v7445
          %7515 = vst.msk [vmem:[#allocation2 + $0x70] sm:$0xf] %vm7486, %v7447
          %7516 = vst.msk [vmem:[#allocation2 + $0x74] sm:$0xf] %vm7486, %v7449
          %7517 = vst.msk [vmem:[#allocation2 + $0x78] sm:$0xf] %vm7486, %v7451
          %7518 = vst.msk [vmem:[#allocation2 + $0x7c] sm:$0xf] %vm7486, %v7453
          %7519 = vrot.lane.b32.xlu0 %v5852, 8
          %v7520 = vpop.permute.xlu0 %7519
          %7521 = vrot.lane.b32.xlu0 %v5853, 8
          %v7522 = vpop.permute.xlu0 %7521
          %7523 = vrot.lane.b32.xlu0 %v5854, 8
          %v7524 = vpop.permute.xlu0 %7523
          %7525 = vrot.lane.b32.xlu0 %v5855, 8
          %v7526 = vpop.permute.xlu0 %7525
          %7527 = vrot.lane.b32.xlu0 %v5856, 8
          %v7528 = vpop.permute.xlu0 %7527
          %7529 = vrot.lane.b32.xlu0 %v5857, 8
          %v7530 = vpop.permute.xlu0 %7529
          %7531 = vrot.lane.b32.xlu0 %v5858, 8
          %v7532 = vpop.permute.xlu0 %7531
          %7533 = vrot.lane.b32.xlu0 %v5859, 8
          %v7534 = vpop.permute.xlu0 %7533
          %7535 = vrot.lane.b32.xlu0 %v5860, 8
          %v7536 = vpop.permute.xlu0 %7535
          %7537 = vrot.lane.b32.xlu0 %v5861, 8
          %v7538 = vpop.permute.xlu0 %7537
          %7539 = vrot.lane.b32.xlu0 %v5862, 8
          %v7540 = vpop.permute.xlu0 %7539
          %7541 = vrot.lane.b32.xlu0 %v5863, 8
          %v7542 = vpop.permute.xlu0 %7541
          %7543 = vrot.lane.b32.xlu0 %v5864, 8
          %v7544 = vpop.permute.xlu0 %7543
          %7545 = vrot.lane.b32.xlu0 %v5865, 8
          %v7546 = vpop.permute.xlu0 %7545
          %7547 = vrot.lane.b32.xlu0 %v5866, 8
          %v7548 = vpop.permute.xlu0 %7547
          %7549 = vrot.lane.b32.xlu0 %v5867, 8
          %v7550 = vpop.permute.xlu0 %7549
          %7551 = vrot.lane.b32.xlu0 %v5868, 8
          %v7552 = vpop.permute.xlu0 %7551
          %7553 = vrot.lane.b32.xlu0 %v5869, 8
          %v7554 = vpop.permute.xlu0 %7553
          %7555 = vrot.lane.b32.xlu0 %v5870, 8
          %v7556 = vpop.permute.xlu0 %7555
          %7557 = vrot.lane.b32.xlu0 %v5871, 8
          %v7558 = vpop.permute.xlu0 %7557
          %7559 = vrot.lane.b32.xlu0 %v5872, 8
          %v7560 = vpop.permute.xlu0 %7559
          %7561 = vrot.lane.b32.xlu0 %v5873, 8
          %v7562 = vpop.permute.xlu0 %7561
          %7563 = vrot.lane.b32.xlu0 %v5874, 8
          %v7564 = vpop.permute.xlu0 %7563
          %7565 = vrot.lane.b32.xlu0 %v5875, 8
          %v7566 = vpop.permute.xlu0 %7565
          %7567 = vrot.lane.b32.xlu0 %v5876, 8
          %v7568 = vpop.permute.xlu0 %7567
          %7569 = vrot.lane.b32.xlu0 %v5877, 8
          %v7570 = vpop.permute.xlu0 %7569
          %7571 = vrot.lane.b32.xlu0 %v5878, 8
          %v7572 = vpop.permute.xlu0 %7571
          %7573 = vrot.lane.b32.xlu0 %v5879, 8
          %v7574 = vpop.permute.xlu0 %7573
          %7575 = vrot.lane.b32.xlu0 %v5880, 8
          %v7576 = vpop.permute.xlu0 %7575
          %7577 = vrot.lane.b32.xlu0 %v5881, 8
          %v7578 = vpop.permute.xlu0 %7577
          %7579 = vrot.lane.b32.xlu0 %v5882, 8
          %v7580 = vpop.permute.xlu0 %7579
          %7581 = vrot.lane.b32.xlu0 %v5883, 8
          %v7582 = vpop.permute.xlu0 %7581
          %vm7615 = vcmask 93248
          %7616 = vst.msk [vmem:[#allocation2] sm:$0xf] %vm7615, %v7520
          %7617 = vst.msk [vmem:[#allocation2 + $0x4] sm:$0xf] %vm7615, %v7522
          %7618 = vst.msk [vmem:[#allocation2 + $0x8] sm:$0xf] %vm7615, %v7524
          %7619 = vst.msk [vmem:[#allocation2 + $0xc] sm:$0xf] %vm7615, %v7526
          %7620 = vst.msk [vmem:[#allocation2 + $0x10] sm:$0xf] %vm7615, %v7528
          %7621 = vst.msk [vmem:[#allocation2 + $0x14] sm:$0xf] %vm7615, %v7530
          %7622 = vst.msk [vmem:[#allocation2 + $0x18] sm:$0xf] %vm7615, %v7532
          %7623 = vst.msk [vmem:[#allocation2 + $0x1c] sm:$0xf] %vm7615, %v7534
          %7624 = vst.msk [vmem:[#allocation2 + $0x20] sm:$0xf] %vm7615, %v7536
          %7625 = vst.msk [vmem:[#allocation2 + $0x24] sm:$0xf] %vm7615, %v7538
          %7626 = vst.msk [vmem:[#allocation2 + $0x28] sm:$0xf] %vm7615, %v7540
          %7627 = vst.msk [vmem:[#allocation2 + $0x2c] sm:$0xf] %vm7615, %v7542
          %7628 = vst.msk [vmem:[#allocation2 + $0x30] sm:$0xf] %vm7615, %v7544
          %7629 = vst.msk [vmem:[#allocation2 + $0x34] sm:$0xf] %vm7615, %v7546
          %7630 = vst.msk [vmem:[#allocation2 + $0x38] sm:$0xf] %vm7615, %v7548
          %7631 = vst.msk [vmem:[#allocation2 + $0x3c] sm:$0xf] %vm7615, %v7550
          %7632 = vst.msk [vmem:[#allocation2 + $0x40] sm:$0xf] %vm7615, %v7552
          %7633 = vst.msk [vmem:[#allocation2 + $0x44] sm:$0xf] %vm7615, %v7554
          %7634 = vst.msk [vmem:[#allocation2 + $0x48] sm:$0xf] %vm7615, %v7556
          %7635 = vst.msk [vmem:[#allocation2 + $0x4c] sm:$0xf] %vm7615, %v7558
          %7636 = vst.msk [vmem:[#allocation2 + $0x50] sm:$0xf] %vm7615, %v7560
          %7637 = vst.msk [vmem:[#allocation2 + $0x54] sm:$0xf] %vm7615, %v7562
          %7638 = vst.msk [vmem:[#allocation2 + $0x58] sm:$0xf] %vm7615, %v7564
          %7639 = vst.msk [vmem:[#allocation2 + $0x5c] sm:$0xf] %vm7615, %v7566
          %7640 = vst.msk [vmem:[#allocation2 + $0x60] sm:$0xf] %vm7615, %v7568
          %7641 = vst.msk [vmem:[#allocation2 + $0x64] sm:$0xf] %vm7615, %v7570
          %7642 = vst.msk [vmem:[#allocation2 + $0x68] sm:$0xf] %vm7615, %v7572
          %7643 = vst.msk [vmem:[#allocation2 + $0x6c] sm:$0xf] %vm7615, %v7574
          %7644 = vst.msk [vmem:[#allocation2 + $0x70] sm:$0xf] %vm7615, %v7576
          %7645 = vst.msk [vmem:[#allocation2 + $0x74] sm:$0xf] %vm7615, %v7578
          %7646 = vst.msk [vmem:[#allocation2 + $0x78] sm:$0xf] %vm7615, %v7580
          %7647 = vst.msk [vmem:[#allocation2 + $0x7c] sm:$0xf] %vm7615, %v7582
          %7680 = vrot.lane.b32.xlu0 %v7326, 12
          %v7681 = vpop.permute.xlu0 %7680
          %7682 = vrot.lane.b32.xlu0 %v7327, 12
          %v7683 = vpop.permute.xlu0 %7682
          %7684 = vrot.lane.b32.xlu0 %v7328, 12
          %v7685 = vpop.permute.xlu0 %7684
          %7686 = vrot.lane.b32.xlu0 %v7329, 12
          %v7687 = vpop.permute.xlu0 %7686
          %7688 = vrot.lane.b32.xlu0 %v7330, 12
          %v7689 = vpop.permute.xlu0 %7688
          %7690 = vrot.lane.b32.xlu0 %v7331, 12
          %v7691 = vpop.permute.xlu0 %7690
          %7692 = vrot.lane.b32.xlu0 %v7332, 12
          %v7693 = vpop.permute.xlu0 %7692
          %7694 = vrot.lane.b32.xlu0 %v7333, 12
          %v7695 = vpop.permute.xlu0 %7694
          %7696 = vrot.lane.b32.xlu0 %v7334, 12
          %v7697 = vpop.permute.xlu0 %7696
          %7698 = vrot.lane.b32.xlu0 %v7335, 12
          %v7699 = vpop.permute.xlu0 %7698
          %7700 = vrot.lane.b32.xlu0 %v7336, 12
          %v7701 = vpop.permute.xlu0 %7700
          %7702 = vrot.lane.b32.xlu0 %v7337, 12
          %v7703 = vpop.permute.xlu0 %7702
          %7704 = vrot.lane.b32.xlu0 %v7338, 12
          %v7705 = vpop.permute.xlu0 %7704
          %7706 = vrot.lane.b32.xlu0 %v7339, 12
          %v7707 = vpop.permute.xlu0 %7706
          %7708 = vrot.lane.b32.xlu0 %v7340, 12
          %v7709 = vpop.permute.xlu0 %7708
          %7710 = vrot.lane.b32.xlu0 %v7341, 12
          %v7711 = vpop.permute.xlu0 %7710
          %7712 = vrot.lane.b32.xlu0 %v7342, 12
          %v7713 = vpop.permute.xlu0 %7712
          %7714 = vrot.lane.b32.xlu0 %v7343, 12
          %v7715 = vpop.permute.xlu0 %7714
          %7716 = vrot.lane.b32.xlu0 %v7344, 12
          %v7717 = vpop.permute.xlu0 %7716
          %7718 = vrot.lane.b32.xlu0 %v7345, 12
          %v7719 = vpop.permute.xlu0 %7718
          %7720 = vrot.lane.b32.xlu0 %v7346, 12
          %v7721 = vpop.permute.xlu0 %7720
          %7722 = vrot.lane.b32.xlu0 %v7347, 12
          %v7723 = vpop.permute.xlu0 %7722
          %7724 = vrot.lane.b32.xlu0 %v7348, 12
          %v7725 = vpop.permute.xlu0 %7724
          %7726 = vrot.lane.b32.xlu0 %v7349, 12
          %v7727 = vpop.permute.xlu0 %7726
          %7728 = vrot.lane.b32.xlu0 %v7350, 12
          %v7729 = vpop.permute.xlu0 %7728
          %7730 = vrot.lane.b32.xlu0 %v7351, 12
          %v7731 = vpop.permute.xlu0 %7730
          %7732 = vrot.lane.b32.xlu0 %v7352, 12
          %v7733 = vpop.permute.xlu0 %7732
          %7734 = vrot.lane.b32.xlu0 %v7353, 12
          %v7735 = vpop.permute.xlu0 %7734
          %7736 = vrot.lane.b32.xlu0 %v7354, 12
          %v7737 = vpop.permute.xlu0 %7736
          %7738 = vrot.lane.b32.xlu0 %v7355, 12
          %v7739 = vpop.permute.xlu0 %7738
          %7740 = vrot.lane.b32.xlu0 %v7356, 12
          %v7741 = vpop.permute.xlu0 %7740
          %7742 = vrot.lane.b32.xlu0 %v7357, 12
          %v7743 = vpop.permute.xlu0 %7742
          %vm7776 = vcmask 126048
          %7777 = vst.msk [vmem:[#allocation2] sm:$0xf] %vm7776, %v7681
          %7778 = vst.msk [vmem:[#allocation2 + $0x4] sm:$0xf] %vm7776, %v7683
          %7779 = vst.msk [vmem:[#allocation2 + $0x8] sm:$0xf] %vm7776, %v7685
          %7780 = vst.msk [vmem:[#allocation2 + $0xc] sm:$0xf] %vm7776, %v7687
          %7781 = vst.msk [vmem:[#allocation2 + $0x10] sm:$0xf] %vm7776, %v7689
          %7782 = vst.msk [vmem:[#allocation2 + $0x14] sm:$0xf] %vm7776, %v7691
          %7783 = vst.msk [vmem:[#allocation2 + $0x18] sm:$0xf] %vm7776, %v7693
          %7784 = vst.msk [vmem:[#allocation2 + $0x1c] sm:$0xf] %vm7776, %v7695
          %7785 = vst.msk [vmem:[#allocation2 + $0x20] sm:$0xf] %vm7776, %v7697
          %7786 = vst.msk [vmem:[#allocation2 + $0x24] sm:$0xf] %vm7776, %v7699
          %7787 = vst.msk [vmem:[#allocation2 + $0x28] sm:$0xf] %vm7776, %v7701
          %7788 = vst.msk [vmem:[#allocation2 + $0x2c] sm:$0xf] %vm7776, %v7703
          %7789 = vst.msk [vmem:[#allocation2 + $0x30] sm:$0xf] %vm7776, %v7705
          %7790 = vst.msk [vmem:[#allocation2 + $0x34] sm:$0xf] %vm7776, %v7707
          %7791 = vst.msk [vmem:[#allocation2 + $0x38] sm:$0xf] %vm7776, %v7709
          %7792 = vst.msk [vmem:[#allocation2 + $0x3c] sm:$0xf] %vm7776, %v7711
          %7793 = vst.msk [vmem:[#allocation2 + $0x40] sm:$0xf] %vm7776, %v7713
          %7794 = vst.msk [vmem:[#allocation2 + $0x44] sm:$0xf] %vm7776, %v7715
          %7795 = vst.msk [vmem:[#allocation2 + $0x48] sm:$0xf] %vm7776, %v7717
          %7796 = vst.msk [vmem:[#allocation2 + $0x4c] sm:$0xf] %vm7776, %v7719
          %7797 = vst.msk [vmem:[#allocation2 + $0x50] sm:$0xf] %vm7776, %v7721
          %7798 = vst.msk [vmem:[#allocation2 + $0x54] sm:$0xf] %vm7776, %v7723
          %7799 = vst.msk [vmem:[#allocation2 + $0x58] sm:$0xf] %vm7776, %v7725
          %7800 = vst.msk [vmem:[#allocation2 + $0x5c] sm:$0xf] %vm7776, %v7727
          %7801 = vst.msk [vmem:[#allocation2 + $0x60] sm:$0xf] %vm7776, %v7729
          %7802 = vst.msk [vmem:[#allocation2 + $0x64] sm:$0xf] %vm7776, %v7731
          %7803 = vst.msk [vmem:[#allocation2 + $0x68] sm:$0xf] %vm7776, %v7733
          %7804 = vst.msk [vmem:[#allocation2 + $0x6c] sm:$0xf] %vm7776, %v7735
          %7805 = vst.msk [vmem:[#allocation2 + $0x70] sm:$0xf] %vm7776, %v7737
          %7806 = vst.msk [vmem:[#allocation2 + $0x74] sm:$0xf] %vm7776, %v7739
          %7807 = vst.msk [vmem:[#allocation2 + $0x78] sm:$0xf] %vm7776, %v7741
          %7808 = vst.msk [vmem:[#allocation2 + $0x7c] sm:$0xf] %vm7776, %v7743
        $region44: #{tpu_custom_call.1} parent=39 // pred_fallthru
          _
        %v7809 = vld [vmem:[#allocation2] sm:$0xf]
        %v7810 = vld [vmem:[#allocation2 + $0x4] sm:$0xf]
        %v7811 = vld [vmem:[#allocation2 + $0x8] sm:$0xf]
        %v7812 = vld [vmem:[#allocation2 + $0xc] sm:$0xf]
        %v7813 = vld [vmem:[#allocation2 + $0x10] sm:$0xf]
        %v7814 = vld [vmem:[#allocation2 + $0x14] sm:$0xf]
        %v7815 = vld [vmem:[#allocation2 + $0x18] sm:$0xf]
        %v7816 = vld [vmem:[#allocation2 + $0x1c] sm:$0xf]
        %v7817 = vld [vmem:[#allocation2 + $0x20] sm:$0xf]
        %v7818 = vld [vmem:[#allocation2 + $0x24] sm:$0xf]
        %v7819 = vld [vmem:[#allocation2 + $0x28] sm:$0xf]
        %v7820 = vld [vmem:[#allocation2 + $0x2c] sm:$0xf]
        %v7821 = vld [vmem:[#allocation2 + $0x30] sm:$0xf]
        %v7822 = vld [vmem:[#allocation2 + $0x34] sm:$0xf]
        %v7823 = vld [vmem:[#allocation2 + $0x38] sm:$0xf]
        %v7824 = vld [vmem:[#allocation2 + $0x3c] sm:$0xf]
        %v7825 = vld [vmem:[#allocation2 + $0x40] sm:$0xf]
        %v7826 = vld [vmem:[#allocation2 + $0x44] sm:$0xf]
        %v7827 = vld [vmem:[#allocation2 + $0x48] sm:$0xf]
        %v7828 = vld [vmem:[#allocation2 + $0x4c] sm:$0xf]
        %v7829 = vld [vmem:[#allocation2 + $0x50] sm:$0xf]
        %v7830 = vld [vmem:[#allocation2 + $0x54] sm:$0xf]
        %v7831 = vld [vmem:[#allocation2 + $0x58] sm:$0xf]
        %v7832 = vld [vmem:[#allocation2 + $0x5c] sm:$0xf]
        %v7833 = vld [vmem:[#allocation2 + $0x60] sm:$0xf]
        %v7834 = vld [vmem:[#allocation2 + $0x64] sm:$0xf]
        %v7835 = vld [vmem:[#allocation2 + $0x68] sm:$0xf]
        %v7836 = vld [vmem:[#allocation2 + $0x6c] sm:$0xf]
        %v7837 = vld [vmem:[#allocation2 + $0x70] sm:$0xf]
        %v7838 = vld [vmem:[#allocation2 + $0x74] sm:$0xf]
        %v7839 = vld [vmem:[#allocation2 + $0x78] sm:$0xf]
        %v7840 = vld [vmem:[#allocation2 + $0x7c] sm:$0xf]
        %v7841 = vld [vmem:[%s264] sm:$0xf]
        %v7842 = vld [vmem:[%s264 + $0x4] sm:$0xf]
        %v7843 = vld [vmem:[%s267] sm:$0x1]
        %v7845 = vperm.slane %v7843, 0
        %v7879 = vunpack.c.l.b16 %v7809
        %v7880 = vunpack.c.l.b16 %v7810
        %v7881 = vunpack.c.l.b16 %v7811
        %v7882 = vunpack.c.l.b16 %v7812
        %v7883 = vunpack.c.l.b16 %v7813
        %v7884 = vunpack.c.l.b16 %v7814
        %v7885 = vunpack.c.l.b16 %v7815
        %v7886 = vunpack.c.l.b16 %v7816
        %v7887 = vunpack.c.l.b16 %v7817
        %v7888 = vunpack.c.l.b16 %v7818
        %v7889 = vunpack.c.l.b16 %v7819
        %v7890 = vunpack.c.l.b16 %v7820
        %v7891 = vunpack.c.l.b16 %v7821
        %v7892 = vunpack.c.l.b16 %v7822
        %v7893 = vunpack.c.l.b16 %v7823
        %v7894 = vunpack.c.l.b16 %v7824
        %v7895 = vunpack.c.l.b16 %v7825
        %v7896 = vunpack.c.l.b16 %v7826
        %v7897 = vunpack.c.l.b16 %v7827
        %v7898 = vunpack.c.l.b16 %v7828
        %v7899 = vunpack.c.l.b16 %v7829
        %v7900 = vunpack.c.l.b16 %v7830
        %v7901 = vunpack.c.l.b16 %v7831
        %v7902 = vunpack.c.l.b16 %v7832
        %v7903 = vunpack.c.l.b16 %v7833
        %v7904 = vunpack.c.l.b16 %v7834
        %v7905 = vunpack.c.l.b16 %v7835
        %v7906 = vunpack.c.l.b16 %v7836
        %v7907 = vunpack.c.l.b16 %v7837
        %v7908 = vunpack.c.l.b16 %v7838
        %v7909 = vunpack.c.l.b16 %v7839
        %v7910 = vunpack.c.l.b16 %v7840
        %v7911 = vpack.c.b16 %v7880, %v7879
        %v7912 = vpack.c.b16 %v7882, %v7881
        %v7913 = vpack.c.b16 %v7884, %v7883
        %v7914 = vpack.c.b16 %v7886, %v7885
        %v7915 = vpack.c.b16 %v7888, %v7887
        %v7916 = vpack.c.b16 %v7890, %v7889
        %v7917 = vpack.c.b16 %v7892, %v7891
        %v7918 = vpack.c.b16 %v7894, %v7893
        %v7919 = vpack.c.b16 %v7896, %v7895
        %v7920 = vpack.c.b16 %v7898, %v7897
        %v7921 = vpack.c.b16 %v7900, %v7899
        %v7922 = vpack.c.b16 %v7902, %v7901
        %v7923 = vpack.c.b16 %v7904, %v7903
        %v7924 = vpack.c.b16 %v7906, %v7905
        %v7925 = vpack.c.b16 %v7908, %v7907
        %v7926 = vpack.c.b16 %v7910, %v7909
        %v7929 = vunpack.c.l.b16 %v7841
        %v7930 = vunpack.c.l.b16 %v7842
        %v7931 = vpack.c.b16 %v7930, %v7929
        %vm7933 = vcmask 130048
        %v7935 = vsel %vm7933, %v7911, 0
        %v7938 = vsel %vm7933, %v7912, 0
        %v7941 = vsel %vm7933, %v7913, 0
        %v7944 = vsel %vm7933, %v7914, 0
        %v7947 = vsel %vm7933, %v7915, 0
        %v7950 = vsel %vm7933, %v7916, 0
        %v7953 = vsel %vm7933, %v7917, 0
        %v7956 = vsel %vm7933, %v7918, 0
        %v7959 = vsel %vm7933, %v7919, 0
        %v7962 = vsel %vm7933, %v7920, 0
        %v7965 = vsel %vm7933, %v7921, 0
        %v7968 = vsel %vm7933, %v7922, 0
        %v7971 = vsel %vm7933, %v7923, 0
        %v7974 = vsel %vm7933, %v7924, 0
        %v7977 = vsel %vm7933, %v7925, 0
        %v7980 = vsel %vm7933, %v7926, 0
        %7982 = vmatpush.bf16.msra.mxu0 0
        %7983 = vmatpush.bf16.msra.mxu0 0
        %7984 = vmatpush.bf16.msra.mxu0 0
        %7985 = vmatpush.bf16.msra.mxu0 0
        %7986 = vmatpush.bf16.msra.mxu0 0
        %7987 = vmatpush.bf16.msra.mxu0 0
        %7988 = vmatpush.bf16.msra.mxu0 0
        %7989 = vmatpush.bf16.msra.mxu0 %v7931
        %7990 = vmatmul.bf16.gmra.mxu0 %v7935
        %v7991 = vpop.f32.mrf.mxu0
        %v7992 = vadd.f32 %v7845, %v7991
        %v7993 = vpop.f32.mrf.mxu0
        %v7994 = vadd.f32 %v7845, %v7993
        %7995 = vmatmul.bf16.gmra.mxu0 %v7938
        %v7996 = vpop.f32.mrf.mxu0
        %v7997 = vadd.f32 %v7845, %v7996
        %v7998 = vpop.f32.mrf.mxu0
        %v7999 = vadd.f32 %v7845, %v7998
        %8000 = vmatmul.bf16.gmra.mxu0 %v7941
        %v8001 = vpop.f32.mrf.mxu0
        %v8002 = vadd.f32 %v7845, %v8001
        %v8003 = vpop.f32.mrf.mxu0
        %v8004 = vadd.f32 %v7845, %v8003
        %8005 = vmatmul.bf16.gmra.mxu0 %v7944
        %v8006 = vpop.f32.mrf.mxu0
        %v8007 = vadd.f32 %v7845, %v8006
        %v8008 = vpop.f32.mrf.mxu0
        %v8009 = vadd.f32 %v7845, %v8008
        %8010 = vmatmul.bf16.gmra.mxu0 %v7947
        %v8011 = vpop.f32.mrf.mxu0
        %v8012 = vadd.f32 %v7845, %v8011
        %v8013 = vpop.f32.mrf.mxu0
        %v8014 = vadd.f32 %v7845, %v8013
        %8015 = vmatmul.bf16.gmra.mxu0 %v7950
        %v8016 = vpop.f32.mrf.mxu0
        %v8017 = vadd.f32 %v7845, %v8016
        %v8018 = vpop.f32.mrf.mxu0
        %v8019 = vadd.f32 %v7845, %v8018
        %8020 = vmatmul.bf16.gmra.mxu0 %v7953
        %v8021 = vpop.f32.mrf.mxu0
        %v8022 = vadd.f32 %v7845, %v8021
        %v8023 = vpop.f32.mrf.mxu0
        %v8024 = vadd.f32 %v7845, %v8023
        %8025 = vmatmul.bf16.gmra.mxu0 %v7956
        %v8026 = vpop.f32.mrf.mxu0
        %v8027 = vadd.f32 %v7845, %v8026
        %v8028 = vpop.f32.mrf.mxu0
        %v8029 = vadd.f32 %v7845, %v8028
        %8030 = vmatmul.bf16.gmra.mxu0 %v7959
        %v8031 = vpop.f32.mrf.mxu0
        %v8032 = vadd.f32 %v7845, %v8031
        %v8033 = vpop.f32.mrf.mxu0
        %v8034 = vadd.f32 %v7845, %v8033
        %8035 = vmatmul.bf16.gmra.mxu0 %v7962
        %v8036 = vpop.f32.mrf.mxu0
        %v8037 = vadd.f32 %v7845, %v8036
        %v8038 = vpop.f32.mrf.mxu0
        %v8039 = vadd.f32 %v7845, %v8038
        %8040 = vmatmul.bf16.gmra.mxu0 %v7965
        %v8041 = vpop.f32.mrf.mxu0
        %v8042 = vadd.f32 %v7845, %v8041
        %v8043 = vpop.f32.mrf.mxu0
        %v8044 = vadd.f32 %v7845, %v8043
        %8045 = vmatmul.bf16.gmra.mxu0 %v7968
        %v8046 = vpop.f32.mrf.mxu0
        %v8047 = vadd.f32 %v7845, %v8046
        %v8048 = vpop.f32.mrf.mxu0
        %v8049 = vadd.f32 %v7845, %v8048
        %8050 = vmatmul.bf16.gmra.mxu0 %v7971
        %v8051 = vpop.f32.mrf.mxu0
        %v8052 = vadd.f32 %v7845, %v8051
        %v8053 = vpop.f32.mrf.mxu0
        %v8054 = vadd.f32 %v7845, %v8053
        %8055 = vmatmul.bf16.gmra.mxu0 %v7974
        %v8056 = vpop.f32.mrf.mxu0
        %v8057 = vadd.f32 %v7845, %v8056
        %v8058 = vpop.f32.mrf.mxu0
        %v8059 = vadd.f32 %v7845, %v8058
        %8060 = vmatmul.bf16.gmra.mxu0 %v7977
        %v8061 = vpop.f32.mrf.mxu0
        %v8062 = vadd.f32 %v7845, %v8061
        %v8063 = vpop.f32.mrf.mxu0
        %v8064 = vadd.f32 %v7845, %v8063
        %8065 = vmatmul.bf16.gmra.mxu0 %v7980
        %v8066 = vpop.f32.mrf.mxu0
        %v8067 = vadd.f32 %v7845, %v8066
        %v8068 = vpop.f32.mrf.mxu0
        %v8069 = vadd.f32 %v7845, %v8068
        %8070 = vdwg.mxu0
        %v8071 = vxor.u32 %v7992, 2147483648
        %v8072 = vxor.u32 %v7994, 2147483648
        %v8073 = vxor.u32 %v7997, 2147483648
        %v8074 = vxor.u32 %v7999, 2147483648
        %v8075 = vxor.u32 %v8002, 2147483648
        %v8076 = vxor.u32 %v8004, 2147483648
        %v8077 = vxor.u32 %v8007, 2147483648
        %v8078 = vxor.u32 %v8009, 2147483648
        %v8079 = vxor.u32 %v8012, 2147483648
        %v8080 = vxor.u32 %v8014, 2147483648
        %v8081 = vxor.u32 %v8017, 2147483648
        %v8082 = vxor.u32 %v8019, 2147483648
        %v8083 = vxor.u32 %v8022, 2147483648
        %v8084 = vxor.u32 %v8024, 2147483648
        %v8085 = vxor.u32 %v8027, 2147483648
        %v8086 = vxor.u32 %v8029, 2147483648
        %v8087 = vxor.u32 %v8032, 2147483648
        %v8088 = vxor.u32 %v8034, 2147483648
        %v8089 = vxor.u32 %v8037, 2147483648
        %v8090 = vxor.u32 %v8039, 2147483648
        %v8091 = vxor.u32 %v8042, 2147483648
        %v8092 = vxor.u32 %v8044, 2147483648
        %v8093 = vxor.u32 %v8047, 2147483648
        %v8094 = vxor.u32 %v8049, 2147483648
        %v8095 = vxor.u32 %v8052, 2147483648
        %v8096 = vxor.u32 %v8054, 2147483648
        %v8097 = vxor.u32 %v8057, 2147483648
        %v8098 = vxor.u32 %v8059, 2147483648
        %v8099 = vxor.u32 %v8062, 2147483648
        %v8100 = vxor.u32 %v8064, 2147483648
        %v8101 = vxor.u32 %v8067, 2147483648
        %v8102 = vxor.u32 %v8069, 2147483648
        %v8103 = vmul.f32 %v8071, 1.442695
        %v8104 = vpow.pop %v8103
        %v8105 = vmul.f32 %v8072, 1.442695
        %v8106 = vpow.pop %v8105
        %v8107 = vmul.f32 %v8073, 1.442695
        %v8108 = vpow.pop %v8107
        %v8109 = vmul.f32 %v8074, 1.442695
        %v8110 = vpow.pop %v8109
        %v8111 = vmul.f32 %v8075, 1.442695
        %v8112 = vpow.pop %v8111
        %v8113 = vmul.f32 %v8076, 1.442695
        %v8114 = vpow.pop %v8113
        %v8115 = vmul.f32 %v8077, 1.442695
        %v8116 = vpow.pop %v8115
        %v8117 = vmul.f32 %v8078, 1.442695
        %v8118 = vpow.pop %v8117
        %v8119 = vmul.f32 %v8079, 1.442695
        %v8120 = vpow.pop %v8119
        %v8121 = vmul.f32 %v8080, 1.442695
        %v8122 = vpow.pop %v8121
        %v8123 = vmul.f32 %v8081, 1.442695
        %v8124 = vpow.pop %v8123
        %v8125 = vmul.f32 %v8082, 1.442695
        %v8126 = vpow.pop %v8125
        %v8127 = vmul.f32 %v8083, 1.442695
        %v8128 = vpow.pop %v8127
        %v8129 = vmul.f32 %v8084, 1.442695
        %v8130 = vpow.pop %v8129
        %v8131 = vmul.f32 %v8085, 1.442695
        %v8132 = vpow.pop %v8131
        %v8133 = vmul.f32 %v8086, 1.442695
        %v8134 = vpow.pop %v8133
        %v8135 = vmul.f32 %v8087, 1.442695
        %v8136 = vpow.pop %v8135
        %v8137 = vmul.f32 %v8088, 1.442695
        %v8138 = vpow.pop %v8137
        %v8139 = vmul.f32 %v8089, 1.442695
        %v8140 = vpow.pop %v8139
        %v8141 = vmul.f32 %v8090, 1.442695
        %v8142 = vpow.pop %v8141
        %v8143 = vmul.f32 %v8091, 1.442695
        %v8144 = vpow.pop %v8143
        %v8145 = vmul.f32 %v8092, 1.442695
        %v8146 = vpow.pop %v8145
        %v8147 = vmul.f32 %v8093, 1.442695
        %v8148 = vpow.pop %v8147
        %v8149 = vmul.f32 %v8094, 1.442695
        %v8150 = vpow.pop %v8149
        %v8151 = vmul.f32 %v8095, 1.442695
        %v8152 = vpow.pop %v8151
        %v8153 = vmul.f32 %v8096, 1.442695
        %v8154 = vpow.pop %v8153
        %v8155 = vmul.f32 %v8097, 1.442695
        %v8156 = vpow.pop %v8155
        %v8157 = vmul.f32 %v8098, 1.442695
        %v8158 = vpow.pop %v8157
        %v8159 = vmul.f32 %v8099, 1.442695
        %v8160 = vpow.pop %v8159
        %v8161 = vmul.f32 %v8100, 1.442695
        %v8162 = vpow.pop %v8161
        %v8163 = vmul.f32 %v8101, 1.442695
        %v8164 = vpow.pop %v8163
        %v8165 = vmul.f32 %v8102, 1.442695
        %v8166 = vpow.pop %v8165
        %v8167 = vadd.f32 %v8104, 1.0
        %v8168 = vadd.f32 %v8106, 1.0
        %v8169 = vadd.f32 %v8108, 1.0
        %v8170 = vadd.f32 %v8110, 1.0
        %v8171 = vadd.f32 %v8112, 1.0
        %v8172 = vadd.f32 %v8114, 1.0
        %v8173 = vadd.f32 %v8116, 1.0
        %v8174 = vadd.f32 %v8118, 1.0
        %v8175 = vadd.f32 %v8120, 1.0
        %v8176 = vadd.f32 %v8122, 1.0
        %v8177 = vadd.f32 %v8124, 1.0
        %v8178 = vadd.f32 %v8126, 1.0
        %v8179 = vadd.f32 %v8128, 1.0
        %v8180 = vadd.f32 %v8130, 1.0
        %v8181 = vadd.f32 %v8132, 1.0
        %v8182 = vadd.f32 %v8134, 1.0
        %v8183 = vadd.f32 %v8136, 1.0
        %v8184 = vadd.f32 %v8138, 1.0
        %v8185 = vadd.f32 %v8140, 1.0
        %v8186 = vadd.f32 %v8142, 1.0
        %v8187 = vadd.f32 %v8144, 1.0
        %v8188 = vadd.f32 %v8146, 1.0
        %v8189 = vadd.f32 %v8148, 1.0
        %v8190 = vadd.f32 %v8150, 1.0
        %v8191 = vadd.f32 %v8152, 1.0
        %v8192 = vadd.f32 %v8154, 1.0
        %v8193 = vadd.f32 %v8156, 1.0
        %v8194 = vadd.f32 %v8158, 1.0
        %v8195 = vadd.f32 %v8160, 1.0
        %v8196 = vadd.f32 %v8162, 1.0
        %v8197 = vadd.f32 %v8164, 1.0
        %v8198 = vadd.f32 %v8166, 1.0
        %v8199 = vrcp.pop %v8167
        %v8200 = vmul.f32 %v8167, %v8199
        %v8201 = vsub.f32 1.0, %v8200
        %v8202 = vmul.f32 %v8199, %v8201
        %v8203 = vadd.f32 %v8199, %v8202
        %vm8204 = vweird.f32 %v8167
        %vm8205 = vweird.f32 %v8199
        %vm8206 = vmor %vm8204, %vm8205
        %v8207 = vsel %vm8206, %v8199, %v8203
        %v8208 = vand.u32 2147483647, %v8167
        %vm8209 = vcmp.eq.f32.partialorder %v8208, 8.507059e+37
        %v8210 = vand.u32 %v8167, 2147483648
        %v8211 = vor.u32 1.1754944e-38, %v8210
        %v8212 = vsel %vm8209, %v8211, %v8207
        %v8213 = vmul.f32 1.0, %v8212
        %v8214 = vrcp.pop %v8168
        %v8215 = vmul.f32 %v8168, %v8214
        %v8216 = vsub.f32 1.0, %v8215
        %v8217 = vmul.f32 %v8214, %v8216
        %v8218 = vadd.f32 %v8214, %v8217
        %vm8219 = vweird.f32 %v8168
        %vm8220 = vweird.f32 %v8214
        %vm8221 = vmor %vm8219, %vm8220
        %v8222 = vsel %vm8221, %v8214, %v8218
        %v8223 = vand.u32 2147483647, %v8168
        %vm8224 = vcmp.eq.f32.partialorder %v8223, 8.507059e+37
        %v8225 = vand.u32 %v8168, 2147483648
        %v8226 = vor.u32 1.1754944e-38, %v8225
        %v8227 = vsel %vm8224, %v8226, %v8222
        %v8228 = vmul.f32 1.0, %v8227
        %v8229 = vrcp.pop %v8169
        %v8230 = vmul.f32 %v8169, %v8229
        %v8231 = vsub.f32 1.0, %v8230
        %v8232 = vmul.f32 %v8229, %v8231
        %v8233 = vadd.f32 %v8229, %v8232
        %vm8234 = vweird.f32 %v8169
        %vm8235 = vweird.f32 %v8229
        %vm8236 = vmor %vm8234, %vm8235
        %v8237 = vsel %vm8236, %v8229, %v8233
        %v8238 = vand.u32 2147483647, %v8169
        %vm8239 = vcmp.eq.f32.partialorder %v8238, 8.507059e+37
        %v8240 = vand.u32 %v8169, 2147483648
        %v8241 = vor.u32 1.1754944e-38, %v8240
        %v8242 = vsel %vm8239, %v8241, %v8237
        %v8243 = vmul.f32 1.0, %v8242
        %v8244 = vrcp.pop %v8170
        %v8245 = vmul.f32 %v8170, %v8244
        %v8246 = vsub.f32 1.0, %v8245
        %v8247 = vmul.f32 %v8244, %v8246
        %v8248 = vadd.f32 %v8244, %v8247
        %vm8249 = vweird.f32 %v8170
        %vm8250 = vweird.f32 %v8244
        %vm8251 = vmor %vm8249, %vm8250
        %v8252 = vsel %vm8251, %v8244, %v8248
        %v8253 = vand.u32 2147483647, %v8170
        %vm8254 = vcmp.eq.f32.partialorder %v8253, 8.507059e+37
        %v8255 = vand.u32 %v8170, 2147483648
        %v8256 = vor.u32 1.1754944e-38, %v8255
        %v8257 = vsel %vm8254, %v8256, %v8252
        %v8258 = vmul.f32 1.0, %v8257
        %v8259 = vrcp.pop %v8171
        %v8260 = vmul.f32 %v8171, %v8259
        %v8261 = vsub.f32 1.0, %v8260
        %v8262 = vmul.f32 %v8259, %v8261
        %v8263 = vadd.f32 %v8259, %v8262
        %vm8264 = vweird.f32 %v8171
        %vm8265 = vweird.f32 %v8259
        %vm8266 = vmor %vm8264, %vm8265
        %v8267 = vsel %vm8266, %v8259, %v8263
        %v8268 = vand.u32 2147483647, %v8171
        %vm8269 = vcmp.eq.f32.partialorder %v8268, 8.507059e+37
        %v8270 = vand.u32 %v8171, 2147483648
        %v8271 = vor.u32 1.1754944e-38, %v8270
        %v8272 = vsel %vm8269, %v8271, %v8267
        %v8273 = vmul.f32 1.0, %v8272
        %v8274 = vrcp.pop %v8172
        %v8275 = vmul.f32 %v8172, %v8274
        %v8276 = vsub.f32 1.0, %v8275
        %v8277 = vmul.f32 %v8274, %v8276
        %v8278 = vadd.f32 %v8274, %v8277
        %vm8279 = vweird.f32 %v8172
        %vm8280 = vweird.f32 %v8274
        %vm8281 = vmor %vm8279, %vm8280
        %v8282 = vsel %vm8281, %v8274, %v8278
        %v8283 = vand.u32 2147483647, %v8172
        %vm8284 = vcmp.eq.f32.partialorder %v8283, 8.507059e+37
        %v8285 = vand.u32 %v8172, 2147483648
        %v8286 = vor.u32 1.1754944e-38, %v8285
        %v8287 = vsel %vm8284, %v8286, %v8282
        %v8288 = vmul.f32 1.0, %v8287
        %v8289 = vrcp.pop %v8173
        %v8290 = vmul.f32 %v8173, %v8289
        %v8291 = vsub.f32 1.0, %v8290
        %v8292 = vmul.f32 %v8289, %v8291
        %v8293 = vadd.f32 %v8289, %v8292
        %vm8294 = vweird.f32 %v8173
        %vm8295 = vweird.f32 %v8289
        %vm8296 = vmor %vm8294, %vm8295
        %v8297 = vsel %vm8296, %v8289, %v8293
        %v8298 = vand.u32 2147483647, %v8173
        %vm8299 = vcmp.eq.f32.partialorder %v8298, 8.507059e+37
        %v8300 = vand.u32 %v8173, 2147483648
        %v8301 = vor.u32 1.1754944e-38, %v8300
        %v8302 = vsel %vm8299, %v8301, %v8297
        %v8303 = vmul.f32 1.0, %v8302
        %v8304 = vrcp.pop %v8174
        %v8305 = vmul.f32 %v8174, %v8304
        %v8306 = vsub.f32 1.0, %v8305
        %v8307 = vmul.f32 %v8304, %v8306
        %v8308 = vadd.f32 %v8304, %v8307
        %vm8309 = vweird.f32 %v8174
        %vm8310 = vweird.f32 %v8304
        %vm8311 = vmor %vm8309, %vm8310
        %v8312 = vsel %vm8311, %v8304, %v8308
        %v8313 = vand.u32 2147483647, %v8174
        %vm8314 = vcmp.eq.f32.partialorder %v8313, 8.507059e+37
        %v8315 = vand.u32 %v8174, 2147483648
        %v8316 = vor.u32 1.1754944e-38, %v8315
        %v8317 = vsel %vm8314, %v8316, %v8312
        %v8318 = vmul.f32 1.0, %v8317
        %v8319 = vrcp.pop %v8175
        %v8320 = vmul.f32 %v8175, %v8319
        %v8321 = vsub.f32 1.0, %v8320
        %v8322 = vmul.f32 %v8319, %v8321
        %v8323 = vadd.f32 %v8319, %v8322
        %vm8324 = vweird.f32 %v8175
        %vm8325 = vweird.f32 %v8319
        %vm8326 = vmor %vm8324, %vm8325
        %v8327 = vsel %vm8326, %v8319, %v8323
        %v8328 = vand.u32 2147483647, %v8175
        %vm8329 = vcmp.eq.f32.partialorder %v8328, 8.507059e+37
        %v8330 = vand.u32 %v8175, 2147483648
        %v8331 = vor.u32 1.1754944e-38, %v8330
        %v8332 = vsel %vm8329, %v8331, %v8327
        %v8333 = vmul.f32 1.0, %v8332
        %v8334 = vrcp.pop %v8176
        %v8335 = vmul.f32 %v8176, %v8334
        %v8336 = vsub.f32 1.0, %v8335
        %v8337 = vmul.f32 %v8334, %v8336
        %v8338 = vadd.f32 %v8334, %v8337
        %vm8339 = vweird.f32 %v8176
        %vm8340 = vweird.f32 %v8334
        %vm8341 = vmor %vm8339, %vm8340
        %v8342 = vsel %vm8341, %v8334, %v8338
        %v8343 = vand.u32 2147483647, %v8176
        %vm8344 = vcmp.eq.f32.partialorder %v8343, 8.507059e+37
        %v8345 = vand.u32 %v8176, 2147483648
        %v8346 = vor.u32 1.1754944e-38, %v8345
        %v8347 = vsel %vm8344, %v8346, %v8342
        %v8348 = vmul.f32 1.0, %v8347
        %v8349 = vrcp.pop %v8177
        %v8350 = vmul.f32 %v8177, %v8349
        %v8351 = vsub.f32 1.0, %v8350
        %v8352 = vmul.f32 %v8349, %v8351
        %v8353 = vadd.f32 %v8349, %v8352
        %vm8354 = vweird.f32 %v8177
        %vm8355 = vweird.f32 %v8349
        %vm8356 = vmor %vm8354, %vm8355
        %v8357 = vsel %vm8356, %v8349, %v8353
        %v8358 = vand.u32 2147483647, %v8177
        %vm8359 = vcmp.eq.f32.partialorder %v8358, 8.507059e+37
        %v8360 = vand.u32 %v8177, 2147483648
        %v8361 = vor.u32 1.1754944e-38, %v8360
        %v8362 = vsel %vm8359, %v8361, %v8357
        %v8363 = vmul.f32 1.0, %v8362
        %v8364 = vrcp.pop %v8178
        %v8365 = vmul.f32 %v8178, %v8364
        %v8366 = vsub.f32 1.0, %v8365
        %v8367 = vmul.f32 %v8364, %v8366
        %v8368 = vadd.f32 %v8364, %v8367
        %vm8369 = vweird.f32 %v8178
        %vm8370 = vweird.f32 %v8364
        %vm8371 = vmor %vm8369, %vm8370
        %v8372 = vsel %vm8371, %v8364, %v8368
        %v8373 = vand.u32 2147483647, %v8178
        %vm8374 = vcmp.eq.f32.partialorder %v8373, 8.507059e+37
        %v8375 = vand.u32 %v8178, 2147483648
        %v8376 = vor.u32 1.1754944e-38, %v8375
        %v8377 = vsel %vm8374, %v8376, %v8372
        %v8378 = vmul.f32 1.0, %v8377
        %v8379 = vrcp.pop %v8179
        %v8380 = vmul.f32 %v8179, %v8379
        %v8381 = vsub.f32 1.0, %v8380
        %v8382 = vmul.f32 %v8379, %v8381
        %v8383 = vadd.f32 %v8379, %v8382
        %vm8384 = vweird.f32 %v8179
        %vm8385 = vweird.f32 %v8379
        %vm8386 = vmor %vm8384, %vm8385
        %v8387 = vsel %vm8386, %v8379, %v8383
        %v8388 = vand.u32 2147483647, %v8179
        %vm8389 = vcmp.eq.f32.partialorder %v8388, 8.507059e+37
        %v8390 = vand.u32 %v8179, 2147483648
        %v8391 = vor.u32 1.1754944e-38, %v8390
        %v8392 = vsel %vm8389, %v8391, %v8387
        %v8393 = vmul.f32 1.0, %v8392
        %v8394 = vrcp.pop %v8180
        %v8395 = vmul.f32 %v8180, %v8394
        %v8396 = vsub.f32 1.0, %v8395
        %v8397 = vmul.f32 %v8394, %v8396
        %v8398 = vadd.f32 %v8394, %v8397
        %vm8399 = vweird.f32 %v8180
        %vm8400 = vweird.f32 %v8394
        %vm8401 = vmor %vm8399, %vm8400
        %v8402 = vsel %vm8401, %v8394, %v8398
        %v8403 = vand.u32 2147483647, %v8180
        %vm8404 = vcmp.eq.f32.partialorder %v8403, 8.507059e+37
        %v8405 = vand.u32 %v8180, 2147483648
        %v8406 = vor.u32 1.1754944e-38, %v8405
        %v8407 = vsel %vm8404, %v8406, %v8402
        %v8408 = vmul.f32 1.0, %v8407
        %v8409 = vrcp.pop %v8181
        %v8410 = vmul.f32 %v8181, %v8409
        %v8411 = vsub.f32 1.0, %v8410
        %v8412 = vmul.f32 %v8409, %v8411
        %v8413 = vadd.f32 %v8409, %v8412
        %vm8414 = vweird.f32 %v8181
        %vm8415 = vweird.f32 %v8409
        %vm8416 = vmor %vm8414, %vm8415
        %v8417 = vsel %vm8416, %v8409, %v8413
        %v8418 = vand.u32 2147483647, %v8181
        %vm8419 = vcmp.eq.f32.partialorder %v8418, 8.507059e+37
        %v8420 = vand.u32 %v8181, 2147483648
        %v8421 = vor.u32 1.1754944e-38, %v8420
        %v8422 = vsel %vm8419, %v8421, %v8417
        %v8423 = vmul.f32 1.0, %v8422
        %v8424 = vrcp.pop %v8182
        %v8425 = vmul.f32 %v8182, %v8424
        %v8426 = vsub.f32 1.0, %v8425
        %v8427 = vmul.f32 %v8424, %v8426
        %v8428 = vadd.f32 %v8424, %v8427
        %vm8429 = vweird.f32 %v8182
        %vm8430 = vweird.f32 %v8424
        %vm8431 = vmor %vm8429, %vm8430
        %v8432 = vsel %vm8431, %v8424, %v8428
        %v8433 = vand.u32 2147483647, %v8182
        %vm8434 = vcmp.eq.f32.partialorder %v8433, 8.507059e+37
        %v8435 = vand.u32 %v8182, 2147483648
        %v8436 = vor.u32 1.1754944e-38, %v8435
        %v8437 = vsel %vm8434, %v8436, %v8432
        %v8438 = vmul.f32 1.0, %v8437
        %v8439 = vrcp.pop %v8183
        %v8440 = vmul.f32 %v8183, %v8439
        %v8441 = vsub.f32 1.0, %v8440
        %v8442 = vmul.f32 %v8439, %v8441
        %v8443 = vadd.f32 %v8439, %v8442
        %vm8444 = vweird.f32 %v8183
        %vm8445 = vweird.f32 %v8439
        %vm8446 = vmor %vm8444, %vm8445
        %v8447 = vsel %vm8446, %v8439, %v8443
        %v8448 = vand.u32 2147483647, %v8183
        %vm8449 = vcmp.eq.f32.partialorder %v8448, 8.507059e+37
        %v8450 = vand.u32 %v8183, 2147483648
        %v8451 = vor.u32 1.1754944e-38, %v8450
        %v8452 = vsel %vm8449, %v8451, %v8447
        %v8453 = vmul.f32 1.0, %v8452
        %v8454 = vrcp.pop %v8184
        %v8455 = vmul.f32 %v8184, %v8454
        %v8456 = vsub.f32 1.0, %v8455
        %v8457 = vmul.f32 %v8454, %v8456
        %v8458 = vadd.f32 %v8454, %v8457
        %vm8459 = vweird.f32 %v8184
        %vm8460 = vweird.f32 %v8454
        %vm8461 = vmor %vm8459, %vm8460
        %v8462 = vsel %vm8461, %v8454, %v8458
        %v8463 = vand.u32 2147483647, %v8184
        %vm8464 = vcmp.eq.f32.partialorder %v8463, 8.507059e+37
        %v8465 = vand.u32 %v8184, 2147483648
        %v8466 = vor.u32 1.1754944e-38, %v8465
        %v8467 = vsel %vm8464, %v8466, %v8462
        %v8468 = vmul.f32 1.0, %v8467
        %v8469 = vrcp.pop %v8185
        %v8470 = vmul.f32 %v8185, %v8469
        %v8471 = vsub.f32 1.0, %v8470
        %v8472 = vmul.f32 %v8469, %v8471
        %v8473 = vadd.f32 %v8469, %v8472
        %vm8474 = vweird.f32 %v8185
        %vm8475 = vweird.f32 %v8469
        %vm8476 = vmor %vm8474, %vm8475
        %v8477 = vsel %vm8476, %v8469, %v8473
        %v8478 = vand.u32 2147483647, %v8185
        %vm8479 = vcmp.eq.f32.partialorder %v8478, 8.507059e+37
        %v8480 = vand.u32 %v8185, 2147483648
        %v8481 = vor.u32 1.1754944e-38, %v8480
        %v8482 = vsel %vm8479, %v8481, %v8477
        %v8483 = vmul.f32 1.0, %v8482
        %v8484 = vrcp.pop %v8186
        %v8485 = vmul.f32 %v8186, %v8484
        %v8486 = vsub.f32 1.0, %v8485
        %v8487 = vmul.f32 %v8484, %v8486
        %v8488 = vadd.f32 %v8484, %v8487
        %vm8489 = vweird.f32 %v8186
        %vm8490 = vweird.f32 %v8484
        %vm8491 = vmor %vm8489, %vm8490
        %v8492 = vsel %vm8491, %v8484, %v8488
        %v8493 = vand.u32 2147483647, %v8186
        %vm8494 = vcmp.eq.f32.partialorder %v8493, 8.507059e+37
        %v8495 = vand.u32 %v8186, 2147483648
        %v8496 = vor.u32 1.1754944e-38, %v8495
        %v8497 = vsel %vm8494, %v8496, %v8492
        %v8498 = vmul.f32 1.0, %v8497
        %v8499 = vrcp.pop %v8187
        %v8500 = vmul.f32 %v8187, %v8499
        %v8501 = vsub.f32 1.0, %v8500
        %v8502 = vmul.f32 %v8499, %v8501
        %v8503 = vadd.f32 %v8499, %v8502
        %vm8504 = vweird.f32 %v8187
        %vm8505 = vweird.f32 %v8499
        %vm8506 = vmor %vm8504, %vm8505
        %v8507 = vsel %vm8506, %v8499, %v8503
        %v8508 = vand.u32 2147483647, %v8187
        %vm8509 = vcmp.eq.f32.partialorder %v8508, 8.507059e+37
        %v8510 = vand.u32 %v8187, 2147483648
        %v8511 = vor.u32 1.1754944e-38, %v8510
        %v8512 = vsel %vm8509, %v8511, %v8507
        %v8513 = vmul.f32 1.0, %v8512
        %v8514 = vrcp.pop %v8188
        %v8515 = vmul.f32 %v8188, %v8514
        %v8516 = vsub.f32 1.0, %v8515
        %v8517 = vmul.f32 %v8514, %v8516
        %v8518 = vadd.f32 %v8514, %v8517
        %vm8519 = vweird.f32 %v8188
        %vm8520 = vweird.f32 %v8514
        %vm8521 = vmor %vm8519, %vm8520
        %v8522 = vsel %vm8521, %v8514, %v8518
        %v8523 = vand.u32 2147483647, %v8188
        %vm8524 = vcmp.eq.f32.partialorder %v8523, 8.507059e+37
        %v8525 = vand.u32 %v8188, 2147483648
        %v8526 = vor.u32 1.1754944e-38, %v8525
        %v8527 = vsel %vm8524, %v8526, %v8522
        %v8528 = vmul.f32 1.0, %v8527
        %v8529 = vrcp.pop %v8189
        %v8530 = vmul.f32 %v8189, %v8529
        %v8531 = vsub.f32 1.0, %v8530
        %v8532 = vmul.f32 %v8529, %v8531
        %v8533 = vadd.f32 %v8529, %v8532
        %vm8534 = vweird.f32 %v8189
        %vm8535 = vweird.f32 %v8529
        %vm8536 = vmor %vm8534, %vm8535
        %v8537 = vsel %vm8536, %v8529, %v8533
        %v8538 = vand.u32 2147483647, %v8189
        %vm8539 = vcmp.eq.f32.partialorder %v8538, 8.507059e+37
        %v8540 = vand.u32 %v8189, 2147483648
        %v8541 = vor.u32 1.1754944e-38, %v8540
        %v8542 = vsel %vm8539, %v8541, %v8537
        %v8543 = vmul.f32 1.0, %v8542
        %v8544 = vrcp.pop %v8190
        %v8545 = vmul.f32 %v8190, %v8544
        %v8546 = vsub.f32 1.0, %v8545
        %v8547 = vmul.f32 %v8544, %v8546
        %v8548 = vadd.f32 %v8544, %v8547
        %vm8549 = vweird.f32 %v8190
        %vm8550 = vweird.f32 %v8544
        %vm8551 = vmor %vm8549, %vm8550
        %v8552 = vsel %vm8551, %v8544, %v8548
        %v8553 = vand.u32 2147483647, %v8190
        %vm8554 = vcmp.eq.f32.partialorder %v8553, 8.507059e+37
        %v8555 = vand.u32 %v8190, 2147483648
        %v8556 = vor.u32 1.1754944e-38, %v8555
        %v8557 = vsel %vm8554, %v8556, %v8552
        %v8558 = vmul.f32 1.0, %v8557
        %v8559 = vrcp.pop %v8191
        %v8560 = vmul.f32 %v8191, %v8559
        %v8561 = vsub.f32 1.0, %v8560
        %v8562 = vmul.f32 %v8559, %v8561
        %v8563 = vadd.f32 %v8559, %v8562
        %vm8564 = vweird.f32 %v8191
        %vm8565 = vweird.f32 %v8559
        %vm8566 = vmor %vm8564, %vm8565
        %v8567 = vsel %vm8566, %v8559, %v8563
        %v8568 = vand.u32 2147483647, %v8191
        %vm8569 = vcmp.eq.f32.partialorder %v8568, 8.507059e+37
        %v8570 = vand.u32 %v8191, 2147483648
        %v8571 = vor.u32 1.1754944e-38, %v8570
        %v8572 = vsel %vm8569, %v8571, %v8567
        %v8573 = vmul.f32 1.0, %v8572
        %v8574 = vrcp.pop %v8192
        %v8575 = vmul.f32 %v8192, %v8574
        %v8576 = vsub.f32 1.0, %v8575
        %v8577 = vmul.f32 %v8574, %v8576
        %v8578 = vadd.f32 %v8574, %v8577
        %vm8579 = vweird.f32 %v8192
        %vm8580 = vweird.f32 %v8574
        %vm8581 = vmor %vm8579, %vm8580
        %v8582 = vsel %vm8581, %v8574, %v8578
        %v8583 = vand.u32 2147483647, %v8192
        %vm8584 = vcmp.eq.f32.partialorder %v8583, 8.507059e+37
        %v8585 = vand.u32 %v8192, 2147483648
        %v8586 = vor.u32 1.1754944e-38, %v8585
        %v8587 = vsel %vm8584, %v8586, %v8582
        %v8588 = vmul.f32 1.0, %v8587
        %v8589 = vrcp.pop %v8193
        %v8590 = vmul.f32 %v8193, %v8589
        %v8591 = vsub.f32 1.0, %v8590
        %v8592 = vmul.f32 %v8589, %v8591
        %v8593 = vadd.f32 %v8589, %v8592
        %vm8594 = vweird.f32 %v8193
        %vm8595 = vweird.f32 %v8589
        %vm8596 = vmor %vm8594, %vm8595
        %v8597 = vsel %vm8596, %v8589, %v8593
        %v8598 = vand.u32 2147483647, %v8193
        %vm8599 = vcmp.eq.f32.partialorder %v8598, 8.507059e+37
        %v8600 = vand.u32 %v8193, 2147483648
        %v8601 = vor.u32 1.1754944e-38, %v8600
        %v8602 = vsel %vm8599, %v8601, %v8597
        %v8603 = vmul.f32 1.0, %v8602
        %v8604 = vrcp.pop %v8194
        %v8605 = vmul.f32 %v8194, %v8604
        %v8606 = vsub.f32 1.0, %v8605
        %v8607 = vmul.f32 %v8604, %v8606
        %v8608 = vadd.f32 %v8604, %v8607
        %vm8609 = vweird.f32 %v8194
        %vm8610 = vweird.f32 %v8604
        %vm8611 = vmor %vm8609, %vm8610
        %v8612 = vsel %vm8611, %v8604, %v8608
        %v8613 = vand.u32 2147483647, %v8194
        %vm8614 = vcmp.eq.f32.partialorder %v8613, 8.507059e+37
        %v8615 = vand.u32 %v8194, 2147483648
        %v8616 = vor.u32 1.1754944e-38, %v8615
        %v8617 = vsel %vm8614, %v8616, %v8612
        %v8618 = vmul.f32 1.0, %v8617
        %v8619 = vrcp.pop %v8195
        %v8620 = vmul.f32 %v8195, %v8619
        %v8621 = vsub.f32 1.0, %v8620
        %v8622 = vmul.f32 %v8619, %v8621
        %v8623 = vadd.f32 %v8619, %v8622
        %vm8624 = vweird.f32 %v8195
        %vm8625 = vweird.f32 %v8619
        %vm8626 = vmor %vm8624, %vm8625
        %v8627 = vsel %vm8626, %v8619, %v8623
        %v8628 = vand.u32 2147483647, %v8195
        %vm8629 = vcmp.eq.f32.partialorder %v8628, 8.507059e+37
        %v8630 = vand.u32 %v8195, 2147483648
        %v8631 = vor.u32 1.1754944e-38, %v8630
        %v8632 = vsel %vm8629, %v8631, %v8627
        %v8633 = vmul.f32 1.0, %v8632
        %v8634 = vrcp.pop %v8196
        %v8635 = vmul.f32 %v8196, %v8634
        %v8636 = vsub.f32 1.0, %v8635
        %v8637 = vmul.f32 %v8634, %v8636
        %v8638 = vadd.f32 %v8634, %v8637
        %vm8639 = vweird.f32 %v8196
        %vm8640 = vweird.f32 %v8634
        %vm8641 = vmor %vm8639, %vm8640
        %v8642 = vsel %vm8641, %v8634, %v8638
        %v8643 = vand.u32 2147483647, %v8196
        %vm8644 = vcmp.eq.f32.partialorder %v8643, 8.507059e+37
        %v8645 = vand.u32 %v8196, 2147483648
        %v8646 = vor.u32 1.1754944e-38, %v8645
        %v8647 = vsel %vm8644, %v8646, %v8642
        %v8648 = vmul.f32 1.0, %v8647
        %v8649 = vrcp.pop %v8197
        %v8650 = vmul.f32 %v8197, %v8649
        %v8651 = vsub.f32 1.0, %v8650
        %v8652 = vmul.f32 %v8649, %v8651
        %v8653 = vadd.f32 %v8649, %v8652
        %vm8654 = vweird.f32 %v8197
        %vm8655 = vweird.f32 %v8649
        %vm8656 = vmor %vm8654, %vm8655
        %v8657 = vsel %vm8656, %v8649, %v8653
        %v8658 = vand.u32 2147483647, %v8197
        %vm8659 = vcmp.eq.f32.partialorder %v8658, 8.507059e+37
        %v8660 = vand.u32 %v8197, 2147483648
        %v8661 = vor.u32 1.1754944e-38, %v8660
        %v8662 = vsel %vm8659, %v8661, %v8657
        %v8663 = vmul.f32 1.0, %v8662
        %v8664 = vrcp.pop %v8198
        %v8665 = vmul.f32 %v8198, %v8664
        %v8666 = vsub.f32 1.0, %v8665
        %v8667 = vmul.f32 %v8664, %v8666
        %v8668 = vadd.f32 %v8664, %v8667
        %vm8669 = vweird.f32 %v8198
        %vm8670 = vweird.f32 %v8664
        %vm8671 = vmor %vm8669, %vm8670
        %v8672 = vsel %vm8671, %v8664, %v8668
        %v8673 = vand.u32 2147483647, %v8198
        %vm8674 = vcmp.eq.f32.partialorder %v8673, 8.507059e+37
        %v8675 = vand.u32 %v8198, 2147483648
        %v8676 = vor.u32 1.1754944e-38, %v8675
        %v8677 = vsel %vm8674, %v8676, %v8672
        %v8678 = vmul.f32 1.0, %v8677
        %v8679 = vmul.f32 %v7992, %v8213
        %v8680 = vmul.f32 %v7994, %v8228
        %v8681 = vmul.f32 %v7997, %v8243
        %v8682 = vmul.f32 %v7999, %v8258
        %v8683 = vmul.f32 %v8002, %v8273
        %v8684 = vmul.f32 %v8004, %v8288
        %v8685 = vmul.f32 %v8007, %v8303
        %v8686 = vmul.f32 %v8009, %v8318
        %v8687 = vmul.f32 %v8012, %v8333
        %v8688 = vmul.f32 %v8014, %v8348
        %v8689 = vmul.f32 %v8017, %v8363
        %v8690 = vmul.f32 %v8019, %v8378
        %v8691 = vmul.f32 %v8022, %v8393
        %v8692 = vmul.f32 %v8024, %v8408
        %v8693 = vmul.f32 %v8027, %v8423
        %v8694 = vmul.f32 %v8029, %v8438
        %v8695 = vmul.f32 %v8032, %v8453
        %v8696 = vmul.f32 %v8034, %v8468
        %v8697 = vmul.f32 %v8037, %v8483
        %v8698 = vmul.f32 %v8039, %v8498
        %v8699 = vmul.f32 %v8042, %v8513
        %v8700 = vmul.f32 %v8044, %v8528
        %v8701 = vmul.f32 %v8047, %v8543
        %v8702 = vmul.f32 %v8049, %v8558
        %v8703 = vmul.f32 %v8052, %v8573
        %v8704 = vmul.f32 %v8054, %v8588
        %v8705 = vmul.f32 %v8057, %v8603
        %v8706 = vmul.f32 %v8059, %v8618
        %v8707 = vmul.f32 %v8062, %v8633
        %v8708 = vmul.f32 %v8064, %v8648
        %v8709 = vmul.f32 %v8067, %v8663
        %v8710 = vmul.f32 %v8069, %v8678
        %8711 = vst [vmem:[%s255] sm:$0xff] %v8679
        %8712 = vst [vmem:[%s255 + $0x8] sm:$0xff] %v8680
        %8713 = vst [vmem:[%s255 + $0x10] sm:$0xff] %v8681
        %8714 = vst [vmem:[%s255 + $0x18] sm:$0xff] %v8682
        %8715 = vst [vmem:[%s255 + $0x20] sm:$0xff] %v8683
        %8716 = vst [vmem:[%s255 + $0x28] sm:$0xff] %v8684
        %8717 = vst [vmem:[%s255 + $0x30] sm:$0xff] %v8685
        %8718 = vst [vmem:[%s255 + $0x38] sm:$0xff] %v8686
        %8719 = vst [vmem:[%s255 + $0x40] sm:$0xff] %v8687
        %8720 = vst [vmem:[%s255 + $0x48] sm:$0xff] %v8688
        %8721 = vst [vmem:[%s255 + $0x50] sm:$0xff] %v8689
        %8722 = vst [vmem:[%s255 + $0x58] sm:$0xff] %v8690
        %8723 = vst [vmem:[%s255 + $0x60] sm:$0xff] %v8691
        %8724 = vst [vmem:[%s255 + $0x68] sm:$0xff] %v8692
        %8725 = vst [vmem:[%s255 + $0x70] sm:$0xff] %v8693
        %8726 = vst [vmem:[%s255 + $0x78] sm:$0xff] %v8694
        %8727 = vst [vmem:[%s255 + $0x80] sm:$0xff] %v8695
        %8728 = vst [vmem:[%s255 + $0x88] sm:$0xff] %v8696
        %8729 = vst [vmem:[%s255 + $0x90] sm:$0xff] %v8697
        %8730 = vst [vmem:[%s255 + $0x98] sm:$0xff] %v8698
        %8731 = vst [vmem:[%s255 + $0xa0] sm:$0xff] %v8699
        %8732 = vst [vmem:[%s255 + $0xa8] sm:$0xff] %v8700
        %8733 = vst [vmem:[%s255 + $0xb0] sm:$0xff] %v8701
        %8734 = vst [vmem:[%s255 + $0xb8] sm:$0xff] %v8702
        %8735 = vst [vmem:[%s255 + $0xc0] sm:$0xff] %v8703
        %8736 = vst [vmem:[%s255 + $0xc8] sm:$0xff] %v8704
        %8737 = vst [vmem:[%s255 + $0xd0] sm:$0xff] %v8705
        %8738 = vst [vmem:[%s255 + $0xd8] sm:$0xff] %v8706
        %8739 = vst [vmem:[%s255 + $0xe0] sm:$0xff] %v8707
        %8740 = vst [vmem:[%s255 + $0xe8] sm:$0xff] %v8708
        %8741 = vst [vmem:[%s255 + $0xf0] sm:$0xff] %v8709
        %8742 = vst [vmem:[%s255 + $0xf8] sm:$0xff] %v8710
        %s8743 = sand.u32 %s161, 1
        %s8744 = scalar_lea.sflag [#allocation5], %s8743
        %s8745 = sand.u32 %s161, 1
        %s8746 = smul.addr %s8745, 256
        %s8747 = scalar_lea.vmem [#allocation4], %s8746
        // Predicated region
        $region45: #{tpu_custom_call.1} parent=39 // pred_check
          %p8748 = pneg %p171
        $region46: #{tpu_custom_call.1} parent=39 // pred_check_branch
          %8750 = sbr.rel (%p8748) target = $region48
        $region47: #{tpu_custom_call.1} parent=39 // pred_region
          %8752 = vsyncadd %s8744, 0
          %s8753 = smul.addr %s23, 32
          %s8754 = sadd.s32 %s24, %s8753
          %s8755 = smul.addr %s8754, 8
          %s8756 = scalar_lea.hbm %s5, %s8755
          %s8757 = sshll.u32 %s8747, 4
          %s8758 = int_to_ptr.vmem [resolvable:$true] %s8757
          %s8759 = sshll.u32 %s8756, 4
          %s8760 = int_to_ptr.hbm [resolvable:$true] %s8759
          %8765 = dma.vmem_to_hbm [thread:$0]  %s8758, 4096, %s8760, %s8744, 128, 128, 8
        $region48: #{tpu_custom_call.1} parent=39 // pred_fallthru
          _
      $region40: #{tpu_custom_call.1} parent=5 // pred_fallthru
        _
      %p8766 = scmp.le.s32.totalorder 2, %s14
      // Predicated region
      $region49: #{tpu_custom_call.1} parent=5 // pred_check
        %p8767 = pneg %p8766
      $region50: #{tpu_custom_call.1} parent=5 // pred_check_branch
        %8769 = sbr.rel (%p8767) target = $region52
      $region51: #{tpu_custom_call.1} parent=5 // pred_region
        %s8770 = ssub.s32 %s14, 2
        // Predicated region
        $region53: #{tpu_custom_call.1} parent=51 // pred_check
          %p8771 = pneg %p177
        $region54: #{tpu_custom_call.1} parent=51 // pred_check_branch
          %8773 = sbr.rel (%p8771) target = $region56
        $region55: #{tpu_custom_call.1} parent=51 // pred_region
          %s8774 = sand.u32 %s162, 1
          %s8775 = scalar_lea.sflag [#allocation5], %s8774
          %s8776 = sand.u32 %s162, 1
          %s8777 = smul.addr %s8776, 256
          %s8778 = scalar_lea.vmem [#allocation4], %s8777
          %8780 = dma.done %s8775, 4096
        $region56: #{tpu_custom_call.1} parent=51 // pred_fallthru
          _
      $region52: #{tpu_custom_call.1} parent=5 // pred_fallthru
        _
    $region6: #{tpu_custom_call.1} parent=1 // loop_footer
      %s18 = sadd.s32 1, %s14
    $region7: #{tpu_custom_call.1} parent=1 // loop_footer_branch
      %13 = sbr.rel target = $region3
    $region8: #{tpu_custom_call.1} parent=1 // loop_exit
      _
    %8781 = vsyncpa [#allocation5], 1
    %s8782 = scalar_lea.sflag [#allocation5], 1
    %8783 = vsyncpa %s8782, 1

</llo_original>
